<compile_context>
chip_gen: v7x
topology: tpu7x:2x2x1
jax: 0.10.0
libtpu: 0.0.40
codegen_flags: <defaults>
</compile_context>

<pallas_src>
import functools

import jax
import jax.numpy as jnp
from jax import lax
from jax.experimental import pallas as pl
from jax.experimental.pallas import tpu as pltpu

K = 33          # Conv1d kernel size
PAD = 16        # Conv1d padding (same-length output)
G = 128         # lane-aligned gutter width (>= PAD) for the padded VMEM slabs
EXTRA = 16      # sublane-aligned bias rows appended to the stack (row K*C = ones, rest unused)
BN_EPS = 1e-5


def _resblock_kernel(x_ref, w1_ref, w2_ref, o_ref, xg_ref, hg_ref, stack_ref):
    """NB batch elements per grid step.

    x_ref  : (NB, C, L)        unpadded input block (f32)
    wX_ref : (C, K*C + EXTRA)  im2col-packed conv weights, BN scale + fused bias folded in
    o_ref  : (NB, C, L)
    xg_ref, hg_ref : VMEM (C, NB*(L+G)+G) padded slabs (element nb at lane nb*(L+G)+G)
    stack_ref      : VMEM (K*C + EXTRA, NB*TL) im2col shifted stack (shared by both convs)
    """
    NB, C, L = o_ref.shape
    TL = stack_ref.shape[1] // NB
    n_tiles = L // TL
    KC = K * C
    stride = L + G                       # per-element stride inside the padded slabs
    cdt = xg_ref.dtype                   # slab/stack/weight dtype (f32 or bf16)

    # Zero only the gutters (aligned (C, G) stores); the data columns are fully overwritten
    # every step so the slabs never need full re-zeroing.  Done every step (not pid==0)
    # so "parallel" megacore sharding of the batch axis cannot see uninitialized gutters.
    zg = jnp.zeros((C, G), cdt)
    for m in range(NB + 1):
        xg_ref[:, m * stride:m * stride + G] = zg
        hg_ref[:, m * stride:m * stride + G] = zg

    # Bias rows of the stack: row KC multiplies the bias column of the packed weights;
    # rows KC+1..KC+EXTRA-1 multiply zero weight columns.  One aligned (EXTRA, NB*TL) store.
    stack_ref[KC:KC + EXTRA, :] = jnp.ones((EXTRA, NB * TL), cdt)

    # Stage the NB unpadded inputs at lane-aligned offsets inside the padded slab.
    for nb in range(NB):
        xg_ref[:, nb * stride + G:nb * stride + G + L] = x_ref[nb].astype(cdt)

    def conv_tile(src_slab, w_ref, t):
        # Build the shifted im2col stack for lane-tile t, then ONE MXU matmul (f32 acc).
        for nb in range(NB):
            base = nb * stride + G - PAD + t * TL
            for k in range(K):           # static unroll; all offsets are compile-time ints
                stack_ref[k * C:(k + 1) * C, nb * TL:(nb + 1) * TL] = \
                    src_slab[:, base + k:base + k + TL]
        return jnp.dot(w_ref[...], stack_ref[...], preferred_element_type=jnp.float32)

    # ---- conv1 + bn1 (+ fused bias, all folded into w1) + ReLU -> hidden slab ----
    for t in range(n_tiles):
        h = jnp.maximum(conv_tile(xg_ref, w1_ref, t), 0.0)           # (C, NB*TL) f32
        for nb in range(NB):
            dst = nb * stride + G + t * TL
            hg_ref[:, dst:dst + TL] = h[:, nb * TL:(nb + 1) * TL].astype(cdt)

    # ---- conv2 + bn2 (folded) + residual add (dropout identity in eval) ----
    for t in range(n_tiles):
        y = conv_tile(hg_ref, w2_ref, t)                              # (C, NB*TL) f32
        for nb in range(NB):
            res = x_ref[nb, :, t * TL:(t + 1) * TL].astype(jnp.float32)   # late residual read
            o_ref[nb, :, t * TL:(t + 1) * TL] = \
                (y[:, nb * TL:(nb + 1) * TL] + res).astype(o_ref.dtype)


@functools.partial(jax.jit, static_argnames=("nb", "tl"))
def residual_block(x, w1p, w2p, *, nb=2, tl=128):
    """x: (N, C, L) f32.  wXp: (C, K*C + EXTRA) packed weights (dtype = compute dtype)."""
    N, C, L = x.shape
    KCE = K * C + EXTRA
    assert w1p.shape == (C, KCE) and w2p.shape == (C, KCE)
    assert C % 8 == 0, "C must be a multiple of 8 (sublane tiling)"
    assert tl % 128 == 0 and L % tl == 0, "L must tile into 128-multiple lane tiles"
    assert N % nb == 0, "batch must be divisible by the per-step batch tile"

    cdt = w1p.dtype
    esize = jnp.dtype(cdt).itemsize
    stride = L + G
    slab_w = nb * stride + G

    # VMEM budget from actual buffer sizes (scratch + double-buffered I/O blocks + weights),
    # clamped to [32 MiB, 48 MiB] so it stays safe on v7x (64 MiB physical) while still
    # allowing bigger nb / tl on v5e & v6e.
    scratch_bytes = 2 * C * slab_w * esize + KCE * nb * tl * esize
    io_bytes = 2 * 2 * nb * C * L * 4
    w_bytes = 2 * 2 * C * KCE * esize
    vmem_limit = int(min(max(2 * (scratch_bytes + io_bytes + w_bytes), 32 << 20), 48 << 20))

    return pl.pallas_call(
        _resblock_kernel,
        out_shape=jax.ShapeDtypeStruct((N, C, L), x.dtype),
        grid_spec=pltpu.PrefetchScalarGridSpec(
            num_scalar_prefetch=0,
            grid=(N // nb,),
            in_specs=[
                pl.BlockSpec((nb, C, L), lambda n: (n, 0, 0)),    # x (nb elements per step)
                # Grid-invariant packed weights (BN scale + fused bias folded in). At large C
                # on v7x these would be single-buffered via pipeline_mode=pl.Buffered(1);
                # left at the default here (they are tiny at this channel count).
                pl.BlockSpec((C, KCE), lambda n: (0, 0)),         # w1
                pl.BlockSpec((C, KCE), lambda n: (0, 0)),         # w2
            ],
            out_specs=pl.BlockSpec((nb, C, L), lambda n: (n, 0, 0)),
            scratch_shapes=[
                pltpu.VMEM((C, slab_w), cdt),        # padded input slab  (nb elements)
                pltpu.VMEM((C, slab_w), cdt),        # padded hidden slab (nb elements)
                pltpu.VMEM((KCE, nb * tl), cdt),     # im2col stack (shared by both convs)
            ],
        ),
        compiler_params=pltpu.CompilerParams(
            dimension_semantics=("parallel",),
            vmem_limit_bytes=vmem_limit),
    )(x, w1p, w2p)


def _pack_params(w_oik, conv_bias, gamma, beta, running_mean, running_var,
                 dtype=jnp.float32):
    """Torch (O, I, K) conv weight + BN stats -> (C, K*C + EXTRA) packed weight.

    Column layout: [k*C + i] = scale[o] * w[o, i, k];  column K*C = fused bias
    (scale*(conv_bias - mean) + beta);  remaining EXTRA-1 columns are zero padding that
    multiplies the ones rows of the stack.
    """
    C = w_oik.shape[0]
    scale = gamma / jnp.sqrt(running_var + BN_EPS)               # (C,)
    bias = scale * (conv_bias - running_mean) + beta             # (C,)
    w2d = jnp.transpose(w_oik, (0, 2, 1)).reshape(C, K * C) * scale[:, None]
    pad_cols = jnp.zeros((C, EXTRA), jnp.float32).at[:, 0].set(bias)
    return jnp.concatenate([w2d, pad_cols], axis=1).astype(dtype)


def _reference(x, w1_oik, cb1, g1, be1, rm1, rv1, w2_oik, cb2, g2, be2, rm2, rv2):
    """Pure-JAX eval-mode reference using lax.conv_general_dilated (NCL)."""
    def conv(inp, w, b):
        y = lax.conv_general_dilated(
            inp, w, window_strides=(1,), padding=[(PAD, PAD)],
            dimension_numbers=("NCH", "OIH", "NCH"))
        return y + b.reshape(1, -1, 1)

    def bn(y, g, b, rm, rv):
        return g.reshape(1, -1, 1) * (y - rm.reshape(1, -1, 1)) / \
            jnp.sqrt(rv.reshape(1, -1, 1) + BN_EPS) + b.reshape(1, -1, 1)

    out = jnp.maximum(bn(conv(x, w1_oik, cb1), g1, be1, rm1, rv1), 0.0)
    out = bn(conv(out, w2_oik, cb2), g2, be2, rm2, rv2)
    return out + x  # dropout identity in eval


if __name__ == "__main__":
    N, C, L = 4, 16, 256
    NB, TL = 2, 128                      # exercises both the NB-batching and the L-tiling paths
    key = jax.random.PRNGKey(0)
    ks = jax.random.split(key, 12)

    # Deterministic synthetic parameters (shapes match nn.Conv1d / nn.BatchNorm1d).
    w1_oik = jax.random.normal(ks[0], (C, C, K), jnp.float32) * 0.05   # torch layout (O, I, K)
    cb1 = jax.random.normal(ks[1], (C,), jnp.float32) * 0.05
    w2_oik = jax.random.normal(ks[2], (C, C, K), jnp.float32) * 0.05
    cb2 = jax.random.normal(ks[3], (C,), jnp.float32) * 0.05
    g1 = 1.0 + 0.1 * jax.random.normal(ks[4], (C,), jnp.float32)
    be1 = 0.1 * jax.random.normal(ks[5], (C,), jnp.float32)
    rm1 = 0.1 * jax.random.normal(ks[6], (C,), jnp.float32)
    rv1 = 1.0 + 0.1 * jax.random.uniform(ks[7], (C,), jnp.float32)
    g2 = 1.0 + 0.1 * jax.random.normal(ks[8], (C,), jnp.float32)
    be2 = 0.1 * jax.random.normal(ks[9], (C,), jnp.float32)
    rm2 = 0.1 * jax.random.normal(ks[10], (C,), jnp.float32)
    rv2 = 1.0 + 0.1 * jax.random.uniform(ks[11], (C,), jnp.float32)

    x = jax.random.normal(jax.random.PRNGKey(1), (N, C, L), jnp.float32)

    ref = _reference(x, w1_oik, cb1, g1, be1, rm1, rv1,
                     w2_oik, cb2, g2, be2, rm2, rv2)

    # ---- f32 path (exact eval-mode semantics), tight tolerance ----
    w1p = _pack_params(w1_oik, cb1, g1, be1, rm1, rv1, dtype=jnp.float32)
    w2p = _pack_params(w2_oik, cb2, g2, be2, rm2, rv2, dtype=jnp.float32)
    out = jax.block_until_ready(residual_block(x, w1p, w2p, nb=NB, tl=TL))
    assert out.shape == (N, C, L)
    assert jnp.allclose(out, ref, atol=1e-3, rtol=1e-3), "f32 path mismatch vs JAX reference"

    # ---- bf16 weights / slabs / stack (f32 MXU accumulation), looser tolerance ----
    w1b = _pack_params(w1_oik, cb1, g1, be1, rm1, rv1, dtype=jnp.bfloat16)
    w2b = _pack_params(w2_oik, cb2, g2, be2, rm2, rv2, dtype=jnp.bfloat16)
    out_b = jax.block_until_ready(residual_block(x, w1b, w2b, nb=NB, tl=TL))
    assert jnp.allclose(out_b, ref, atol=1e-1, rtol=1e-1), "bf16 path mismatch vs JAX reference"

    print("KERNEL_OK")
</pallas_src>

<mosaic_0001>
module attributes {stable_mosaic.version = 11 : i64} {
  func.func @_resblock_kernel(%arg0: i32, %arg1: memref<2x16x256xf32, #tpu.memory_space<vmem>>, %arg2: memref<16x544xf32, #tpu.memory_space<vmem>>, %arg3: memref<16x544xf32, #tpu.memory_space<vmem>>, %arg4: memref<2x16x256xf32, #tpu.memory_space<vmem>>, %arg5: memref<16x896xf32, #tpu.memory_space<vmem>>, %arg6: memref<16x896xf32, #tpu.memory_space<vmem>>, %arg7: memref<544x256xf32, #tpu.memory_space<vmem>>) attributes {dimension_semantics = [#tpu.dimension_semantics<parallel>], iteration_bounds = array<i64: 2>, scalar_prefetch = 0 : i64, scratch_operands = 3 : i64, tpu.core_type = #tpu.core_type<tc>, window_params = [{transform_indices = @transform_0, window_bounds = array<i64: 2, 16, 256>}, {pipeline_mode = #tpu.pipeline_mode<synchronous>, transform_indices = @transform_1, window_bounds = array<i64: 16, 544>}, {pipeline_mode = #tpu.pipeline_mode<synchronous>, transform_indices = @transform_2, window_bounds = array<i64: 16, 544>}, {transform_indices = @transform_3, window_bounds = array<i64: 2, 16, 256>}]} {
    %cst = arith.constant 0.000000e+00 : f32
    %0 = vector.broadcast %cst : f32 to vector<16x128xf32>
    %c0 = arith.constant 0 : index
    %c0_0 = arith.constant 0 : index
    %1 = vector.load %arg5[%c0, %c0_0] : memref<16x896xf32, #tpu.memory_space<vmem>>, vector<16x128xf32>
    tpu.vector_store %arg5[%c0, %c0_0], %0 {strides = array<i32>} : memref<16x896xf32, #tpu.memory_space<vmem>>, vector<16x128xf32>,
    %c0_1 = arith.constant 0 : index
    %c0_2 = arith.constant 0 : index
    %2 = vector.load %arg6[%c0_1, %c0_2] : memref<16x896xf32, #tpu.memory_space<vmem>>, vector<16x128xf32>
    tpu.vector_store %arg6[%c0_1, %c0_2], %0 {strides = array<i32>} : memref<16x896xf32, #tpu.memory_space<vmem>>, vector<16x128xf32>,
    %c0_3 = arith.constant 0 : index
    %c384 = arith.constant 384 : index
    %3 = vector.load %arg5[%c0_3, %c384] : memref<16x896xf32, #tpu.memory_space<vmem>>, vector<16x128xf32>
    tpu.vector_store %arg5[%c0_3, %c384], %0 {strides = array<i32>} : memref<16x896xf32, #tpu.memory_space<vmem>>, vector<16x128xf32>,
    %c0_4 = arith.constant 0 : index
    %c384_5 = arith.constant 384 : index
    %4 = vector.load %arg6[%c0_4, %c384_5] : memref<16x896xf32, #tpu.memory_space<vmem>>, vector<16x128xf32>
    tpu.vector_store %arg6[%c0_4, %c384_5], %0 {strides = array<i32>} : memref<16x896xf32, #tpu.memory_space<vmem>>, vector<16x128xf32>,
    %c0_6 = arith.constant 0 : index
    %c768 = arith.constant 768 : index
    %5 = vector.load %arg5[%c0_6, %c768] : memref<16x896xf32, #tpu.memory_space<vmem>>, vector<16x128xf32>
    tpu.vector_store %arg5[%c0_6, %c768], %0 {strides = array<i32>} : memref<16x896xf32, #tpu.memory_space<vmem>>, vector<16x128xf32>,
    %c0_7 = arith.constant 0 : index
    %c768_8 = arith.constant 768 : index
    %6 = vector.load %arg6[%c0_7, %c768_8] : memref<16x896xf32, #tpu.memory_space<vmem>>, vector<16x128xf32>
    tpu.vector_store %arg6[%c0_7, %c768_8], %0 {strides = array<i32>} : memref<16x896xf32, #tpu.memory_space<vmem>>, vector<16x128xf32>,
    %cst_9 = arith.constant 1.000000e+00 : f32
    %7 = vector.broadcast %cst_9 : f32 to vector<16x256xf32>
    %c528 = arith.constant 528 : index
    %c0_10 = arith.constant 0 : index
    %8 = vector.load %arg7[%c528, %c0_10] : memref<544x256xf32, #tpu.memory_space<vmem>>, vector<16x256xf32>
    tpu.vector_store %arg7[%c528, %c0_10], %7 {strides = array<i32>} : memref<544x256xf32, #tpu.memory_space<vmem>>, vector<16x256xf32>,
    %c0_11 = arith.constant 0 : index
    %c0_12 = arith.constant 0 : index
    %c0_13 = arith.constant 0 : index
    %9 = vector.load %arg1[%c0_11, %c0_12, %c0_13] : memref<2x16x256xf32, #tpu.memory_space<vmem>>, vector<1x16x256xf32>
    %10 = vector.shape_cast %9 : vector<1x16x256xf32> to vector<16x256xf32>
    %c0_14 = arith.constant 0 : index
    %c128 = arith.constant 128 : index
    %11 = vector.load %arg5[%c0_14, %c128] : memref<16x896xf32, #tpu.memory_space<vmem>>, vector<16x256xf32>
    tpu.vector_store %arg5[%c0_14, %c128], %10 {strides = array<i32>} : memref<16x896xf32, #tpu.memory_space<vmem>>, vector<16x256xf32>,
    %c1 = arith.constant 1 : index
    %c0_15 = arith.constant 0 : index
    %c0_16 = arith.constant 0 : index
    %12 = vector.load %arg1[%c1, %c0_15, %c0_16] : memref<2x16x256xf32, #tpu.memory_space<vmem>>, vector<1x16x256xf32>
    %13 = vector.shape_cast %12 : vector<1x16x256xf32> to vector<16x256xf32>
    %c0_17 = arith.constant 0 : index
    %c512 = arith.constant 512 : index
    %14 = vector.load %arg5[%c0_17, %c512] : memref<16x896xf32, #tpu.memory_space<vmem>>, vector<16x256xf32>
    tpu.vector_store %arg5[%c0_17, %c512], %13 {strides = array<i32>} : memref<16x896xf32, #tpu.memory_space<vmem>>, vector<16x256xf32>,
    %c0_18 = arith.constant 0 : index
    %c112 = arith.constant 112 : index
    %15 = vector.load %arg5[%c0_18, %c112] : memref<16x896xf32, #tpu.memory_space<vmem>>, vector<16x128xf32>
    %c0_19 = arith.constant 0 : index
    %c0_20 = arith.constant 0 : index
    %16 = vector.load %arg7[%c0_19, %c0_20] : memref<544x256xf32, #tpu.memory_space<vmem>>, vector<16x128xf32>
    tpu.vector_store %arg7[%c0_19, %c0_20], %15 {strides = array<i32>} : memref<544x256xf32, #tpu.memory_space<vmem>>, vector<16x128xf32>,
    %c0_21 = arith.constant 0 : index
    %c113 = arith.constant 113 : index
    %17 = vector.load %arg5[%c0_21, %c113] : memref<16x896xf32, #tpu.memory_space<vmem>>, vector<16x128xf32>
    %c16 = arith.constant 16 : index
    %c0_22 = arith.constant 0 : index
    %18 = vector.load %arg7[%c16, %c0_22] : memref<544x256xf32, #tpu.memory_space<vmem>>, vector<16x128xf32>
    tpu.vector_store %arg7[%c16, %c0_22], %17 {strides = array<i32>} : memref<544x256xf32, #tpu.memory_space<vmem>>, vector<16x128xf32>,
    %c0_23 = arith.constant 0 : index
    %c114 = arith.constant 114 : index
    %19 = vector.load %arg5[%c0_23, %c114] : memref<16x896xf32, #tpu.memory_space<vmem>>, vector<16x128xf32>
    %c32 = arith.constant 32 : index
    %c0_24 = arith.constant 0 : index
    %20 = vector.load %arg7[%c32, %c0_24] : memref<544x256xf32, #tpu.memory_space<vmem>>, vector<16x128xf32>
    tpu.vector_store %arg7[%c32, %c0_24], %19 {strides = array<i32>} : memref<544x256xf32, #tpu.memory_space<vmem>>, vector<16x128xf32>,
    %c0_25 = arith.constant 0 : index
    %c115 = arith.constant 115 : index
    %21 = vector.load %arg5[%c0_25, %c115] : memref<16x896xf32, #tpu.memory_space<vmem>>, vector<16x128xf32>
    %c48 = arith.constant 48 : index
    %c0_26 = arith.constant 0 : index
    %22 = vector.load %arg7[%c48, %c0_26] : memref<544x256xf32, #tpu.memory_space<vmem>>, vector<16x128xf32>
    tpu.vector_store %arg7[%c48, %c0_26], %21 {strides = array<i32>} : memref<544x256xf32, #tpu.memory_space<vmem>>, vector<16x128xf32>,
    %c0_27 = arith.constant 0 : index
    %c116 = arith.constant 116 : index
    %23 = vector.load %arg5[%c0_27, %c116] : memref<16x896xf32, #tpu.memory_space<vmem>>, vector<16x128xf32>
    %c64 = arith.constant 64 : index
    %c0_28 = arith.constant 0 : index
    %24 = vector.load %arg7[%c64, %c0_28] : memref<544x256xf32, #tpu.memory_space<vmem>>, vector<16x128xf32>
    tpu.vector_store %arg7[%c64, %c0_28], %23 {strides = array<i32>} : memref<544x256xf32, #tpu.memory_space<vmem>>, vector<16x128xf32>,
    %c0_29 = arith.constant 0 : index
    %c117 = arith.constant 117 : index
    %25 = vector.load %arg5[%c0_29, %c117] : memref<16x896xf32, #tpu.memory_space<vmem>>, vector<16x128xf32>
    %c80 = arith.constant 80 : index
    %c0_30 = arith.constant 0 : index
    %26 = vector.load %arg7[%c80, %c0_30] : memref<544x256xf32, #tpu.memory_space<vmem>>, vector<16x128xf32>
    tpu.vector_store %arg7[%c80, %c0_30], %25 {strides = array<i32>} : memref<544x256xf32, #tpu.memory_space<vmem>>, vector<16x128xf32>,
    %c0_31 = arith.constant 0 : index
    %c118 = arith.constant 118 : index
    %27 = vector.load %arg5[%c0_31, %c118] : memref<16x896xf32, #tpu.memory_space<vmem>>, vector<16x128xf32>
    %c96 = arith.constant 96 : index
    %c0_32 = arith.constant 0 : index
    %28 = vector.load %arg7[%c96, %c0_32] : memref<544x256xf32, #tpu.memory_space<vmem>>, vector<16x128xf32>
    tpu.vector_store %arg7[%c96, %c0_32], %27 {strides = array<i32>} : memref<544x256xf32, #tpu.memory_space<vmem>>, vector<16x128xf32>,
    %c0_33 = arith.constant 0 : index
    %c119 = arith.constant 119 : index
    %29 = vector.load %arg5[%c0_33, %c119] : memref<16x896xf32, #tpu.memory_space<vmem>>, vector<16x128xf32>
    %c112_34 = arith.constant 112 : index
    %c0_35 = arith.constant 0 : index
    %30 = vector.load %arg7[%c112_34, %c0_35] : memref<544x256xf32, #tpu.memory_space<vmem>>, vector<16x128xf32>
    tpu.vector_store %arg7[%c112_34, %c0_35], %29 {strides = array<i32>} : memref<544x256xf32, #tpu.memory_space<vmem>>, vector<16x128xf32>,
    %c0_36 = arith.constant 0 : index
    %c120 = arith.constant 120 : index
    %31 = vector.load %arg5[%c0_36, %c120] : memref<16x896xf32, #tpu.memory_space<vmem>>, vector<16x128xf32>
    %c128_37 = arith.constant 128 : index
    %c0_38 = arith.constant 0 : index
    %32 = vector.load %arg7[%c128_37, %c0_38] : memref<544x256xf32, #tpu.memory_space<vmem>>, vector<16x128xf32>
    tpu.vector_store %arg7[%c128_37, %c0_38], %31 {strides = array<i32>} : memref<544x256xf32, #tpu.memory_space<vmem>>, vector<16x128xf32>,
    %c0_39 = arith.constant 0 : index
    %c121 = arith.constant 121 : index
    %33 = vector.load %arg5[%c0_39, %c121] : memref<16x896xf32, #tpu.memory_space<vmem>>, vector<16x128xf32>
    %c144 = arith.constant 144 : index
    %c0_40 = arith.constant 0 : index
    %34 = vector.load %arg7[%c144, %c0_40] : memref<544x256xf32, #tpu.memory_space<vmem>>, vector<16x128xf32>
    tpu.vector_store %arg7[%c144, %c0_40], %33 {strides = array<i32>} : memref<544x256xf32, #tpu.memory_space<vmem>>, vector<16x128xf32>,
    %c0_41 = arith.constant 0 : index
    %c122 = arith.constant 122 : index
    %35 = vector.load %arg5[%c0_41, %c122] : memref<16x896xf32, #tpu.memory_space<vmem>>, vector<16x128xf32>
    %c160 = arith.constant 160 : index
    %c0_42 = arith.constant 0 : index
    %36 = vector.load %arg7[%c160, %c0_42] : memref<544x256xf32, #tpu.memory_space<vmem>>, vector<16x128xf32>
    tpu.vector_store %arg7[%c160, %c0_42], %35 {strides = array<i32>} : memref<544x256xf32, #tpu.memory_space<vmem>>, vector<16x128xf32>,
    %c0_43 = arith.constant 0 : index
    %c123 = arith.constant 123 : index
    %37 = vector.load %arg5[%c0_43, %c123] : memref<16x896xf32, #tpu.memory_space<vmem>>, vector<16x128xf32>
    %c176 = arith.constant 176 : index
    %c0_44 = arith.constant 0 : index
    %38 = vector.load %arg7[%c176, %c0_44] : memref<544x256xf32, #tpu.memory_space<vmem>>, vector<16x128xf32>
    tpu.vector_store %arg7[%c176, %c0_44], %37 {strides = array<i32>} : memref<544x256xf32, #tpu.memory_space<vmem>>, vector<16x128xf32>,
    %c0_45 = arith.constant 0 : index
    %c124 = arith.constant 124 : index
    %39 = vector.load %arg5[%c0_45, %c124] : memref<16x896xf32, #tpu.memory_space<vmem>>, vector<16x128xf32>
    %c192 = arith.constant 192 : index
    %c0_46 = arith.constant 0 : index
    %40 = vector.load %arg7[%c192, %c0_46] : memref<544x256xf32, #tpu.memory_space<vmem>>, vector<16x128xf32>
    tpu.vector_store %arg7[%c192, %c0_46], %39 {strides = array<i32>} : memref<544x256xf32, #tpu.memory_space<vmem>>, vector<16x128xf32>,
    %c0_47 = arith.constant 0 : index
    %c125 = arith.constant 125 : index
    %41 = vector.load %arg5[%c0_47, %c125] : memref<16x896xf32, #tpu.memory_space<vmem>>, vector<16x128xf32>
    %c208 = arith.constant 208 : index
    %c0_48 = arith.constant 0 : index
    %42 = vector.load %arg7[%c208, %c0_48] : memref<544x256xf32, #tpu.memory_space<vmem>>, vector<16x128xf32>
    tpu.vector_store %arg7[%c208, %c0_48], %41 {strides = array<i32>} : memref<544x256xf32, #tpu.memory_space<vmem>>, vector<16x128xf32>,
    %c0_49 = arith.constant 0 : index
    %c126 = arith.constant 126 : index
    %43 = vector.load %arg5[%c0_49, %c126] : memref<16x896xf32, #tpu.memory_space<vmem>>, vector<16x128xf32>
    %c224 = arith.constant 224 : index
    %c0_50 = arith.constant 0 : index
    %44 = vector.load %arg7[%c224, %c0_50] : memref<544x256xf32, #tpu.memory_space<vmem>>, vector<16x128xf32>
    tpu.vector_store %arg7[%c224, %c0_50], %43 {strides = array<i32>} : memref<544x256xf32, #tpu.memory_space<vmem>>, vector<16x128xf32>,
    %c0_51 = arith.constant 0 : index
    %c127 = arith.constant 127 : index
    %45 = vector.load %arg5[%c0_51, %c127] : memref<16x896xf32, #tpu.memory_space<vmem>>, vector<16x128xf32>
    %c240 = arith.constant 240 : index
    %c0_52 = arith.constant 0 : index
    %46 = vector.load %arg7[%c240, %c0_52] : memref<544x256xf32, #tpu.memory_space<vmem>>, vector<16x128xf32>
    tpu.vector_store %arg7[%c240, %c0_52], %45 {strides = array<i32>} : memref<544x256xf32, #tpu.memory_space<vmem>>, vector<16x128xf32>,
    %c0_53 = arith.constant 0 : index
    %c128_54 = arith.constant 128 : index
    %47 = vector.load %arg5[%c0_53, %c128_54] : memref<16x896xf32, #tpu.memory_space<vmem>>, vector<16x128xf32>
    %c256 = arith.constant 256 : index
    %c0_55 = arith.constant 0 : index
    %48 = vector.load %arg7[%c256, %c0_55] : memref<544x256xf32, #tpu.memory_space<vmem>>, vector<16x128xf32>
    tpu.vector_store %arg7[%c256, %c0_55], %47 {strides = array<i32>} : memref<544x256xf32, #tpu.memory_space<vmem>>, vector<16x128xf32>,
    %c0_56 = arith.constant 0 : index
    %c129 = arith.constant 129 : index
    %49 = vector.load %arg5[%c0_56, %c129] : memref<16x896xf32, #tpu.memory_space<vmem>>, vector<16x128xf32>
    %c272 = arith.constant 272 : index
    %c0_57 = arith.constant 0 : index
    %50 = vector.load %arg7[%c272, %c0_57] : memref<544x256xf32, #tpu.memory_space<vmem>>, vector<16x128xf32>
    tpu.vector_store %arg7[%c272, %c0_57], %49 {strides = array<i32>} : memref<544x256xf32, #tpu.memory_space<vmem>>, vector<16x128xf32>,
    %c0_58 = arith.constant 0 : index
    %c130 = arith.constant 130 : index
    %51 = vector.load %arg5[%c0_58, %c130] : memref<16x896xf32, #tpu.memory_space<vmem>>, vector<16x128xf32>
    %c288 = arith.constant 288 : index
    %c0_59 = arith.constant 0 : index
    %52 = vector.load %arg7[%c288, %c0_59] : memref<544x256xf32, #tpu.memory_space<vmem>>, vector<16x128xf32>
    tpu.vector_store %arg7[%c288, %c0_59], %51 {strides = array<i32>} : memref<544x256xf32, #tpu.memory_space<vmem>>, vector<16x128xf32>,
    %c0_60 = arith.constant 0 : index
    %c131 = arith.constant 131 : index
    %53 = vector.load %arg5[%c0_60, %c131] : memref<16x896xf32, #tpu.memory_space<vmem>>, vector<16x128xf32>
    %c304 = arith.constant 304 : index
    %c0_61 = arith.constant 0 : index
    %54 = vector.load %arg7[%c304, %c0_61] : memref<544x256xf32, #tpu.memory_space<vmem>>, vector<16x128xf32>
    tpu.vector_store %arg7[%c304, %c0_61], %53 {strides = array<i32>} : memref<544x256xf32, #tpu.memory_space<vmem>>, vector<16x128xf32>,
    %c0_62 = arith.constant 0 : index
    %c132 = arith.constant 132 : index
    %55 = vector.load %arg5[%c0_62, %c132] : memref<16x896xf32, #tpu.memory_space<vmem>>, vector<16x128xf32>
    %c320 = arith.constant 320 : index
    %c0_63 = arith.constant 0 : index
    %56 = vector.load %arg7[%c320, %c0_63] : memref<544x256xf32, #tpu.memory_space<vmem>>, vector<16x128xf32>
    tpu.vector_store %arg7[%c320, %c0_63], %55 {strides = array<i32>} : memref<544x256xf32, #tpu.memory_space<vmem>>, vector<16x128xf32>,
    %c0_64 = arith.constant 0 : index
    %c133 = arith.constant 133 : index
    %57 = vector.load %arg5[%c0_64, %c133] : memref<16x896xf32, #tpu.memory_space<vmem>>, vector<16x128xf32>
    %c336 = arith.constant 336 : index
    %c0_65 = arith.constant 0 : index
    %58 = vector.load %arg7[%c336, %c0_65] : memref<544x256xf32, #tpu.memory_space<vmem>>, vector<16x128xf32>
    tpu.vector_store %arg7[%c336, %c0_65], %57 {strides = array<i32>} : memref<544x256xf32, #tpu.memory_space<vmem>>, vector<16x128xf32>,
    %c0_66 = arith.constant 0 : index
    %c134 = arith.constant 134 : index
    %59 = vector.load %arg5[%c0_66, %c134] : memref<16x896xf32, #tpu.memory_space<vmem>>, vector<16x128xf32>
    %c352 = arith.constant 352 : index
    %c0_67 = arith.constant 0 : index
    %60 = vector.load %arg7[%c352, %c0_67] : memref<544x256xf32, #tpu.memory_space<vmem>>, vector<16x128xf32>
    tpu.vector_store %arg7[%c352, %c0_67], %59 {strides = array<i32>} : memref<544x256xf32, #tpu.memory_space<vmem>>, vector<16x128xf32>,
    %c0_68 = arith.constant 0 : index
    %c135 = arith.constant 135 : index
    %61 = vector.load %arg5[%c0_68, %c135] : memref<16x896xf32, #tpu.memory_space<vmem>>, vector<16x128xf32>
    %c368 = arith.constant 368 : index
    %c0_69 = arith.constant 0 : index
    %62 = vector.load %arg7[%c368, %c0_69] : memref<544x256xf32, #tpu.memory_space<vmem>>, vector<16x128xf32>
    tpu.vector_store %arg7[%c368, %c0_69], %61 {strides = array<i32>} : memref<544x256xf32, #tpu.memory_space<vmem>>, vector<16x128xf32>,
    %c0_70 = arith.constant 0 : index
    %c136 = arith.constant 136 : index
    %63 = vector.load %arg5[%c0_70, %c136] : memref<16x896xf32, #tpu.memory_space<vmem>>, vector<16x128xf32>
    %c384_71 = arith.constant 384 : index
    %c0_72 = arith.constant 0 : index
    %64 = vector.load %arg7[%c384_71, %c0_72] : memref<544x256xf32, #tpu.memory_space<vmem>>, vector<16x128xf32>
    tpu.vector_store %arg7[%c384_71, %c0_72], %63 {strides = array<i32>} : memref<544x256xf32, #tpu.memory_space<vmem>>, vector<16x128xf32>,
    %c0_73 = arith.constant 0 : index
    %c137 = arith.constant 137 : index
    %65 = vector.load %arg5[%c0_73, %c137] : memref<16x896xf32, #tpu.memory_space<vmem>>, vector<16x128xf32>
    %c400 = arith.constant 400 : index
    %c0_74 = arith.constant 0 : index
    %66 = vector.load %arg7[%c400, %c0_74] : memref<544x256xf32, #tpu.memory_space<vmem>>, vector<16x128xf32>
    tpu.vector_store %arg7[%c400, %c0_74], %65 {strides = array<i32>} : memref<544x256xf32, #tpu.memory_space<vmem>>, vector<16x128xf32>,
    %c0_75 = arith.constant 0 : index
    %c138 = arith.constant 138 : index
    %67 = vector.load %arg5[%c0_75, %c138] : memref<16x896xf32, #tpu.memory_space<vmem>>, vector<16x128xf32>
    %c416 = arith.constant 416 : index
    %c0_76 = arith.constant 0 : index
    %68 = vector.load %arg7[%c416, %c0_76] : memref<544x256xf32, #tpu.memory_space<vmem>>, vector<16x128xf32>
    tpu.vector_store %arg7[%c416, %c0_76], %67 {strides = array<i32>} : memref<544x256xf32, #tpu.memory_space<vmem>>, vector<16x128xf32>,
    %c0_77 = arith.constant 0 : index
    %c139 = arith.constant 139 : index
    %69 = vector.load %arg5[%c0_77, %c139] : memref<16x896xf32, #tpu.memory_space<vmem>>, vector<16x128xf32>
    %c432 = arith.constant 432 : index
    %c0_78 = arith.constant 0 : index
    %70 = vector.load %arg7[%c432, %c0_78] : memref<544x256xf32, #tpu.memory_space<vmem>>, vector<16x128xf32>
    tpu.vector_store %arg7[%c432, %c0_78], %69 {strides = array<i32>} : memref<544x256xf32, #tpu.memory_space<vmem>>, vector<16x128xf32>,
    %c0_79 = arith.constant 0 : index
    %c140 = arith.constant 140 : index
    %71 = vector.load %arg5[%c0_79, %c140] : memref<16x896xf32, #tpu.memory_space<vmem>>, vector<16x128xf32>
    %c448 = arith.constant 448 : index
    %c0_80 = arith.constant 0 : index
    %72 = vector.load %arg7[%c448, %c0_80] : memref<544x256xf32, #tpu.memory_space<vmem>>, vector<16x128xf32>
    tpu.vector_store %arg7[%c448, %c0_80], %71 {strides = array<i32>} : memref<544x256xf32, #tpu.memory_space<vmem>>, vector<16x128xf32>,
    %c0_81 = arith.constant 0 : index
    %c141 = arith.constant 141 : index
    %73 = vector.load %arg5[%c0_81, %c141] : memref<16x896xf32, #tpu.memory_space<vmem>>, vector<16x128xf32>
    %c464 = arith.constant 464 : index
    %c0_82 = arith.constant 0 : index
    %74 = vector.load %arg7[%c464, %c0_82] : memref<544x256xf32, #tpu.memory_space<vmem>>, vector<16x128xf32>
    tpu.vector_store %arg7[%c464, %c0_82], %73 {strides = array<i32>} : memref<544x256xf32, #tpu.memory_space<vmem>>, vector<16x128xf32>,
    %c0_83 = arith.constant 0 : index
    %c142 = arith.constant 142 : index
    %75 = vector.load %arg5[%c0_83, %c142] : memref<16x896xf32, #tpu.memory_space<vmem>>, vector<16x128xf32>
    %c480 = arith.constant 480 : index
    %c0_84 = arith.constant 0 : index
    %76 = vector.load %arg7[%c480, %c0_84] : memref<544x256xf32, #tpu.memory_space<vmem>>, vector<16x128xf32>
    tpu.vector_store %arg7[%c480, %c0_84], %75 {strides = array<i32>} : memref<544x256xf32, #tpu.memory_space<vmem>>, vector<16x128xf32>,
    %c0_85 = arith.constant 0 : index
    %c143 = arith.constant 143 : index
    %77 = vector.load %arg5[%c0_85, %c143] : memref<16x896xf32, #tpu.memory_space<vmem>>, vector<16x128xf32>
    %c496 = arith.constant 496 : index
    %c0_86 = arith.constant 0 : index
    %78 = vector.load %arg7[%c496, %c0_86] : memref<544x256xf32, #tpu.memory_space<vmem>>, vector<16x128xf32>
    tpu.vector_store %arg7[%c496, %c0_86], %77 {strides = array<i32>} : memref<544x256xf32, #tpu.memory_space<vmem>>, vector<16x128xf32>,
    %c0_87 = arith.constant 0 : index
    %c144_88 = arith.constant 144 : index
    %79 = vector.load %arg5[%c0_87, %c144_88] : memref<16x896xf32, #tpu.memory_space<vmem>>, vector<16x128xf32>
    %c512_89 = arith.constant 512 : index
    %c0_90 = arith.constant 0 : index
    %80 = vector.load %arg7[%c512_89, %c0_90] : memref<544x256xf32, #tpu.memory_space<vmem>>, vector<16x128xf32>
    tpu.vector_store %arg7[%c512_89, %c0_90], %79 {strides = array<i32>} : memref<544x256xf32, #tpu.memory_space<vmem>>, vector<16x128xf32>,
    %c0_91 = arith.constant 0 : index
    %c496_92 = arith.constant 496 : index
    %81 = vector.load %arg5[%c0_91, %c496_92] : memref<16x896xf32, #tpu.memory_space<vmem>>, vector<16x128xf32>
    %c0_93 = arith.constant 0 : index
    %c128_94 = arith.constant 128 : index
    %82 = vector.load %arg7[%c0_93, %c128_94] : memref<544x256xf32, #tpu.memory_space<vmem>>, vector<16x128xf32>
    tpu.vector_store %arg7[%c0_93, %c128_94], %81 {strides = array<i32>} : memref<544x256xf32, #tpu.memory_space<vmem>>, vector<16x128xf32>,
    %c0_95 = arith.constant 0 : index
    %c497 = arith.constant 497 : index
    %83 = vector.load %arg5[%c0_95, %c497] : memref<16x896xf32, #tpu.memory_space<vmem>>, vector<16x128xf32>
    %c16_96 = arith.constant 16 : index
    %c128_97 = arith.constant 128 : index
    %84 = vector.load %arg7[%c16_96, %c128_97] : memref<544x256xf32, #tpu.memory_space<vmem>>, vector<16x128xf32>
    tpu.vector_store %arg7[%c16_96, %c128_97], %83 {strides = array<i32>} : memref<544x256xf32, #tpu.memory_space<vmem>>, vector<16x128xf32>,
    %c0_98 = arith.constant 0 : index
    %c498 = arith.constant 498 : index
    %85 = vector.load %arg5[%c0_98, %c498] : memref<16x896xf32, #tpu.memory_space<vmem>>, vector<16x128xf32>
    %c32_99 = arith.constant 32 : index
    %c128_100 = arith.constant 128 : index
    %86 = vector.load %arg7[%c32_99, %c128_100] : memref<544x256xf32, #tpu.memory_space<vmem>>, vector<16x128xf32>
    tpu.vector_store %arg7[%c32_99, %c128_100], %85 {strides = array<i32>} : memref<544x256xf32, #tpu.memory_space<vmem>>, vector<16x128xf32>,
    %c0_101 = arith.constant 0 : index
    %c499 = arith.constant 499 : index
    %87 = vector.load %arg5[%c0_101, %c499] : memref<16x896xf32, #tpu.memory_space<vmem>>, vector<16x128xf32>
    %c48_102 = arith.constant 48 : index
    %c128_103 = arith.constant 128 : index
    %88 = vector.load %arg7[%c48_102, %c128_103] : memref<544x256xf32, #tpu.memory_space<vmem>>, vector<16x128xf32>
    tpu.vector_store %arg7[%c48_102, %c128_103], %87 {strides = array<i32>} : memref<544x256xf32, #tpu.memory_space<vmem>>, vector<16x128xf32>,
    %c0_104 = arith.constant 0 : index
    %c500 = arith.constant 500 : index
    %89 = vector.load %arg5[%c0_104, %c500] : memref<16x896xf32, #tpu.memory_space<vmem>>, vector<16x128xf32>
    %c64_105 = arith.constant 64 : index
    %c128_106 = arith.constant 128 : index
    %90 = vector.load %arg7[%c64_105, %c128_106] : memref<544x256xf32, #tpu.memory_space<vmem>>, vector<16x128xf32>
    tpu.vector_store %arg7[%c64_105, %c128_106], %89 {strides = array<i32>} : memref<544x256xf32, #tpu.memory_space<vmem>>, vector<16x128xf32>,
    %c0_107 = arith.constant 0 : index
    %c501 = arith.constant 501 : index
    %91 = vector.load %arg5[%c0_107, %c501] : memref<16x896xf32, #tpu.memory_space<vmem>>, vector<16x128xf32>
    %c80_108 = arith.constant 80 : index
    %c128_109 = arith.constant 128 : index
    %92 = vector.load %arg7[%c80_108, %c128_109] : memref<544x256xf32, #tpu.memory_space<vmem>>, vector<16x128xf32>
    tpu.vector_store %arg7[%c80_108, %c128_109], %91 {strides = array<i32>} : memref<544x256xf32, #tpu.memory_space<vmem>>, vector<16x128xf32>,
    %c0_110 = arith.constant 0 : index
    %c502 = arith.constant 502 : index
    %93 = vector.load %arg5[%c0_110, %c502] : memref<16x896xf32, #tpu.memory_space<vmem>>, vector<16x128xf32>
    %c96_111 = arith.constant 96 : index
    %c128_112 = arith.constant 128 : index
    %94 = vector.load %arg7[%c96_111, %c128_112] : memref<544x256xf32, #tpu.memory_space<vmem>>, vector<16x128xf32>
    tpu.vector_store %arg7[%c96_111, %c128_112], %93 {strides = array<i32>} : memref<544x256xf32, #tpu.memory_space<vmem>>, vector<16x128xf32>,
    %c0_113 = arith.constant 0 : index
    %c503 = arith.constant 503 : index
    %95 = vector.load %arg5[%c0_113, %c503] : memref<16x896xf32, #tpu.memory_space<vmem>>, vector<16x128xf32>
    %c112_114 = arith.constant 112 : index
    %c128_115 = arith.constant 128 : index
    %96 = vector.load %arg7[%c112_114, %c128_115] : memref<544x256xf32, #tpu.memory_space<vmem>>, vector<16x128xf32>
    tpu.vector_store %arg7[%c112_114, %c128_115], %95 {strides = array<i32>} : memref<544x256xf32, #tpu.memory_space<vmem>>, vector<16x128xf32>,
    %c0_116 = arith.constant 0 : index
    %c504 = arith.constant 504 : index
    %97 = vector.load %arg5[%c0_116, %c504] : memref<16x896xf32, #tpu.memory_space<vmem>>, vector<16x128xf32>
    %c128_117 = arith.constant 128 : index
    %c128_118 = arith.constant 128 : index
    %98 = vector.load %arg7[%c128_117, %c128_118] : memref<544x256xf32, #tpu.memory_space<vmem>>, vector<16x128xf32>
    tpu.vector_store %arg7[%c128_117, %c128_118], %97 {strides = array<i32>} : memref<544x256xf32, #tpu.memory_space<vmem>>, vector<16x128xf32>,
    %c0_119 = arith.constant 0 : index
    %c505 = arith.constant 505 : index
    %99 = vector.load %arg5[%c0_119, %c505] : memref<16x896xf32, #tpu.memory_space<vmem>>, vector<16x128xf32>
    %c144_120 = arith.constant 144 : index
    %c128_121 = arith.constant 128 : index
    %100 = vector.load %arg7[%c144_120, %c128_121] : memref<544x256xf32, #tpu.memory_space<vmem>>, vector<16x128xf32>
    tpu.vector_store %arg7[%c144_120, %c128_121], %99 {strides = array<i32>} : memref<544x256xf32, #tpu.memory_space<vmem>>, vector<16x128xf32>,
    %c0_122 = arith.constant 0 : index
    %c506 = arith.constant 506 : index
    %101 = vector.load %arg5[%c0_122, %c506] : memref<16x896xf32, #tpu.memory_space<vmem>>, vector<16x128xf32>
    %c160_123 = arith.constant 160 : index
    %c128_124 = arith.constant 128 : index
    %102 = vector.load %arg7[%c160_123, %c128_124] : memref<544x256xf32, #tpu.memory_space<vmem>>, vector<16x128xf32>
    tpu.vector_store %arg7[%c160_123, %c128_124], %101 {strides = array<i32>} : memref<544x256xf32, #tpu.memory_space<vmem>>, vector<16x128xf32>,
    %c0_125 = arith.constant 0 : index
    %c507 = arith.constant 507 : index
    %103 = vector.load %arg5[%c0_125, %c507] : memref<16x896xf32, #tpu.memory_space<vmem>>, vector<16x128xf32>
    %c176_126 = arith.constant 176 : index
    %c128_127 = arith.constant 128 : index
    %104 = vector.load %arg7[%c176_126, %c128_127] : memref<544x256xf32, #tpu.memory_space<vmem>>, vector<16x128xf32>
    tpu.vector_store %arg7[%c176_126, %c128_127], %103 {strides = array<i32>} : memref<544x256xf32, #tpu.memory_space<vmem>>, vector<16x128xf32>,
    %c0_128 = arith.constant 0 : index
    %c508 = arith.constant 508 : index
    %105 = vector.load %arg5[%c0_128, %c508] : memref<16x896xf32, #tpu.memory_space<vmem>>, vector<16x128xf32>
    %c192_129 = arith.constant 192 : index
    %c128_130 = arith.constant 128 : index
    %106 = vector.load %arg7[%c192_129, %c128_130] : memref<544x256xf32, #tpu.memory_space<vmem>>, vector<16x128xf32>
    tpu.vector_store %arg7[%c192_129, %c128_130], %105 {strides = array<i32>} : memref<544x256xf32, #tpu.memory_space<vmem>>, vector<16x128xf32>,
    %c0_131 = arith.constant 0 : index
    %c509 = arith.constant 509 : index
    %107 = vector.load %arg5[%c0_131, %c509] : memref<16x896xf32, #tpu.memory_space<vmem>>, vector<16x128xf32>
    %c208_132 = arith.constant 208 : index
    %c128_133 = arith.constant 128 : index
    %108 = vector.load %arg7[%c208_132, %c128_133] : memref<544x256xf32, #tpu.memory_space<vmem>>, vector<16x128xf32>
    tpu.vector_store %arg7[%c208_132, %c128_133], %107 {strides = array<i32>} : memref<544x256xf32, #tpu.memory_space<vmem>>, vector<16x128xf32>,
    %c0_134 = arith.constant 0 : index
    %c510 = arith.constant 510 : index
    %109 = vector.load %arg5[%c0_134, %c510] : memref<16x896xf32, #tpu.memory_space<vmem>>, vector<16x128xf32>
    %c224_135 = arith.constant 224 : index
    %c128_136 = arith.constant 128 : index
    %110 = vector.load %arg7[%c224_135, %c128_136] : memref<544x256xf32, #tpu.memory_space<vmem>>, vector<16x128xf32>
    tpu.vector_store %arg7[%c224_135, %c128_136], %109 {strides = array<i32>} : memref<544x256xf32, #tpu.memory_space<vmem>>, vector<16x128xf32>,
    %c0_137 = arith.constant 0 : index
    %c511 = arith.constant 511 : index
    %111 = vector.load %arg5[%c0_137, %c511] : memref<16x896xf32, #tpu.memory_space<vmem>>, vector<16x128xf32>
    %c240_138 = arith.constant 240 : index
    %c128_139 = arith.constant 128 : index
    %112 = vector.load %arg7[%c240_138, %c128_139] : memref<544x256xf32, #tpu.memory_space<vmem>>, vector<16x128xf32>
    tpu.vector_store %arg7[%c240_138, %c128_139], %111 {strides = array<i32>} : memref<544x256xf32, #tpu.memory_space<vmem>>, vector<16x128xf32>,
    %c0_140 = arith.constant 0 : index
    %c512_141 = arith.constant 512 : index
    %113 = vector.load %arg5[%c0_140, %c512_141] : memref<16x896xf32, #tpu.memory_space<vmem>>, vector<16x128xf32>
    %c256_142 = arith.constant 256 : index
    %c128_143 = arith.constant 128 : index
    %114 = vector.load %arg7[%c256_142, %c128_143] : memref<544x256xf32, #tpu.memory_space<vmem>>, vector<16x128xf32>
    tpu.vector_store %arg7[%c256_142, %c128_143], %113 {strides = array<i32>} : memref<544x256xf32, #tpu.memory_space<vmem>>, vector<16x128xf32>,
    %c0_144 = arith.constant 0 : index
    %c513 = arith.constant 513 : index
    %115 = vector.load %arg5[%c0_144, %c513] : memref<16x896xf32, #tpu.memory_space<vmem>>, vector<16x128xf32>
    %c272_145 = arith.constant 272 : index
    %c128_146 = arith.constant 128 : index
    %116 = vector.load %arg7[%c272_145, %c128_146] : memref<544x256xf32, #tpu.memory_space<vmem>>, vector<16x128xf32>
    tpu.vector_store %arg7[%c272_145, %c128_146], %115 {strides = array<i32>} : memref<544x256xf32, #tpu.memory_space<vmem>>, vector<16x128xf32>,
    %c0_147 = arith.constant 0 : index
    %c514 = arith.constant 514 : index
    %117 = vector.load %arg5[%c0_147, %c514] : memref<16x896xf32, #tpu.memory_space<vmem>>, vector<16x128xf32>
    %c288_148 = arith.constant 288 : index
    %c128_149 = arith.constant 128 : index
    %118 = vector.load %arg7[%c288_148, %c128_149] : memref<544x256xf32, #tpu.memory_space<vmem>>, vector<16x128xf32>
    tpu.vector_store %arg7[%c288_148, %c128_149], %117 {strides = array<i32>} : memref<544x256xf32, #tpu.memory_space<vmem>>, vector<16x128xf32>,
    %c0_150 = arith.constant 0 : index
    %c515 = arith.constant 515 : index
    %119 = vector.load %arg5[%c0_150, %c515] : memref<16x896xf32, #tpu.memory_space<vmem>>, vector<16x128xf32>
    %c304_151 = arith.constant 304 : index
    %c128_152 = arith.constant 128 : index
    %120 = vector.load %arg7[%c304_151, %c128_152] : memref<544x256xf32, #tpu.memory_space<vmem>>, vector<16x128xf32>
    tpu.vector_store %arg7[%c304_151, %c128_152], %119 {strides = array<i32>} : memref<544x256xf32, #tpu.memory_space<vmem>>, vector<16x128xf32>,
    %c0_153 = arith.constant 0 : index
    %c516 = arith.constant 516 : index
    %121 = vector.load %arg5[%c0_153, %c516] : memref<16x896xf32, #tpu.memory_space<vmem>>, vector<16x128xf32>
    %c320_154 = arith.constant 320 : index
    %c128_155 = arith.constant 128 : index
    %122 = vector.load %arg7[%c320_154, %c128_155] : memref<544x256xf32, #tpu.memory_space<vmem>>, vector<16x128xf32>
    tpu.vector_store %arg7[%c320_154, %c128_155], %121 {strides = array<i32>} : memref<544x256xf32, #tpu.memory_space<vmem>>, vector<16x128xf32>,
    %c0_156 = arith.constant 0 : index
    %c517 = arith.constant 517 : index
    %123 = vector.load %arg5[%c0_156, %c517] : memref<16x896xf32, #tpu.memory_space<vmem>>, vector<16x128xf32>
    %c336_157 = arith.constant 336 : index
    %c128_158 = arith.constant 128 : index
    %124 = vector.load %arg7[%c336_157, %c128_158] : memref<544x256xf32, #tpu.memory_space<vmem>>, vector<16x128xf32>
    tpu.vector_store %arg7[%c336_157, %c128_158], %123 {strides = array<i32>} : memref<544x256xf32, #tpu.memory_space<vmem>>, vector<16x128xf32>,
    %c0_159 = arith.constant 0 : index
    %c518 = arith.constant 518 : index
    %125 = vector.load %arg5[%c0_159, %c518] : memref<16x896xf32, #tpu.memory_space<vmem>>, vector<16x128xf32>
    %c352_160 = arith.constant 352 : index
    %c128_161 = arith.constant 128 : index
    %126 = vector.load %arg7[%c352_160, %c128_161] : memref<544x256xf32, #tpu.memory_space<vmem>>, vector<16x128xf32>
    tpu.vector_store %arg7[%c352_160, %c128_161], %125 {strides = array<i32>} : memref<544x256xf32, #tpu.memory_space<vmem>>, vector<16x128xf32>,
    %c0_162 = arith.constant 0 : index
    %c519 = arith.constant 519 : index
    %127 = vector.load %arg5[%c0_162, %c519] : memref<16x896xf32, #tpu.memory_space<vmem>>, vector<16x128xf32>
    %c368_163 = arith.constant 368 : index
    %c128_164 = arith.constant 128 : index
    %128 = vector.load %arg7[%c368_163, %c128_164] : memref<544x256xf32, #tpu.memory_space<vmem>>, vector<16x128xf32>
    tpu.vector_store %arg7[%c368_163, %c128_164], %127 {strides = array<i32>} : memref<544x256xf32, #tpu.memory_space<vmem>>, vector<16x128xf32>,
    %c0_165 = arith.constant 0 : index
    %c520 = arith.constant 520 : index
    %129 = vector.load %arg5[%c0_165, %c520] : memref<16x896xf32, #tpu.memory_space<vmem>>, vector<16x128xf32>
    %c384_166 = arith.constant 384 : index
    %c128_167 = arith.constant 128 : index
    %130 = vector.load %arg7[%c384_166, %c128_167] : memref<544x256xf32, #tpu.memory_space<vmem>>, vector<16x128xf32>
    tpu.vector_store %arg7[%c384_166, %c128_167], %129 {strides = array<i32>} : memref<544x256xf32, #tpu.memory_space<vmem>>, vector<16x128xf32>,
    %c0_168 = arith.constant 0 : index
    %c521 = arith.constant 521 : index
    %131 = vector.load %arg5[%c0_168, %c521] : memref<16x896xf32, #tpu.memory_space<vmem>>, vector<16x128xf32>
    %c400_169 = arith.constant 400 : index
    %c128_170 = arith.constant 128 : index
    %132 = vector.load %arg7[%c400_169, %c128_170] : memref<544x256xf32, #tpu.memory_space<vmem>>, vector<16x128xf32>
    tpu.vector_store %arg7[%c400_169, %c128_170], %131 {strides = array<i32>} : memref<544x256xf32, #tpu.memory_space<vmem>>, vector<16x128xf32>,
    %c0_171 = arith.constant 0 : index
    %c522 = arith.constant 522 : index
    %133 = vector.load %arg5[%c0_171, %c522] : memref<16x896xf32, #tpu.memory_space<vmem>>, vector<16x128xf32>
    %c416_172 = arith.constant 416 : index
    %c128_173 = arith.constant 128 : index
    %134 = vector.load %arg7[%c416_172, %c128_173] : memref<544x256xf32, #tpu.memory_space<vmem>>, vector<16x128xf32>
    tpu.vector_store %arg7[%c416_172, %c128_173], %133 {strides = array<i32>} : memref<544x256xf32, #tpu.memory_space<vmem>>, vector<16x128xf32>,
    %c0_174 = arith.constant 0 : index
    %c523 = arith.constant 523 : index
    %135 = vector.load %arg5[%c0_174, %c523] : memref<16x896xf32, #tpu.memory_space<vmem>>, vector<16x128xf32>
    %c432_175 = arith.constant 432 : index
    %c128_176 = arith.constant 128 : index
    %136 = vector.load %arg7[%c432_175, %c128_176] : memref<544x256xf32, #tpu.memory_space<vmem>>, vector<16x128xf32>
    tpu.vector_store %arg7[%c432_175, %c128_176], %135 {strides = array<i32>} : memref<544x256xf32, #tpu.memory_space<vmem>>, vector<16x128xf32>,
    %c0_177 = arith.constant 0 : index
    %c524 = arith.constant 524 : index
    %137 = vector.load %arg5[%c0_177, %c524] : memref<16x896xf32, #tpu.memory_space<vmem>>, vector<16x128xf32>
    %c448_178 = arith.constant 448 : index
    %c128_179 = arith.constant 128 : index
    %138 = vector.load %arg7[%c448_178, %c128_179] : memref<544x256xf32, #tpu.memory_space<vmem>>, vector<16x128xf32>
    tpu.vector_store %arg7[%c448_178, %c128_179], %137 {strides = array<i32>} : memref<544x256xf32, #tpu.memory_space<vmem>>, vector<16x128xf32>,
    %c0_180 = arith.constant 0 : index
    %c525 = arith.constant 525 : index
    %139 = vector.load %arg5[%c0_180, %c525] : memref<16x896xf32, #tpu.memory_space<vmem>>, vector<16x128xf32>
    %c464_181 = arith.constant 464 : index
    %c128_182 = arith.constant 128 : index
    %140 = vector.load %arg7[%c464_181, %c128_182] : memref<544x256xf32, #tpu.memory_space<vmem>>, vector<16x128xf32>
    tpu.vector_store %arg7[%c464_181, %c128_182], %139 {strides = array<i32>} : memref<544x256xf32, #tpu.memory_space<vmem>>, vector<16x128xf32>,
    %c0_183 = arith.constant 0 : index
    %c526 = arith.constant 526 : index
    %141 = vector.load %arg5[%c0_183, %c526] : memref<16x896xf32, #tpu.memory_space<vmem>>, vector<16x128xf32>
    %c480_184 = arith.constant 480 : index
    %c128_185 = arith.constant 128 : index
    %142 = vector.load %arg7[%c480_184, %c128_185] : memref<544x256xf32, #tpu.memory_space<vmem>>, vector<16x128xf32>
    tpu.vector_store %arg7[%c480_184, %c128_185], %141 {strides = array<i32>} : memref<544x256xf32, #tpu.memory_space<vmem>>, vector<16x128xf32>,
    %c0_186 = arith.constant 0 : index
    %c527 = arith.constant 527 : index
    %143 = vector.load %arg5[%c0_186, %c527] : memref<16x896xf32, #tpu.memory_space<vmem>>, vector<16x128xf32>
    %c496_187 = arith.constant 496 : index
    %c128_188 = arith.constant 128 : index
    %144 = vector.load %arg7[%c496_187, %c128_188] : memref<544x256xf32, #tpu.memory_space<vmem>>, vector<16x128xf32>
    tpu.vector_store %arg7[%c496_187, %c128_188], %143 {strides = array<i32>} : memref<544x256xf32, #tpu.memory_space<vmem>>, vector<16x128xf32>,
    %c0_189 = arith.constant 0 : index
    %c528_190 = arith.constant 528 : index
    %145 = vector.load %arg5[%c0_189, %c528_190] : memref<16x896xf32, #tpu.memory_space<vmem>>, vector<16x128xf32>
    %c512_191 = arith.constant 512 : index
    %c128_192 = arith.constant 128 : index
    %146 = vector.load %arg7[%c512_191, %c128_192] : memref<544x256xf32, #tpu.memory_space<vmem>>, vector<16x128xf32>
    tpu.vector_store %arg7[%c512_191, %c128_192], %145 {strides = array<i32>} : memref<544x256xf32, #tpu.memory_space<vmem>>, vector<16x128xf32>,
    %c0_193 = arith.constant 0 : index
    %c0_194 = arith.constant 0 : index
    %147 = vector.load %arg2[%c0_193, %c0_194] : memref<16x544xf32, #tpu.memory_space<vmem>>, vector<16x544xf32>
    %c0_195 = arith.constant 0 : index
    %c0_196 = arith.constant 0 : index
    %148 = vector.load %arg7[%c0_195, %c0_196] : memref<544x256xf32, #tpu.memory_space<vmem>>, vector<544x256xf32>
    %cst_197 = arith.constant dense<0.000000e+00> : vector<16x256xf32>
    %149 = tpu.matmul %147, %148, %cst_197 {dimension_numbers = #tpu.dot_dimension_numbers<[1], [0], [0], [1], [0, 0, 1, 1], [], []>} : vector<16x544xf32>, vector<544x256xf32>, vector<16x256xf32> -> vector<16x256xf32>
    %cst_198 = arith.constant 0.000000e+00 : f32
    %150 = vector.broadcast %cst_198 : f32 to vector<16x256xf32>
    %151 = arith.maximumf %149, %150 : vector<16x256xf32>
    %152 = vector.extract_strided_slice %151 {offsets = [0, 0], sizes = [16, 128], strides = [1, 1]} : vector<16x256xf32> to vector<16x128xf32>
    %c0_199 = arith.constant 0 : index
    %c128_200 = arith.constant 128 : index
    %153 = vector.load %arg6[%c0_199, %c128_200] : memref<16x896xf32, #tpu.memory_space<vmem>>, vector<16x128xf32>
    tpu.vector_store %arg6[%c0_199, %c128_200], %152 {strides = array<i32>} : memref<16x896xf32, #tpu.memory_space<vmem>>, vector<16x128xf32>,
    %154 = vector.extract_strided_slice %151 {offsets = [0, 128], sizes = [16, 128], strides = [1, 1]} : vector<16x256xf32> to vector<16x128xf32>
    %c0_201 = arith.constant 0 : index
    %c512_202 = arith.constant 512 : index
    %155 = vector.load %arg6[%c0_201, %c512_202] : memref<16x896xf32, #tpu.memory_space<vmem>>, vector<16x128xf32>
    tpu.vector_store %arg6[%c0_201, %c512_202], %154 {strides = array<i32>} : memref<16x896xf32, #tpu.memory_space<vmem>>, vector<16x128xf32>,
    %c0_203 = arith.constant 0 : index
    %c240_204 = arith.constant 240 : index
    %156 = vector.load %arg5[%c0_203, %c240_204] : memref<16x896xf32, #tpu.memory_space<vmem>>, vector<16x128xf32>
    %c0_205 = arith.constant 0 : index
    %c0_206 = arith.constant 0 : index
    %157 = vector.load %arg7[%c0_205, %c0_206] : memref<544x256xf32, #tpu.memory_space<vmem>>, vector<16x128xf32>
    tpu.vector_store %arg7[%c0_205, %c0_206], %156 {strides = array<i32>} : memref<544x256xf32, #tpu.memory_space<vmem>>, vector<16x128xf32>,
    %c0_207 = arith.constant 0 : index
    %c241 = arith.constant 241 : index
    %158 = vector.load %arg5[%c0_207, %c241] : memref<16x896xf32, #tpu.memory_space<vmem>>, vector<16x128xf32>
    %c16_208 = arith.constant 16 : index
    %c0_209 = arith.constant 0 : index
    %159 = vector.load %arg7[%c16_208, %c0_209] : memref<544x256xf32, #tpu.memory_space<vmem>>, vector<16x128xf32>
    tpu.vector_store %arg7[%c16_208, %c0_209], %158 {strides = array<i32>} : memref<544x256xf32, #tpu.memory_space<vmem>>, vector<16x128xf32>,
    %c0_210 = arith.constant 0 : index
    %c242 = arith.constant 242 : index
    %160 = vector.load %arg5[%c0_210, %c242] : memref<16x896xf32, #tpu.memory_space<vmem>>, vector<16x128xf32>
    %c32_211 = arith.constant 32 : index
    %c0_212 = arith.constant 0 : index
    %161 = vector.load %arg7[%c32_211, %c0_212] : memref<544x256xf32, #tpu.memory_space<vmem>>, vector<16x128xf32>
    tpu.vector_store %arg7[%c32_211, %c0_212], %160 {strides = array<i32>} : memref<544x256xf32, #tpu.memory_space<vmem>>, vector<16x128xf32>,
    %c0_213 = arith.constant 0 : index
    %c243 = arith.constant 243 : index
    %162 = vector.load %arg5[%c0_213, %c243] : memref<16x896xf32, #tpu.memory_space<vmem>>, vector<16x128xf32>
    %c48_214 = arith.constant 48 : index
    %c0_215 = arith.constant 0 : index
    %163 = vector.load %arg7[%c48_214, %c0_215] : memref<544x256xf32, #tpu.memory_space<vmem>>, vector<16x128xf32>
    tpu.vector_store %arg7[%c48_214, %c0_215], %162 {strides = array<i32>} : memref<544x256xf32, #tpu.memory_space<vmem>>, vector<16x128xf32>,
    %c0_216 = arith.constant 0 : index
    %c244 = arith.constant 244 : index
    %164 = vector.load %arg5[%c0_216, %c244] : memref<16x896xf32, #tpu.memory_space<vmem>>, vector<16x128xf32>
    %c64_217 = arith.constant 64 : index
    %c0_218 = arith.constant 0 : index
    %165 = vector.load %arg7[%c64_217, %c0_218] : memref<544x256xf32, #tpu.memory_space<vmem>>, vector<16x128xf32>
    tpu.vector_store %arg7[%c64_217, %c0_218], %164 {strides = array<i32>} : memref<544x256xf32, #tpu.memory_space<vmem>>, vector<16x128xf32>,
    %c0_219 = arith.constant 0 : index
    %c245 = arith.constant 245 : index
    %166 = vector.load %arg5[%c0_219, %c245] : memref<16x896xf32, #tpu.memory_space<vmem>>, vector<16x128xf32>
    %c80_220 = arith.constant 80 : index
    %c0_221 = arith.constant 0 : index
    %167 = vector.load %arg7[%c80_220, %c0_221] : memref<544x256xf32, #tpu.memory_space<vmem>>, vector<16x128xf32>
    tpu.vector_store %arg7[%c80_220, %c0_221], %166 {strides = array<i32>} : memref<544x256xf32, #tpu.memory_space<vmem>>, vector<16x128xf32>,
    %c0_222 = arith.constant 0 : index
    %c246 = arith.constant 246 : index
    %168 = vector.load %arg5[%c0_222, %c246] : memref<16x896xf32, #tpu.memory_space<vmem>>, vector<16x128xf32>
    %c96_223 = arith.constant 96 : index
    %c0_224 = arith.constant 0 : index
    %169 = vector.load %arg7[%c96_223, %c0_224] : memref<544x256xf32, #tpu.memory_space<vmem>>, vector<16x128xf32>
    tpu.vector_store %arg7[%c96_223, %c0_224], %168 {strides = array<i32>} : memref<544x256xf32, #tpu.memory_space<vmem>>, vector<16x128xf32>,
    %c0_225 = arith.constant 0 : index
    %c247 = arith.constant 247 : index
    %170 = vector.load %arg5[%c0_225, %c247] : memref<16x896xf32, #tpu.memory_space<vmem>>, vector<16x128xf32>
    %c112_226 = arith.constant 112 : index
    %c0_227 = arith.constant 0 : index
    %171 = vector.load %arg7[%c112_226, %c0_227] : memref<544x256xf32, #tpu.memory_space<vmem>>, vector<16x128xf32>
    tpu.vector_store %arg7[%c112_226, %c0_227], %170 {strides = array<i32>} : memref<544x256xf32, #tpu.memory_space<vmem>>, vector<16x128xf32>,
    %c0_228 = arith.constant 0 : index
    %c248 = arith.constant 248 : index
    %172 = vector.load %arg5[%c0_228, %c248] : memref<16x896xf32, #tpu.memory_space<vmem>>, vector<16x128xf32>
    %c128_229 = arith.constant 128 : index
    %c0_230 = arith.constant 0 : index
    %173 = vector.load %arg7[%c128_229, %c0_230] : memref<544x256xf32, #tpu.memory_space<vmem>>, vector<16x128xf32>
    tpu.vector_store %arg7[%c128_229, %c0_230], %172 {strides = array<i32>} : memref<544x256xf32, #tpu.memory_space<vmem>>, vector<16x128xf32>,
    %c0_231 = arith.constant 0 : index
    %c249 = arith.constant 249 : index
    %174 = vector.load %arg5[%c0_231, %c249] : memref<16x896xf32, #tpu.memory_space<vmem>>, vector<16x128xf32>
    %c144_232 = arith.constant 144 : index
    %c0_233 = arith.constant 0 : index
    %175 = vector.load %arg7[%c144_232, %c0_233] : memref<544x256xf32, #tpu.memory_space<vmem>>, vector<16x128xf32>
    tpu.vector_store %arg7[%c144_232, %c0_233], %174 {strides = array<i32>} : memref<544x256xf32, #tpu.memory_space<vmem>>, vector<16x128xf32>,
    %c0_234 = arith.constant 0 : index
    %c250 = arith.constant 250 : index
    %176 = vector.load %arg5[%c0_234, %c250] : memref<16x896xf32, #tpu.memory_space<vmem>>, vector<16x128xf32>
    %c160_235 = arith.constant 160 : index
    %c0_236 = arith.constant 0 : index
    %177 = vector.load %arg7[%c160_235, %c0_236] : memref<544x256xf32, #tpu.memory_space<vmem>>, vector<16x128xf32>
    tpu.vector_store %arg7[%c160_235, %c0_236], %176 {strides = array<i32>} : memref<544x256xf32, #tpu.memory_space<vmem>>, vector<16x128xf32>,
    %c0_237 = arith.constant 0 : index
    %c251 = arith.constant 251 : index
    %178 = vector.load %arg5[%c0_237, %c251] : memref<16x896xf32, #tpu.memory_space<vmem>>, vector<16x128xf32>
    %c176_238 = arith.constant 176 : index
    %c0_239 = arith.constant 0 : index
    %179 = vector.load %arg7[%c176_238, %c0_239] : memref<544x256xf32, #tpu.memory_space<vmem>>, vector<16x128xf32>
    tpu.vector_store %arg7[%c176_238, %c0_239], %178 {strides = array<i32>} : memref<544x256xf32, #tpu.memory_space<vmem>>, vector<16x128xf32>,
    %c0_240 = arith.constant 0 : index
    %c252 = arith.constant 252 : index
    %180 = vector.load %arg5[%c0_240, %c252] : memref<16x896xf32, #tpu.memory_space<vmem>>, vector<16x128xf32>
    %c192_241 = arith.constant 192 : index
    %c0_242 = arith.constant 0 : index
    %181 = vector.load %arg7[%c192_241, %c0_242] : memref<544x256xf32, #tpu.memory_space<vmem>>, vector<16x128xf32>
    tpu.vector_store %arg7[%c192_241, %c0_242], %180 {strides = array<i32>} : memref<544x256xf32, #tpu.memory_space<vmem>>, vector<16x128xf32>,
    %c0_243 = arith.constant 0 : index
    %c253 = arith.constant 253 : index
    %182 = vector.load %arg5[%c0_243, %c253] : memref<16x896xf32, #tpu.memory_space<vmem>>, vector<16x128xf32>
    %c208_244 = arith.constant 208 : index
    %c0_245 = arith.constant 0 : index
    %183 = vector.load %arg7[%c208_244, %c0_245] : memref<544x256xf32, #tpu.memory_space<vmem>>, vector<16x128xf32>
    tpu.vector_store %arg7[%c208_244, %c0_245], %182 {strides = array<i32>} : memref<544x256xf32, #tpu.memory_space<vmem>>, vector<16x128xf32>,
    %c0_246 = arith.constant 0 : index
    %c254 = arith.constant 254 : index
    %184 = vector.load %arg5[%c0_246, %c254] : memref<16x896xf32, #tpu.memory_space<vmem>>, vector<16x128xf32>
    %c224_247 = arith.constant 224 : index
    %c0_248 = arith.constant 0 : index
    %185 = vector.load %arg7[%c224_247, %c0_248] : memref<544x256xf32, #tpu.memory_space<vmem>>, vector<16x128xf32>
    tpu.vector_store %arg7[%c224_247, %c0_248], %184 {strides = array<i32>} : memref<544x256xf32, #tpu.memory_space<vmem>>, vector<16x128xf32>,
    %c0_249 = arith.constant 0 : index
    %c255 = arith.constant 255 : index
    %186 = vector.load %arg5[%c0_249, %c255] : memref<16x896xf32, #tpu.memory_space<vmem>>, vector<16x128xf32>
    %c240_250 = arith.constant 240 : index
    %c0_251 = arith.constant 0 : index
    %187 = vector.load %arg7[%c240_250, %c0_251] : memref<544x256xf32, #tpu.memory_space<vmem>>, vector<16x128xf32>
    tpu.vector_store %arg7[%c240_250, %c0_251], %186 {strides = array<i32>} : memref<544x256xf32, #tpu.memory_space<vmem>>, vector<16x128xf32>,
    %c0_252 = arith.constant 0 : index
    %c256_253 = arith.constant 256 : index
    %188 = vector.load %arg5[%c0_252, %c256_253] : memref<16x896xf32, #tpu.memory_space<vmem>>, vector<16x128xf32>
    %c256_254 = arith.constant 256 : index
    %c0_255 = arith.constant 0 : index
    %189 = vector.load %arg7[%c256_254, %c0_255] : memref<544x256xf32, #tpu.memory_space<vmem>>, vector<16x128xf32>
    tpu.vector_store %arg7[%c256_254, %c0_255], %188 {strides = array<i32>} : memref<544x256xf32, #tpu.memory_space<vmem>>, vector<16x128xf32>,
    %c0_256 = arith.constant 0 : index
    %c257 = arith.constant 257 : index
    %190 = vector.load %arg5[%c0_256, %c257] : memref<16x896xf32, #tpu.memory_space<vmem>>, vector<16x128xf32>
    %c272_257 = arith.constant 272 : index
    %c0_258 = arith.constant 0 : index
    %191 = vector.load %arg7[%c272_257, %c0_258] : memref<544x256xf32, #tpu.memory_space<vmem>>, vector<16x128xf32>
    tpu.vector_store %arg7[%c272_257, %c0_258], %190 {strides = array<i32>} : memref<544x256xf32, #tpu.memory_space<vmem>>, vector<16x128xf32>,
    %c0_259 = arith.constant 0 : index
    %c258 = arith.constant 258 : index
    %192 = vector.load %arg5[%c0_259, %c258] : memref<16x896xf32, #tpu.memory_space<vmem>>, vector<16x128xf32>
    %c288_260 = arith.constant 288 : index
    %c0_261 = arith.constant 0 : index
    %193 = vector.load %arg7[%c288_260, %c0_261] : memref<544x256xf32, #tpu.memory_space<vmem>>, vector<16x128xf32>
    tpu.vector_store %arg7[%c288_260, %c0_261], %192 {strides = array<i32>} : memref<544x256xf32, #tpu.memory_space<vmem>>, vector<16x128xf32>,
    %c0_262 = arith.constant 0 : index
    %c259 = arith.constant 259 : index
    %194 = vector.load %arg5[%c0_262, %c259] : memref<16x896xf32, #tpu.memory_space<vmem>>, vector<16x128xf32>
    %c304_263 = arith.constant 304 : index
    %c0_264 = arith.constant 0 : index
    %195 = vector.load %arg7[%c304_263, %c0_264] : memref<544x256xf32, #tpu.memory_space<vmem>>, vector<16x128xf32>
    tpu.vector_store %arg7[%c304_263, %c0_264], %194 {strides = array<i32>} : memref<544x256xf32, #tpu.memory_space<vmem>>, vector<16x128xf32>,
    %c0_265 = arith.constant 0 : index
    %c260 = arith.constant 260 : index
    %196 = vector.load %arg5[%c0_265, %c260] : memref<16x896xf32, #tpu.memory_space<vmem>>, vector<16x128xf32>
    %c320_266 = arith.constant 320 : index
    %c0_267 = arith.constant 0 : index
    %197 = vector.load %arg7[%c320_266, %c0_267] : memref<544x256xf32, #tpu.memory_space<vmem>>, vector<16x128xf32>
    tpu.vector_store %arg7[%c320_266, %c0_267], %196 {strides = array<i32>} : memref<544x256xf32, #tpu.memory_space<vmem>>, vector<16x128xf32>,
    %c0_268 = arith.constant 0 : index
    %c261 = arith.constant 261 : index
    %198 = vector.load %arg5[%c0_268, %c261] : memref<16x896xf32, #tpu.memory_space<vmem>>, vector<16x128xf32>
    %c336_269 = arith.constant 336 : index
    %c0_270 = arith.constant 0 : index
    %199 = vector.load %arg7[%c336_269, %c0_270] : memref<544x256xf32, #tpu.memory_space<vmem>>, vector<16x128xf32>
    tpu.vector_store %arg7[%c336_269, %c0_270], %198 {strides = array<i32>} : memref<544x256xf32, #tpu.memory_space<vmem>>, vector<16x128xf32>,
    %c0_271 = arith.constant 0 : index
    %c262 = arith.constant 262 : index
    %200 = vector.load %arg5[%c0_271, %c262] : memref<16x896xf32, #tpu.memory_space<vmem>>, vector<16x128xf32>
    %c352_272 = arith.constant 352 : index
    %c0_273 = arith.constant 0 : index
    %201 = vector.load %arg7[%c352_272, %c0_273] : memref<544x256xf32, #tpu.memory_space<vmem>>, vector<16x128xf32>
    tpu.vector_store %arg7[%c352_272, %c0_273], %200 {strides = array<i32>} : memref<544x256xf32, #tpu.memory_space<vmem>>, vector<16x128xf32>,
    %c0_274 = arith.constant 0 : index
    %c263 = arith.constant 263 : index
    %202 = vector.load %arg5[%c0_274, %c263] : memref<16x896xf32, #tpu.memory_space<vmem>>, vector<16x128xf32>
    %c368_275 = arith.constant 368 : index
    %c0_276 = arith.constant 0 : index
    %203 = vector.load %arg7[%c368_275, %c0_276] : memref<544x256xf32, #tpu.memory_space<vmem>>, vector<16x128xf32>
    tpu.vector_store %arg7[%c368_275, %c0_276], %202 {strides = array<i32>} : memref<544x256xf32, #tpu.memory_space<vmem>>, vector<16x128xf32>,
    %c0_277 = arith.constant 0 : index
    %c264 = arith.constant 264 : index
    %204 = vector.load %arg5[%c0_277, %c264] : memref<16x896xf32, #tpu.memory_space<vmem>>, vector<16x128xf32>
    %c384_278 = arith.constant 384 : index
    %c0_279 = arith.constant 0 : index
    %205 = vector.load %arg7[%c384_278, %c0_279] : memref<544x256xf32, #tpu.memory_space<vmem>>, vector<16x128xf32>
    tpu.vector_store %arg7[%c384_278, %c0_279], %204 {strides = array<i32>} : memref<544x256xf32, #tpu.memory_space<vmem>>, vector<16x128xf32>,
    %c0_280 = arith.constant 0 : index
    %c265 = arith.constant 265 : index
    %206 = vector.load %arg5[%c0_280, %c265] : memref<16x896xf32, #tpu.memory_space<vmem>>, vector<16x128xf32>
    %c400_281 = arith.constant 400 : index
    %c0_282 = arith.constant 0 : index
    %207 = vector.load %arg7[%c400_281, %c0_282] : memref<544x256xf32, #tpu.memory_space<vmem>>, vector<16x128xf32>
    tpu.vector_store %arg7[%c400_281, %c0_282], %206 {strides = array<i32>} : memref<544x256xf32, #tpu.memory_space<vmem>>, vector<16x128xf32>,
    %c0_283 = arith.constant 0 : index
    %c266 = arith.constant 266 : index
    %208 = vector.load %arg5[%c0_283, %c266] : memref<16x896xf32, #tpu.memory_space<vmem>>, vector<16x128xf32>
    %c416_284 = arith.constant 416 : index
    %c0_285 = arith.constant 0 : index
    %209 = vector.load %arg7[%c416_284, %c0_285] : memref<544x256xf32, #tpu.memory_space<vmem>>, vector<16x128xf32>
    tpu.vector_store %arg7[%c416_284, %c0_285], %208 {strides = array<i32>} : memref<544x256xf32, #tpu.memory_space<vmem>>, vector<16x128xf32>,
    %c0_286 = arith.constant 0 : index
    %c267 = arith.constant 267 : index
    %210 = vector.load %arg5[%c0_286, %c267] : memref<16x896xf32, #tpu.memory_space<vmem>>, vector<16x128xf32>
    %c432_287 = arith.constant 432 : index
    %c0_288 = arith.constant 0 : index
    %211 = vector.load %arg7[%c432_287, %c0_288] : memref<544x256xf32, #tpu.memory_space<vmem>>, vector<16x128xf32>
    tpu.vector_store %arg7[%c432_287, %c0_288], %210 {strides = array<i32>} : memref<544x256xf32, #tpu.memory_space<vmem>>, vector<16x128xf32>,
    %c0_289 = arith.constant 0 : index
    %c268 = arith.constant 268 : index
    %212 = vector.load %arg5[%c0_289, %c268] : memref<16x896xf32, #tpu.memory_space<vmem>>, vector<16x128xf32>
    %c448_290 = arith.constant 448 : index
    %c0_291 = arith.constant 0 : index
    %213 = vector.load %arg7[%c448_290, %c0_291] : memref<544x256xf32, #tpu.memory_space<vmem>>, vector<16x128xf32>
    tpu.vector_store %arg7[%c448_290, %c0_291], %212 {strides = array<i32>} : memref<544x256xf32, #tpu.memory_space<vmem>>, vector<16x128xf32>,
    %c0_292 = arith.constant 0 : index
    %c269 = arith.constant 269 : index
    %214 = vector.load %arg5[%c0_292, %c269] : memref<16x896xf32, #tpu.memory_space<vmem>>, vector<16x128xf32>
    %c464_293 = arith.constant 464 : index
    %c0_294 = arith.constant 0 : index
    %215 = vector.load %arg7[%c464_293, %c0_294] : memref<544x256xf32, #tpu.memory_space<vmem>>, vector<16x128xf32>
    tpu.vector_store %arg7[%c464_293, %c0_294], %214 {strides = array<i32>} : memref<544x256xf32, #tpu.memory_space<vmem>>, vector<16x128xf32>,
    %c0_295 = arith.constant 0 : index
    %c270 = arith.constant 270 : index
    %216 = vector.load %arg5[%c0_295, %c270] : memref<16x896xf32, #tpu.memory_space<vmem>>, vector<16x128xf32>
    %c480_296 = arith.constant 480 : index
    %c0_297 = arith.constant 0 : index
    %217 = vector.load %arg7[%c480_296, %c0_297] : memref<544x256xf32, #tpu.memory_space<vmem>>, vector<16x128xf32>
    tpu.vector_store %arg7[%c480_296, %c0_297], %216 {strides = array<i32>} : memref<544x256xf32, #tpu.memory_space<vmem>>, vector<16x128xf32>,
    %c0_298 = arith.constant 0 : index
    %c271 = arith.constant 271 : index
    %218 = vector.load %arg5[%c0_298, %c271] : memref<16x896xf32, #tpu.memory_space<vmem>>, vector<16x128xf32>
    %c496_299 = arith.constant 496 : index
    %c0_300 = arith.constant 0 : index
    %219 = vector.load %arg7[%c496_299, %c0_300] : memref<544x256xf32, #tpu.memory_space<vmem>>, vector<16x128xf32>
    tpu.vector_store %arg7[%c496_299, %c0_300], %218 {strides = array<i32>} : memref<544x256xf32, #tpu.memory_space<vmem>>, vector<16x128xf32>,
    %c0_301 = arith.constant 0 : index
    %c272_302 = arith.constant 272 : index
    %220 = vector.load %arg5[%c0_301, %c272_302] : memref<16x896xf32, #tpu.memory_space<vmem>>, vector<16x128xf32>
    %c512_303 = arith.constant 512 : index
    %c0_304 = arith.constant 0 : index
    %221 = vector.load %arg7[%c512_303, %c0_304] : memref<544x256xf32, #tpu.memory_space<vmem>>, vector<16x128xf32>
    tpu.vector_store %arg7[%c512_303, %c0_304], %220 {strides = array<i32>} : memref<544x256xf32, #tpu.memory_space<vmem>>, vector<16x128xf32>,
    %c0_305 = arith.constant 0 : index
    %c624 = arith.constant 624 : index
    %222 = vector.load %arg5[%c0_305, %c624] : memref<16x896xf32, #tpu.memory_space<vmem>>, vector<16x128xf32>
    %c0_306 = arith.constant 0 : index
    %c128_307 = arith.constant 128 : index
    %223 = vector.load %arg7[%c0_306, %c128_307] : memref<544x256xf32, #tpu.memory_space<vmem>>, vector<16x128xf32>
    tpu.vector_store %arg7[%c0_306, %c128_307], %222 {strides = array<i32>} : memref<544x256xf32, #tpu.memory_space<vmem>>, vector<16x128xf32>,
    %c0_308 = arith.constant 0 : index
    %c625 = arith.constant 625 : index
    %224 = vector.load %arg5[%c0_308, %c625] : memref<16x896xf32, #tpu.memory_space<vmem>>, vector<16x128xf32>
    %c16_309 = arith.constant 16 : index
    %c128_310 = arith.constant 128 : index
    %225 = vector.load %arg7[%c16_309, %c128_310] : memref<544x256xf32, #tpu.memory_space<vmem>>, vector<16x128xf32>
    tpu.vector_store %arg7[%c16_309, %c128_310], %224 {strides = array<i32>} : memref<544x256xf32, #tpu.memory_space<vmem>>, vector<16x128xf32>,
    %c0_311 = arith.constant 0 : index
    %c626 = arith.constant 626 : index
    %226 = vector.load %arg5[%c0_311, %c626] : memref<16x896xf32, #tpu.memory_space<vmem>>, vector<16x128xf32>
    %c32_312 = arith.constant 32 : index
    %c128_313 = arith.constant 128 : index
    %227 = vector.load %arg7[%c32_312, %c128_313] : memref<544x256xf32, #tpu.memory_space<vmem>>, vector<16x128xf32>
    tpu.vector_store %arg7[%c32_312, %c128_313], %226 {strides = array<i32>} : memref<544x256xf32, #tpu.memory_space<vmem>>, vector<16x128xf32>,
    %c0_314 = arith.constant 0 : index
    %c627 = arith.constant 627 : index
    %228 = vector.load %arg5[%c0_314, %c627] : memref<16x896xf32, #tpu.memory_space<vmem>>, vector<16x128xf32>
    %c48_315 = arith.constant 48 : index
    %c128_316 = arith.constant 128 : index
    %229 = vector.load %arg7[%c48_315, %c128_316] : memref<544x256xf32, #tpu.memory_space<vmem>>, vector<16x128xf32>
    tpu.vector_store %arg7[%c48_315, %c128_316], %228 {strides = array<i32>} : memref<544x256xf32, #tpu.memory_space<vmem>>, vector<16x128xf32>,
    %c0_317 = arith.constant 0 : index
    %c628 = arith.constant 628 : index
    %230 = vector.load %arg5[%c0_317, %c628] : memref<16x896xf32, #tpu.memory_space<vmem>>, vector<16x128xf32>
    %c64_318 = arith.constant 64 : index
    %c128_319 = arith.constant 128 : index
    %231 = vector.load %arg7[%c64_318, %c128_319] : memref<544x256xf32, #tpu.memory_space<vmem>>, vector<16x128xf32>
    tpu.vector_store %arg7[%c64_318, %c128_319], %230 {strides = array<i32>} : memref<544x256xf32, #tpu.memory_space<vmem>>, vector<16x128xf32>,
    %c0_320 = arith.constant 0 : index
    %c629 = arith.constant 629 : index
    %232 = vector.load %arg5[%c0_320, %c629] : memref<16x896xf32, #tpu.memory_space<vmem>>, vector<16x128xf32>
    %c80_321 = arith.constant 80 : index
    %c128_322 = arith.constant 128 : index
    %233 = vector.load %arg7[%c80_321, %c128_322] : memref<544x256xf32, #tpu.memory_space<vmem>>, vector<16x128xf32>
    tpu.vector_store %arg7[%c80_321, %c128_322], %232 {strides = array<i32>} : memref<544x256xf32, #tpu.memory_space<vmem>>, vector<16x128xf32>,
    %c0_323 = arith.constant 0 : index
    %c630 = arith.constant 630 : index
    %234 = vector.load %arg5[%c0_323, %c630] : memref<16x896xf32, #tpu.memory_space<vmem>>, vector<16x128xf32>
    %c96_324 = arith.constant 96 : index
    %c128_325 = arith.constant 128 : index
    %235 = vector.load %arg7[%c96_324, %c128_325] : memref<544x256xf32, #tpu.memory_space<vmem>>, vector<16x128xf32>
    tpu.vector_store %arg7[%c96_324, %c128_325], %234 {strides = array<i32>} : memref<544x256xf32, #tpu.memory_space<vmem>>, vector<16x128xf32>,
    %c0_326 = arith.constant 0 : index
    %c631 = arith.constant 631 : index
    %236 = vector.load %arg5[%c0_326, %c631] : memref<16x896xf32, #tpu.memory_space<vmem>>, vector<16x128xf32>
    %c112_327 = arith.constant 112 : index
    %c128_328 = arith.constant 128 : index
    %237 = vector.load %arg7[%c112_327, %c128_328] : memref<544x256xf32, #tpu.memory_space<vmem>>, vector<16x128xf32>
    tpu.vector_store %arg7[%c112_327, %c128_328], %236 {strides = array<i32>} : memref<544x256xf32, #tpu.memory_space<vmem>>, vector<16x128xf32>,
    %c0_329 = arith.constant 0 : index
    %c632 = arith.constant 632 : index
    %238 = vector.load %arg5[%c0_329, %c632] : memref<16x896xf32, #tpu.memory_space<vmem>>, vector<16x128xf32>
    %c128_330 = arith.constant 128 : index
    %c128_331 = arith.constant 128 : index
    %239 = vector.load %arg7[%c128_330, %c128_331] : memref<544x256xf32, #tpu.memory_space<vmem>>, vector<16x128xf32>
    tpu.vector_store %arg7[%c128_330, %c128_331], %238 {strides = array<i32>} : memref<544x256xf32, #tpu.memory_space<vmem>>, vector<16x128xf32>,
    %c0_332 = arith.constant 0 : index
    %c633 = arith.constant 633 : index
    %240 = vector.load %arg5[%c0_332, %c633] : memref<16x896xf32, #tpu.memory_space<vmem>>, vector<16x128xf32>
    %c144_333 = arith.constant 144 : index
    %c128_334 = arith.constant 128 : index
    %241 = vector.load %arg7[%c144_333, %c128_334] : memref<544x256xf32, #tpu.memory_space<vmem>>, vector<16x128xf32>
    tpu.vector_store %arg7[%c144_333, %c128_334], %240 {strides = array<i32>} : memref<544x256xf32, #tpu.memory_space<vmem>>, vector<16x128xf32>,
    %c0_335 = arith.constant 0 : index
    %c634 = arith.constant 634 : index
    %242 = vector.load %arg5[%c0_335, %c634] : memref<16x896xf32, #tpu.memory_space<vmem>>, vector<16x128xf32>
    %c160_336 = arith.constant 160 : index
    %c128_337 = arith.constant 128 : index
    %243 = vector.load %arg7[%c160_336, %c128_337] : memref<544x256xf32, #tpu.memory_space<vmem>>, vector<16x128xf32>
    tpu.vector_store %arg7[%c160_336, %c128_337], %242 {strides = array<i32>} : memref<544x256xf32, #tpu.memory_space<vmem>>, vector<16x128xf32>,
    %c0_338 = arith.constant 0 : index
    %c635 = arith.constant 635 : index
    %244 = vector.load %arg5[%c0_338, %c635] : memref<16x896xf32, #tpu.memory_space<vmem>>, vector<16x128xf32>
    %c176_339 = arith.constant 176 : index
    %c128_340 = arith.constant 128 : index
    %245 = vector.load %arg7[%c176_339, %c128_340] : memref<544x256xf32, #tpu.memory_space<vmem>>, vector<16x128xf32>
    tpu.vector_store %arg7[%c176_339, %c128_340], %244 {strides = array<i32>} : memref<544x256xf32, #tpu.memory_space<vmem>>, vector<16x128xf32>,
    %c0_341 = arith.constant 0 : index
    %c636 = arith.constant 636 : index
    %246 = vector.load %arg5[%c0_341, %c636] : memref<16x896xf32, #tpu.memory_space<vmem>>, vector<16x128xf32>
    %c192_342 = arith.constant 192 : index
    %c128_343 = arith.constant 128 : index
    %247 = vector.load %arg7[%c192_342, %c128_343] : memref<544x256xf32, #tpu.memory_space<vmem>>, vector<16x128xf32>
    tpu.vector_store %arg7[%c192_342, %c128_343], %246 {strides = array<i32>} : memref<544x256xf32, #tpu.memory_space<vmem>>, vector<16x128xf32>,
    %c0_344 = arith.constant 0 : index
    %c637 = arith.constant 637 : index
    %248 = vector.load %arg5[%c0_344, %c637] : memref<16x896xf32, #tpu.memory_space<vmem>>, vector<16x128xf32>
    %c208_345 = arith.constant 208 : index
    %c128_346 = arith.constant 128 : index
    %249 = vector.load %arg7[%c208_345, %c128_346] : memref<544x256xf32, #tpu.memory_space<vmem>>, vector<16x128xf32>
    tpu.vector_store %arg7[%c208_345, %c128_346], %248 {strides = array<i32>} : memref<544x256xf32, #tpu.memory_space<vmem>>, vector<16x128xf32>,
    %c0_347 = arith.constant 0 : index
    %c638 = arith.constant 638 : index
    %250 = vector.load %arg5[%c0_347, %c638] : memref<16x896xf32, #tpu.memory_space<vmem>>, vector<16x128xf32>
    %c224_348 = arith.constant 224 : index
    %c128_349 = arith.constant 128 : index
    %251 = vector.load %arg7[%c224_348, %c128_349] : memref<544x256xf32, #tpu.memory_space<vmem>>, vector<16x128xf32>
    tpu.vector_store %arg7[%c224_348, %c128_349], %250 {strides = array<i32>} : memref<544x256xf32, #tpu.memory_space<vmem>>, vector<16x128xf32>,
    %c0_350 = arith.constant 0 : index
    %c639 = arith.constant 639 : index
    %252 = vector.load %arg5[%c0_350, %c639] : memref<16x896xf32, #tpu.memory_space<vmem>>, vector<16x128xf32>
    %c240_351 = arith.constant 240 : index
    %c128_352 = arith.constant 128 : index
    %253 = vector.load %arg7[%c240_351, %c128_352] : memref<544x256xf32, #tpu.memory_space<vmem>>, vector<16x128xf32>
    tpu.vector_store %arg7[%c240_351, %c128_352], %252 {strides = array<i32>} : memref<544x256xf32, #tpu.memory_space<vmem>>, vector<16x128xf32>,
    %c0_353 = arith.constant 0 : index
    %c640 = arith.constant 640 : index
    %254 = vector.load %arg5[%c0_353, %c640] : memref<16x896xf32, #tpu.memory_space<vmem>>, vector<16x128xf32>
    %c256_354 = arith.constant 256 : index
    %c128_355 = arith.constant 128 : index
    %255 = vector.load %arg7[%c256_354, %c128_355] : memref<544x256xf32, #tpu.memory_space<vmem>>, vector<16x128xf32>
    tpu.vector_store %arg7[%c256_354, %c128_355], %254 {strides = array<i32>} : memref<544x256xf32, #tpu.memory_space<vmem>>, vector<16x128xf32>,
    %c0_356 = arith.constant 0 : index
    %c641 = arith.constant 641 : index
    %256 = vector.load %arg5[%c0_356, %c641] : memref<16x896xf32, #tpu.memory_space<vmem>>, vector<16x128xf32>
    %c272_357 = arith.constant 272 : index
    %c128_358 = arith.constant 128 : index
    %257 = vector.load %arg7[%c272_357, %c128_358] : memref<544x256xf32, #tpu.memory_space<vmem>>, vector<16x128xf32>
    tpu.vector_store %arg7[%c272_357, %c128_358], %256 {strides = array<i32>} : memref<544x256xf32, #tpu.memory_space<vmem>>, vector<16x128xf32>,
    %c0_359 = arith.constant 0 : index
    %c642 = arith.constant 642 : index
    %258 = vector.load %arg5[%c0_359, %c642] : memref<16x896xf32, #tpu.memory_space<vmem>>, vector<16x128xf32>
    %c288_360 = arith.constant 288 : index
    %c128_361 = arith.constant 128 : index
    %259 = vector.load %arg7[%c288_360, %c128_361] : memref<544x256xf32, #tpu.memory_space<vmem>>, vector<16x128xf32>
    tpu.vector_store %arg7[%c288_360, %c128_361], %258 {strides = array<i32>} : memref<544x256xf32, #tpu.memory_space<vmem>>, vector<16x128xf32>,
    %c0_362 = arith.constant 0 : index
    %c643 = arith.constant 643 : index
    %260 = vector.load %arg5[%c0_362, %c643] : memref<16x896xf32, #tpu.memory_space<vmem>>, vector<16x128xf32>
    %c304_363 = arith.constant 304 : index
    %c128_364 = arith.constant 128 : index
    %261 = vector.load %arg7[%c304_363, %c128_364] : memref<544x256xf32, #tpu.memory_space<vmem>>, vector<16x128xf32>
    tpu.vector_store %arg7[%c304_363, %c128_364], %260 {strides = array<i32>} : memref<544x256xf32, #tpu.memory_space<vmem>>, vector<16x128xf32>,
    %c0_365 = arith.constant 0 : index
    %c644 = arith.constant 644 : index
    %262 = vector.load %arg5[%c0_365, %c644] : memref<16x896xf32, #tpu.memory_space<vmem>>, vector<16x128xf32>
    %c320_366 = arith.constant 320 : index
    %c128_367 = arith.constant 128 : index
    %263 = vector.load %arg7[%c320_366, %c128_367] : memref<544x256xf32, #tpu.memory_space<vmem>>, vector<16x128xf32>
    tpu.vector_store %arg7[%c320_366, %c128_367], %262 {strides = array<i32>} : memref<544x256xf32, #tpu.memory_space<vmem>>, vector<16x128xf32>,
    %c0_368 = arith.constant 0 : index
    %c645 = arith.constant 645 : index
    %264 = vector.load %arg5[%c0_368, %c645] : memref<16x896xf32, #tpu.memory_space<vmem>>, vector<16x128xf32>
    %c336_369 = arith.constant 336 : index
    %c128_370 = arith.constant 128 : index
    %265 = vector.load %arg7[%c336_369, %c128_370] : memref<544x256xf32, #tpu.memory_space<vmem>>, vector<16x128xf32>
    tpu.vector_store %arg7[%c336_369, %c128_370], %264 {strides = array<i32>} : memref<544x256xf32, #tpu.memory_space<vmem>>, vector<16x128xf32>,
    %c0_371 = arith.constant 0 : index
    %c646 = arith.constant 646 : index
    %266 = vector.load %arg5[%c0_371, %c646] : memref<16x896xf32, #tpu.memory_space<vmem>>, vector<16x128xf32>
    %c352_372 = arith.constant 352 : index
    %c128_373 = arith.constant 128 : index
    %267 = vector.load %arg7[%c352_372, %c128_373] : memref<544x256xf32, #tpu.memory_space<vmem>>, vector<16x128xf32>
    tpu.vector_store %arg7[%c352_372, %c128_373], %266 {strides = array<i32>} : memref<544x256xf32, #tpu.memory_space<vmem>>, vector<16x128xf32>,
    %c0_374 = arith.constant 0 : index
    %c647 = arith.constant 647 : index
    %268 = vector.load %arg5[%c0_374, %c647] : memref<16x896xf32, #tpu.memory_space<vmem>>, vector<16x128xf32>
    %c368_375 = arith.constant 368 : index
    %c128_376 = arith.constant 128 : index
    %269 = vector.load %arg7[%c368_375, %c128_376] : memref<544x256xf32, #tpu.memory_space<vmem>>, vector<16x128xf32>
    tpu.vector_store %arg7[%c368_375, %c128_376], %268 {strides = array<i32>} : memref<544x256xf32, #tpu.memory_space<vmem>>, vector<16x128xf32>,
    %c0_377 = arith.constant 0 : index
    %c648 = arith.constant 648 : index
    %270 = vector.load %arg5[%c0_377, %c648] : memref<16x896xf32, #tpu.memory_space<vmem>>, vector<16x128xf32>
    %c384_378 = arith.constant 384 : index
    %c128_379 = arith.constant 128 : index
    %271 = vector.load %arg7[%c384_378, %c128_379] : memref<544x256xf32, #tpu.memory_space<vmem>>, vector<16x128xf32>
    tpu.vector_store %arg7[%c384_378, %c128_379], %270 {strides = array<i32>} : memref<544x256xf32, #tpu.memory_space<vmem>>, vector<16x128xf32>,
    %c0_380 = arith.constant 0 : index
    %c649 = arith.constant 649 : index
    %272 = vector.load %arg5[%c0_380, %c649] : memref<16x896xf32, #tpu.memory_space<vmem>>, vector<16x128xf32>
    %c400_381 = arith.constant 400 : index
    %c128_382 = arith.constant 128 : index
    %273 = vector.load %arg7[%c400_381, %c128_382] : memref<544x256xf32, #tpu.memory_space<vmem>>, vector<16x128xf32>
    tpu.vector_store %arg7[%c400_381, %c128_382], %272 {strides = array<i32>} : memref<544x256xf32, #tpu.memory_space<vmem>>, vector<16x128xf32>,
    %c0_383 = arith.constant 0 : index
    %c650 = arith.constant 650 : index
    %274 = vector.load %arg5[%c0_383, %c650] : memref<16x896xf32, #tpu.memory_space<vmem>>, vector<16x128xf32>
    %c416_384 = arith.constant 416 : index
    %c128_385 = arith.constant 128 : index
    %275 = vector.load %arg7[%c416_384, %c128_385] : memref<544x256xf32, #tpu.memory_space<vmem>>, vector<16x128xf32>
    tpu.vector_store %arg7[%c416_384, %c128_385], %274 {strides = array<i32>} : memref<544x256xf32, #tpu.memory_space<vmem>>, vector<16x128xf32>,
    %c0_386 = arith.constant 0 : index
    %c651 = arith.constant 651 : index
    %276 = vector.load %arg5[%c0_386, %c651] : memref<16x896xf32, #tpu.memory_space<vmem>>, vector<16x128xf32>
    %c432_387 = arith.constant 432 : index
    %c128_388 = arith.constant 128 : index
    %277 = vector.load %arg7[%c432_387, %c128_388] : memref<544x256xf32, #tpu.memory_space<vmem>>, vector<16x128xf32>
    tpu.vector_store %arg7[%c432_387, %c128_388], %276 {strides = array<i32>} : memref<544x256xf32, #tpu.memory_space<vmem>>, vector<16x128xf32>,
    %c0_389 = arith.constant 0 : index
    %c652 = arith.constant 652 : index
    %278 = vector.load %arg5[%c0_389, %c652] : memref<16x896xf32, #tpu.memory_space<vmem>>, vector<16x128xf32>
    %c448_390 = arith.constant 448 : index
    %c128_391 = arith.constant 128 : index
    %279 = vector.load %arg7[%c448_390, %c128_391] : memref<544x256xf32, #tpu.memory_space<vmem>>, vector<16x128xf32>
    tpu.vector_store %arg7[%c448_390, %c128_391], %278 {strides = array<i32>} : memref<544x256xf32, #tpu.memory_space<vmem>>, vector<16x128xf32>,
    %c0_392 = arith.constant 0 : index
    %c653 = arith.constant 653 : index
    %280 = vector.load %arg5[%c0_392, %c653] : memref<16x896xf32, #tpu.memory_space<vmem>>, vector<16x128xf32>
    %c464_393 = arith.constant 464 : index
    %c128_394 = arith.constant 128 : index
    %281 = vector.load %arg7[%c464_393, %c128_394] : memref<544x256xf32, #tpu.memory_space<vmem>>, vector<16x128xf32>
    tpu.vector_store %arg7[%c464_393, %c128_394], %280 {strides = array<i32>} : memref<544x256xf32, #tpu.memory_space<vmem>>, vector<16x128xf32>,
    %c0_395 = arith.constant 0 : index
    %c654 = arith.constant 654 : index
    %282 = vector.load %arg5[%c0_395, %c654] : memref<16x896xf32, #tpu.memory_space<vmem>>, vector<16x128xf32>
    %c480_396 = arith.constant 480 : index
    %c128_397 = arith.constant 128 : index
    %283 = vector.load %arg7[%c480_396, %c128_397] : memref<544x256xf32, #tpu.memory_space<vmem>>, vector<16x128xf32>
    tpu.vector_store %arg7[%c480_396, %c128_397], %282 {strides = array<i32>} : memref<544x256xf32, #tpu.memory_space<vmem>>, vector<16x128xf32>,
    %c0_398 = arith.constant 0 : index
    %c655 = arith.constant 655 : index
    %284 = vector.load %arg5[%c0_398, %c655] : memref<16x896xf32, #tpu.memory_space<vmem>>, vector<16x128xf32>
    %c496_399 = arith.constant 496 : index
    %c128_400 = arith.constant 128 : index
    %285 = vector.load %arg7[%c496_399, %c128_400] : memref<544x256xf32, #tpu.memory_space<vmem>>, vector<16x128xf32>
    tpu.vector_store %arg7[%c496_399, %c128_400], %284 {strides = array<i32>} : memref<544x256xf32, #tpu.memory_space<vmem>>, vector<16x128xf32>,
    %c0_401 = arith.constant 0 : index
    %c656 = arith.constant 656 : index
    %286 = vector.load %arg5[%c0_401, %c656] : memref<16x896xf32, #tpu.memory_space<vmem>>, vector<16x128xf32>
    %c512_402 = arith.constant 512 : index
    %c128_403 = arith.constant 128 : index
    %287 = vector.load %arg7[%c512_402, %c128_403] : memref<544x256xf32, #tpu.memory_space<vmem>>, vector<16x128xf32>
    tpu.vector_store %arg7[%c512_402, %c128_403], %286 {strides = array<i32>} : memref<544x256xf32, #tpu.memory_space<vmem>>, vector<16x128xf32>,
    %c0_404 = arith.constant 0 : index
    %c0_405 = arith.constant 0 : index
    %288 = vector.load %arg2[%c0_404, %c0_405] : memref<16x544xf32, #tpu.memory_space<vmem>>, vector<16x544xf32>
    %c0_406 = arith.constant 0 : index
    %c0_407 = arith.constant 0 : index
    %289 = vector.load %arg7[%c0_406, %c0_407] : memref<544x256xf32, #tpu.memory_space<vmem>>, vector<544x256xf32>
    %cst_408 = arith.constant dense<0.000000e+00> : vector<16x256xf32>
    %290 = tpu.matmul %288, %289, %cst_408 {dimension_numbers = #tpu.dot_dimension_numbers<[1], [0], [0], [1], [0, 0, 1, 1], [], []>} : vector<16x544xf32>, vector<544x256xf32>, vector<16x256xf32> -> vector<16x256xf32>
    %cst_409 = arith.constant 0.000000e+00 : f32
    %291 = vector.broadcast %cst_409 : f32 to vector<16x256xf32>
    %292 = arith.maximumf %290, %291 : vector<16x256xf32>
    %293 = vector.extract_strided_slice %292 {offsets = [0, 0], sizes = [16, 128], strides = [1, 1]} : vector<16x256xf32> to vector<16x128xf32>
    %c0_410 = arith.constant 0 : index
    %c256_411 = arith.constant 256 : index
    %294 = vector.load %arg6[%c0_410, %c256_411] : memref<16x896xf32, #tpu.memory_space<vmem>>, vector<16x128xf32>
    tpu.vector_store %arg6[%c0_410, %c256_411], %293 {strides = array<i32>} : memref<16x896xf32, #tpu.memory_space<vmem>>, vector<16x128xf32>,
    %295 = vector.extract_strided_slice %292 {offsets = [0, 128], sizes = [16, 128], strides = [1, 1]} : vector<16x256xf32> to vector<16x128xf32>
    %c0_412 = arith.constant 0 : index
    %c640_413 = arith.constant 640 : index
    %296 = vector.load %arg6[%c0_412, %c640_413] : memref<16x896xf32, #tpu.memory_space<vmem>>, vector<16x128xf32>
    tpu.vector_store %arg6[%c0_412, %c640_413], %295 {strides = array<i32>} : memref<16x896xf32, #tpu.memory_space<vmem>>, vector<16x128xf32>,
    %c0_414 = arith.constant 0 : index
    %c112_415 = arith.constant 112 : index
    %297 = vector.load %arg6[%c0_414, %c112_415] : memref<16x896xf32, #tpu.memory_space<vmem>>, vector<16x128xf32>
    %c0_416 = arith.constant 0 : index
    %c0_417 = arith.constant 0 : index
    %298 = vector.load %arg7[%c0_416, %c0_417] : memref<544x256xf32, #tpu.memory_space<vmem>>, vector<16x128xf32>
    tpu.vector_store %arg7[%c0_416, %c0_417], %297 {strides = array<i32>} : memref<544x256xf32, #tpu.memory_space<vmem>>, vector<16x128xf32>,
    %c0_418 = arith.constant 0 : index
    %c113_419 = arith.constant 113 : index
    %299 = vector.load %arg6[%c0_418, %c113_419] : memref<16x896xf32, #tpu.memory_space<vmem>>, vector<16x128xf32>
    %c16_420 = arith.constant 16 : index
    %c0_421 = arith.constant 0 : index
    %300 = vector.load %arg7[%c16_420, %c0_421] : memref<544x256xf32, #tpu.memory_space<vmem>>, vector<16x128xf32>
    tpu.vector_store %arg7[%c16_420, %c0_421], %299 {strides = array<i32>} : memref<544x256xf32, #tpu.memory_space<vmem>>, vector<16x128xf32>,
    %c0_422 = arith.constant 0 : index
    %c114_423 = arith.constant 114 : index
    %301 = vector.load %arg6[%c0_422, %c114_423] : memref<16x896xf32, #tpu.memory_space<vmem>>, vector<16x128xf32>
    %c32_424 = arith.constant 32 : index
    %c0_425 = arith.constant 0 : index
    %302 = vector.load %arg7[%c32_424, %c0_425] : memref<544x256xf32, #tpu.memory_space<vmem>>, vector<16x128xf32>
    tpu.vector_store %arg7[%c32_424, %c0_425], %301 {strides = array<i32>} : memref<544x256xf32, #tpu.memory_space<vmem>>, vector<16x128xf32>,
    %c0_426 = arith.constant 0 : index
    %c115_427 = arith.constant 115 : index
    %303 = vector.load %arg6[%c0_426, %c115_427] : memref<16x896xf32, #tpu.memory_space<vmem>>, vector<16x128xf32>
    %c48_428 = arith.constant 48 : index
    %c0_429 = arith.constant 0 : index
    %304 = vector.load %arg7[%c48_428, %c0_429] : memref<544x256xf32, #tpu.memory_space<vmem>>, vector<16x128xf32>
    tpu.vector_store %arg7[%c48_428, %c0_429], %303 {strides = array<i32>} : memref<544x256xf32, #tpu.memory_space<vmem>>, vector<16x128xf32>,
    %c0_430 = arith.constant 0 : index
    %c116_431 = arith.constant 116 : index
    %305 = vector.load %arg6[%c0_430, %c116_431] : memref<16x896xf32, #tpu.memory_space<vmem>>, vector<16x128xf32>
    %c64_432 = arith.constant 64 : index
    %c0_433 = arith.constant 0 : index
    %306 = vector.load %arg7[%c64_432, %c0_433] : memref<544x256xf32, #tpu.memory_space<vmem>>, vector<16x128xf32>
    tpu.vector_store %arg7[%c64_432, %c0_433], %305 {strides = array<i32>} : memref<544x256xf32, #tpu.memory_space<vmem>>, vector<16x128xf32>,
    %c0_434 = arith.constant 0 : index
    %c117_435 = arith.constant 117 : index
    %307 = vector.load %arg6[%c0_434, %c117_435] : memref<16x896xf32, #tpu.memory_space<vmem>>, vector<16x128xf32>
    %c80_436 = arith.constant 80 : index
    %c0_437 = arith.constant 0 : index
    %308 = vector.load %arg7[%c80_436, %c0_437] : memref<544x256xf32, #tpu.memory_space<vmem>>, vector<16x128xf32>
    tpu.vector_store %arg7[%c80_436, %c0_437], %307 {strides = array<i32>} : memref<544x256xf32, #tpu.memory_space<vmem>>, vector<16x128xf32>,
    %c0_438 = arith.constant 0 : index
    %c118_439 = arith.constant 118 : index
    %309 = vector.load %arg6[%c0_438, %c118_439] : memref<16x896xf32, #tpu.memory_space<vmem>>, vector<16x128xf32>
    %c96_440 = arith.constant 96 : index
    %c0_441 = arith.constant 0 : index
    %310 = vector.load %arg7[%c96_440, %c0_441] : memref<544x256xf32, #tpu.memory_space<vmem>>, vector<16x128xf32>
    tpu.vector_store %arg7[%c96_440, %c0_441], %309 {strides = array<i32>} : memref<544x256xf32, #tpu.memory_space<vmem>>, vector<16x128xf32>,
    %c0_442 = arith.constant 0 : index
    %c119_443 = arith.constant 119 : index
    %311 = vector.load %arg6[%c0_442, %c119_443] : memref<16x896xf32, #tpu.memory_space<vmem>>, vector<16x128xf32>
    %c112_444 = arith.constant 112 : index
    %c0_445 = arith.constant 0 : index
    %312 = vector.load %arg7[%c112_444, %c0_445] : memref<544x256xf32, #tpu.memory_space<vmem>>, vector<16x128xf32>
    tpu.vector_store %arg7[%c112_444, %c0_445], %311 {strides = array<i32>} : memref<544x256xf32, #tpu.memory_space<vmem>>, vector<16x128xf32>,
    %c0_446 = arith.constant 0 : index
    %c120_447 = arith.constant 120 : index
    %313 = vector.load %arg6[%c0_446, %c120_447] : memref<16x896xf32, #tpu.memory_space<vmem>>, vector<16x128xf32>
    %c128_448 = arith.constant 128 : index
    %c0_449 = arith.constant 0 : index
    %314 = vector.load %arg7[%c128_448, %c0_449] : memref<544x256xf32, #tpu.memory_space<vmem>>, vector<16x128xf32>
    tpu.vector_store %arg7[%c128_448, %c0_449], %313 {strides = array<i32>} : memref<544x256xf32, #tpu.memory_space<vmem>>, vector<16x128xf32>,
    %c0_450 = arith.constant 0 : index
    %c121_451 = arith.constant 121 : index
    %315 = vector.load %arg6[%c0_450, %c121_451] : memref<16x896xf32, #tpu.memory_space<vmem>>, vector<16x128xf32>
    %c144_452 = arith.constant 144 : index
    %c0_453 = arith.constant 0 : index
    %316 = vector.load %arg7[%c144_452, %c0_453] : memref<544x256xf32, #tpu.memory_space<vmem>>, vector<16x128xf32>
    tpu.vector_store %arg7[%c144_452, %c0_453], %315 {strides = array<i32>} : memref<544x256xf32, #tpu.memory_space<vmem>>, vector<16x128xf32>,
    %c0_454 = arith.constant 0 : index
    %c122_455 = arith.constant 122 : index
    %317 = vector.load %arg6[%c0_454, %c122_455] : memref<16x896xf32, #tpu.memory_space<vmem>>, vector<16x128xf32>
    %c160_456 = arith.constant 160 : index
    %c0_457 = arith.constant 0 : index
    %318 = vector.load %arg7[%c160_456, %c0_457] : memref<544x256xf32, #tpu.memory_space<vmem>>, vector<16x128xf32>
    tpu.vector_store %arg7[%c160_456, %c0_457], %317 {strides = array<i32>} : memref<544x256xf32, #tpu.memory_space<vmem>>, vector<16x128xf32>,
    %c0_458 = arith.constant 0 : index
    %c123_459 = arith.constant 123 : index
    %319 = vector.load %arg6[%c0_458, %c123_459] : memref<16x896xf32, #tpu.memory_space<vmem>>, vector<16x128xf32>
    %c176_460 = arith.constant 176 : index
    %c0_461 = arith.constant 0 : index
    %320 = vector.load %arg7[%c176_460, %c0_461] : memref<544x256xf32, #tpu.memory_space<vmem>>, vector<16x128xf32>
    tpu.vector_store %arg7[%c176_460, %c0_461], %319 {strides = array<i32>} : memref<544x256xf32, #tpu.memory_space<vmem>>, vector<16x128xf32>,
    %c0_462 = arith.constant 0 : index
    %c124_463 = arith.constant 124 : index
    %321 = vector.load %arg6[%c0_462, %c124_463] : memref<16x896xf32, #tpu.memory_space<vmem>>, vector<16x128xf32>
    %c192_464 = arith.constant 192 : index
    %c0_465 = arith.constant 0 : index
    %322 = vector.load %arg7[%c192_464, %c0_465] : memref<544x256xf32, #tpu.memory_space<vmem>>, vector<16x128xf32>
    tpu.vector_store %arg7[%c192_464, %c0_465], %321 {strides = array<i32>} : memref<544x256xf32, #tpu.memory_space<vmem>>, vector<16x128xf32>,
    %c0_466 = arith.constant 0 : index
    %c125_467 = arith.constant 125 : index
    %323 = vector.load %arg6[%c0_466, %c125_467] : memref<16x896xf32, #tpu.memory_space<vmem>>, vector<16x128xf32>
    %c208_468 = arith.constant 208 : index
    %c0_469 = arith.constant 0 : index
    %324 = vector.load %arg7[%c208_468, %c0_469] : memref<544x256xf32, #tpu.memory_space<vmem>>, vector<16x128xf32>
    tpu.vector_store %arg7[%c208_468, %c0_469], %323 {strides = array<i32>} : memref<544x256xf32, #tpu.memory_space<vmem>>, vector<16x128xf32>,
    %c0_470 = arith.constant 0 : index
    %c126_471 = arith.constant 126 : index
    %325 = vector.load %arg6[%c0_470, %c126_471] : memref<16x896xf32, #tpu.memory_space<vmem>>, vector<16x128xf32>
    %c224_472 = arith.constant 224 : index
    %c0_473 = arith.constant 0 : index
    %326 = vector.load %arg7[%c224_472, %c0_473] : memref<544x256xf32, #tpu.memory_space<vmem>>, vector<16x128xf32>
    tpu.vector_store %arg7[%c224_472, %c0_473], %325 {strides = array<i32>} : memref<544x256xf32, #tpu.memory_space<vmem>>, vector<16x128xf32>,
    %c0_474 = arith.constant 0 : index
    %c127_475 = arith.constant 127 : index
    %327 = vector.load %arg6[%c0_474, %c127_475] : memref<16x896xf32, #tpu.memory_space<vmem>>, vector<16x128xf32>
    %c240_476 = arith.constant 240 : index
    %c0_477 = arith.constant 0 : index
    %328 = vector.load %arg7[%c240_476, %c0_477] : memref<544x256xf32, #tpu.memory_space<vmem>>, vector<16x128xf32>
    tpu.vector_store %arg7[%c240_476, %c0_477], %327 {strides = array<i32>} : memref<544x256xf32, #tpu.memory_space<vmem>>, vector<16x128xf32>,
    %c0_478 = arith.constant 0 : index
    %c128_479 = arith.constant 128 : index
    %329 = vector.load %arg6[%c0_478, %c128_479] : memref<16x896xf32, #tpu.memory_space<vmem>>, vector<16x128xf32>
    %c256_480 = arith.constant 256 : index
    %c0_481 = arith.constant 0 : index
    %330 = vector.load %arg7[%c256_480, %c0_481] : memref<544x256xf32, #tpu.memory_space<vmem>>, vector<16x128xf32>
    tpu.vector_store %arg7[%c256_480, %c0_481], %329 {strides = array<i32>} : memref<544x256xf32, #tpu.memory_space<vmem>>, vector<16x128xf32>,
    %c0_482 = arith.constant 0 : index
    %c129_483 = arith.constant 129 : index
    %331 = vector.load %arg6[%c0_482, %c129_483] : memref<16x896xf32, #tpu.memory_space<vmem>>, vector<16x128xf32>
    %c272_484 = arith.constant 272 : index
    %c0_485 = arith.constant 0 : index
    %332 = vector.load %arg7[%c272_484, %c0_485] : memref<544x256xf32, #tpu.memory_space<vmem>>, vector<16x128xf32>
    tpu.vector_store %arg7[%c272_484, %c0_485], %331 {strides = array<i32>} : memref<544x256xf32, #tpu.memory_space<vmem>>, vector<16x128xf32>,
    %c0_486 = arith.constant 0 : index
    %c130_487 = arith.constant 130 : index
    %333 = vector.load %arg6[%c0_486, %c130_487] : memref<16x896xf32, #tpu.memory_space<vmem>>, vector<16x128xf32>
    %c288_488 = arith.constant 288 : index
    %c0_489 = arith.constant 0 : index
    %334 = vector.load %arg7[%c288_488, %c0_489] : memref<544x256xf32, #tpu.memory_space<vmem>>, vector<16x128xf32>
    tpu.vector_store %arg7[%c288_488, %c0_489], %333 {strides = array<i32>} : memref<544x256xf32, #tpu.memory_space<vmem>>, vector<16x128xf32>,
    %c0_490 = arith.constant 0 : index
    %c131_491 = arith.constant 131 : index
    %335 = vector.load %arg6[%c0_490, %c131_491] : memref<16x896xf32, #tpu.memory_space<vmem>>, vector<16x128xf32>
    %c304_492 = arith.constant 304 : index
    %c0_493 = arith.constant 0 : index
    %336 = vector.load %arg7[%c304_492, %c0_493] : memref<544x256xf32, #tpu.memory_space<vmem>>, vector<16x128xf32>
    tpu.vector_store %arg7[%c304_492, %c0_493], %335 {strides = array<i32>} : memref<544x256xf32, #tpu.memory_space<vmem>>, vector<16x128xf32>,
    %c0_494 = arith.constant 0 : index
    %c132_495 = arith.constant 132 : index
    %337 = vector.load %arg6[%c0_494, %c132_495] : memref<16x896xf32, #tpu.memory_space<vmem>>, vector<16x128xf32>
    %c320_496 = arith.constant 320 : index
    %c0_497 = arith.constant 0 : index
    %338 = vector.load %arg7[%c320_496, %c0_497] : memref<544x256xf32, #tpu.memory_space<vmem>>, vector<16x128xf32>
    tpu.vector_store %arg7[%c320_496, %c0_497], %337 {strides = array<i32>} : memref<544x256xf32, #tpu.memory_space<vmem>>, vector<16x128xf32>,
    %c0_498 = arith.constant 0 : index
    %c133_499 = arith.constant 133 : index
    %339 = vector.load %arg6[%c0_498, %c133_499] : memref<16x896xf32, #tpu.memory_space<vmem>>, vector<16x128xf32>
    %c336_500 = arith.constant 336 : index
    %c0_501 = arith.constant 0 : index
    %340 = vector.load %arg7[%c336_500, %c0_501] : memref<544x256xf32, #tpu.memory_space<vmem>>, vector<16x128xf32>
    tpu.vector_store %arg7[%c336_500, %c0_501], %339 {strides = array<i32>} : memref<544x256xf32, #tpu.memory_space<vmem>>, vector<16x128xf32>,
    %c0_502 = arith.constant 0 : index
    %c134_503 = arith.constant 134 : index
    %341 = vector.load %arg6[%c0_502, %c134_503] : memref<16x896xf32, #tpu.memory_space<vmem>>, vector<16x128xf32>
    %c352_504 = arith.constant 352 : index
    %c0_505 = arith.constant 0 : index
    %342 = vector.load %arg7[%c352_504, %c0_505] : memref<544x256xf32, #tpu.memory_space<vmem>>, vector<16x128xf32>
    tpu.vector_store %arg7[%c352_504, %c0_505], %341 {strides = array<i32>} : memref<544x256xf32, #tpu.memory_space<vmem>>, vector<16x128xf32>,
    %c0_506 = arith.constant 0 : index
    %c135_507 = arith.constant 135 : index
    %343 = vector.load %arg6[%c0_506, %c135_507] : memref<16x896xf32, #tpu.memory_space<vmem>>, vector<16x128xf32>
    %c368_508 = arith.constant 368 : index
    %c0_509 = arith.constant 0 : index
    %344 = vector.load %arg7[%c368_508, %c0_509] : memref<544x256xf32, #tpu.memory_space<vmem>>, vector<16x128xf32>
    tpu.vector_store %arg7[%c368_508, %c0_509], %343 {strides = array<i32>} : memref<544x256xf32, #tpu.memory_space<vmem>>, vector<16x128xf32>,
    %c0_510 = arith.constant 0 : index
    %c136_511 = arith.constant 136 : index
    %345 = vector.load %arg6[%c0_510, %c136_511] : memref<16x896xf32, #tpu.memory_space<vmem>>, vector<16x128xf32>
    %c384_512 = arith.constant 384 : index
    %c0_513 = arith.constant 0 : index
    %346 = vector.load %arg7[%c384_512, %c0_513] : memref<544x256xf32, #tpu.memory_space<vmem>>, vector<16x128xf32>
    tpu.vector_store %arg7[%c384_512, %c0_513], %345 {strides = array<i32>} : memref<544x256xf32, #tpu.memory_space<vmem>>, vector<16x128xf32>,
    %c0_514 = arith.constant 0 : index
    %c137_515 = arith.constant 137 : index
    %347 = vector.load %arg6[%c0_514, %c137_515] : memref<16x896xf32, #tpu.memory_space<vmem>>, vector<16x128xf32>
    %c400_516 = arith.constant 400 : index
    %c0_517 = arith.constant 0 : index
    %348 = vector.load %arg7[%c400_516, %c0_517] : memref<544x256xf32, #tpu.memory_space<vmem>>, vector<16x128xf32>
    tpu.vector_store %arg7[%c400_516, %c0_517], %347 {strides = array<i32>} : memref<544x256xf32, #tpu.memory_space<vmem>>, vector<16x128xf32>,
    %c0_518 = arith.constant 0 : index
    %c138_519 = arith.constant 138 : index
    %349 = vector.load %arg6[%c0_518, %c138_519] : memref<16x896xf32, #tpu.memory_space<vmem>>, vector<16x128xf32>
    %c416_520 = arith.constant 416 : index
    %c0_521 = arith.constant 0 : index
    %350 = vector.load %arg7[%c416_520, %c0_521] : memref<544x256xf32, #tpu.memory_space<vmem>>, vector<16x128xf32>
    tpu.vector_store %arg7[%c416_520, %c0_521], %349 {strides = array<i32>} : memref<544x256xf32, #tpu.memory_space<vmem>>, vector<16x128xf32>,
    %c0_522 = arith.constant 0 : index
    %c139_523 = arith.constant 139 : index
    %351 = vector.load %arg6[%c0_522, %c139_523] : memref<16x896xf32, #tpu.memory_space<vmem>>, vector<16x128xf32>
    %c432_524 = arith.constant 432 : index
    %c0_525 = arith.constant 0 : index
    %352 = vector.load %arg7[%c432_524, %c0_525] : memref<544x256xf32, #tpu.memory_space<vmem>>, vector<16x128xf32>
    tpu.vector_store %arg7[%c432_524, %c0_525], %351 {strides = array<i32>} : memref<544x256xf32, #tpu.memory_space<vmem>>, vector<16x128xf32>,
    %c0_526 = arith.constant 0 : index
    %c140_527 = arith.constant 140 : index
    %353 = vector.load %arg6[%c0_526, %c140_527] : memref<16x896xf32, #tpu.memory_space<vmem>>, vector<16x128xf32>
    %c448_528 = arith.constant 448 : index
    %c0_529 = arith.constant 0 : index
    %354 = vector.load %arg7[%c448_528, %c0_529] : memref<544x256xf32, #tpu.memory_space<vmem>>, vector<16x128xf32>
    tpu.vector_store %arg7[%c448_528, %c0_529], %353 {strides = array<i32>} : memref<544x256xf32, #tpu.memory_space<vmem>>, vector<16x128xf32>,
    %c0_530 = arith.constant 0 : index
    %c141_531 = arith.constant 141 : index
    %355 = vector.load %arg6[%c0_530, %c141_531] : memref<16x896xf32, #tpu.memory_space<vmem>>, vector<16x128xf32>
    %c464_532 = arith.constant 464 : index
    %c0_533 = arith.constant 0 : index
    %356 = vector.load %arg7[%c464_532, %c0_533] : memref<544x256xf32, #tpu.memory_space<vmem>>, vector<16x128xf32>
    tpu.vector_store %arg7[%c464_532, %c0_533], %355 {strides = array<i32>} : memref<544x256xf32, #tpu.memory_space<vmem>>, vector<16x128xf32>,
    %c0_534 = arith.constant 0 : index
    %c142_535 = arith.constant 142 : index
    %357 = vector.load %arg6[%c0_534, %c142_535] : memref<16x896xf32, #tpu.memory_space<vmem>>, vector<16x128xf32>
    %c480_536 = arith.constant 480 : index
    %c0_537 = arith.constant 0 : index
    %358 = vector.load %arg7[%c480_536, %c0_537] : memref<544x256xf32, #tpu.memory_space<vmem>>, vector<16x128xf32>
    tpu.vector_store %arg7[%c480_536, %c0_537], %357 {strides = array<i32>} : memref<544x256xf32, #tpu.memory_space<vmem>>, vector<16x128xf32>,
    %c0_538 = arith.constant 0 : index
    %c143_539 = arith.constant 143 : index
    %359 = vector.load %arg6[%c0_538, %c143_539] : memref<16x896xf32, #tpu.memory_space<vmem>>, vector<16x128xf32>
    %c496_540 = arith.constant 496 : index
    %c0_541 = arith.constant 0 : index
    %360 = vector.load %arg7[%c496_540, %c0_541] : memref<544x256xf32, #tpu.memory_space<vmem>>, vector<16x128xf32>
    tpu.vector_store %arg7[%c496_540, %c0_541], %359 {strides = array<i32>} : memref<544x256xf32, #tpu.memory_space<vmem>>, vector<16x128xf32>,
    %c0_542 = arith.constant 0 : index
    %c144_543 = arith.constant 144 : index
    %361 = vector.load %arg6[%c0_542, %c144_543] : memref<16x896xf32, #tpu.memory_space<vmem>>, vector<16x128xf32>
    %c512_544 = arith.constant 512 : index
    %c0_545 = arith.constant 0 : index
    %362 = vector.load %arg7[%c512_544, %c0_545] : memref<544x256xf32, #tpu.memory_space<vmem>>, vector<16x128xf32>
    tpu.vector_store %arg7[%c512_544, %c0_545], %361 {strides = array<i32>} : memref<544x256xf32, #tpu.memory_space<vmem>>, vector<16x128xf32>,
    %c0_546 = arith.constant 0 : index
    %c496_547 = arith.constant 496 : index
    %363 = vector.load %arg6[%c0_546, %c496_547] : memref<16x896xf32, #tpu.memory_space<vmem>>, vector<16x128xf32>
    %c0_548 = arith.constant 0 : index
    %c128_549 = arith.constant 128 : index
    %364 = vector.load %arg7[%c0_548, %c128_549] : memref<544x256xf32, #tpu.memory_space<vmem>>, vector<16x128xf32>
    tpu.vector_store %arg7[%c0_548, %c128_549], %363 {strides = array<i32>} : memref<544x256xf32, #tpu.memory_space<vmem>>, vector<16x128xf32>,
    %c0_550 = arith.constant 0 : index
    %c497_551 = arith.constant 497 : index
    %365 = vector.load %arg6[%c0_550, %c497_551] : memref<16x896xf32, #tpu.memory_space<vmem>>, vector<16x128xf32>
    %c16_552 = arith.constant 16 : index
    %c128_553 = arith.constant 128 : index
    %366 = vector.load %arg7[%c16_552, %c128_553] : memref<544x256xf32, #tpu.memory_space<vmem>>, vector<16x128xf32>
    tpu.vector_store %arg7[%c16_552, %c128_553], %365 {strides = array<i32>} : memref<544x256xf32, #tpu.memory_space<vmem>>, vector<16x128xf32>,
    %c0_554 = arith.constant 0 : index
    %c498_555 = arith.constant 498 : index
    %367 = vector.load %arg6[%c0_554, %c498_555] : memref<16x896xf32, #tpu.memory_space<vmem>>, vector<16x128xf32>
    %c32_556 = arith.constant 32 : index
    %c128_557 = arith.constant 128 : index
    %368 = vector.load %arg7[%c32_556, %c128_557] : memref<544x256xf32, #tpu.memory_space<vmem>>, vector<16x128xf32>
    tpu.vector_store %arg7[%c32_556, %c128_557], %367 {strides = array<i32>} : memref<544x256xf32, #tpu.memory_space<vmem>>, vector<16x128xf32>,
    %c0_558 = arith.constant 0 : index
    %c499_559 = arith.constant 499 : index
    %369 = vector.load %arg6[%c0_558, %c499_559] : memref<16x896xf32, #tpu.memory_space<vmem>>, vector<16x128xf32>
    %c48_560 = arith.constant 48 : index
    %c128_561 = arith.constant 128 : index
    %370 = vector.load %arg7[%c48_560, %c128_561] : memref<544x256xf32, #tpu.memory_space<vmem>>, vector<16x128xf32>
    tpu.vector_store %arg7[%c48_560, %c128_561], %369 {strides = array<i32>} : memref<544x256xf32, #tpu.memory_space<vmem>>, vector<16x128xf32>,
    %c0_562 = arith.constant 0 : index
    %c500_563 = arith.constant 500 : index
    %371 = vector.load %arg6[%c0_562, %c500_563] : memref<16x896xf32, #tpu.memory_space<vmem>>, vector<16x128xf32>
    %c64_564 = arith.constant 64 : index
    %c128_565 = arith.constant 128 : index
    %372 = vector.load %arg7[%c64_564, %c128_565] : memref<544x256xf32, #tpu.memory_space<vmem>>, vector<16x128xf32>
    tpu.vector_store %arg7[%c64_564, %c128_565], %371 {strides = array<i32>} : memref<544x256xf32, #tpu.memory_space<vmem>>, vector<16x128xf32>,
    %c0_566 = arith.constant 0 : index
    %c501_567 = arith.constant 501 : index
    %373 = vector.load %arg6[%c0_566, %c501_567] : memref<16x896xf32, #tpu.memory_space<vmem>>, vector<16x128xf32>
    %c80_568 = arith.constant 80 : index
    %c128_569 = arith.constant 128 : index
    %374 = vector.load %arg7[%c80_568, %c128_569] : memref<544x256xf32, #tpu.memory_space<vmem>>, vector<16x128xf32>
    tpu.vector_store %arg7[%c80_568, %c128_569], %373 {strides = array<i32>} : memref<544x256xf32, #tpu.memory_space<vmem>>, vector<16x128xf32>,
    %c0_570 = arith.constant 0 : index
    %c502_571 = arith.constant 502 : index
    %375 = vector.load %arg6[%c0_570, %c502_571] : memref<16x896xf32, #tpu.memory_space<vmem>>, vector<16x128xf32>
    %c96_572 = arith.constant 96 : index
    %c128_573 = arith.constant 128 : index
    %376 = vector.load %arg7[%c96_572, %c128_573] : memref<544x256xf32, #tpu.memory_space<vmem>>, vector<16x128xf32>
    tpu.vector_store %arg7[%c96_572, %c128_573], %375 {strides = array<i32>} : memref<544x256xf32, #tpu.memory_space<vmem>>, vector<16x128xf32>,
    %c0_574 = arith.constant 0 : index
    %c503_575 = arith.constant 503 : index
    %377 = vector.load %arg6[%c0_574, %c503_575] : memref<16x896xf32, #tpu.memory_space<vmem>>, vector<16x128xf32>
    %c112_576 = arith.constant 112 : index
    %c128_577 = arith.constant 128 : index
    %378 = vector.load %arg7[%c112_576, %c128_577] : memref<544x256xf32, #tpu.memory_space<vmem>>, vector<16x128xf32>
    tpu.vector_store %arg7[%c112_576, %c128_577], %377 {strides = array<i32>} : memref<544x256xf32, #tpu.memory_space<vmem>>, vector<16x128xf32>,
    %c0_578 = arith.constant 0 : index
    %c504_579 = arith.constant 504 : index
    %379 = vector.load %arg6[%c0_578, %c504_579] : memref<16x896xf32, #tpu.memory_space<vmem>>, vector<16x128xf32>
    %c128_580 = arith.constant 128 : index
    %c128_581 = arith.constant 128 : index
    %380 = vector.load %arg7[%c128_580, %c128_581] : memref<544x256xf32, #tpu.memory_space<vmem>>, vector<16x128xf32>
    tpu.vector_store %arg7[%c128_580, %c128_581], %379 {strides = array<i32>} : memref<544x256xf32, #tpu.memory_space<vmem>>, vector<16x128xf32>,
    %c0_582 = arith.constant 0 : index
    %c505_583 = arith.constant 505 : index
    %381 = vector.load %arg6[%c0_582, %c505_583] : memref<16x896xf32, #tpu.memory_space<vmem>>, vector<16x128xf32>
    %c144_584 = arith.constant 144 : index
    %c128_585 = arith.constant 128 : index
    %382 = vector.load %arg7[%c144_584, %c128_585] : memref<544x256xf32, #tpu.memory_space<vmem>>, vector<16x128xf32>
    tpu.vector_store %arg7[%c144_584, %c128_585], %381 {strides = array<i32>} : memref<544x256xf32, #tpu.memory_space<vmem>>, vector<16x128xf32>,
    %c0_586 = arith.constant 0 : index
    %c506_587 = arith.constant 506 : index
    %383 = vector.load %arg6[%c0_586, %c506_587] : memref<16x896xf32, #tpu.memory_space<vmem>>, vector<16x128xf32>
    %c160_588 = arith.constant 160 : index
    %c128_589 = arith.constant 128 : index
    %384 = vector.load %arg7[%c160_588, %c128_589] : memref<544x256xf32, #tpu.memory_space<vmem>>, vector<16x128xf32>
    tpu.vector_store %arg7[%c160_588, %c128_589], %383 {strides = array<i32>} : memref<544x256xf32, #tpu.memory_space<vmem>>, vector<16x128xf32>,
    %c0_590 = arith.constant 0 : index
    %c507_591 = arith.constant 507 : index
    %385 = vector.load %arg6[%c0_590, %c507_591] : memref<16x896xf32, #tpu.memory_space<vmem>>, vector<16x128xf32>
    %c176_592 = arith.constant 176 : index
    %c128_593 = arith.constant 128 : index
    %386 = vector.load %arg7[%c176_592, %c128_593] : memref<544x256xf32, #tpu.memory_space<vmem>>, vector<16x128xf32>
    tpu.vector_store %arg7[%c176_592, %c128_593], %385 {strides = array<i32>} : memref<544x256xf32, #tpu.memory_space<vmem>>, vector<16x128xf32>,
    %c0_594 = arith.constant 0 : index
    %c508_595 = arith.constant 508 : index
    %387 = vector.load %arg6[%c0_594, %c508_595] : memref<16x896xf32, #tpu.memory_space<vmem>>, vector<16x128xf32>
    %c192_596 = arith.constant 192 : index
    %c128_597 = arith.constant 128 : index
    %388 = vector.load %arg7[%c192_596, %c128_597] : memref<544x256xf32, #tpu.memory_space<vmem>>, vector<16x128xf32>
    tpu.vector_store %arg7[%c192_596, %c128_597], %387 {strides = array<i32>} : memref<544x256xf32, #tpu.memory_space<vmem>>, vector<16x128xf32>,
    %c0_598 = arith.constant 0 : index
    %c509_599 = arith.constant 509 : index
    %389 = vector.load %arg6[%c0_598, %c509_599] : memref<16x896xf32, #tpu.memory_space<vmem>>, vector<16x128xf32>
    %c208_600 = arith.constant 208 : index
    %c128_601 = arith.constant 128 : index
    %390 = vector.load %arg7[%c208_600, %c128_601] : memref<544x256xf32, #tpu.memory_space<vmem>>, vector<16x128xf32>
    tpu.vector_store %arg7[%c208_600, %c128_601], %389 {strides = array<i32>} : memref<544x256xf32, #tpu.memory_space<vmem>>, vector<16x128xf32>,
    %c0_602 = arith.constant 0 : index
    %c510_603 = arith.constant 510 : index
    %391 = vector.load %arg6[%c0_602, %c510_603] : memref<16x896xf32, #tpu.memory_space<vmem>>, vector<16x128xf32>
    %c224_604 = arith.constant 224 : index
    %c128_605 = arith.constant 128 : index
    %392 = vector.load %arg7[%c224_604, %c128_605] : memref<544x256xf32, #tpu.memory_space<vmem>>, vector<16x128xf32>
    tpu.vector_store %arg7[%c224_604, %c128_605], %391 {strides = array<i32>} : memref<544x256xf32, #tpu.memory_space<vmem>>, vector<16x128xf32>,
    %c0_606 = arith.constant 0 : index
    %c511_607 = arith.constant 511 : index
    %393 = vector.load %arg6[%c0_606, %c511_607] : memref<16x896xf32, #tpu.memory_space<vmem>>, vector<16x128xf32>
    %c240_608 = arith.constant 240 : index
    %c128_609 = arith.constant 128 : index
    %394 = vector.load %arg7[%c240_608, %c128_609] : memref<544x256xf32, #tpu.memory_space<vmem>>, vector<16x128xf32>
    tpu.vector_store %arg7[%c240_608, %c128_609], %393 {strides = array<i32>} : memref<544x256xf32, #tpu.memory_space<vmem>>, vector<16x128xf32>,
    %c0_610 = arith.constant 0 : index
    %c512_611 = arith.constant 512 : index
    %395 = vector.load %arg6[%c0_610, %c512_611] : memref<16x896xf32, #tpu.memory_space<vmem>>, vector<16x128xf32>
    %c256_612 = arith.constant 256 : index
    %c128_613 = arith.constant 128 : index
    %396 = vector.load %arg7[%c256_612, %c128_613] : memref<544x256xf32, #tpu.memory_space<vmem>>, vector<16x128xf32>
    tpu.vector_store %arg7[%c256_612, %c128_613], %395 {strides = array<i32>} : memref<544x256xf32, #tpu.memory_space<vmem>>, vector<16x128xf32>,
    %c0_614 = arith.constant 0 : index
    %c513_615 = arith.constant 513 : index
    %397 = vector.load %arg6[%c0_614, %c513_615] : memref<16x896xf32, #tpu.memory_space<vmem>>, vector<16x128xf32>
    %c272_616 = arith.constant 272 : index
    %c128_617 = arith.constant 128 : index
    %398 = vector.load %arg7[%c272_616, %c128_617] : memref<544x256xf32, #tpu.memory_space<vmem>>, vector<16x128xf32>
    tpu.vector_store %arg7[%c272_616, %c128_617], %397 {strides = array<i32>} : memref<544x256xf32, #tpu.memory_space<vmem>>, vector<16x128xf32>,
    %c0_618 = arith.constant 0 : index
    %c514_619 = arith.constant 514 : index
    %399 = vector.load %arg6[%c0_618, %c514_619] : memref<16x896xf32, #tpu.memory_space<vmem>>, vector<16x128xf32>
    %c288_620 = arith.constant 288 : index
    %c128_621 = arith.constant 128 : index
    %400 = vector.load %arg7[%c288_620, %c128_621] : memref<544x256xf32, #tpu.memory_space<vmem>>, vector<16x128xf32>
    tpu.vector_store %arg7[%c288_620, %c128_621], %399 {strides = array<i32>} : memref<544x256xf32, #tpu.memory_space<vmem>>, vector<16x128xf32>,
    %c0_622 = arith.constant 0 : index
    %c515_623 = arith.constant 515 : index
    %401 = vector.load %arg6[%c0_622, %c515_623] : memref<16x896xf32, #tpu.memory_space<vmem>>, vector<16x128xf32>
    %c304_624 = arith.constant 304 : index
    %c128_625 = arith.constant 128 : index
    %402 = vector.load %arg7[%c304_624, %c128_625] : memref<544x256xf32, #tpu.memory_space<vmem>>, vector<16x128xf32>
    tpu.vector_store %arg7[%c304_624, %c128_625], %401 {strides = array<i32>} : memref<544x256xf32, #tpu.memory_space<vmem>>, vector<16x128xf32>,
    %c0_626 = arith.constant 0 : index
    %c516_627 = arith.constant 516 : index
    %403 = vector.load %arg6[%c0_626, %c516_627] : memref<16x896xf32, #tpu.memory_space<vmem>>, vector<16x128xf32>
    %c320_628 = arith.constant 320 : index
    %c128_629 = arith.constant 128 : index
    %404 = vector.load %arg7[%c320_628, %c128_629] : memref<544x256xf32, #tpu.memory_space<vmem>>, vector<16x128xf32>
    tpu.vector_store %arg7[%c320_628, %c128_629], %403 {strides = array<i32>} : memref<544x256xf32, #tpu.memory_space<vmem>>, vector<16x128xf32>,
    %c0_630 = arith.constant 0 : index
    %c517_631 = arith.constant 517 : index
    %405 = vector.load %arg6[%c0_630, %c517_631] : memref<16x896xf32, #tpu.memory_space<vmem>>, vector<16x128xf32>
    %c336_632 = arith.constant 336 : index
    %c128_633 = arith.constant 128 : index
    %406 = vector.load %arg7[%c336_632, %c128_633] : memref<544x256xf32, #tpu.memory_space<vmem>>, vector<16x128xf32>
    tpu.vector_store %arg7[%c336_632, %c128_633], %405 {strides = array<i32>} : memref<544x256xf32, #tpu.memory_space<vmem>>, vector<16x128xf32>,
    %c0_634 = arith.constant 0 : index
    %c518_635 = arith.constant 518 : index
    %407 = vector.load %arg6[%c0_634, %c518_635] : memref<16x896xf32, #tpu.memory_space<vmem>>, vector<16x128xf32>
    %c352_636 = arith.constant 352 : index
    %c128_637 = arith.constant 128 : index
    %408 = vector.load %arg7[%c352_636, %c128_637] : memref<544x256xf32, #tpu.memory_space<vmem>>, vector<16x128xf32>
    tpu.vector_store %arg7[%c352_636, %c128_637], %407 {strides = array<i32>} : memref<544x256xf32, #tpu.memory_space<vmem>>, vector<16x128xf32>,
    %c0_638 = arith.constant 0 : index
    %c519_639 = arith.constant 519 : index
    %409 = vector.load %arg6[%c0_638, %c519_639] : memref<16x896xf32, #tpu.memory_space<vmem>>, vector<16x128xf32>
    %c368_640 = arith.constant 368 : index
    %c128_641 = arith.constant 128 : index
    %410 = vector.load %arg7[%c368_640, %c128_641] : memref<544x256xf32, #tpu.memory_space<vmem>>, vector<16x128xf32>
    tpu.vector_store %arg7[%c368_640, %c128_641], %409 {strides = array<i32>} : memref<544x256xf32, #tpu.memory_space<vmem>>, vector<16x128xf32>,
    %c0_642 = arith.constant 0 : index
    %c520_643 = arith.constant 520 : index
    %411 = vector.load %arg6[%c0_642, %c520_643] : memref<16x896xf32, #tpu.memory_space<vmem>>, vector<16x128xf32>
    %c384_644 = arith.constant 384 : index
    %c128_645 = arith.constant 128 : index
    %412 = vector.load %arg7[%c384_644, %c128_645] : memref<544x256xf32, #tpu.memory_space<vmem>>, vector<16x128xf32>
    tpu.vector_store %arg7[%c384_644, %c128_645], %411 {strides = array<i32>} : memref<544x256xf32, #tpu.memory_space<vmem>>, vector<16x128xf32>,
    %c0_646 = arith.constant 0 : index
    %c521_647 = arith.constant 521 : index
    %413 = vector.load %arg6[%c0_646, %c521_647] : memref<16x896xf32, #tpu.memory_space<vmem>>, vector<16x128xf32>
    %c400_648 = arith.constant 400 : index
    %c128_649 = arith.constant 128 : index
    %414 = vector.load %arg7[%c400_648, %c128_649] : memref<544x256xf32, #tpu.memory_space<vmem>>, vector<16x128xf32>
    tpu.vector_store %arg7[%c400_648, %c128_649], %413 {strides = array<i32>} : memref<544x256xf32, #tpu.memory_space<vmem>>, vector<16x128xf32>,
    %c0_650 = arith.constant 0 : index
    %c522_651 = arith.constant 522 : index
    %415 = vector.load %arg6[%c0_650, %c522_651] : memref<16x896xf32, #tpu.memory_space<vmem>>, vector<16x128xf32>
    %c416_652 = arith.constant 416 : index
    %c128_653 = arith.constant 128 : index
    %416 = vector.load %arg7[%c416_652, %c128_653] : memref<544x256xf32, #tpu.memory_space<vmem>>, vector<16x128xf32>
    tpu.vector_store %arg7[%c416_652, %c128_653], %415 {strides = array<i32>} : memref<544x256xf32, #tpu.memory_space<vmem>>, vector<16x128xf32>,
    %c0_654 = arith.constant 0 : index
    %c523_655 = arith.constant 523 : index
    %417 = vector.load %arg6[%c0_654, %c523_655] : memref<16x896xf32, #tpu.memory_space<vmem>>, vector<16x128xf32>
    %c432_656 = arith.constant 432 : index
    %c128_657 = arith.constant 128 : index
    %418 = vector.load %arg7[%c432_656, %c128_657] : memref<544x256xf32, #tpu.memory_space<vmem>>, vector<16x128xf32>
    tpu.vector_store %arg7[%c432_656, %c128_657], %417 {strides = array<i32>} : memref<544x256xf32, #tpu.memory_space<vmem>>, vector<16x128xf32>,
    %c0_658 = arith.constant 0 : index
    %c524_659 = arith.constant 524 : index
    %419 = vector.load %arg6[%c0_658, %c524_659] : memref<16x896xf32, #tpu.memory_space<vmem>>, vector<16x128xf32>
    %c448_660 = arith.constant 448 : index
    %c128_661 = arith.constant 128 : index
    %420 = vector.load %arg7[%c448_660, %c128_661] : memref<544x256xf32, #tpu.memory_space<vmem>>, vector<16x128xf32>
    tpu.vector_store %arg7[%c448_660, %c128_661], %419 {strides = array<i32>} : memref<544x256xf32, #tpu.memory_space<vmem>>, vector<16x128xf32>,
    %c0_662 = arith.constant 0 : index
    %c525_663 = arith.constant 525 : index
    %421 = vector.load %arg6[%c0_662, %c525_663] : memref<16x896xf32, #tpu.memory_space<vmem>>, vector<16x128xf32>
    %c464_664 = arith.constant 464 : index
    %c128_665 = arith.constant 128 : index
    %422 = vector.load %arg7[%c464_664, %c128_665] : memref<544x256xf32, #tpu.memory_space<vmem>>, vector<16x128xf32>
    tpu.vector_store %arg7[%c464_664, %c128_665], %421 {strides = array<i32>} : memref<544x256xf32, #tpu.memory_space<vmem>>, vector<16x128xf32>,
    %c0_666 = arith.constant 0 : index
    %c526_667 = arith.constant 526 : index
    %423 = vector.load %arg6[%c0_666, %c526_667] : memref<16x896xf32, #tpu.memory_space<vmem>>, vector<16x128xf32>
    %c480_668 = arith.constant 480 : index
    %c128_669 = arith.constant 128 : index
    %424 = vector.load %arg7[%c480_668, %c128_669] : memref<544x256xf32, #tpu.memory_space<vmem>>, vector<16x128xf32>
    tpu.vector_store %arg7[%c480_668, %c128_669], %423 {strides = array<i32>} : memref<544x256xf32, #tpu.memory_space<vmem>>, vector<16x128xf32>,
    %c0_670 = arith.constant 0 : index
    %c527_671 = arith.constant 527 : index
    %425 = vector.load %arg6[%c0_670, %c527_671] : memref<16x896xf32, #tpu.memory_space<vmem>>, vector<16x128xf32>
    %c496_672 = arith.constant 496 : index
    %c128_673 = arith.constant 128 : index
    %426 = vector.load %arg7[%c496_672, %c128_673] : memref<544x256xf32, #tpu.memory_space<vmem>>, vector<16x128xf32>
    tpu.vector_store %arg7[%c496_672, %c128_673], %425 {strides = array<i32>} : memref<544x256xf32, #tpu.memory_space<vmem>>, vector<16x128xf32>,
    %c0_674 = arith.constant 0 : index
    %c528_675 = arith.constant 528 : index
    %427 = vector.load %arg6[%c0_674, %c528_675] : memref<16x896xf32, #tpu.memory_space<vmem>>, vector<16x128xf32>
    %c512_676 = arith.constant 512 : index
    %c128_677 = arith.constant 128 : index
    %428 = vector.load %arg7[%c512_676, %c128_677] : memref<544x256xf32, #tpu.memory_space<vmem>>, vector<16x128xf32>
    tpu.vector_store %arg7[%c512_676, %c128_677], %427 {strides = array<i32>} : memref<544x256xf32, #tpu.memory_space<vmem>>, vector<16x128xf32>,
    %c0_678 = arith.constant 0 : index
    %c0_679 = arith.constant 0 : index
    %429 = vector.load %arg3[%c0_678, %c0_679] : memref<16x544xf32, #tpu.memory_space<vmem>>, vector<16x544xf32>
    %c0_680 = arith.constant 0 : index
    %c0_681 = arith.constant 0 : index
    %430 = vector.load %arg7[%c0_680, %c0_681] : memref<544x256xf32, #tpu.memory_space<vmem>>, vector<544x256xf32>
    %cst_682 = arith.constant dense<0.000000e+00> : vector<16x256xf32>
    %431 = tpu.matmul %429, %430, %cst_682 {dimension_numbers = #tpu.dot_dimension_numbers<[1], [0], [0], [1], [0, 0, 1, 1], [], []>} : vector<16x544xf32>, vector<544x256xf32>, vector<16x256xf32> -> vector<16x256xf32>
    %c0_683 = arith.constant 0 : index
    %c0_684 = arith.constant 0 : index
    %c0_685 = arith.constant 0 : index
    %432 = vector.load %arg1[%c0_683, %c0_684, %c0_685] : memref<2x16x256xf32, #tpu.memory_space<vmem>>, vector<1x16x128xf32>
    %433 = vector.shape_cast %432 : vector<1x16x128xf32> to vector<16x128xf32>
    %434 = vector.extract_strided_slice %431 {offsets = [0, 0], sizes = [16, 128], strides = [1, 1]} : vector<16x256xf32> to vector<16x128xf32>
    %435 = arith.addf %434, %433 : vector<16x128xf32>
    %c0_686 = arith.constant 0 : index
    %c0_687 = arith.constant 0 : index
    %c0_688 = arith.constant 0 : index
    %436 = vector.load %arg4[%c0_686, %c0_687, %c0_688] : memref<2x16x256xf32, #tpu.memory_space<vmem>>, vector<1x16x128xf32>
    %437 = vector.shape_cast %436 : vector<1x16x128xf32> to vector<16x128xf32>
    %438 = vector.shape_cast %435 : vector<16x128xf32> to vector<1x16x128xf32>
    tpu.vector_store %arg4[%c0_686, %c0_687, %c0_688], %438 {strides = array<i32>} : memref<2x16x256xf32, #tpu.memory_space<vmem>>, vector<1x16x128xf32>,
    %c1_689 = arith.constant 1 : index
    %c0_690 = arith.constant 0 : index
    %c0_691 = arith.constant 0 : index
    %439 = vector.load %arg1[%c1_689, %c0_690, %c0_691] : memref<2x16x256xf32, #tpu.memory_space<vmem>>, vector<1x16x128xf32>
    %440 = vector.shape_cast %439 : vector<1x16x128xf32> to vector<16x128xf32>
    %441 = vector.extract_strided_slice %431 {offsets = [0, 128], sizes = [16, 128], strides = [1, 1]} : vector<16x256xf32> to vector<16x128xf32>
    %442 = arith.addf %441, %440 : vector<16x128xf32>
    %c1_692 = arith.constant 1 : index
    %c0_693 = arith.constant 0 : index
    %c0_694 = arith.constant 0 : index
    %443 = vector.load %arg4[%c1_692, %c0_693, %c0_694] : memref<2x16x256xf32, #tpu.memory_space<vmem>>, vector<1x16x128xf32>
    %444 = vector.shape_cast %443 : vector<1x16x128xf32> to vector<16x128xf32>
    %445 = vector.shape_cast %442 : vector<16x128xf32> to vector<1x16x128xf32>
    tpu.vector_store %arg4[%c1_692, %c0_693, %c0_694], %445 {strides = array<i32>} : memref<2x16x256xf32, #tpu.memory_space<vmem>>, vector<1x16x128xf32>,
    %c0_695 = arith.constant 0 : index
    %c240_696 = arith.constant 240 : index
    %446 = vector.load %arg6[%c0_695, %c240_696] : memref<16x896xf32, #tpu.memory_space<vmem>>, vector<16x128xf32>
    %c0_697 = arith.constant 0 : index
    %c0_698 = arith.constant 0 : index
    %447 = vector.load %arg7[%c0_697, %c0_698] : memref<544x256xf32, #tpu.memory_space<vmem>>, vector<16x128xf32>
    tpu.vector_store %arg7[%c0_697, %c0_698], %446 {strides = array<i32>} : memref<544x256xf32, #tpu.memory_space<vmem>>, vector<16x128xf32>,
    %c0_699 = arith.constant 0 : index
    %c241_700 = arith.constant 241 : index
    %448 = vector.load %arg6[%c0_699, %c241_700] : memref<16x896xf32, #tpu.memory_space<vmem>>, vector<16x128xf32>
    %c16_701 = arith.constant 16 : index
    %c0_702 = arith.constant 0 : index
    %449 = vector.load %arg7[%c16_701, %c0_702] : memref<544x256xf32, #tpu.memory_space<vmem>>, vector<16x128xf32>
    tpu.vector_store %arg7[%c16_701, %c0_702], %448 {strides = array<i32>} : memref<544x256xf32, #tpu.memory_space<vmem>>, vector<16x128xf32>,
    %c0_703 = arith.constant 0 : index
    %c242_704 = arith.constant 242 : index
    %450 = vector.load %arg6[%c0_703, %c242_704] : memref<16x896xf32, #tpu.memory_space<vmem>>, vector<16x128xf32>
    %c32_705 = arith.constant 32 : index
    %c0_706 = arith.constant 0 : index
    %451 = vector.load %arg7[%c32_705, %c0_706] : memref<544x256xf32, #tpu.memory_space<vmem>>, vector<16x128xf32>
    tpu.vector_store %arg7[%c32_705, %c0_706], %450 {strides = array<i32>} : memref<544x256xf32, #tpu.memory_space<vmem>>, vector<16x128xf32>,
    %c0_707 = arith.constant 0 : index
    %c243_708 = arith.constant 243 : index
    %452 = vector.load %arg6[%c0_707, %c243_708] : memref<16x896xf32, #tpu.memory_space<vmem>>, vector<16x128xf32>
    %c48_709 = arith.constant 48 : index
    %c0_710 = arith.constant 0 : index
    %453 = vector.load %arg7[%c48_709, %c0_710] : memref<544x256xf32, #tpu.memory_space<vmem>>, vector<16x128xf32>
    tpu.vector_store %arg7[%c48_709, %c0_710], %452 {strides = array<i32>} : memref<544x256xf32, #tpu.memory_space<vmem>>, vector<16x128xf32>,
    %c0_711 = arith.constant 0 : index
    %c244_712 = arith.constant 244 : index
    %454 = vector.load %arg6[%c0_711, %c244_712] : memref<16x896xf32, #tpu.memory_space<vmem>>, vector<16x128xf32>
    %c64_713 = arith.constant 64 : index
    %c0_714 = arith.constant 0 : index
    %455 = vector.load %arg7[%c64_713, %c0_714] : memref<544x256xf32, #tpu.memory_space<vmem>>, vector<16x128xf32>
    tpu.vector_store %arg7[%c64_713, %c0_714], %454 {strides = array<i32>} : memref<544x256xf32, #tpu.memory_space<vmem>>, vector<16x128xf32>,
    %c0_715 = arith.constant 0 : index
    %c245_716 = arith.constant 245 : index
    %456 = vector.load %arg6[%c0_715, %c245_716] : memref<16x896xf32, #tpu.memory_space<vmem>>, vector<16x128xf32>
    %c80_717 = arith.constant 80 : index
    %c0_718 = arith.constant 0 : index
    %457 = vector.load %arg7[%c80_717, %c0_718] : memref<544x256xf32, #tpu.memory_space<vmem>>, vector<16x128xf32>
    tpu.vector_store %arg7[%c80_717, %c0_718], %456 {strides = array<i32>} : memref<544x256xf32, #tpu.memory_space<vmem>>, vector<16x128xf32>,
    %c0_719 = arith.constant 0 : index
    %c246_720 = arith.constant 246 : index
    %458 = vector.load %arg6[%c0_719, %c246_720] : memref<16x896xf32, #tpu.memory_space<vmem>>, vector<16x128xf32>
    %c96_721 = arith.constant 96 : index
    %c0_722 = arith.constant 0 : index
    %459 = vector.load %arg7[%c96_721, %c0_722] : memref<544x256xf32, #tpu.memory_space<vmem>>, vector<16x128xf32>
    tpu.vector_store %arg7[%c96_721, %c0_722], %458 {strides = array<i32>} : memref<544x256xf32, #tpu.memory_space<vmem>>, vector<16x128xf32>,
    %c0_723 = arith.constant 0 : index
    %c247_724 = arith.constant 247 : index
    %460 = vector.load %arg6[%c0_723, %c247_724] : memref<16x896xf32, #tpu.memory_space<vmem>>, vector<16x128xf32>
    %c112_725 = arith.constant 112 : index
    %c0_726 = arith.constant 0 : index
    %461 = vector.load %arg7[%c112_725, %c0_726] : memref<544x256xf32, #tpu.memory_space<vmem>>, vector<16x128xf32>
    tpu.vector_store %arg7[%c112_725, %c0_726], %460 {strides = array<i32>} : memref<544x256xf32, #tpu.memory_space<vmem>>, vector<16x128xf32>,
    %c0_727 = arith.constant 0 : index
    %c248_728 = arith.constant 248 : index
    %462 = vector.load %arg6[%c0_727, %c248_728] : memref<16x896xf32, #tpu.memory_space<vmem>>, vector<16x128xf32>
    %c128_729 = arith.constant 128 : index
    %c0_730 = arith.constant 0 : index
    %463 = vector.load %arg7[%c128_729, %c0_730] : memref<544x256xf32, #tpu.memory_space<vmem>>, vector<16x128xf32>
    tpu.vector_store %arg7[%c128_729, %c0_730], %462 {strides = array<i32>} : memref<544x256xf32, #tpu.memory_space<vmem>>, vector<16x128xf32>,
    %c0_731 = arith.constant 0 : index
    %c249_732 = arith.constant 249 : index
    %464 = vector.load %arg6[%c0_731, %c249_732] : memref<16x896xf32, #tpu.memory_space<vmem>>, vector<16x128xf32>
    %c144_733 = arith.constant 144 : index
    %c0_734 = arith.constant 0 : index
    %465 = vector.load %arg7[%c144_733, %c0_734] : memref<544x256xf32, #tpu.memory_space<vmem>>, vector<16x128xf32>
    tpu.vector_store %arg7[%c144_733, %c0_734], %464 {strides = array<i32>} : memref<544x256xf32, #tpu.memory_space<vmem>>, vector<16x128xf32>,
    %c0_735 = arith.constant 0 : index
    %c250_736 = arith.constant 250 : index
    %466 = vector.load %arg6[%c0_735, %c250_736] : memref<16x896xf32, #tpu.memory_space<vmem>>, vector<16x128xf32>
    %c160_737 = arith.constant 160 : index
    %c0_738 = arith.constant 0 : index
    %467 = vector.load %arg7[%c160_737, %c0_738] : memref<544x256xf32, #tpu.memory_space<vmem>>, vector<16x128xf32>
    tpu.vector_store %arg7[%c160_737, %c0_738], %466 {strides = array<i32>} : memref<544x256xf32, #tpu.memory_space<vmem>>, vector<16x128xf32>,
    %c0_739 = arith.constant 0 : index
    %c251_740 = arith.constant 251 : index
    %468 = vector.load %arg6[%c0_739, %c251_740] : memref<16x896xf32, #tpu.memory_space<vmem>>, vector<16x128xf32>
    %c176_741 = arith.constant 176 : index
    %c0_742 = arith.constant 0 : index
    %469 = vector.load %arg7[%c176_741, %c0_742] : memref<544x256xf32, #tpu.memory_space<vmem>>, vector<16x128xf32>
    tpu.vector_store %arg7[%c176_741, %c0_742], %468 {strides = array<i32>} : memref<544x256xf32, #tpu.memory_space<vmem>>, vector<16x128xf32>,
    %c0_743 = arith.constant 0 : index
    %c252_744 = arith.constant 252 : index
    %470 = vector.load %arg6[%c0_743, %c252_744] : memref<16x896xf32, #tpu.memory_space<vmem>>, vector<16x128xf32>
    %c192_745 = arith.constant 192 : index
    %c0_746 = arith.constant 0 : index
    %471 = vector.load %arg7[%c192_745, %c0_746] : memref<544x256xf32, #tpu.memory_space<vmem>>, vector<16x128xf32>
    tpu.vector_store %arg7[%c192_745, %c0_746], %470 {strides = array<i32>} : memref<544x256xf32, #tpu.memory_space<vmem>>, vector<16x128xf32>,
    %c0_747 = arith.constant 0 : index
    %c253_748 = arith.constant 253 : index
    %472 = vector.load %arg6[%c0_747, %c253_748] : memref<16x896xf32, #tpu.memory_space<vmem>>, vector<16x128xf32>
    %c208_749 = arith.constant 208 : index
    %c0_750 = arith.constant 0 : index
    %473 = vector.load %arg7[%c208_749, %c0_750] : memref<544x256xf32, #tpu.memory_space<vmem>>, vector<16x128xf32>
    tpu.vector_store %arg7[%c208_749, %c0_750], %472 {strides = array<i32>} : memref<544x256xf32, #tpu.memory_space<vmem>>, vector<16x128xf32>,
    %c0_751 = arith.constant 0 : index
    %c254_752 = arith.constant 254 : index
    %474 = vector.load %arg6[%c0_751, %c254_752] : memref<16x896xf32, #tpu.memory_space<vmem>>, vector<16x128xf32>
    %c224_753 = arith.constant 224 : index
    %c0_754 = arith.constant 0 : index
    %475 = vector.load %arg7[%c224_753, %c0_754] : memref<544x256xf32, #tpu.memory_space<vmem>>, vector<16x128xf32>
    tpu.vector_store %arg7[%c224_753, %c0_754], %474 {strides = array<i32>} : memref<544x256xf32, #tpu.memory_space<vmem>>, vector<16x128xf32>,
    %c0_755 = arith.constant 0 : index
    %c255_756 = arith.constant 255 : index
    %476 = vector.load %arg6[%c0_755, %c255_756] : memref<16x896xf32, #tpu.memory_space<vmem>>, vector<16x128xf32>
    %c240_757 = arith.constant 240 : index
    %c0_758 = arith.constant 0 : index
    %477 = vector.load %arg7[%c240_757, %c0_758] : memref<544x256xf32, #tpu.memory_space<vmem>>, vector<16x128xf32>
    tpu.vector_store %arg7[%c240_757, %c0_758], %476 {strides = array<i32>} : memref<544x256xf32, #tpu.memory_space<vmem>>, vector<16x128xf32>,
    %c0_759 = arith.constant 0 : index
    %c256_760 = arith.constant 256 : index
    %478 = vector.load %arg6[%c0_759, %c256_760] : memref<16x896xf32, #tpu.memory_space<vmem>>, vector<16x128xf32>
    %c256_761 = arith.constant 256 : index
    %c0_762 = arith.constant 0 : index
    %479 = vector.load %arg7[%c256_761, %c0_762] : memref<544x256xf32, #tpu.memory_space<vmem>>, vector<16x128xf32>
    tpu.vector_store %arg7[%c256_761, %c0_762], %478 {strides = array<i32>} : memref<544x256xf32, #tpu.memory_space<vmem>>, vector<16x128xf32>,
    %c0_763 = arith.constant 0 : index
    %c257_764 = arith.constant 257 : index
    %480 = vector.load %arg6[%c0_763, %c257_764] : memref<16x896xf32, #tpu.memory_space<vmem>>, vector<16x128xf32>
    %c272_765 = arith.constant 272 : index
    %c0_766 = arith.constant 0 : index
    %481 = vector.load %arg7[%c272_765, %c0_766] : memref<544x256xf32, #tpu.memory_space<vmem>>, vector<16x128xf32>
    tpu.vector_store %arg7[%c272_765, %c0_766], %480 {strides = array<i32>} : memref<544x256xf32, #tpu.memory_space<vmem>>, vector<16x128xf32>,
    %c0_767 = arith.constant 0 : index
    %c258_768 = arith.constant 258 : index
    %482 = vector.load %arg6[%c0_767, %c258_768] : memref<16x896xf32, #tpu.memory_space<vmem>>, vector<16x128xf32>
    %c288_769 = arith.constant 288 : index
    %c0_770 = arith.constant 0 : index
    %483 = vector.load %arg7[%c288_769, %c0_770] : memref<544x256xf32, #tpu.memory_space<vmem>>, vector<16x128xf32>
    tpu.vector_store %arg7[%c288_769, %c0_770], %482 {strides = array<i32>} : memref<544x256xf32, #tpu.memory_space<vmem>>, vector<16x128xf32>,
    %c0_771 = arith.constant 0 : index
    %c259_772 = arith.constant 259 : index
    %484 = vector.load %arg6[%c0_771, %c259_772] : memref<16x896xf32, #tpu.memory_space<vmem>>, vector<16x128xf32>
    %c304_773 = arith.constant 304 : index
    %c0_774 = arith.constant 0 : index
    %485 = vector.load %arg7[%c304_773, %c0_774] : memref<544x256xf32, #tpu.memory_space<vmem>>, vector<16x128xf32>
    tpu.vector_store %arg7[%c304_773, %c0_774], %484 {strides = array<i32>} : memref<544x256xf32, #tpu.memory_space<vmem>>, vector<16x128xf32>,
    %c0_775 = arith.constant 0 : index
    %c260_776 = arith.constant 260 : index
    %486 = vector.load %arg6[%c0_775, %c260_776] : memref<16x896xf32, #tpu.memory_space<vmem>>, vector<16x128xf32>
    %c320_777 = arith.constant 320 : index
    %c0_778 = arith.constant 0 : index
    %487 = vector.load %arg7[%c320_777, %c0_778] : memref<544x256xf32, #tpu.memory_space<vmem>>, vector<16x128xf32>
    tpu.vector_store %arg7[%c320_777, %c0_778], %486 {strides = array<i32>} : memref<544x256xf32, #tpu.memory_space<vmem>>, vector<16x128xf32>,
    %c0_779 = arith.constant 0 : index
    %c261_780 = arith.constant 261 : index
    %488 = vector.load %arg6[%c0_779, %c261_780] : memref<16x896xf32, #tpu.memory_space<vmem>>, vector<16x128xf32>
    %c336_781 = arith.constant 336 : index
    %c0_782 = arith.constant 0 : index
    %489 = vector.load %arg7[%c336_781, %c0_782] : memref<544x256xf32, #tpu.memory_space<vmem>>, vector<16x128xf32>
    tpu.vector_store %arg7[%c336_781, %c0_782], %488 {strides = array<i32>} : memref<544x256xf32, #tpu.memory_space<vmem>>, vector<16x128xf32>,
    %c0_783 = arith.constant 0 : index
    %c262_784 = arith.constant 262 : index
    %490 = vector.load %arg6[%c0_783, %c262_784] : memref<16x896xf32, #tpu.memory_space<vmem>>, vector<16x128xf32>
    %c352_785 = arith.constant 352 : index
    %c0_786 = arith.constant 0 : index
    %491 = vector.load %arg7[%c352_785, %c0_786] : memref<544x256xf32, #tpu.memory_space<vmem>>, vector<16x128xf32>
    tpu.vector_store %arg7[%c352_785, %c0_786], %490 {strides = array<i32>} : memref<544x256xf32, #tpu.memory_space<vmem>>, vector<16x128xf32>,
    %c0_787 = arith.constant 0 : index
    %c263_788 = arith.constant 263 : index
    %492 = vector.load %arg6[%c0_787, %c263_788] : memref<16x896xf32, #tpu.memory_space<vmem>>, vector<16x128xf32>
    %c368_789 = arith.constant 368 : index
    %c0_790 = arith.constant 0 : index
    %493 = vector.load %arg7[%c368_789, %c0_790] : memref<544x256xf32, #tpu.memory_space<vmem>>, vector<16x128xf32>
    tpu.vector_store %arg7[%c368_789, %c0_790], %492 {strides = array<i32>} : memref<544x256xf32, #tpu.memory_space<vmem>>, vector<16x128xf32>,
    %c0_791 = arith.constant 0 : index
    %c264_792 = arith.constant 264 : index
    %494 = vector.load %arg6[%c0_791, %c264_792] : memref<16x896xf32, #tpu.memory_space<vmem>>, vector<16x128xf32>
    %c384_793 = arith.constant 384 : index
    %c0_794 = arith.constant 0 : index
    %495 = vector.load %arg7[%c384_793, %c0_794] : memref<544x256xf32, #tpu.memory_space<vmem>>, vector<16x128xf32>
    tpu.vector_store %arg7[%c384_793, %c0_794], %494 {strides = array<i32>} : memref<544x256xf32, #tpu.memory_space<vmem>>, vector<16x128xf32>,
    %c0_795 = arith.constant 0 : index
    %c265_796 = arith.constant 265 : index
    %496 = vector.load %arg6[%c0_795, %c265_796] : memref<16x896xf32, #tpu.memory_space<vmem>>, vector<16x128xf32>
    %c400_797 = arith.constant 400 : index
    %c0_798 = arith.constant 0 : index
    %497 = vector.load %arg7[%c400_797, %c0_798] : memref<544x256xf32, #tpu.memory_space<vmem>>, vector<16x128xf32>
    tpu.vector_store %arg7[%c400_797, %c0_798], %496 {strides = array<i32>} : memref<544x256xf32, #tpu.memory_space<vmem>>, vector<16x128xf32>,
    %c0_799 = arith.constant 0 : index
    %c266_800 = arith.constant 266 : index
    %498 = vector.load %arg6[%c0_799, %c266_800] : memref<16x896xf32, #tpu.memory_space<vmem>>, vector<16x128xf32>
    %c416_801 = arith.constant 416 : index
    %c0_802 = arith.constant 0 : index
    %499 = vector.load %arg7[%c416_801, %c0_802] : memref<544x256xf32, #tpu.memory_space<vmem>>, vector<16x128xf32>
    tpu.vector_store %arg7[%c416_801, %c0_802], %498 {strides = array<i32>} : memref<544x256xf32, #tpu.memory_space<vmem>>, vector<16x128xf32>,
    %c0_803 = arith.constant 0 : index
    %c267_804 = arith.constant 267 : index
    %500 = vector.load %arg6[%c0_803, %c267_804] : memref<16x896xf32, #tpu.memory_space<vmem>>, vector<16x128xf32>
    %c432_805 = arith.constant 432 : index
    %c0_806 = arith.constant 0 : index
    %501 = vector.load %arg7[%c432_805, %c0_806] : memref<544x256xf32, #tpu.memory_space<vmem>>, vector<16x128xf32>
    tpu.vector_store %arg7[%c432_805, %c0_806], %500 {strides = array<i32>} : memref<544x256xf32, #tpu.memory_space<vmem>>, vector<16x128xf32>,
    %c0_807 = arith.constant 0 : index
    %c268_808 = arith.constant 268 : index
    %502 = vector.load %arg6[%c0_807, %c268_808] : memref<16x896xf32, #tpu.memory_space<vmem>>, vector<16x128xf32>
    %c448_809 = arith.constant 448 : index
    %c0_810 = arith.constant 0 : index
    %503 = vector.load %arg7[%c448_809, %c0_810] : memref<544x256xf32, #tpu.memory_space<vmem>>, vector<16x128xf32>
    tpu.vector_store %arg7[%c448_809, %c0_810], %502 {strides = array<i32>} : memref<544x256xf32, #tpu.memory_space<vmem>>, vector<16x128xf32>,
    %c0_811 = arith.constant 0 : index
    %c269_812 = arith.constant 269 : index
    %504 = vector.load %arg6[%c0_811, %c269_812] : memref<16x896xf32, #tpu.memory_space<vmem>>, vector<16x128xf32>
    %c464_813 = arith.constant 464 : index
    %c0_814 = arith.constant 0 : index
    %505 = vector.load %arg7[%c464_813, %c0_814] : memref<544x256xf32, #tpu.memory_space<vmem>>, vector<16x128xf32>
    tpu.vector_store %arg7[%c464_813, %c0_814], %504 {strides = array<i32>} : memref<544x256xf32, #tpu.memory_space<vmem>>, vector<16x128xf32>,
    %c0_815 = arith.constant 0 : index
    %c270_816 = arith.constant 270 : index
    %506 = vector.load %arg6[%c0_815, %c270_816] : memref<16x896xf32, #tpu.memory_space<vmem>>, vector<16x128xf32>
    %c480_817 = arith.constant 480 : index
    %c0_818 = arith.constant 0 : index
    %507 = vector.load %arg7[%c480_817, %c0_818] : memref<544x256xf32, #tpu.memory_space<vmem>>, vector<16x128xf32>
    tpu.vector_store %arg7[%c480_817, %c0_818], %506 {strides = array<i32>} : memref<544x256xf32, #tpu.memory_space<vmem>>, vector<16x128xf32>,
    %c0_819 = arith.constant 0 : index
    %c271_820 = arith.constant 271 : index
    %508 = vector.load %arg6[%c0_819, %c271_820] : memref<16x896xf32, #tpu.memory_space<vmem>>, vector<16x128xf32>
    %c496_821 = arith.constant 496 : index
    %c0_822 = arith.constant 0 : index
    %509 = vector.load %arg7[%c496_821, %c0_822] : memref<544x256xf32, #tpu.memory_space<vmem>>, vector<16x128xf32>
    tpu.vector_store %arg7[%c496_821, %c0_822], %508 {strides = array<i32>} : memref<544x256xf32, #tpu.memory_space<vmem>>, vector<16x128xf32>,
    %c0_823 = arith.constant 0 : index
    %c272_824 = arith.constant 272 : index
    %510 = vector.load %arg6[%c0_823, %c272_824] : memref<16x896xf32, #tpu.memory_space<vmem>>, vector<16x128xf32>
    %c512_825 = arith.constant 512 : index
    %c0_826 = arith.constant 0 : index
    %511 = vector.load %arg7[%c512_825, %c0_826] : memref<544x256xf32, #tpu.memory_space<vmem>>, vector<16x128xf32>
    tpu.vector_store %arg7[%c512_825, %c0_826], %510 {strides = array<i32>} : memref<544x256xf32, #tpu.memory_space<vmem>>, vector<16x128xf32>,
    %c0_827 = arith.constant 0 : index
    %c624_828 = arith.constant 624 : index
    %512 = vector.load %arg6[%c0_827, %c624_828] : memref<16x896xf32, #tpu.memory_space<vmem>>, vector<16x128xf32>
    %c0_829 = arith.constant 0 : index
    %c128_830 = arith.constant 128 : index
    %513 = vector.load %arg7[%c0_829, %c128_830] : memref<544x256xf32, #tpu.memory_space<vmem>>, vector<16x128xf32>
    tpu.vector_store %arg7[%c0_829, %c128_830], %512 {strides = array<i32>} : memref<544x256xf32, #tpu.memory_space<vmem>>, vector<16x128xf32>,
    %c0_831 = arith.constant 0 : index
    %c625_832 = arith.constant 625 : index
    %514 = vector.load %arg6[%c0_831, %c625_832] : memref<16x896xf32, #tpu.memory_space<vmem>>, vector<16x128xf32>
    %c16_833 = arith.constant 16 : index
    %c128_834 = arith.constant 128 : index
    %515 = vector.load %arg7[%c16_833, %c128_834] : memref<544x256xf32, #tpu.memory_space<vmem>>, vector<16x128xf32>
    tpu.vector_store %arg7[%c16_833, %c128_834], %514 {strides = array<i32>} : memref<544x256xf32, #tpu.memory_space<vmem>>, vector<16x128xf32>,
    %c0_835 = arith.constant 0 : index
    %c626_836 = arith.constant 626 : index
    %516 = vector.load %arg6[%c0_835, %c626_836] : memref<16x896xf32, #tpu.memory_space<vmem>>, vector<16x128xf32>
    %c32_837 = arith.constant 32 : index
    %c128_838 = arith.constant 128 : index
    %517 = vector.load %arg7[%c32_837, %c128_838] : memref<544x256xf32, #tpu.memory_space<vmem>>, vector<16x128xf32>
    tpu.vector_store %arg7[%c32_837, %c128_838], %516 {strides = array<i32>} : memref<544x256xf32, #tpu.memory_space<vmem>>, vector<16x128xf32>,
    %c0_839 = arith.constant 0 : index
    %c627_840 = arith.constant 627 : index
    %518 = vector.load %arg6[%c0_839, %c627_840] : memref<16x896xf32, #tpu.memory_space<vmem>>, vector<16x128xf32>
    %c48_841 = arith.constant 48 : index
    %c128_842 = arith.constant 128 : index
    %519 = vector.load %arg7[%c48_841, %c128_842] : memref<544x256xf32, #tpu.memory_space<vmem>>, vector<16x128xf32>
    tpu.vector_store %arg7[%c48_841, %c128_842], %518 {strides = array<i32>} : memref<544x256xf32, #tpu.memory_space<vmem>>, vector<16x128xf32>,
    %c0_843 = arith.constant 0 : index
    %c628_844 = arith.constant 628 : index
    %520 = vector.load %arg6[%c0_843, %c628_844] : memref<16x896xf32, #tpu.memory_space<vmem>>, vector<16x128xf32>
    %c64_845 = arith.constant 64 : index
    %c128_846 = arith.constant 128 : index
    %521 = vector.load %arg7[%c64_845, %c128_846] : memref<544x256xf32, #tpu.memory_space<vmem>>, vector<16x128xf32>
    tpu.vector_store %arg7[%c64_845, %c128_846], %520 {strides = array<i32>} : memref<544x256xf32, #tpu.memory_space<vmem>>, vector<16x128xf32>,
    %c0_847 = arith.constant 0 : index
    %c629_848 = arith.constant 629 : index
    %522 = vector.load %arg6[%c0_847, %c629_848] : memref<16x896xf32, #tpu.memory_space<vmem>>, vector<16x128xf32>
    %c80_849 = arith.constant 80 : index
    %c128_850 = arith.constant 128 : index
    %523 = vector.load %arg7[%c80_849, %c128_850] : memref<544x256xf32, #tpu.memory_space<vmem>>, vector<16x128xf32>
    tpu.vector_store %arg7[%c80_849, %c128_850], %522 {strides = array<i32>} : memref<544x256xf32, #tpu.memory_space<vmem>>, vector<16x128xf32>,
    %c0_851 = arith.constant 0 : index
    %c630_852 = arith.constant 630 : index
    %524 = vector.load %arg6[%c0_851, %c630_852] : memref<16x896xf32, #tpu.memory_space<vmem>>, vector<16x128xf32>
    %c96_853 = arith.constant 96 : index
    %c128_854 = arith.constant 128 : index
    %525 = vector.load %arg7[%c96_853, %c128_854] : memref<544x256xf32, #tpu.memory_space<vmem>>, vector<16x128xf32>
    tpu.vector_store %arg7[%c96_853, %c128_854], %524 {strides = array<i32>} : memref<544x256xf32, #tpu.memory_space<vmem>>, vector<16x128xf32>,
    %c0_855 = arith.constant 0 : index
    %c631_856 = arith.constant 631 : index
    %526 = vector.load %arg6[%c0_855, %c631_856] : memref<16x896xf32, #tpu.memory_space<vmem>>, vector<16x128xf32>
    %c112_857 = arith.constant 112 : index
    %c128_858 = arith.constant 128 : index
    %527 = vector.load %arg7[%c112_857, %c128_858] : memref<544x256xf32, #tpu.memory_space<vmem>>, vector<16x128xf32>
    tpu.vector_store %arg7[%c112_857, %c128_858], %526 {strides = array<i32>} : memref<544x256xf32, #tpu.memory_space<vmem>>, vector<16x128xf32>,
    %c0_859 = arith.constant 0 : index
    %c632_860 = arith.constant 632 : index
    %528 = vector.load %arg6[%c0_859, %c632_860] : memref<16x896xf32, #tpu.memory_space<vmem>>, vector<16x128xf32>
    %c128_861 = arith.constant 128 : index
    %c128_862 = arith.constant 128 : index
    %529 = vector.load %arg7[%c128_861, %c128_862] : memref<544x256xf32, #tpu.memory_space<vmem>>, vector<16x128xf32>
    tpu.vector_store %arg7[%c128_861, %c128_862], %528 {strides = array<i32>} : memref<544x256xf32, #tpu.memory_space<vmem>>, vector<16x128xf32>,
    %c0_863 = arith.constant 0 : index
    %c633_864 = arith.constant 633 : index
    %530 = vector.load %arg6[%c0_863, %c633_864] : memref<16x896xf32, #tpu.memory_space<vmem>>, vector<16x128xf32>
    %c144_865 = arith.constant 144 : index
    %c128_866 = arith.constant 128 : index
    %531 = vector.load %arg7[%c144_865, %c128_866] : memref<544x256xf32, #tpu.memory_space<vmem>>, vector<16x128xf32>
    tpu.vector_store %arg7[%c144_865, %c128_866], %530 {strides = array<i32>} : memref<544x256xf32, #tpu.memory_space<vmem>>, vector<16x128xf32>,
    %c0_867 = arith.constant 0 : index
    %c634_868 = arith.constant 634 : index
    %532 = vector.load %arg6[%c0_867, %c634_868] : memref<16x896xf32, #tpu.memory_space<vmem>>, vector<16x128xf32>
    %c160_869 = arith.constant 160 : index
    %c128_870 = arith.constant 128 : index
    %533 = vector.load %arg7[%c160_869, %c128_870] : memref<544x256xf32, #tpu.memory_space<vmem>>, vector<16x128xf32>
    tpu.vector_store %arg7[%c160_869, %c128_870], %532 {strides = array<i32>} : memref<544x256xf32, #tpu.memory_space<vmem>>, vector<16x128xf32>,
    %c0_871 = arith.constant 0 : index
    %c635_872 = arith.constant 635 : index
    %534 = vector.load %arg6[%c0_871, %c635_872] : memref<16x896xf32, #tpu.memory_space<vmem>>, vector<16x128xf32>
    %c176_873 = arith.constant 176 : index
    %c128_874 = arith.constant 128 : index
    %535 = vector.load %arg7[%c176_873, %c128_874] : memref<544x256xf32, #tpu.memory_space<vmem>>, vector<16x128xf32>
    tpu.vector_store %arg7[%c176_873, %c128_874], %534 {strides = array<i32>} : memref<544x256xf32, #tpu.memory_space<vmem>>, vector<16x128xf32>,
    %c0_875 = arith.constant 0 : index
    %c636_876 = arith.constant 636 : index
    %536 = vector.load %arg6[%c0_875, %c636_876] : memref<16x896xf32, #tpu.memory_space<vmem>>, vector<16x128xf32>
    %c192_877 = arith.constant 192 : index
    %c128_878 = arith.constant 128 : index
    %537 = vector.load %arg7[%c192_877, %c128_878] : memref<544x256xf32, #tpu.memory_space<vmem>>, vector<16x128xf32>
    tpu.vector_store %arg7[%c192_877, %c128_878], %536 {strides = array<i32>} : memref<544x256xf32, #tpu.memory_space<vmem>>, vector<16x128xf32>,
    %c0_879 = arith.constant 0 : index
    %c637_880 = arith.constant 637 : index
    %538 = vector.load %arg6[%c0_879, %c637_880] : memref<16x896xf32, #tpu.memory_space<vmem>>, vector<16x128xf32>
    %c208_881 = arith.constant 208 : index
    %c128_882 = arith.constant 128 : index
    %539 = vector.load %arg7[%c208_881, %c128_882] : memref<544x256xf32, #tpu.memory_space<vmem>>, vector<16x128xf32>
    tpu.vector_store %arg7[%c208_881, %c128_882], %538 {strides = array<i32>} : memref<544x256xf32, #tpu.memory_space<vmem>>, vector<16x128xf32>,
    %c0_883 = arith.constant 0 : index
    %c638_884 = arith.constant 638 : index
    %540 = vector.load %arg6[%c0_883, %c638_884] : memref<16x896xf32, #tpu.memory_space<vmem>>, vector<16x128xf32>
    %c224_885 = arith.constant 224 : index
    %c128_886 = arith.constant 128 : index
    %541 = vector.load %arg7[%c224_885, %c128_886] : memref<544x256xf32, #tpu.memory_space<vmem>>, vector<16x128xf32>
    tpu.vector_store %arg7[%c224_885, %c128_886], %540 {strides = array<i32>} : memref<544x256xf32, #tpu.memory_space<vmem>>, vector<16x128xf32>,
    %c0_887 = arith.constant 0 : index
    %c639_888 = arith.constant 639 : index
    %542 = vector.load %arg6[%c0_887, %c639_888] : memref<16x896xf32, #tpu.memory_space<vmem>>, vector<16x128xf32>
    %c240_889 = arith.constant 240 : index
    %c128_890 = arith.constant 128 : index
    %543 = vector.load %arg7[%c240_889, %c128_890] : memref<544x256xf32, #tpu.memory_space<vmem>>, vector<16x128xf32>
    tpu.vector_store %arg7[%c240_889, %c128_890], %542 {strides = array<i32>} : memref<544x256xf32, #tpu.memory_space<vmem>>, vector<16x128xf32>,
    %c0_891 = arith.constant 0 : index
    %c640_892 = arith.constant 640 : index
    %544 = vector.load %arg6[%c0_891, %c640_892] : memref<16x896xf32, #tpu.memory_space<vmem>>, vector<16x128xf32>
    %c256_893 = arith.constant 256 : index
    %c128_894 = arith.constant 128 : index
    %545 = vector.load %arg7[%c256_893, %c128_894] : memref<544x256xf32, #tpu.memory_space<vmem>>, vector<16x128xf32>
    tpu.vector_store %arg7[%c256_893, %c128_894], %544 {strides = array<i32>} : memref<544x256xf32, #tpu.memory_space<vmem>>, vector<16x128xf32>,
    %c0_895 = arith.constant 0 : index
    %c641_896 = arith.constant 641 : index
    %546 = vector.load %arg6[%c0_895, %c641_896] : memref<16x896xf32, #tpu.memory_space<vmem>>, vector<16x128xf32>
    %c272_897 = arith.constant 272 : index
    %c128_898 = arith.constant 128 : index
    %547 = vector.load %arg7[%c272_897, %c128_898] : memref<544x256xf32, #tpu.memory_space<vmem>>, vector<16x128xf32>
    tpu.vector_store %arg7[%c272_897, %c128_898], %546 {strides = array<i32>} : memref<544x256xf32, #tpu.memory_space<vmem>>, vector<16x128xf32>,
    %c0_899 = arith.constant 0 : index
    %c642_900 = arith.constant 642 : index
    %548 = vector.load %arg6[%c0_899, %c642_900] : memref<16x896xf32, #tpu.memory_space<vmem>>, vector<16x128xf32>
    %c288_901 = arith.constant 288 : index
    %c128_902 = arith.constant 128 : index
    %549 = vector.load %arg7[%c288_901, %c128_902] : memref<544x256xf32, #tpu.memory_space<vmem>>, vector<16x128xf32>
    tpu.vector_store %arg7[%c288_901, %c128_902], %548 {strides = array<i32>} : memref<544x256xf32, #tpu.memory_space<vmem>>, vector<16x128xf32>,
    %c0_903 = arith.constant 0 : index
    %c643_904 = arith.constant 643 : index
    %550 = vector.load %arg6[%c0_903, %c643_904] : memref<16x896xf32, #tpu.memory_space<vmem>>, vector<16x128xf32>
    %c304_905 = arith.constant 304 : index
    %c128_906 = arith.constant 128 : index
    %551 = vector.load %arg7[%c304_905, %c128_906] : memref<544x256xf32, #tpu.memory_space<vmem>>, vector<16x128xf32>
    tpu.vector_store %arg7[%c304_905, %c128_906], %550 {strides = array<i32>} : memref<544x256xf32, #tpu.memory_space<vmem>>, vector<16x128xf32>,
    %c0_907 = arith.constant 0 : index
    %c644_908 = arith.constant 644 : index
    %552 = vector.load %arg6[%c0_907, %c644_908] : memref<16x896xf32, #tpu.memory_space<vmem>>, vector<16x128xf32>
    %c320_909 = arith.constant 320 : index
    %c128_910 = arith.constant 128 : index
    %553 = vector.load %arg7[%c320_909, %c128_910] : memref<544x256xf32, #tpu.memory_space<vmem>>, vector<16x128xf32>
    tpu.vector_store %arg7[%c320_909, %c128_910], %552 {strides = array<i32>} : memref<544x256xf32, #tpu.memory_space<vmem>>, vector<16x128xf32>,
    %c0_911 = arith.constant 0 : index
    %c645_912 = arith.constant 645 : index
    %554 = vector.load %arg6[%c0_911, %c645_912] : memref<16x896xf32, #tpu.memory_space<vmem>>, vector<16x128xf32>
    %c336_913 = arith.constant 336 : index
    %c128_914 = arith.constant 128 : index
    %555 = vector.load %arg7[%c336_913, %c128_914] : memref<544x256xf32, #tpu.memory_space<vmem>>, vector<16x128xf32>
    tpu.vector_store %arg7[%c336_913, %c128_914], %554 {strides = array<i32>} : memref<544x256xf32, #tpu.memory_space<vmem>>, vector<16x128xf32>,
    %c0_915 = arith.constant 0 : index
    %c646_916 = arith.constant 646 : index
    %556 = vector.load %arg6[%c0_915, %c646_916] : memref<16x896xf32, #tpu.memory_space<vmem>>, vector<16x128xf32>
    %c352_917 = arith.constant 352 : index
    %c128_918 = arith.constant 128 : index
    %557 = vector.load %arg7[%c352_917, %c128_918] : memref<544x256xf32, #tpu.memory_space<vmem>>, vector<16x128xf32>
    tpu.vector_store %arg7[%c352_917, %c128_918], %556 {strides = array<i32>} : memref<544x256xf32, #tpu.memory_space<vmem>>, vector<16x128xf32>,
    %c0_919 = arith.constant 0 : index
    %c647_920 = arith.constant 647 : index
    %558 = vector.load %arg6[%c0_919, %c647_920] : memref<16x896xf32, #tpu.memory_space<vmem>>, vector<16x128xf32>
    %c368_921 = arith.constant 368 : index
    %c128_922 = arith.constant 128 : index
    %559 = vector.load %arg7[%c368_921, %c128_922] : memref<544x256xf32, #tpu.memory_space<vmem>>, vector<16x128xf32>
    tpu.vector_store %arg7[%c368_921, %c128_922], %558 {strides = array<i32>} : memref<544x256xf32, #tpu.memory_space<vmem>>, vector<16x128xf32>,
    %c0_923 = arith.constant 0 : index
    %c648_924 = arith.constant 648 : index
    %560 = vector.load %arg6[%c0_923, %c648_924] : memref<16x896xf32, #tpu.memory_space<vmem>>, vector<16x128xf32>
    %c384_925 = arith.constant 384 : index
    %c128_926 = arith.constant 128 : index
    %561 = vector.load %arg7[%c384_925, %c128_926] : memref<544x256xf32, #tpu.memory_space<vmem>>, vector<16x128xf32>
    tpu.vector_store %arg7[%c384_925, %c128_926], %560 {strides = array<i32>} : memref<544x256xf32, #tpu.memory_space<vmem>>, vector<16x128xf32>,
    %c0_927 = arith.constant 0 : index
    %c649_928 = arith.constant 649 : index
    %562 = vector.load %arg6[%c0_927, %c649_928] : memref<16x896xf32, #tpu.memory_space<vmem>>, vector<16x128xf32>
    %c400_929 = arith.constant 400 : index
    %c128_930 = arith.constant 128 : index
    %563 = vector.load %arg7[%c400_929, %c128_930] : memref<544x256xf32, #tpu.memory_space<vmem>>, vector<16x128xf32>
    tpu.vector_store %arg7[%c400_929, %c128_930], %562 {strides = array<i32>} : memref<544x256xf32, #tpu.memory_space<vmem>>, vector<16x128xf32>,
    %c0_931 = arith.constant 0 : index
    %c650_932 = arith.constant 650 : index
    %564 = vector.load %arg6[%c0_931, %c650_932] : memref<16x896xf32, #tpu.memory_space<vmem>>, vector<16x128xf32>
    %c416_933 = arith.constant 416 : index
    %c128_934 = arith.constant 128 : index
    %565 = vector.load %arg7[%c416_933, %c128_934] : memref<544x256xf32, #tpu.memory_space<vmem>>, vector<16x128xf32>
    tpu.vector_store %arg7[%c416_933, %c128_934], %564 {strides = array<i32>} : memref<544x256xf32, #tpu.memory_space<vmem>>, vector<16x128xf32>,
    %c0_935 = arith.constant 0 : index
    %c651_936 = arith.constant 651 : index
    %566 = vector.load %arg6[%c0_935, %c651_936] : memref<16x896xf32, #tpu.memory_space<vmem>>, vector<16x128xf32>
    %c432_937 = arith.constant 432 : index
    %c128_938 = arith.constant 128 : index
    %567 = vector.load %arg7[%c432_937, %c128_938] : memref<544x256xf32, #tpu.memory_space<vmem>>, vector<16x128xf32>
    tpu.vector_store %arg7[%c432_937, %c128_938], %566 {strides = array<i32>} : memref<544x256xf32, #tpu.memory_space<vmem>>, vector<16x128xf32>,
    %c0_939 = arith.constant 0 : index
    %c652_940 = arith.constant 652 : index
    %568 = vector.load %arg6[%c0_939, %c652_940] : memref<16x896xf32, #tpu.memory_space<vmem>>, vector<16x128xf32>
    %c448_941 = arith.constant 448 : index
    %c128_942 = arith.constant 128 : index
    %569 = vector.load %arg7[%c448_941, %c128_942] : memref<544x256xf32, #tpu.memory_space<vmem>>, vector<16x128xf32>
    tpu.vector_store %arg7[%c448_941, %c128_942], %568 {strides = array<i32>} : memref<544x256xf32, #tpu.memory_space<vmem>>, vector<16x128xf32>,
    %c0_943 = arith.constant 0 : index
    %c653_944 = arith.constant 653 : index
    %570 = vector.load %arg6[%c0_943, %c653_944] : memref<16x896xf32, #tpu.memory_space<vmem>>, vector<16x128xf32>
    %c464_945 = arith.constant 464 : index
    %c128_946 = arith.constant 128 : index
    %571 = vector.load %arg7[%c464_945, %c128_946] : memref<544x256xf32, #tpu.memory_space<vmem>>, vector<16x128xf32>
    tpu.vector_store %arg7[%c464_945, %c128_946], %570 {strides = array<i32>} : memref<544x256xf32, #tpu.memory_space<vmem>>, vector<16x128xf32>,
    %c0_947 = arith.constant 0 : index
    %c654_948 = arith.constant 654 : index
    %572 = vector.load %arg6[%c0_947, %c654_948] : memref<16x896xf32, #tpu.memory_space<vmem>>, vector<16x128xf32>
    %c480_949 = arith.constant 480 : index
    %c128_950 = arith.constant 128 : index
    %573 = vector.load %arg7[%c480_949, %c128_950] : memref<544x256xf32, #tpu.memory_space<vmem>>, vector<16x128xf32>
    tpu.vector_store %arg7[%c480_949, %c128_950], %572 {strides = array<i32>} : memref<544x256xf32, #tpu.memory_space<vmem>>, vector<16x128xf32>,
    %c0_951 = arith.constant 0 : index
    %c655_952 = arith.constant 655 : index
    %574 = vector.load %arg6[%c0_951, %c655_952] : memref<16x896xf32, #tpu.memory_space<vmem>>, vector<16x128xf32>
    %c496_953 = arith.constant 496 : index
    %c128_954 = arith.constant 128 : index
    %575 = vector.load %arg7[%c496_953, %c128_954] : memref<544x256xf32, #tpu.memory_space<vmem>>, vector<16x128xf32>
    tpu.vector_store %arg7[%c496_953, %c128_954], %574 {strides = array<i32>} : memref<544x256xf32, #tpu.memory_space<vmem>>, vector<16x128xf32>,
    %c0_955 = arith.constant 0 : index
    %c656_956 = arith.constant 656 : index
    %576 = vector.load %arg6[%c0_955, %c656_956] : memref<16x896xf32, #tpu.memory_space<vmem>>, vector<16x128xf32>
    %c512_957 = arith.constant 512 : index
    %c128_958 = arith.constant 128 : index
    %577 = vector.load %arg7[%c512_957, %c128_958] : memref<544x256xf32, #tpu.memory_space<vmem>>, vector<16x128xf32>
    tpu.vector_store %arg7[%c512_957, %c128_958], %576 {strides = array<i32>} : memref<544x256xf32, #tpu.memory_space<vmem>>, vector<16x128xf32>,
    %c0_959 = arith.constant 0 : index
    %c0_960 = arith.constant 0 : index
    %578 = vector.load %arg3[%c0_959, %c0_960] : memref<16x544xf32, #tpu.memory_space<vmem>>, vector<16x544xf32>
    %c0_961 = arith.constant 0 : index
    %c0_962 = arith.constant 0 : index
    %579 = vector.load %arg7[%c0_961, %c0_962] : memref<544x256xf32, #tpu.memory_space<vmem>>, vector<544x256xf32>
    %cst_963 = arith.constant dense<0.000000e+00> : vector<16x256xf32>
    %580 = tpu.matmul %578, %579, %cst_963 {dimension_numbers = #tpu.dot_dimension_numbers<[1], [0], [0], [1], [0, 0, 1, 1], [], []>} : vector<16x544xf32>, vector<544x256xf32>, vector<16x256xf32> -> vector<16x256xf32>
    %c0_964 = arith.constant 0 : index
    %c0_965 = arith.constant 0 : index
    %c128_966 = arith.constant 128 : index
    %581 = vector.load %arg1[%c0_964, %c0_965, %c128_966] : memref<2x16x256xf32, #tpu.memory_space<vmem>>, vector<1x16x128xf32>
    %582 = vector.shape_cast %581 : vector<1x16x128xf32> to vector<16x128xf32>
    %583 = vector.extract_strided_slice %580 {offsets = [0, 0], sizes = [16, 128], strides = [1, 1]} : vector<16x256xf32> to vector<16x128xf32>
    %584 = arith.addf %583, %582 : vector<16x128xf32>
    %c0_967 = arith.constant 0 : index
    %c0_968 = arith.constant 0 : index
    %c128_969 = arith.constant 128 : index
    %585 = vector.load %arg4[%c0_967, %c0_968, %c128_969] : memref<2x16x256xf32, #tpu.memory_space<vmem>>, vector<1x16x128xf32>
    %586 = vector.shape_cast %585 : vector<1x16x128xf32> to vector<16x128xf32>
    %587 = vector.shape_cast %584 : vector<16x128xf32> to vector<1x16x128xf32>
    tpu.vector_store %arg4[%c0_967, %c0_968, %c128_969], %587 {strides = array<i32>} : memref<2x16x256xf32, #tpu.memory_space<vmem>>, vector<1x16x128xf32>,
    %c1_970 = arith.constant 1 : index
    %c0_971 = arith.constant 0 : index
    %c128_972 = arith.constant 128 : index
    %588 = vector.load %arg1[%c1_970, %c0_971, %c128_972] : memref<2x16x256xf32, #tpu.memory_space<vmem>>, vector<1x16x128xf32>
    %589 = vector.shape_cast %588 : vector<1x16x128xf32> to vector<16x128xf32>
    %590 = vector.extract_strided_slice %580 {offsets = [0, 128], sizes = [16, 128], strides = [1, 1]} : vector<16x256xf32> to vector<16x128xf32>
    %591 = arith.addf %590, %589 : vector<16x128xf32>
    %c1_973 = arith.constant 1 : index
    %c0_974 = arith.constant 0 : index
    %c128_975 = arith.constant 128 : index
    %592 = vector.load %arg4[%c1_973, %c0_974, %c128_975] : memref<2x16x256xf32, #tpu.memory_space<vmem>>, vector<1x16x128xf32>
    %593 = vector.shape_cast %592 : vector<1x16x128xf32> to vector<16x128xf32>
    %594 = vector.shape_cast %591 : vector<16x128xf32> to vector<1x16x128xf32>
    tpu.vector_store %arg4[%c1_973, %c0_974, %c128_975], %594 {strides = array<i32>} : memref<2x16x256xf32, #tpu.memory_space<vmem>>, vector<1x16x128xf32>,
    return
  }
  func.func @transform_0(%arg0: i32) -> (i32, i32, i32) {
    %c0_i32 = arith.constant 0 : i32
    %c0_i32_0 = arith.constant 0 : i32
    %c0_i32_1 = arith.constant 0 : i32
    return %arg0, %c0_i32, %c0_i32_0 : i32, i32, i32
  }
  func.func @transform_1(%arg0: i32) -> (i32, i32) {
    %c0_i32 = arith.constant 0 : i32
    %c0_i32_0 = arith.constant 0 : i32
    %c0_i32_1 = arith.constant 0 : i32
    return %c0_i32, %c0_i32_0 : i32, i32
  }
  func.func @transform_2(%arg0: i32) -> (i32, i32) {
    %c0_i32 = arith.constant 0 : i32
    %c0_i32_0 = arith.constant 0 : i32
    %c0_i32_1 = arith.constant 0 : i32
    return %c0_i32, %c0_i32_0 : i32, i32
  }
  func.func @transform_3(%arg0: i32) -> (i32, i32, i32) {
    %c0_i32 = arith.constant 0 : i32
    %c0_i32_0 = arith.constant 0 : i32
    %c0_i32_1 = arith.constant 0 : i32
    return %arg0, %c0_i32, %c0_i32_0 : i32, i32, i32
  }
}

</mosaic_0001>

<llo_original>
// kernel: residual_block.1
$region0: #{residual_block.1}
  #allocation0 [shape = 'u32[]', space=smem, size = 0x4, offset = 0x4, fixed_abs, tag = 'smem constant byte address 0x4 - core index']
  #allocation1 [shape = 'u32[144,128]{1,0:T(1,128)}', space=vmem, size = 0x12000, scoped, tag = 'internal scratch']
  #allocation2 [shape = 'f32[16,896]{1,0:T(8,128)}', space=vmem, size = 0xe000, scoped, tag = 'scratch operand']
  #allocation3 [shape = 'f32[16,896]{1,0:T(8,128)}', space=vmem, size = 0xe000, scoped, tag = 'scratch operand']
  #allocation4 [shape = 'f32[544,256]{1,0:T(8,128)}', space=vmem, size = 0x88000, scoped, tag = 'scratch operand']
  %s0 = inlined_call_operand.hbm [shape: f32[4,16,256], index: 0, kind: input, shape index: {}]
  %s1 = inlined_call_operand.hbm [shape: f32[16,544], index: 1, kind: input, shape index: {}]
  %s2 = inlined_call_operand.hbm [shape: f32[16,544], index: 2, kind: input, shape index: {}]
  %s3 = inlined_call_operand.hbm [shape: f32[4,16,256], index: 3, kind: output, shape index: {}]
  %s4 = sld [smem:[#allocation0]]
  $region57: #{residual_block.1} parent=0
    _
  %s6 = ssub.s32 1, %s4
  %s7 = scalar_select 0, %s6, %s4
  $region1: #{residual_block.1} parent=0
    #allocation5 [shape = 'u8[65536]{0}', space=vmem, size = 0x10000, scoped, tag = 'input window, operand 0']
    #allocation6 [shape = 's32[2]{0}', space=sflag, size = 0x8, scoped, tag = 'scoped memory for residual_block.1']
    #allocation7 [shape = 's32[2]{0}', space=sflag, size = 0x8, scoped, tag = 'scoped memory for residual_block.1']
    #allocation8 [shape = 'u8[40960]{0}', space=vmem, size = 0xa000, scoped, tag = 'input window, operand 1, single buffered']
    #allocation9 [shape = 's32[1]{0}', space=sflag, size = 0x4, scoped, tag = 'scoped memory for residual_block.1']
    #allocation10 [shape = 'u8[40960]{0}', space=vmem, size = 0xa000, scoped, tag = 'input window, operand 2, single buffered']
    #allocation11 [shape = 'u8[65536]{0}', space=vmem, size = 0x10000, scoped, tag = 'output window, operand 0']
    %8 = vsyncpa [#allocation6], 0
    %s9 = scalar_lea.sflag [#allocation6], 1
    %10 = vsyncpa %s9, 0
    %11 = vsyncpa [#allocation9], 0
    %12 = vsyncpa [#allocation7], 0
    %s13 = scalar_lea.sflag [#allocation7], 1
    %14 = vsyncpa %s13, 0
    loop: start=0, step=1, limit=4
    $region2: #{residual_block.1} parent=1 // loop_pre_header
      _
    $region3: #{residual_block.1} parent=1 // loop_header
      %s16 = sphi 0, %s20
      %p17 = scmp.ge.s32.totalorder %s16, 4
      %s26 = sphi 0, %s28
      %s29 = sphi 0, %s26
      %s30 = sphi 0, %s29
      %s46 = sphi 0, %s30
      %s50 = sphi 0, %s50
      %s52 = sphi 0, %s50
      %s53 = sphi 0, %s52
      %s67 = sphi 0, %s53
      %s71 = sphi 0, %s71
      %s73 = sphi 0, %s71
      %s74 = sphi 0, %s73
      %s88 = sphi 0, %s74
      %s94 = sphi 0, %s96
      %s97 = sphi 0, %s94
      %s98 = sphi 0, %s97
      %s114 = sphi 0, %s98
    $region4: #{residual_block.1} parent=1 // loop_header_branch
      %19 = sbr.rel (%p17) target = $region8
    $region5: #{residual_block.1} parent=1 // loop_body
      %s21 = ssub.s32 %s16, 1
      %s22 = ssub.s32 %s16, 2
      %s23 = sadd.s32 %s16, 1
      %s24 = ssub.s32 %s16, %s23
      %p25 = scmp.eq.s32.totalorder %s24, 0
      %s27 = sadd.s32 %s26, 1
      %s28 = scalar_select %p25, %s26, %s27
      %p31 = pneg %p25
      %p32 = scmp.eq.s32.totalorder %s16, 1
      %p33 = por %p31, %p32
      %p34 = scmp.ne.s32.totalorder %s26, %s29
      %p35 = scmp.eq.s32.totalorder %s16, 0
      %p36 = por %p34, %p35
      %p37 = scmp.ne.s32.totalorder %s26, %s29
      %p38 = scmp.eq.s32.totalorder %s21, 1
      %p39 = por %p37, %p38
      %p40 = scmp.ne.s32.totalorder %s29, %s30
      %p41 = scmp.eq.s32.totalorder %s21, 0
      %p42 = por %p40, %p41
      %p43 = scmp.ne.s32.totalorder %s29, %s30
      %p44 = scmp.eq.s32.totalorder %s22, 1
      %p45 = por %p43, %p44
      %p47 = scmp.ne.s32.totalorder %s30, %s46
      %p48 = scmp.eq.s32.totalorder %s22, 0
      %p49 = por %p47, %p48
      %s51 = sadd.s32 %s50, 1
      %p54 = scmp.eq.s32.totalorder %s16, 1
      %p55 = scmp.ne.s32.totalorder %s50, %s52
      %p56 = scmp.eq.s32.totalorder %s16, 0
      %p57 = por %p55, %p56
      %p58 = scmp.ne.s32.totalorder %s50, %s52
      %p59 = scmp.eq.s32.totalorder %s21, 1
      %p60 = por %p58, %p59
      %p61 = scmp.ne.s32.totalorder %s52, %s53
      %p62 = scmp.eq.s32.totalorder %s21, 0
      %p63 = por %p61, %p62
      %p64 = scmp.ne.s32.totalorder %s52, %s53
      %p65 = scmp.eq.s32.totalorder %s22, 1
      %p66 = por %p64, %p65
      %p68 = scmp.ne.s32.totalorder %s53, %s67
      %p69 = scmp.eq.s32.totalorder %s22, 0
      %p70 = por %p68, %p69
      %s72 = sadd.s32 %s71, 1
      %p75 = scmp.eq.s32.totalorder %s16, 1
      %p76 = scmp.ne.s32.totalorder %s71, %s73
      %p77 = scmp.eq.s32.totalorder %s16, 0
      %p78 = por %p76, %p77
      %p79 = scmp.ne.s32.totalorder %s71, %s73
      %p80 = scmp.eq.s32.totalorder %s21, 1
      %p81 = por %p79, %p80
      %p82 = scmp.ne.s32.totalorder %s73, %s74
      %p83 = scmp.eq.s32.totalorder %s21, 0
      %p84 = por %p82, %p83
      %p85 = scmp.ne.s32.totalorder %s73, %s74
      %p86 = scmp.eq.s32.totalorder %s22, 1
      %p87 = por %p85, %p86
      %p89 = scmp.ne.s32.totalorder %s74, %s88
      %p90 = scmp.eq.s32.totalorder %s22, 0
      %p91 = por %p89, %p90
      %s92 = ssub.s32 %s16, %s23
      %p93 = scmp.eq.s32.totalorder %s92, 0
      %s95 = sadd.s32 %s94, 1
      %s96 = scalar_select %p93, %s94, %s95
      %p99 = pneg %p93
      %p100 = scmp.eq.s32.totalorder %s16, 1
      %p101 = por %p99, %p100
      %p102 = scmp.ne.s32.totalorder %s94, %s97
      %p103 = scmp.eq.s32.totalorder %s16, 0
      %p104 = por %p102, %p103
      %p105 = scmp.ne.s32.totalorder %s94, %s97
      %p106 = scmp.eq.s32.totalorder %s21, 1
      %p107 = por %p105, %p106
      %p108 = scmp.ne.s32.totalorder %s97, %s98
      %p109 = scmp.eq.s32.totalorder %s21, 0
      %p110 = por %p108, %p109
      %p111 = scmp.ne.s32.totalorder %s97, %s98
      %p112 = scmp.eq.s32.totalorder %s22, 1
      %p113 = por %p111, %p112
      %p115 = scmp.ne.s32.totalorder %s98, %s114
      %p116 = scmp.eq.s32.totalorder %s22, 0
      %p117 = por %p115, %p116
      %p118 = scmp.le.s32.totalorder 1, %s16
      %p119 = scmp.lt.s32.totalorder %s16, 3
      %p120 = pnand %p118, %p119
      %p121 = pneg %p120
      // Predicated region
      $region9: #{residual_block.1} parent=5 // pred_check
        _
      $region10: #{residual_block.1} parent=5 // pred_check_branch
        %123 = sbr.rel (%p120) target = $region12
      $region11: #{residual_block.1} parent=5 // pred_region
        %s124 = ssub.s32 %s16, 1
        // Predicated region
        $region13: #{residual_block.1} parent=11 // pred_check
          %p125 = pneg %p63
        $region14: #{residual_block.1} parent=11 // pred_check_branch
          %127 = sbr.rel (%p125) target = $region16
        $region15: #{residual_block.1} parent=11 // pred_region
          %s129 = ssub.s32 1280, 1280
          %130 = vsyncadd [#allocation9], %s129
          %s131 = sshll.u32 [#allocation8], 4
          %s132 = int_to_ptr.vmem [resolvable:$true] %s131
          %137 = dma.hbm_to_vmem [thread:$0]  %s1, 1280, %s132, [#allocation9], 640, 640, 40
        $region16: #{residual_block.1} parent=11 // pred_fallthru
          _
        // Predicated region
        $region17: #{residual_block.1} parent=11 // pred_check
          %p138 = pneg %p84
        $region18: #{residual_block.1} parent=11 // pred_check_branch
          %140 = sbr.rel (%p138) target = $region20
        $region19: #{residual_block.1} parent=11 // pred_region
          %s142 = ssub.s32 1280, 1280
          %143 = vsyncadd [#allocation9], %s142
          %s144 = sshll.u32 [#allocation10], 4
          %s145 = int_to_ptr.vmem [resolvable:$true] %s144
          %150 = dma.hbm_to_vmem [thread:$0]  %s2, 1280, %s145, [#allocation9], 640, 640, 40
        $region20: #{residual_block.1} parent=11 // pred_fallthru
          _
      $region12: #{residual_block.1} parent=5 // pred_fallthru
        _
      %p151 = scmp.lt.s32.totalorder %s16, 2
      // Predicated region
      $region21: #{residual_block.1} parent=5 // pred_check
        %p152 = pneg %p151
      $region22: #{residual_block.1} parent=5 // pred_check_branch
        %154 = sbr.rel (%p152) target = $region24
      $region23: #{residual_block.1} parent=5 // pred_region
        // Predicated region
        $region25: #{residual_block.1} parent=23 // pred_check
          %p155 = pneg %p36
        $region26: #{residual_block.1} parent=23 // pred_check_branch
          %157 = sbr.rel (%p155) target = $region28
        $region27: #{residual_block.1} parent=23 // pred_region
          %s158 = sand.u32 %s26, 1
          %s159 = scalar_lea.sflag [#allocation6], %s158
          %s160 = sand.u32 %s26, 1
          %s161 = smul.addr %s160, 64
          %s162 = scalar_lea.vmem [#allocation5], %s161
          %s163 = smul.u32 2, %s16
          %s165 = ssub.s32 1024, 1024
          %166 = vsyncadd %s159, %s165
          %s167 = smul.addr %s163, 4
          %s168 = smul.addr %s167, 128
          %s169 = scalar_lea.hbm %s0, %s168
          %s170 = sshll.u32 %s162, 4
          %s171 = int_to_ptr.vmem [resolvable:$true] %s170
          %176 = dma.hbm_to_vmem [thread:$0]  %s169, 1024, %s171, %s159, 256, 256, 16
        $region28: #{residual_block.1} parent=23 // pred_fallthru
          _
      $region24: #{residual_block.1} parent=5 // pred_fallthru
        _
      %p177 = scmp.le.s32.totalorder 1, %s16
      %p178 = scmp.lt.s32.totalorder %s16, 3
      %p179 = pnand %p177, %p178
      %p180 = pneg %p179
      // Predicated region
      $region29: #{residual_block.1} parent=5 // pred_check
        _
      $region30: #{residual_block.1} parent=5 // pred_check_branch
        %182 = sbr.rel (%p179) target = $region32
      $region31: #{residual_block.1} parent=5 // pred_region
        %s183 = ssub.s32 %s16, 1
        %s184 = sand.u32 %s29, 1
        %s185 = scalar_lea.sflag [#allocation6], %s184
        %s186 = sand.u32 %s29, 1
        %s187 = smul.addr %s186, 64
        %s188 = scalar_lea.vmem [#allocation5], %s187
        // Predicated region
        $region33: #{residual_block.1} parent=31 // pred_check
          %p189 = pneg %p42
        $region34: #{residual_block.1} parent=31 // pred_check_branch
          %191 = sbr.rel (%p189) target = $region36
        $region35: #{residual_block.1} parent=31 // pred_region
          %192 = dma.done %s185, 1024
        $region36: #{residual_block.1} parent=31 // pred_fallthru
          _
        // Predicated region
        $region37: #{residual_block.1} parent=31 // pred_check
          %p193 = pneg %p63
        $region38: #{residual_block.1} parent=31 // pred_check_branch
          %195 = sbr.rel (%p193) target = $region40
        $region39: #{residual_block.1} parent=31 // pred_region
          %196 = dma.done [#allocation9], 1280
        $region40: #{residual_block.1} parent=31 // pred_fallthru
          _
        // Predicated region
        $region41: #{residual_block.1} parent=31 // pred_check
          %p197 = pneg %p84
        $region42: #{residual_block.1} parent=31 // pred_check_branch
          %199 = sbr.rel (%p197) target = $region44
        $region43: #{residual_block.1} parent=31 // pred_region
          %200 = dma.done [#allocation9], 1280
        $region44: #{residual_block.1} parent=31 // pred_fallthru
          _
        %s201 = sand.u32 %s29, 1
        %s202 = scalar_lea.sflag [#allocation6], %s201
        %s203 = sand.u32 %s29, 1
        %s204 = smul.addr %s203, 64
        %s205 = scalar_lea.vmem [#allocation5], %s204
        %p206 = pneg %p42
        %p207 = pneg %p39
        %p208 = pneg %p63
        %p209 = pneg %p60
        %p210 = pneg %p84
        %p211 = pneg %p81
        %p212 = pneg %p110
        %p213 = pneg %p107
        %s214 = sand.u32 %s97, 1
        %s215 = scalar_lea.sflag [#allocation7], %s214
        %s216 = sand.u32 %s97, 1
        %s217 = smul.addr %s216, 64
        %s218 = scalar_lea.vmem [#allocation11], %s217
        %s219 = smul.u32 2, %s21
        %s220 = smul.u32 2, %s21
        %221 = vst [vmem:[#allocation2] sm:$0xff] 0.0
        %222 = vst [vmem:[#allocation2 + $0x38] sm:$0xff] 0.0
        %223 = vst [vmem:[#allocation3] sm:$0xff] 0.0
        %224 = vst [vmem:[#allocation3 + $0x38] sm:$0xff] 0.0
        %225 = vst [vmem:[#allocation2 + $0x18] sm:$0xff] 0.0
        %226 = vst [vmem:[#allocation2 + $0x50] sm:$0xff] 0.0
        %227 = vst [vmem:[#allocation3 + $0x18] sm:$0xff] 0.0
        %228 = vst [vmem:[#allocation3 + $0x50] sm:$0xff] 0.0
        %229 = vst [vmem:[#allocation2 + $0x30] sm:$0xff] 0.0
        %230 = vst [vmem:[#allocation2 + $0x68] sm:$0xff] 0.0
        %231 = vst [vmem:[#allocation3 + $0x30] sm:$0xff] 0.0
        %232 = vst [vmem:[#allocation3 + $0x68] sm:$0xff] 0.0
        %233 = vst [vmem:[#allocation4 + $0x420] sm:$0xff] 1.0
        %234 = vst [vmem:[#allocation4 + $0x428] sm:$0xff] 1.0
        %235 = vst [vmem:[#allocation4 + $0x430] sm:$0xff] 1.0
        %236 = vst [vmem:[#allocation4 + $0x438] sm:$0xff] 1.0
        %v237 = vld [vmem:[%s188] sm:$0xff]
        %v238 = vld [vmem:[%s188 + $0x8] sm:$0xff]
        %v239 = vld [vmem:[%s188 + $0x10] sm:$0xff]
        %v240 = vld [vmem:[%s188 + $0x18] sm:$0xff]
        %241 = vst [vmem:[#allocation2 + $0x8] sm:$0xff] %v237
        %242 = vst [vmem:[#allocation2 + $0x10] sm:$0xff] %v238
        %243 = vst [vmem:[#allocation2 + $0x40] sm:$0xff] %v239
        %244 = vst [vmem:[#allocation2 + $0x48] sm:$0xff] %v240
        %s245 = scalar_lea.vmem %s188, 32 [#allocation5]
        %v246 = vld [vmem:[%s245] sm:$0xff]
        %v247 = vld [vmem:[%s245 + $0x8] sm:$0xff]
        %v248 = vld [vmem:[%s245 + $0x10] sm:$0xff]
        %v249 = vld [vmem:[%s245 + $0x18] sm:$0xff]
        %250 = vst [vmem:[#allocation2 + $0x20] sm:$0xff] %v246
        %251 = vst [vmem:[#allocation2 + $0x28] sm:$0xff] %v247
        %252 = vst [vmem:[#allocation2 + $0x58] sm:$0xff] %v248
        %253 = vst [vmem:[#allocation2 + $0x60] sm:$0xff] %v249
        %v254 = vld [vmem:[#allocation2] sm:$0xff]
        %v255 = vld [vmem:[#allocation2 + $0x8] sm:$0xff]
        %v256 = vld [vmem:[#allocation2 + $0x38] sm:$0xff]
        %v257 = vld [vmem:[#allocation2 + $0x40] sm:$0xff]
        %262 = vrot.lane.b32.xlu0 %v254, 16
        %v263 = vpop.permute.xlu0 %262
        %264 = vrot.lane.b32.xlu0 %v255, 16
        %v265 = vpop.permute.xlu0 %264
        %266 = vrot.lane.b32.xlu0 %v256, 16
        %v267 = vpop.permute.xlu0 %266
        %268 = vrot.lane.b32.xlu0 %v257, 16
        %v269 = vpop.permute.xlu0 %268
        %vm270 = vcmask 130048
        %v271 = vsel %vm270, %v263, %v265
        %v272 = vsel %vm270, %v267, %v269
        %275 = vst [vmem:[#allocation4] sm:$0xff] %v271
        %276 = vst [vmem:[#allocation4 + $0x10] sm:$0xff] %v272
        %v277 = vld [vmem:[#allocation2] sm:$0xff]
        %v278 = vld [vmem:[#allocation2 + $0x8] sm:$0xff]
        %v279 = vld [vmem:[#allocation2 + $0x38] sm:$0xff]
        %v280 = vld [vmem:[#allocation2 + $0x40] sm:$0xff]
        %285 = vrot.lane.b32.xlu0 %v277, 15
        %v286 = vpop.permute.xlu0 %285
        %287 = vrot.lane.b32.xlu0 %v278, 15
        %v288 = vpop.permute.xlu0 %287
        %289 = vrot.lane.b32.xlu0 %v279, 15
        %v290 = vpop.permute.xlu0 %289
        %291 = vrot.lane.b32.xlu0 %v280, 15
        %v292 = vpop.permute.xlu0 %291
        %vm293 = vcmask 121856
        %v294 = vsel %vm293, %v286, %v288
        %v295 = vsel %vm293, %v290, %v292
        %298 = vst [vmem:[#allocation4 + $0x20] sm:$0xff] %v294
        %299 = vst [vmem:[#allocation4 + $0x30] sm:$0xff] %v295
        %v300 = vld [vmem:[#allocation2] sm:$0xff]
        %v301 = vld [vmem:[#allocation2 + $0x8] sm:$0xff]
        %v302 = vld [vmem:[#allocation2 + $0x38] sm:$0xff]
        %v303 = vld [vmem:[#allocation2 + $0x40] sm:$0xff]
        %308 = vrot.lane.b32.xlu0 %v300, 14
        %v309 = vpop.permute.xlu0 %308
        %310 = vrot.lane.b32.xlu0 %v301, 14
        %v311 = vpop.permute.xlu0 %310
        %312 = vrot.lane.b32.xlu0 %v302, 14
        %v313 = vpop.permute.xlu0 %312
        %314 = vrot.lane.b32.xlu0 %v303, 14
        %v315 = vpop.permute.xlu0 %314
        %vm316 = vcmask 113664
        %v317 = vsel %vm316, %v309, %v311
        %v318 = vsel %vm316, %v313, %v315
        %321 = vst [vmem:[#allocation4 + $0x40] sm:$0xff] %v317
        %322 = vst [vmem:[#allocation4 + $0x50] sm:$0xff] %v318
        %v323 = vld [vmem:[#allocation2] sm:$0xff]
        %v324 = vld [vmem:[#allocation2 + $0x8] sm:$0xff]
        %v325 = vld [vmem:[#allocation2 + $0x38] sm:$0xff]
        %v326 = vld [vmem:[#allocation2 + $0x40] sm:$0xff]
        %331 = vrot.lane.b32.xlu0 %v323, 13
        %v332 = vpop.permute.xlu0 %331
        %333 = vrot.lane.b32.xlu0 %v324, 13
        %v334 = vpop.permute.xlu0 %333
        %335 = vrot.lane.b32.xlu0 %v325, 13
        %v336 = vpop.permute.xlu0 %335
        %337 = vrot.lane.b32.xlu0 %v326, 13
        %v338 = vpop.permute.xlu0 %337
        %vm339 = vcmask 105472
        %v340 = vsel %vm339, %v332, %v334
        %v341 = vsel %vm339, %v336, %v338
        %344 = vst [vmem:[#allocation4 + $0x60] sm:$0xff] %v340
        %345 = vst [vmem:[#allocation4 + $0x70] sm:$0xff] %v341
        %v346 = vld [vmem:[#allocation2] sm:$0xff]
        %v347 = vld [vmem:[#allocation2 + $0x8] sm:$0xff]
        %v348 = vld [vmem:[#allocation2 + $0x38] sm:$0xff]
        %v349 = vld [vmem:[#allocation2 + $0x40] sm:$0xff]
        %354 = vrot.lane.b32.xlu0 %v346, 12
        %v355 = vpop.permute.xlu0 %354
        %356 = vrot.lane.b32.xlu0 %v347, 12
        %v357 = vpop.permute.xlu0 %356
        %358 = vrot.lane.b32.xlu0 %v348, 12
        %v359 = vpop.permute.xlu0 %358
        %360 = vrot.lane.b32.xlu0 %v349, 12
        %v361 = vpop.permute.xlu0 %360
        %vm362 = vcmask 97280
        %v363 = vsel %vm362, %v355, %v357
        %v364 = vsel %vm362, %v359, %v361
        %367 = vst [vmem:[#allocation4 + $0x80] sm:$0xff] %v363
        %368 = vst [vmem:[#allocation4 + $0x90] sm:$0xff] %v364
        %v369 = vld [vmem:[#allocation2] sm:$0xff]
        %v370 = vld [vmem:[#allocation2 + $0x8] sm:$0xff]
        %v371 = vld [vmem:[#allocation2 + $0x38] sm:$0xff]
        %v372 = vld [vmem:[#allocation2 + $0x40] sm:$0xff]
        %377 = vrot.lane.b32.xlu0 %v369, 11
        %v378 = vpop.permute.xlu0 %377
        %379 = vrot.lane.b32.xlu0 %v370, 11
        %v380 = vpop.permute.xlu0 %379
        %381 = vrot.lane.b32.xlu0 %v371, 11
        %v382 = vpop.permute.xlu0 %381
        %383 = vrot.lane.b32.xlu0 %v372, 11
        %v384 = vpop.permute.xlu0 %383
        %vm385 = vcmask 89088
        %v386 = vsel %vm385, %v378, %v380
        %v387 = vsel %vm385, %v382, %v384
        %390 = vst [vmem:[#allocation4 + $0xa0] sm:$0xff] %v386
        %391 = vst [vmem:[#allocation4 + $0xb0] sm:$0xff] %v387
        %v392 = vld [vmem:[#allocation2] sm:$0xff]
        %v393 = vld [vmem:[#allocation2 + $0x8] sm:$0xff]
        %v394 = vld [vmem:[#allocation2 + $0x38] sm:$0xff]
        %v395 = vld [vmem:[#allocation2 + $0x40] sm:$0xff]
        %400 = vrot.lane.b32.xlu0 %v392, 10
        %v401 = vpop.permute.xlu0 %400
        %402 = vrot.lane.b32.xlu0 %v393, 10
        %v403 = vpop.permute.xlu0 %402
        %404 = vrot.lane.b32.xlu0 %v394, 10
        %v405 = vpop.permute.xlu0 %404
        %406 = vrot.lane.b32.xlu0 %v395, 10
        %v407 = vpop.permute.xlu0 %406
        %vm408 = vcmask 80896
        %v409 = vsel %vm408, %v401, %v403
        %v410 = vsel %vm408, %v405, %v407
        %413 = vst [vmem:[#allocation4 + $0xc0] sm:$0xff] %v409
        %414 = vst [vmem:[#allocation4 + $0xd0] sm:$0xff] %v410
        %v415 = vld [vmem:[#allocation2] sm:$0xff]
        %v416 = vld [vmem:[#allocation2 + $0x8] sm:$0xff]
        %v417 = vld [vmem:[#allocation2 + $0x38] sm:$0xff]
        %v418 = vld [vmem:[#allocation2 + $0x40] sm:$0xff]
        %423 = vrot.lane.b32.xlu0 %v415, 9
        %v424 = vpop.permute.xlu0 %423
        %425 = vrot.lane.b32.xlu0 %v416, 9
        %v426 = vpop.permute.xlu0 %425
        %427 = vrot.lane.b32.xlu0 %v417, 9
        %v428 = vpop.permute.xlu0 %427
        %429 = vrot.lane.b32.xlu0 %v418, 9
        %v430 = vpop.permute.xlu0 %429
        %vm431 = vcmask 72704
        %v432 = vsel %vm431, %v424, %v426
        %v433 = vsel %vm431, %v428, %v430
        %436 = vst [vmem:[#allocation4 + $0xe0] sm:$0xff] %v432
        %437 = vst [vmem:[#allocation4 + $0xf0] sm:$0xff] %v433
        %v438 = vld [vmem:[#allocation2] sm:$0xff]
        %v439 = vld [vmem:[#allocation2 + $0x8] sm:$0xff]
        %v440 = vld [vmem:[#allocation2 + $0x38] sm:$0xff]
        %v441 = vld [vmem:[#allocation2 + $0x40] sm:$0xff]
        %446 = vrot.lane.b32.xlu0 %v438, 8
        %v447 = vpop.permute.xlu0 %446
        %448 = vrot.lane.b32.xlu0 %v439, 8
        %v449 = vpop.permute.xlu0 %448
        %450 = vrot.lane.b32.xlu0 %v440, 8
        %v451 = vpop.permute.xlu0 %450
        %452 = vrot.lane.b32.xlu0 %v441, 8
        %v453 = vpop.permute.xlu0 %452
        %vm454 = vcmask 64512
        %v455 = vsel %vm454, %v447, %v449
        %v456 = vsel %vm454, %v451, %v453
        %459 = vst [vmem:[#allocation4 + $0x100] sm:$0xff] %v455
        %460 = vst [vmem:[#allocation4 + $0x110] sm:$0xff] %v456
        %v461 = vld [vmem:[#allocation2] sm:$0xff]
        %v462 = vld [vmem:[#allocation2 + $0x8] sm:$0xff]
        %v463 = vld [vmem:[#allocation2 + $0x38] sm:$0xff]
        %v464 = vld [vmem:[#allocation2 + $0x40] sm:$0xff]
        %469 = vrot.lane.b32.xlu0 %v461, 7
        %v470 = vpop.permute.xlu0 %469
        %471 = vrot.lane.b32.xlu0 %v462, 7
        %v472 = vpop.permute.xlu0 %471
        %473 = vrot.lane.b32.xlu0 %v463, 7
        %v474 = vpop.permute.xlu0 %473
        %475 = vrot.lane.b32.xlu0 %v464, 7
        %v476 = vpop.permute.xlu0 %475
        %vm477 = vcmask 56320
        %v478 = vsel %vm477, %v470, %v472
        %v479 = vsel %vm477, %v474, %v476
        %482 = vst [vmem:[#allocation4 + $0x120] sm:$0xff] %v478
        %483 = vst [vmem:[#allocation4 + $0x130] sm:$0xff] %v479
        %v484 = vld [vmem:[#allocation2] sm:$0xff]
        %v485 = vld [vmem:[#allocation2 + $0x8] sm:$0xff]
        %v486 = vld [vmem:[#allocation2 + $0x38] sm:$0xff]
        %v487 = vld [vmem:[#allocation2 + $0x40] sm:$0xff]
        %492 = vrot.lane.b32.xlu0 %v484, 6
        %v493 = vpop.permute.xlu0 %492
        %494 = vrot.lane.b32.xlu0 %v485, 6
        %v495 = vpop.permute.xlu0 %494
        %496 = vrot.lane.b32.xlu0 %v486, 6
        %v497 = vpop.permute.xlu0 %496
        %498 = vrot.lane.b32.xlu0 %v487, 6
        %v499 = vpop.permute.xlu0 %498
        %vm500 = vcmask 48128
        %v501 = vsel %vm500, %v493, %v495
        %v502 = vsel %vm500, %v497, %v499
        %505 = vst [vmem:[#allocation4 + $0x140] sm:$0xff] %v501
        %506 = vst [vmem:[#allocation4 + $0x150] sm:$0xff] %v502
        %v507 = vld [vmem:[#allocation2] sm:$0xff]
        %v508 = vld [vmem:[#allocation2 + $0x8] sm:$0xff]
        %v509 = vld [vmem:[#allocation2 + $0x38] sm:$0xff]
        %v510 = vld [vmem:[#allocation2 + $0x40] sm:$0xff]
        %515 = vrot.lane.b32.xlu0 %v507, 5
        %v516 = vpop.permute.xlu0 %515
        %517 = vrot.lane.b32.xlu0 %v508, 5
        %v518 = vpop.permute.xlu0 %517
        %519 = vrot.lane.b32.xlu0 %v509, 5
        %v520 = vpop.permute.xlu0 %519
        %521 = vrot.lane.b32.xlu0 %v510, 5
        %v522 = vpop.permute.xlu0 %521
        %vm523 = vcmask 39936
        %v524 = vsel %vm523, %v516, %v518
        %v525 = vsel %vm523, %v520, %v522
        %528 = vst [vmem:[#allocation4 + $0x160] sm:$0xff] %v524
        %529 = vst [vmem:[#allocation4 + $0x170] sm:$0xff] %v525
        %v530 = vld [vmem:[#allocation2] sm:$0xff]
        %v531 = vld [vmem:[#allocation2 + $0x8] sm:$0xff]
        %v532 = vld [vmem:[#allocation2 + $0x38] sm:$0xff]
        %v533 = vld [vmem:[#allocation2 + $0x40] sm:$0xff]
        %538 = vrot.lane.b32.xlu0 %v530, 4
        %v539 = vpop.permute.xlu0 %538
        %540 = vrot.lane.b32.xlu0 %v531, 4
        %v541 = vpop.permute.xlu0 %540
        %542 = vrot.lane.b32.xlu0 %v532, 4
        %v543 = vpop.permute.xlu0 %542
        %544 = vrot.lane.b32.xlu0 %v533, 4
        %v545 = vpop.permute.xlu0 %544
        %vm546 = vcmask 31744
        %v547 = vsel %vm546, %v539, %v541
        %v548 = vsel %vm546, %v543, %v545
        %551 = vst [vmem:[#allocation4 + $0x180] sm:$0xff] %v547
        %552 = vst [vmem:[#allocation4 + $0x190] sm:$0xff] %v548
        %v553 = vld [vmem:[#allocation2] sm:$0xff]
        %v554 = vld [vmem:[#allocation2 + $0x8] sm:$0xff]
        %v555 = vld [vmem:[#allocation2 + $0x38] sm:$0xff]
        %v556 = vld [vmem:[#allocation2 + $0x40] sm:$0xff]
        %561 = vrot.lane.b32.xlu0 %v553, 3
        %v562 = vpop.permute.xlu0 %561
        %563 = vrot.lane.b32.xlu0 %v554, 3
        %v564 = vpop.permute.xlu0 %563
        %565 = vrot.lane.b32.xlu0 %v555, 3
        %v566 = vpop.permute.xlu0 %565
        %567 = vrot.lane.b32.xlu0 %v556, 3
        %v568 = vpop.permute.xlu0 %567
        %vm569 = vcmask 23552
        %v570 = vsel %vm569, %v562, %v564
        %v571 = vsel %vm569, %v566, %v568
        %574 = vst [vmem:[#allocation4 + $0x1a0] sm:$0xff] %v570
        %575 = vst [vmem:[#allocation4 + $0x1b0] sm:$0xff] %v571
        %v576 = vld [vmem:[#allocation2] sm:$0xff]
        %v577 = vld [vmem:[#allocation2 + $0x8] sm:$0xff]
        %v578 = vld [vmem:[#allocation2 + $0x38] sm:$0xff]
        %v579 = vld [vmem:[#allocation2 + $0x40] sm:$0xff]
        %584 = vrot.lane.b32.xlu0 %v576, 2
        %v585 = vpop.permute.xlu0 %584
        %586 = vrot.lane.b32.xlu0 %v577, 2
        %v587 = vpop.permute.xlu0 %586
        %588 = vrot.lane.b32.xlu0 %v578, 2
        %v589 = vpop.permute.xlu0 %588
        %590 = vrot.lane.b32.xlu0 %v579, 2
        %v591 = vpop.permute.xlu0 %590
        %vm592 = vcmask 15360
        %v593 = vsel %vm592, %v585, %v587
        %v594 = vsel %vm592, %v589, %v591
        %597 = vst [vmem:[#allocation4 + $0x1c0] sm:$0xff] %v593
        %598 = vst [vmem:[#allocation4 + $0x1d0] sm:$0xff] %v594
        %v599 = vld [vmem:[#allocation2] sm:$0xff]
        %v600 = vld [vmem:[#allocation2 + $0x8] sm:$0xff]
        %v601 = vld [vmem:[#allocation2 + $0x38] sm:$0xff]
        %v602 = vld [vmem:[#allocation2 + $0x40] sm:$0xff]
        %607 = vrot.lane.b32.xlu0 %v599, 1
        %v608 = vpop.permute.xlu0 %607
        %609 = vrot.lane.b32.xlu0 %v600, 1
        %v610 = vpop.permute.xlu0 %609
        %611 = vrot.lane.b32.xlu0 %v601, 1
        %v612 = vpop.permute.xlu0 %611
        %613 = vrot.lane.b32.xlu0 %v602, 1
        %v614 = vpop.permute.xlu0 %613
        %vm615 = vcmask 7168
        %v616 = vsel %vm615, %v608, %v610
        %v617 = vsel %vm615, %v612, %v614
        %620 = vst [vmem:[#allocation4 + $0x1e0] sm:$0xff] %v616
        %621 = vst [vmem:[#allocation4 + $0x1f0] sm:$0xff] %v617
        %v622 = vld [vmem:[#allocation2 + $0x8] sm:$0xff]
        %v623 = vld [vmem:[#allocation2 + $0x40] sm:$0xff]
        %624 = vst [vmem:[#allocation4 + $0x200] sm:$0xff] %v622
        %625 = vst [vmem:[#allocation4 + $0x210] sm:$0xff] %v623
        %v626 = vld [vmem:[#allocation2 + $0x8] sm:$0xff]
        %v627 = vld [vmem:[#allocation2 + $0x10] sm:$0xff]
        %v628 = vld [vmem:[#allocation2 + $0x40] sm:$0xff]
        %v629 = vld [vmem:[#allocation2 + $0x48] sm:$0xff]
        %634 = vrot.lane.b32.xlu0 %v626, 127
        %v635 = vpop.permute.xlu0 %634
        %636 = vrot.lane.b32.xlu0 %v627, 127
        %v637 = vpop.permute.xlu0 %636
        %638 = vrot.lane.b32.xlu0 %v628, 127
        %v639 = vpop.permute.xlu0 %638
        %640 = vrot.lane.b32.xlu0 %v629, 127
        %v641 = vpop.permute.xlu0 %640
        %vm642 = vcmask 1039360
        %v643 = vsel %vm642, %v635, %v637
        %v644 = vsel %vm642, %v639, %v641
        %647 = vst [vmem:[#allocation4 + $0x220] sm:$0xff] %v643
        %648 = vst [vmem:[#allocation4 + $0x230] sm:$0xff] %v644
        %v649 = vld [vmem:[#allocation2 + $0x8] sm:$0xff]
        %v650 = vld [vmem:[#allocation2 + $0x10] sm:$0xff]
        %v651 = vld [vmem:[#allocation2 + $0x40] sm:$0xff]
        %v652 = vld [vmem:[#allocation2 + $0x48] sm:$0xff]
        %657 = vrot.lane.b32.xlu0 %v649, 126
        %v658 = vpop.permute.xlu0 %657
        %659 = vrot.lane.b32.xlu0 %v650, 126
        %v660 = vpop.permute.xlu0 %659
        %661 = vrot.lane.b32.xlu0 %v651, 126
        %v662 = vpop.permute.xlu0 %661
        %663 = vrot.lane.b32.xlu0 %v652, 126
        %v664 = vpop.permute.xlu0 %663
        %vm665 = vcmask 1031168
        %v666 = vsel %vm665, %v658, %v660
        %v667 = vsel %vm665, %v662, %v664
        %670 = vst [vmem:[#allocation4 + $0x240] sm:$0xff] %v666
        %671 = vst [vmem:[#allocation4 + $0x250] sm:$0xff] %v667
        %v672 = vld [vmem:[#allocation2 + $0x8] sm:$0xff]
        %v673 = vld [vmem:[#allocation2 + $0x10] sm:$0xff]
        %v674 = vld [vmem:[#allocation2 + $0x40] sm:$0xff]
        %v675 = vld [vmem:[#allocation2 + $0x48] sm:$0xff]
        %680 = vrot.lane.b32.xlu0 %v672, 125
        %v681 = vpop.permute.xlu0 %680
        %682 = vrot.lane.b32.xlu0 %v673, 125
        %v683 = vpop.permute.xlu0 %682
        %684 = vrot.lane.b32.xlu0 %v674, 125
        %v685 = vpop.permute.xlu0 %684
        %686 = vrot.lane.b32.xlu0 %v675, 125
        %v687 = vpop.permute.xlu0 %686
        %vm688 = vcmask 1022976
        %v689 = vsel %vm688, %v681, %v683
        %v690 = vsel %vm688, %v685, %v687
        %693 = vst [vmem:[#allocation4 + $0x260] sm:$0xff] %v689
        %694 = vst [vmem:[#allocation4 + $0x270] sm:$0xff] %v690
        %v695 = vld [vmem:[#allocation2 + $0x8] sm:$0xff]
        %v696 = vld [vmem:[#allocation2 + $0x10] sm:$0xff]
        %v697 = vld [vmem:[#allocation2 + $0x40] sm:$0xff]
        %v698 = vld [vmem:[#allocation2 + $0x48] sm:$0xff]
        %703 = vrot.lane.b32.xlu0 %v695, 124
        %v704 = vpop.permute.xlu0 %703
        %705 = vrot.lane.b32.xlu0 %v696, 124
        %v706 = vpop.permute.xlu0 %705
        %707 = vrot.lane.b32.xlu0 %v697, 124
        %v708 = vpop.permute.xlu0 %707
        %709 = vrot.lane.b32.xlu0 %v698, 124
        %v710 = vpop.permute.xlu0 %709
        %vm711 = vcmask 1014784
        %v712 = vsel %vm711, %v704, %v706
        %v713 = vsel %vm711, %v708, %v710
        %716 = vst [vmem:[#allocation4 + $0x280] sm:$0xff] %v712
        %717 = vst [vmem:[#allocation4 + $0x290] sm:$0xff] %v713
        %v718 = vld [vmem:[#allocation2 + $0x8] sm:$0xff]
        %v719 = vld [vmem:[#allocation2 + $0x10] sm:$0xff]
        %v720 = vld [vmem:[#allocation2 + $0x40] sm:$0xff]
        %v721 = vld [vmem:[#allocation2 + $0x48] sm:$0xff]
        %726 = vrot.lane.b32.xlu0 %v718, 123
        %v727 = vpop.permute.xlu0 %726
        %728 = vrot.lane.b32.xlu0 %v719, 123
        %v729 = vpop.permute.xlu0 %728
        %730 = vrot.lane.b32.xlu0 %v720, 123
        %v731 = vpop.permute.xlu0 %730
        %732 = vrot.lane.b32.xlu0 %v721, 123
        %v733 = vpop.permute.xlu0 %732
        %vm734 = vcmask 1006592
        %v735 = vsel %vm734, %v727, %v729
        %v736 = vsel %vm734, %v731, %v733
        %739 = vst [vmem:[#allocation4 + $0x2a0] sm:$0xff] %v735
        %740 = vst [vmem:[#allocation4 + $0x2b0] sm:$0xff] %v736
        %v741 = vld [vmem:[#allocation2 + $0x8] sm:$0xff]
        %v742 = vld [vmem:[#allocation2 + $0x10] sm:$0xff]
        %v743 = vld [vmem:[#allocation2 + $0x40] sm:$0xff]
        %v744 = vld [vmem:[#allocation2 + $0x48] sm:$0xff]
        %749 = vrot.lane.b32.xlu0 %v741, 122
        %v750 = vpop.permute.xlu0 %749
        %751 = vrot.lane.b32.xlu0 %v742, 122
        %v752 = vpop.permute.xlu0 %751
        %753 = vrot.lane.b32.xlu0 %v743, 122
        %v754 = vpop.permute.xlu0 %753
        %755 = vrot.lane.b32.xlu0 %v744, 122
        %v756 = vpop.permute.xlu0 %755
        %vm757 = vcmask 998400
        %v758 = vsel %vm757, %v750, %v752
        %v759 = vsel %vm757, %v754, %v756
        %762 = vst [vmem:[#allocation4 + $0x2c0] sm:$0xff] %v758
        %763 = vst [vmem:[#allocation4 + $0x2d0] sm:$0xff] %v759
        %v764 = vld [vmem:[#allocation2 + $0x8] sm:$0xff]
        %v765 = vld [vmem:[#allocation2 + $0x10] sm:$0xff]
        %v766 = vld [vmem:[#allocation2 + $0x40] sm:$0xff]
        %v767 = vld [vmem:[#allocation2 + $0x48] sm:$0xff]
        %772 = vrot.lane.b32.xlu0 %v764, 121
        %v773 = vpop.permute.xlu0 %772
        %774 = vrot.lane.b32.xlu0 %v765, 121
        %v775 = vpop.permute.xlu0 %774
        %776 = vrot.lane.b32.xlu0 %v766, 121
        %v777 = vpop.permute.xlu0 %776
        %778 = vrot.lane.b32.xlu0 %v767, 121
        %v779 = vpop.permute.xlu0 %778
        %vm780 = vcmask 990208
        %v781 = vsel %vm780, %v773, %v775
        %v782 = vsel %vm780, %v777, %v779
        %785 = vst [vmem:[#allocation4 + $0x2e0] sm:$0xff] %v781
        %786 = vst [vmem:[#allocation4 + $0x2f0] sm:$0xff] %v782
        %v787 = vld [vmem:[#allocation2 + $0x8] sm:$0xff]
        %v788 = vld [vmem:[#allocation2 + $0x10] sm:$0xff]
        %v789 = vld [vmem:[#allocation2 + $0x40] sm:$0xff]
        %v790 = vld [vmem:[#allocation2 + $0x48] sm:$0xff]
        %795 = vrot.lane.b32.xlu0 %v787, 120
        %v796 = vpop.permute.xlu0 %795
        %797 = vrot.lane.b32.xlu0 %v788, 120
        %v798 = vpop.permute.xlu0 %797
        %799 = vrot.lane.b32.xlu0 %v789, 120
        %v800 = vpop.permute.xlu0 %799
        %801 = vrot.lane.b32.xlu0 %v790, 120
        %v802 = vpop.permute.xlu0 %801
        %vm803 = vcmask 982016
        %v804 = vsel %vm803, %v796, %v798
        %v805 = vsel %vm803, %v800, %v802
        %808 = vst [vmem:[#allocation4 + $0x300] sm:$0xff] %v804
        %809 = vst [vmem:[#allocation4 + $0x310] sm:$0xff] %v805
        %v810 = vld [vmem:[#allocation2 + $0x8] sm:$0xff]
        %v811 = vld [vmem:[#allocation2 + $0x10] sm:$0xff]
        %v812 = vld [vmem:[#allocation2 + $0x40] sm:$0xff]
        %v813 = vld [vmem:[#allocation2 + $0x48] sm:$0xff]
        %818 = vrot.lane.b32.xlu0 %v810, 119
        %v819 = vpop.permute.xlu0 %818
        %820 = vrot.lane.b32.xlu0 %v811, 119
        %v821 = vpop.permute.xlu0 %820
        %822 = vrot.lane.b32.xlu0 %v812, 119
        %v823 = vpop.permute.xlu0 %822
        %824 = vrot.lane.b32.xlu0 %v813, 119
        %v825 = vpop.permute.xlu0 %824
        %vm826 = vcmask 973824
        %v827 = vsel %vm826, %v819, %v821
        %v828 = vsel %vm826, %v823, %v825
        %831 = vst [vmem:[#allocation4 + $0x320] sm:$0xff] %v827
        %832 = vst [vmem:[#allocation4 + $0x330] sm:$0xff] %v828
        %v833 = vld [vmem:[#allocation2 + $0x8] sm:$0xff]
        %v834 = vld [vmem:[#allocation2 + $0x10] sm:$0xff]
        %v835 = vld [vmem:[#allocation2 + $0x40] sm:$0xff]
        %v836 = vld [vmem:[#allocation2 + $0x48] sm:$0xff]
        %841 = vrot.lane.b32.xlu0 %v833, 118
        %v842 = vpop.permute.xlu0 %841
        %843 = vrot.lane.b32.xlu0 %v834, 118
        %v844 = vpop.permute.xlu0 %843
        %845 = vrot.lane.b32.xlu0 %v835, 118
        %v846 = vpop.permute.xlu0 %845
        %847 = vrot.lane.b32.xlu0 %v836, 118
        %v848 = vpop.permute.xlu0 %847
        %vm849 = vcmask 965632
        %v850 = vsel %vm849, %v842, %v844
        %v851 = vsel %vm849, %v846, %v848
        %854 = vst [vmem:[#allocation4 + $0x340] sm:$0xff] %v850
        %855 = vst [vmem:[#allocation4 + $0x350] sm:$0xff] %v851
        %v856 = vld [vmem:[#allocation2 + $0x8] sm:$0xff]
        %v857 = vld [vmem:[#allocation2 + $0x10] sm:$0xff]
        %v858 = vld [vmem:[#allocation2 + $0x40] sm:$0xff]
        %v859 = vld [vmem:[#allocation2 + $0x48] sm:$0xff]
        %864 = vrot.lane.b32.xlu0 %v856, 117
        %v865 = vpop.permute.xlu0 %864
        %866 = vrot.lane.b32.xlu0 %v857, 117
        %v867 = vpop.permute.xlu0 %866
        %868 = vrot.lane.b32.xlu0 %v858, 117
        %v869 = vpop.permute.xlu0 %868
        %870 = vrot.lane.b32.xlu0 %v859, 117
        %v871 = vpop.permute.xlu0 %870
        %vm872 = vcmask 957440
        %v873 = vsel %vm872, %v865, %v867
        %v874 = vsel %vm872, %v869, %v871
        %877 = vst [vmem:[#allocation4 + $0x360] sm:$0xff] %v873
        %878 = vst [vmem:[#allocation4 + $0x370] sm:$0xff] %v874
        %v879 = vld [vmem:[#allocation2 + $0x8] sm:$0xff]
        %v880 = vld [vmem:[#allocation2 + $0x10] sm:$0xff]
        %v881 = vld [vmem:[#allocation2 + $0x40] sm:$0xff]
        %v882 = vld [vmem:[#allocation2 + $0x48] sm:$0xff]
        %887 = vrot.lane.b32.xlu0 %v879, 116
        %v888 = vpop.permute.xlu0 %887
        %889 = vrot.lane.b32.xlu0 %v880, 116
        %v890 = vpop.permute.xlu0 %889
        %891 = vrot.lane.b32.xlu0 %v881, 116
        %v892 = vpop.permute.xlu0 %891
        %893 = vrot.lane.b32.xlu0 %v882, 116
        %v894 = vpop.permute.xlu0 %893
        %vm895 = vcmask 949248
        %v896 = vsel %vm895, %v888, %v890
        %v897 = vsel %vm895, %v892, %v894
        %900 = vst [vmem:[#allocation4 + $0x380] sm:$0xff] %v896
        %901 = vst [vmem:[#allocation4 + $0x390] sm:$0xff] %v897
        %v902 = vld [vmem:[#allocation2 + $0x8] sm:$0xff]
        %v903 = vld [vmem:[#allocation2 + $0x10] sm:$0xff]
        %v904 = vld [vmem:[#allocation2 + $0x40] sm:$0xff]
        %v905 = vld [vmem:[#allocation2 + $0x48] sm:$0xff]
        %910 = vrot.lane.b32.xlu0 %v902, 115
        %v911 = vpop.permute.xlu0 %910
        %912 = vrot.lane.b32.xlu0 %v903, 115
        %v913 = vpop.permute.xlu0 %912
        %914 = vrot.lane.b32.xlu0 %v904, 115
        %v915 = vpop.permute.xlu0 %914
        %916 = vrot.lane.b32.xlu0 %v905, 115
        %v917 = vpop.permute.xlu0 %916
        %vm918 = vcmask 941056
        %v919 = vsel %vm918, %v911, %v913
        %v920 = vsel %vm918, %v915, %v917
        %923 = vst [vmem:[#allocation4 + $0x3a0] sm:$0xff] %v919
        %924 = vst [vmem:[#allocation4 + $0x3b0] sm:$0xff] %v920
        %v925 = vld [vmem:[#allocation2 + $0x8] sm:$0xff]
        %v926 = vld [vmem:[#allocation2 + $0x10] sm:$0xff]
        %v927 = vld [vmem:[#allocation2 + $0x40] sm:$0xff]
        %v928 = vld [vmem:[#allocation2 + $0x48] sm:$0xff]
        %933 = vrot.lane.b32.xlu0 %v925, 114
        %v934 = vpop.permute.xlu0 %933
        %935 = vrot.lane.b32.xlu0 %v926, 114
        %v936 = vpop.permute.xlu0 %935
        %937 = vrot.lane.b32.xlu0 %v927, 114
        %v938 = vpop.permute.xlu0 %937
        %939 = vrot.lane.b32.xlu0 %v928, 114
        %v940 = vpop.permute.xlu0 %939
        %vm941 = vcmask 932864
        %v942 = vsel %vm941, %v934, %v936
        %v943 = vsel %vm941, %v938, %v940
        %946 = vst [vmem:[#allocation4 + $0x3c0] sm:$0xff] %v942
        %947 = vst [vmem:[#allocation4 + $0x3d0] sm:$0xff] %v943
        %v948 = vld [vmem:[#allocation2 + $0x8] sm:$0xff]
        %v949 = vld [vmem:[#allocation2 + $0x10] sm:$0xff]
        %v950 = vld [vmem:[#allocation2 + $0x40] sm:$0xff]
        %v951 = vld [vmem:[#allocation2 + $0x48] sm:$0xff]
        %956 = vrot.lane.b32.xlu0 %v948, 113
        %v957 = vpop.permute.xlu0 %956
        %958 = vrot.lane.b32.xlu0 %v949, 113
        %v959 = vpop.permute.xlu0 %958
        %960 = vrot.lane.b32.xlu0 %v950, 113
        %v961 = vpop.permute.xlu0 %960
        %962 = vrot.lane.b32.xlu0 %v951, 113
        %v963 = vpop.permute.xlu0 %962
        %vm964 = vcmask 924672
        %v965 = vsel %vm964, %v957, %v959
        %v966 = vsel %vm964, %v961, %v963
        %969 = vst [vmem:[#allocation4 + $0x3e0] sm:$0xff] %v965
        %970 = vst [vmem:[#allocation4 + $0x3f0] sm:$0xff] %v966
        %v971 = vld [vmem:[#allocation2 + $0x8] sm:$0xff]
        %v972 = vld [vmem:[#allocation2 + $0x10] sm:$0xff]
        %v973 = vld [vmem:[#allocation2 + $0x40] sm:$0xff]
        %v974 = vld [vmem:[#allocation2 + $0x48] sm:$0xff]
        %979 = vrot.lane.b32.xlu0 %v971, 112
        %v980 = vpop.permute.xlu0 %979
        %981 = vrot.lane.b32.xlu0 %v972, 112
        %v982 = vpop.permute.xlu0 %981
        %983 = vrot.lane.b32.xlu0 %v973, 112
        %v984 = vpop.permute.xlu0 %983
        %985 = vrot.lane.b32.xlu0 %v974, 112
        %v986 = vpop.permute.xlu0 %985
        %vm987 = vcmask 916480
        %v988 = vsel %vm987, %v980, %v982
        %v989 = vsel %vm987, %v984, %v986
        %992 = vst [vmem:[#allocation4 + $0x400] sm:$0xff] %v988
        %993 = vst [vmem:[#allocation4 + $0x410] sm:$0xff] %v989
        %v994 = vld [vmem:[#allocation2 + $0x18] sm:$0xff]
        %v995 = vld [vmem:[#allocation2 + $0x20] sm:$0xff]
        %v996 = vld [vmem:[#allocation2 + $0x50] sm:$0xff]
        %v997 = vld [vmem:[#allocation2 + $0x58] sm:$0xff]
        %1002 = vrot.lane.b32.xlu0 %v994, 16
        %v1003 = vpop.permute.xlu0 %1002
        %1004 = vrot.lane.b32.xlu0 %v995, 16
        %v1005 = vpop.permute.xlu0 %1004
        %1006 = vrot.lane.b32.xlu0 %v996, 16
        %v1007 = vpop.permute.xlu0 %1006
        %1008 = vrot.lane.b32.xlu0 %v997, 16
        %v1009 = vpop.permute.xlu0 %1008
        %v1010 = vsel %vm270, %v1003, %v1005
        %v1011 = vsel %vm270, %v1007, %v1009
        %1014 = vst [vmem:[#allocation4 + $0x8] sm:$0xff] %v1010
        %1015 = vst [vmem:[#allocation4 + $0x18] sm:$0xff] %v1011
        %v1016 = vld [vmem:[#allocation2 + $0x18] sm:$0xff]
        %v1017 = vld [vmem:[#allocation2 + $0x20] sm:$0xff]
        %v1018 = vld [vmem:[#allocation2 + $0x50] sm:$0xff]
        %v1019 = vld [vmem:[#allocation2 + $0x58] sm:$0xff]
        %1024 = vrot.lane.b32.xlu0 %v1016, 15
        %v1025 = vpop.permute.xlu0 %1024
        %1026 = vrot.lane.b32.xlu0 %v1017, 15
        %v1027 = vpop.permute.xlu0 %1026
        %1028 = vrot.lane.b32.xlu0 %v1018, 15
        %v1029 = vpop.permute.xlu0 %1028
        %1030 = vrot.lane.b32.xlu0 %v1019, 15
        %v1031 = vpop.permute.xlu0 %1030
        %v1032 = vsel %vm293, %v1025, %v1027
        %v1033 = vsel %vm293, %v1029, %v1031
        %1036 = vst [vmem:[#allocation4 + $0x28] sm:$0xff] %v1032
        %1037 = vst [vmem:[#allocation4 + $0x38] sm:$0xff] %v1033
        %v1038 = vld [vmem:[#allocation2 + $0x18] sm:$0xff]
        %v1039 = vld [vmem:[#allocation2 + $0x20] sm:$0xff]
        %v1040 = vld [vmem:[#allocation2 + $0x50] sm:$0xff]
        %v1041 = vld [vmem:[#allocation2 + $0x58] sm:$0xff]
        %1046 = vrot.lane.b32.xlu0 %v1038, 14
        %v1047 = vpop.permute.xlu0 %1046
        %1048 = vrot.lane.b32.xlu0 %v1039, 14
        %v1049 = vpop.permute.xlu0 %1048
        %1050 = vrot.lane.b32.xlu0 %v1040, 14
        %v1051 = vpop.permute.xlu0 %1050
        %1052 = vrot.lane.b32.xlu0 %v1041, 14
        %v1053 = vpop.permute.xlu0 %1052
        %v1054 = vsel %vm316, %v1047, %v1049
        %v1055 = vsel %vm316, %v1051, %v1053
        %1058 = vst [vmem:[#allocation4 + $0x48] sm:$0xff] %v1054
        %1059 = vst [vmem:[#allocation4 + $0x58] sm:$0xff] %v1055
        %v1060 = vld [vmem:[#allocation2 + $0x18] sm:$0xff]
        %v1061 = vld [vmem:[#allocation2 + $0x20] sm:$0xff]
        %v1062 = vld [vmem:[#allocation2 + $0x50] sm:$0xff]
        %v1063 = vld [vmem:[#allocation2 + $0x58] sm:$0xff]
        %1068 = vrot.lane.b32.xlu0 %v1060, 13
        %v1069 = vpop.permute.xlu0 %1068
        %1070 = vrot.lane.b32.xlu0 %v1061, 13
        %v1071 = vpop.permute.xlu0 %1070
        %1072 = vrot.lane.b32.xlu0 %v1062, 13
        %v1073 = vpop.permute.xlu0 %1072
        %1074 = vrot.lane.b32.xlu0 %v1063, 13
        %v1075 = vpop.permute.xlu0 %1074
        %v1076 = vsel %vm339, %v1069, %v1071
        %v1077 = vsel %vm339, %v1073, %v1075
        %1080 = vst [vmem:[#allocation4 + $0x68] sm:$0xff] %v1076
        %1081 = vst [vmem:[#allocation4 + $0x78] sm:$0xff] %v1077
        %v1082 = vld [vmem:[#allocation2 + $0x18] sm:$0xff]
        %v1083 = vld [vmem:[#allocation2 + $0x20] sm:$0xff]
        %v1084 = vld [vmem:[#allocation2 + $0x50] sm:$0xff]
        %v1085 = vld [vmem:[#allocation2 + $0x58] sm:$0xff]
        %1090 = vrot.lane.b32.xlu0 %v1082, 12
        %v1091 = vpop.permute.xlu0 %1090
        %1092 = vrot.lane.b32.xlu0 %v1083, 12
        %v1093 = vpop.permute.xlu0 %1092
        %1094 = vrot.lane.b32.xlu0 %v1084, 12
        %v1095 = vpop.permute.xlu0 %1094
        %1096 = vrot.lane.b32.xlu0 %v1085, 12
        %v1097 = vpop.permute.xlu0 %1096
        %v1098 = vsel %vm362, %v1091, %v1093
        %v1099 = vsel %vm362, %v1095, %v1097
        %1102 = vst [vmem:[#allocation4 + $0x88] sm:$0xff] %v1098
        %1103 = vst [vmem:[#allocation4 + $0x98] sm:$0xff] %v1099
        %v1104 = vld [vmem:[#allocation2 + $0x18] sm:$0xff]
        %v1105 = vld [vmem:[#allocation2 + $0x20] sm:$0xff]
        %v1106 = vld [vmem:[#allocation2 + $0x50] sm:$0xff]
        %v1107 = vld [vmem:[#allocation2 + $0x58] sm:$0xff]
        %1112 = vrot.lane.b32.xlu0 %v1104, 11
        %v1113 = vpop.permute.xlu0 %1112
        %1114 = vrot.lane.b32.xlu0 %v1105, 11
        %v1115 = vpop.permute.xlu0 %1114
        %1116 = vrot.lane.b32.xlu0 %v1106, 11
        %v1117 = vpop.permute.xlu0 %1116
        %1118 = vrot.lane.b32.xlu0 %v1107, 11
        %v1119 = vpop.permute.xlu0 %1118
        %v1120 = vsel %vm385, %v1113, %v1115
        %v1121 = vsel %vm385, %v1117, %v1119
        %1124 = vst [vmem:[#allocation4 + $0xa8] sm:$0xff] %v1120
        %1125 = vst [vmem:[#allocation4 + $0xb8] sm:$0xff] %v1121
        %v1126 = vld [vmem:[#allocation2 + $0x18] sm:$0xff]
        %v1127 = vld [vmem:[#allocation2 + $0x20] sm:$0xff]
        %v1128 = vld [vmem:[#allocation2 + $0x50] sm:$0xff]
        %v1129 = vld [vmem:[#allocation2 + $0x58] sm:$0xff]
        %1134 = vrot.lane.b32.xlu0 %v1126, 10
        %v1135 = vpop.permute.xlu0 %1134
        %1136 = vrot.lane.b32.xlu0 %v1127, 10
        %v1137 = vpop.permute.xlu0 %1136
        %1138 = vrot.lane.b32.xlu0 %v1128, 10
        %v1139 = vpop.permute.xlu0 %1138
        %1140 = vrot.lane.b32.xlu0 %v1129, 10
        %v1141 = vpop.permute.xlu0 %1140
        %v1142 = vsel %vm408, %v1135, %v1137
        %v1143 = vsel %vm408, %v1139, %v1141
        %1146 = vst [vmem:[#allocation4 + $0xc8] sm:$0xff] %v1142
        %1147 = vst [vmem:[#allocation4 + $0xd8] sm:$0xff] %v1143
        %v1148 = vld [vmem:[#allocation2 + $0x18] sm:$0xff]
        %v1149 = vld [vmem:[#allocation2 + $0x20] sm:$0xff]
        %v1150 = vld [vmem:[#allocation2 + $0x50] sm:$0xff]
        %v1151 = vld [vmem:[#allocation2 + $0x58] sm:$0xff]
        %1156 = vrot.lane.b32.xlu0 %v1148, 9
        %v1157 = vpop.permute.xlu0 %1156
        %1158 = vrot.lane.b32.xlu0 %v1149, 9
        %v1159 = vpop.permute.xlu0 %1158
        %1160 = vrot.lane.b32.xlu0 %v1150, 9
        %v1161 = vpop.permute.xlu0 %1160
        %1162 = vrot.lane.b32.xlu0 %v1151, 9
        %v1163 = vpop.permute.xlu0 %1162
        %v1164 = vsel %vm431, %v1157, %v1159
        %v1165 = vsel %vm431, %v1161, %v1163
        %1168 = vst [vmem:[#allocation4 + $0xe8] sm:$0xff] %v1164
        %1169 = vst [vmem:[#allocation4 + $0xf8] sm:$0xff] %v1165
        %v1170 = vld [vmem:[#allocation2 + $0x18] sm:$0xff]
        %v1171 = vld [vmem:[#allocation2 + $0x20] sm:$0xff]
        %v1172 = vld [vmem:[#allocation2 + $0x50] sm:$0xff]
        %v1173 = vld [vmem:[#allocation2 + $0x58] sm:$0xff]
        %1178 = vrot.lane.b32.xlu0 %v1170, 8
        %v1179 = vpop.permute.xlu0 %1178
        %1180 = vrot.lane.b32.xlu0 %v1171, 8
        %v1181 = vpop.permute.xlu0 %1180
        %1182 = vrot.lane.b32.xlu0 %v1172, 8
        %v1183 = vpop.permute.xlu0 %1182
        %1184 = vrot.lane.b32.xlu0 %v1173, 8
        %v1185 = vpop.permute.xlu0 %1184
        %v1186 = vsel %vm454, %v1179, %v1181
        %v1187 = vsel %vm454, %v1183, %v1185
        %1190 = vst [vmem:[#allocation4 + $0x108] sm:$0xff] %v1186
        %1191 = vst [vmem:[#allocation4 + $0x118] sm:$0xff] %v1187
        %v1192 = vld [vmem:[#allocation2 + $0x18] sm:$0xff]
        %v1193 = vld [vmem:[#allocation2 + $0x20] sm:$0xff]
        %v1194 = vld [vmem:[#allocation2 + $0x50] sm:$0xff]
        %v1195 = vld [vmem:[#allocation2 + $0x58] sm:$0xff]
        %1200 = vrot.lane.b32.xlu0 %v1192, 7
        %v1201 = vpop.permute.xlu0 %1200
        %1202 = vrot.lane.b32.xlu0 %v1193, 7
        %v1203 = vpop.permute.xlu0 %1202
        %1204 = vrot.lane.b32.xlu0 %v1194, 7
        %v1205 = vpop.permute.xlu0 %1204
        %1206 = vrot.lane.b32.xlu0 %v1195, 7
        %v1207 = vpop.permute.xlu0 %1206
        %v1208 = vsel %vm477, %v1201, %v1203
        %v1209 = vsel %vm477, %v1205, %v1207
        %1212 = vst [vmem:[#allocation4 + $0x128] sm:$0xff] %v1208
        %1213 = vst [vmem:[#allocation4 + $0x138] sm:$0xff] %v1209
        %v1214 = vld [vmem:[#allocation2 + $0x18] sm:$0xff]
        %v1215 = vld [vmem:[#allocation2 + $0x20] sm:$0xff]
        %v1216 = vld [vmem:[#allocation2 + $0x50] sm:$0xff]
        %v1217 = vld [vmem:[#allocation2 + $0x58] sm:$0xff]
        %1222 = vrot.lane.b32.xlu0 %v1214, 6
        %v1223 = vpop.permute.xlu0 %1222
        %1224 = vrot.lane.b32.xlu0 %v1215, 6
        %v1225 = vpop.permute.xlu0 %1224
        %1226 = vrot.lane.b32.xlu0 %v1216, 6
        %v1227 = vpop.permute.xlu0 %1226
        %1228 = vrot.lane.b32.xlu0 %v1217, 6
        %v1229 = vpop.permute.xlu0 %1228
        %v1230 = vsel %vm500, %v1223, %v1225
        %v1231 = vsel %vm500, %v1227, %v1229
        %1234 = vst [vmem:[#allocation4 + $0x148] sm:$0xff] %v1230
        %1235 = vst [vmem:[#allocation4 + $0x158] sm:$0xff] %v1231
        %v1236 = vld [vmem:[#allocation2 + $0x18] sm:$0xff]
        %v1237 = vld [vmem:[#allocation2 + $0x20] sm:$0xff]
        %v1238 = vld [vmem:[#allocation2 + $0x50] sm:$0xff]
        %v1239 = vld [vmem:[#allocation2 + $0x58] sm:$0xff]
        %1244 = vrot.lane.b32.xlu0 %v1236, 5
        %v1245 = vpop.permute.xlu0 %1244
        %1246 = vrot.lane.b32.xlu0 %v1237, 5
        %v1247 = vpop.permute.xlu0 %1246
        %1248 = vrot.lane.b32.xlu0 %v1238, 5
        %v1249 = vpop.permute.xlu0 %1248
        %1250 = vrot.lane.b32.xlu0 %v1239, 5
        %v1251 = vpop.permute.xlu0 %1250
        %v1252 = vsel %vm523, %v1245, %v1247
        %v1253 = vsel %vm523, %v1249, %v1251
        %1256 = vst [vmem:[#allocation4 + $0x168] sm:$0xff] %v1252
        %1257 = vst [vmem:[#allocation4 + $0x178] sm:$0xff] %v1253
        %v1258 = vld [vmem:[#allocation2 + $0x18] sm:$0xff]
        %v1259 = vld [vmem:[#allocation2 + $0x20] sm:$0xff]
        %v1260 = vld [vmem:[#allocation2 + $0x50] sm:$0xff]
        %v1261 = vld [vmem:[#allocation2 + $0x58] sm:$0xff]
        %1266 = vrot.lane.b32.xlu0 %v1258, 4
        %v1267 = vpop.permute.xlu0 %1266
        %1268 = vrot.lane.b32.xlu0 %v1259, 4
        %v1269 = vpop.permute.xlu0 %1268
        %1270 = vrot.lane.b32.xlu0 %v1260, 4
        %v1271 = vpop.permute.xlu0 %1270
        %1272 = vrot.lane.b32.xlu0 %v1261, 4
        %v1273 = vpop.permute.xlu0 %1272
        %v1274 = vsel %vm546, %v1267, %v1269
        %v1275 = vsel %vm546, %v1271, %v1273
        %1278 = vst [vmem:[#allocation4 + $0x188] sm:$0xff] %v1274
        %1279 = vst [vmem:[#allocation4 + $0x198] sm:$0xff] %v1275
        %v1280 = vld [vmem:[#allocation2 + $0x18] sm:$0xff]
        %v1281 = vld [vmem:[#allocation2 + $0x20] sm:$0xff]
        %v1282 = vld [vmem:[#allocation2 + $0x50] sm:$0xff]
        %v1283 = vld [vmem:[#allocation2 + $0x58] sm:$0xff]
        %1288 = vrot.lane.b32.xlu0 %v1280, 3
        %v1289 = vpop.permute.xlu0 %1288
        %1290 = vrot.lane.b32.xlu0 %v1281, 3
        %v1291 = vpop.permute.xlu0 %1290
        %1292 = vrot.lane.b32.xlu0 %v1282, 3
        %v1293 = vpop.permute.xlu0 %1292
        %1294 = vrot.lane.b32.xlu0 %v1283, 3
        %v1295 = vpop.permute.xlu0 %1294
        %v1296 = vsel %vm569, %v1289, %v1291
        %v1297 = vsel %vm569, %v1293, %v1295
        %1300 = vst [vmem:[#allocation4 + $0x1a8] sm:$0xff] %v1296
        %1301 = vst [vmem:[#allocation4 + $0x1b8] sm:$0xff] %v1297
        %v1302 = vld [vmem:[#allocation2 + $0x18] sm:$0xff]
        %v1303 = vld [vmem:[#allocation2 + $0x20] sm:$0xff]
        %v1304 = vld [vmem:[#allocation2 + $0x50] sm:$0xff]
        %v1305 = vld [vmem:[#allocation2 + $0x58] sm:$0xff]
        %1310 = vrot.lane.b32.xlu0 %v1302, 2
        %v1311 = vpop.permute.xlu0 %1310
        %1312 = vrot.lane.b32.xlu0 %v1303, 2
        %v1313 = vpop.permute.xlu0 %1312
        %1314 = vrot.lane.b32.xlu0 %v1304, 2
        %v1315 = vpop.permute.xlu0 %1314
        %1316 = vrot.lane.b32.xlu0 %v1305, 2
        %v1317 = vpop.permute.xlu0 %1316
        %v1318 = vsel %vm592, %v1311, %v1313
        %v1319 = vsel %vm592, %v1315, %v1317
        %1322 = vst [vmem:[#allocation4 + $0x1c8] sm:$0xff] %v1318
        %1323 = vst [vmem:[#allocation4 + $0x1d8] sm:$0xff] %v1319
        %v1324 = vld [vmem:[#allocation2 + $0x18] sm:$0xff]
        %v1325 = vld [vmem:[#allocation2 + $0x20] sm:$0xff]
        %v1326 = vld [vmem:[#allocation2 + $0x50] sm:$0xff]
        %v1327 = vld [vmem:[#allocation2 + $0x58] sm:$0xff]
        %1332 = vrot.lane.b32.xlu0 %v1324, 1
        %v1333 = vpop.permute.xlu0 %1332
        %1334 = vrot.lane.b32.xlu0 %v1325, 1
        %v1335 = vpop.permute.xlu0 %1334
        %1336 = vrot.lane.b32.xlu0 %v1326, 1
        %v1337 = vpop.permute.xlu0 %1336
        %1338 = vrot.lane.b32.xlu0 %v1327, 1
        %v1339 = vpop.permute.xlu0 %1338
        %v1340 = vsel %vm615, %v1333, %v1335
        %v1341 = vsel %vm615, %v1337, %v1339
        %1344 = vst [vmem:[#allocation4 + $0x1e8] sm:$0xff] %v1340
        %1345 = vst [vmem:[#allocation4 + $0x1f8] sm:$0xff] %v1341
        %v1346 = vld [vmem:[#allocation2 + $0x20] sm:$0xff]
        %v1347 = vld [vmem:[#allocation2 + $0x58] sm:$0xff]
        %1348 = vst [vmem:[#allocation4 + $0x208] sm:$0xff] %v1346
        %1349 = vst [vmem:[#allocation4 + $0x218] sm:$0xff] %v1347
        %v1350 = vld [vmem:[#allocation2 + $0x20] sm:$0xff]
        %v1351 = vld [vmem:[#allocation2 + $0x28] sm:$0xff]
        %v1352 = vld [vmem:[#allocation2 + $0x58] sm:$0xff]
        %v1353 = vld [vmem:[#allocation2 + $0x60] sm:$0xff]
        %1358 = vrot.lane.b32.xlu0 %v1350, 127
        %v1359 = vpop.permute.xlu0 %1358
        %1360 = vrot.lane.b32.xlu0 %v1351, 127
        %v1361 = vpop.permute.xlu0 %1360
        %1362 = vrot.lane.b32.xlu0 %v1352, 127
        %v1363 = vpop.permute.xlu0 %1362
        %1364 = vrot.lane.b32.xlu0 %v1353, 127
        %v1365 = vpop.permute.xlu0 %1364
        %v1366 = vsel %vm642, %v1359, %v1361
        %v1367 = vsel %vm642, %v1363, %v1365
        %1370 = vst [vmem:[#allocation4 + $0x228] sm:$0xff] %v1366
        %1371 = vst [vmem:[#allocation4 + $0x238] sm:$0xff] %v1367
        %v1372 = vld [vmem:[#allocation2 + $0x20] sm:$0xff]
        %v1373 = vld [vmem:[#allocation2 + $0x28] sm:$0xff]
        %v1374 = vld [vmem:[#allocation2 + $0x58] sm:$0xff]
        %v1375 = vld [vmem:[#allocation2 + $0x60] sm:$0xff]
        %1380 = vrot.lane.b32.xlu0 %v1372, 126
        %v1381 = vpop.permute.xlu0 %1380
        %1382 = vrot.lane.b32.xlu0 %v1373, 126
        %v1383 = vpop.permute.xlu0 %1382
        %1384 = vrot.lane.b32.xlu0 %v1374, 126
        %v1385 = vpop.permute.xlu0 %1384
        %1386 = vrot.lane.b32.xlu0 %v1375, 126
        %v1387 = vpop.permute.xlu0 %1386
        %v1388 = vsel %vm665, %v1381, %v1383
        %v1389 = vsel %vm665, %v1385, %v1387
        %1392 = vst [vmem:[#allocation4 + $0x248] sm:$0xff] %v1388
        %1393 = vst [vmem:[#allocation4 + $0x258] sm:$0xff] %v1389
        %v1394 = vld [vmem:[#allocation2 + $0x20] sm:$0xff]
        %v1395 = vld [vmem:[#allocation2 + $0x28] sm:$0xff]
        %v1396 = vld [vmem:[#allocation2 + $0x58] sm:$0xff]
        %v1397 = vld [vmem:[#allocation2 + $0x60] sm:$0xff]
        %1402 = vrot.lane.b32.xlu0 %v1394, 125
        %v1403 = vpop.permute.xlu0 %1402
        %1404 = vrot.lane.b32.xlu0 %v1395, 125
        %v1405 = vpop.permute.xlu0 %1404
        %1406 = vrot.lane.b32.xlu0 %v1396, 125
        %v1407 = vpop.permute.xlu0 %1406
        %1408 = vrot.lane.b32.xlu0 %v1397, 125
        %v1409 = vpop.permute.xlu0 %1408
        %v1410 = vsel %vm688, %v1403, %v1405
        %v1411 = vsel %vm688, %v1407, %v1409
        %1414 = vst [vmem:[#allocation4 + $0x268] sm:$0xff] %v1410
        %1415 = vst [vmem:[#allocation4 + $0x278] sm:$0xff] %v1411
        %v1416 = vld [vmem:[#allocation2 + $0x20] sm:$0xff]
        %v1417 = vld [vmem:[#allocation2 + $0x28] sm:$0xff]
        %v1418 = vld [vmem:[#allocation2 + $0x58] sm:$0xff]
        %v1419 = vld [vmem:[#allocation2 + $0x60] sm:$0xff]
        %1424 = vrot.lane.b32.xlu0 %v1416, 124
        %v1425 = vpop.permute.xlu0 %1424
        %1426 = vrot.lane.b32.xlu0 %v1417, 124
        %v1427 = vpop.permute.xlu0 %1426
        %1428 = vrot.lane.b32.xlu0 %v1418, 124
        %v1429 = vpop.permute.xlu0 %1428
        %1430 = vrot.lane.b32.xlu0 %v1419, 124
        %v1431 = vpop.permute.xlu0 %1430
        %v1432 = vsel %vm711, %v1425, %v1427
        %v1433 = vsel %vm711, %v1429, %v1431
        %1436 = vst [vmem:[#allocation4 + $0x288] sm:$0xff] %v1432
        %1437 = vst [vmem:[#allocation4 + $0x298] sm:$0xff] %v1433
        %v1438 = vld [vmem:[#allocation2 + $0x20] sm:$0xff]
        %v1439 = vld [vmem:[#allocation2 + $0x28] sm:$0xff]
        %v1440 = vld [vmem:[#allocation2 + $0x58] sm:$0xff]
        %v1441 = vld [vmem:[#allocation2 + $0x60] sm:$0xff]
        %1446 = vrot.lane.b32.xlu0 %v1438, 123
        %v1447 = vpop.permute.xlu0 %1446
        %1448 = vrot.lane.b32.xlu0 %v1439, 123
        %v1449 = vpop.permute.xlu0 %1448
        %1450 = vrot.lane.b32.xlu0 %v1440, 123
        %v1451 = vpop.permute.xlu0 %1450
        %1452 = vrot.lane.b32.xlu0 %v1441, 123
        %v1453 = vpop.permute.xlu0 %1452
        %v1454 = vsel %vm734, %v1447, %v1449
        %v1455 = vsel %vm734, %v1451, %v1453
        %1458 = vst [vmem:[#allocation4 + $0x2a8] sm:$0xff] %v1454
        %1459 = vst [vmem:[#allocation4 + $0x2b8] sm:$0xff] %v1455
        %v1460 = vld [vmem:[#allocation2 + $0x20] sm:$0xff]
        %v1461 = vld [vmem:[#allocation2 + $0x28] sm:$0xff]
        %v1462 = vld [vmem:[#allocation2 + $0x58] sm:$0xff]
        %v1463 = vld [vmem:[#allocation2 + $0x60] sm:$0xff]
        %1468 = vrot.lane.b32.xlu0 %v1460, 122
        %v1469 = vpop.permute.xlu0 %1468
        %1470 = vrot.lane.b32.xlu0 %v1461, 122
        %v1471 = vpop.permute.xlu0 %1470
        %1472 = vrot.lane.b32.xlu0 %v1462, 122
        %v1473 = vpop.permute.xlu0 %1472
        %1474 = vrot.lane.b32.xlu0 %v1463, 122
        %v1475 = vpop.permute.xlu0 %1474
        %v1476 = vsel %vm757, %v1469, %v1471
        %v1477 = vsel %vm757, %v1473, %v1475
        %1480 = vst [vmem:[#allocation4 + $0x2c8] sm:$0xff] %v1476
        %1481 = vst [vmem:[#allocation4 + $0x2d8] sm:$0xff] %v1477
        %v1482 = vld [vmem:[#allocation2 + $0x20] sm:$0xff]
        %v1483 = vld [vmem:[#allocation2 + $0x28] sm:$0xff]
        %v1484 = vld [vmem:[#allocation2 + $0x58] sm:$0xff]
        %v1485 = vld [vmem:[#allocation2 + $0x60] sm:$0xff]
        %1490 = vrot.lane.b32.xlu0 %v1482, 121
        %v1491 = vpop.permute.xlu0 %1490
        %1492 = vrot.lane.b32.xlu0 %v1483, 121
        %v1493 = vpop.permute.xlu0 %1492
        %1494 = vrot.lane.b32.xlu0 %v1484, 121
        %v1495 = vpop.permute.xlu0 %1494
        %1496 = vrot.lane.b32.xlu0 %v1485, 121
        %v1497 = vpop.permute.xlu0 %1496
        %v1498 = vsel %vm780, %v1491, %v1493
        %v1499 = vsel %vm780, %v1495, %v1497
        %1502 = vst [vmem:[#allocation4 + $0x2e8] sm:$0xff] %v1498
        %1503 = vst [vmem:[#allocation4 + $0x2f8] sm:$0xff] %v1499
        %v1504 = vld [vmem:[#allocation2 + $0x20] sm:$0xff]
        %v1505 = vld [vmem:[#allocation2 + $0x28] sm:$0xff]
        %v1506 = vld [vmem:[#allocation2 + $0x58] sm:$0xff]
        %v1507 = vld [vmem:[#allocation2 + $0x60] sm:$0xff]
        %1512 = vrot.lane.b32.xlu0 %v1504, 120
        %v1513 = vpop.permute.xlu0 %1512
        %1514 = vrot.lane.b32.xlu0 %v1505, 120
        %v1515 = vpop.permute.xlu0 %1514
        %1516 = vrot.lane.b32.xlu0 %v1506, 120
        %v1517 = vpop.permute.xlu0 %1516
        %1518 = vrot.lane.b32.xlu0 %v1507, 120
        %v1519 = vpop.permute.xlu0 %1518
        %v1520 = vsel %vm803, %v1513, %v1515
        %v1521 = vsel %vm803, %v1517, %v1519
        %1524 = vst [vmem:[#allocation4 + $0x308] sm:$0xff] %v1520
        %1525 = vst [vmem:[#allocation4 + $0x318] sm:$0xff] %v1521
        %v1526 = vld [vmem:[#allocation2 + $0x20] sm:$0xff]
        %v1527 = vld [vmem:[#allocation2 + $0x28] sm:$0xff]
        %v1528 = vld [vmem:[#allocation2 + $0x58] sm:$0xff]
        %v1529 = vld [vmem:[#allocation2 + $0x60] sm:$0xff]
        %1534 = vrot.lane.b32.xlu0 %v1526, 119
        %v1535 = vpop.permute.xlu0 %1534
        %1536 = vrot.lane.b32.xlu0 %v1527, 119
        %v1537 = vpop.permute.xlu0 %1536
        %1538 = vrot.lane.b32.xlu0 %v1528, 119
        %v1539 = vpop.permute.xlu0 %1538
        %1540 = vrot.lane.b32.xlu0 %v1529, 119
        %v1541 = vpop.permute.xlu0 %1540
        %v1542 = vsel %vm826, %v1535, %v1537
        %v1543 = vsel %vm826, %v1539, %v1541
        %1546 = vst [vmem:[#allocation4 + $0x328] sm:$0xff] %v1542
        %1547 = vst [vmem:[#allocation4 + $0x338] sm:$0xff] %v1543
        %v1548 = vld [vmem:[#allocation2 + $0x20] sm:$0xff]
        %v1549 = vld [vmem:[#allocation2 + $0x28] sm:$0xff]
        %v1550 = vld [vmem:[#allocation2 + $0x58] sm:$0xff]
        %v1551 = vld [vmem:[#allocation2 + $0x60] sm:$0xff]
        %1556 = vrot.lane.b32.xlu0 %v1548, 118
        %v1557 = vpop.permute.xlu0 %1556
        %1558 = vrot.lane.b32.xlu0 %v1549, 118
        %v1559 = vpop.permute.xlu0 %1558
        %1560 = vrot.lane.b32.xlu0 %v1550, 118
        %v1561 = vpop.permute.xlu0 %1560
        %1562 = vrot.lane.b32.xlu0 %v1551, 118
        %v1563 = vpop.permute.xlu0 %1562
        %v1564 = vsel %vm849, %v1557, %v1559
        %v1565 = vsel %vm849, %v1561, %v1563
        %1568 = vst [vmem:[#allocation4 + $0x348] sm:$0xff] %v1564
        %1569 = vst [vmem:[#allocation4 + $0x358] sm:$0xff] %v1565
        %v1570 = vld [vmem:[#allocation2 + $0x20] sm:$0xff]
        %v1571 = vld [vmem:[#allocation2 + $0x28] sm:$0xff]
        %v1572 = vld [vmem:[#allocation2 + $0x58] sm:$0xff]
        %v1573 = vld [vmem:[#allocation2 + $0x60] sm:$0xff]
        %1578 = vrot.lane.b32.xlu0 %v1570, 117
        %v1579 = vpop.permute.xlu0 %1578
        %1580 = vrot.lane.b32.xlu0 %v1571, 117
        %v1581 = vpop.permute.xlu0 %1580
        %1582 = vrot.lane.b32.xlu0 %v1572, 117
        %v1583 = vpop.permute.xlu0 %1582
        %1584 = vrot.lane.b32.xlu0 %v1573, 117
        %v1585 = vpop.permute.xlu0 %1584
        %v1586 = vsel %vm872, %v1579, %v1581
        %v1587 = vsel %vm872, %v1583, %v1585
        %1590 = vst [vmem:[#allocation4 + $0x368] sm:$0xff] %v1586
        %1591 = vst [vmem:[#allocation4 + $0x378] sm:$0xff] %v1587
        %v1592 = vld [vmem:[#allocation2 + $0x20] sm:$0xff]
        %v1593 = vld [vmem:[#allocation2 + $0x28] sm:$0xff]
        %v1594 = vld [vmem:[#allocation2 + $0x58] sm:$0xff]
        %v1595 = vld [vmem:[#allocation2 + $0x60] sm:$0xff]
        %1600 = vrot.lane.b32.xlu0 %v1592, 116
        %v1601 = vpop.permute.xlu0 %1600
        %1602 = vrot.lane.b32.xlu0 %v1593, 116
        %v1603 = vpop.permute.xlu0 %1602
        %1604 = vrot.lane.b32.xlu0 %v1594, 116
        %v1605 = vpop.permute.xlu0 %1604
        %1606 = vrot.lane.b32.xlu0 %v1595, 116
        %v1607 = vpop.permute.xlu0 %1606
        %v1608 = vsel %vm895, %v1601, %v1603
        %v1609 = vsel %vm895, %v1605, %v1607
        %1612 = vst [vmem:[#allocation4 + $0x388] sm:$0xff] %v1608
        %1613 = vst [vmem:[#allocation4 + $0x398] sm:$0xff] %v1609
        %v1614 = vld [vmem:[#allocation2 + $0x20] sm:$0xff]
        %v1615 = vld [vmem:[#allocation2 + $0x28] sm:$0xff]
        %v1616 = vld [vmem:[#allocation2 + $0x58] sm:$0xff]
        %v1617 = vld [vmem:[#allocation2 + $0x60] sm:$0xff]
        %1622 = vrot.lane.b32.xlu0 %v1614, 115
        %v1623 = vpop.permute.xlu0 %1622
        %1624 = vrot.lane.b32.xlu0 %v1615, 115
        %v1625 = vpop.permute.xlu0 %1624
        %1626 = vrot.lane.b32.xlu0 %v1616, 115
        %v1627 = vpop.permute.xlu0 %1626
        %1628 = vrot.lane.b32.xlu0 %v1617, 115
        %v1629 = vpop.permute.xlu0 %1628
        %v1630 = vsel %vm918, %v1623, %v1625
        %v1631 = vsel %vm918, %v1627, %v1629
        %1634 = vst [vmem:[#allocation4 + $0x3a8] sm:$0xff] %v1630
        %1635 = vst [vmem:[#allocation4 + $0x3b8] sm:$0xff] %v1631
        %v1636 = vld [vmem:[#allocation2 + $0x20] sm:$0xff]
        %v1637 = vld [vmem:[#allocation2 + $0x28] sm:$0xff]
        %v1638 = vld [vmem:[#allocation2 + $0x58] sm:$0xff]
        %v1639 = vld [vmem:[#allocation2 + $0x60] sm:$0xff]
        %1644 = vrot.lane.b32.xlu0 %v1636, 114
        %v1645 = vpop.permute.xlu0 %1644
        %1646 = vrot.lane.b32.xlu0 %v1637, 114
        %v1647 = vpop.permute.xlu0 %1646
        %1648 = vrot.lane.b32.xlu0 %v1638, 114
        %v1649 = vpop.permute.xlu0 %1648
        %1650 = vrot.lane.b32.xlu0 %v1639, 114
        %v1651 = vpop.permute.xlu0 %1650
        %v1652 = vsel %vm941, %v1645, %v1647
        %v1653 = vsel %vm941, %v1649, %v1651
        %1656 = vst [vmem:[#allocation4 + $0x3c8] sm:$0xff] %v1652
        %1657 = vst [vmem:[#allocation4 + $0x3d8] sm:$0xff] %v1653
        %v1658 = vld [vmem:[#allocation2 + $0x20] sm:$0xff]
        %v1659 = vld [vmem:[#allocation2 + $0x28] sm:$0xff]
        %v1660 = vld [vmem:[#allocation2 + $0x58] sm:$0xff]
        %v1661 = vld [vmem:[#allocation2 + $0x60] sm:$0xff]
        %1666 = vrot.lane.b32.xlu0 %v1658, 113
        %v1667 = vpop.permute.xlu0 %1666
        %1668 = vrot.lane.b32.xlu0 %v1659, 113
        %v1669 = vpop.permute.xlu0 %1668
        %1670 = vrot.lane.b32.xlu0 %v1660, 113
        %v1671 = vpop.permute.xlu0 %1670
        %1672 = vrot.lane.b32.xlu0 %v1661, 113
        %v1673 = vpop.permute.xlu0 %1672
        %v1674 = vsel %vm964, %v1667, %v1669
        %v1675 = vsel %vm964, %v1671, %v1673
        %1678 = vst [vmem:[#allocation4 + $0x3e8] sm:$0xff] %v1674
        %1679 = vst [vmem:[#allocation4 + $0x3f8] sm:$0xff] %v1675
        %v1680 = vld [vmem:[#allocation2 + $0x20] sm:$0xff]
        %v1681 = vld [vmem:[#allocation2 + $0x28] sm:$0xff]
        %v1682 = vld [vmem:[#allocation2 + $0x58] sm:$0xff]
        %v1683 = vld [vmem:[#allocation2 + $0x60] sm:$0xff]
        %1688 = vrot.lane.b32.xlu0 %v1680, 112
        %v1689 = vpop.permute.xlu0 %1688
        %1690 = vrot.lane.b32.xlu0 %v1681, 112
        %v1691 = vpop.permute.xlu0 %1690
        %1692 = vrot.lane.b32.xlu0 %v1682, 112
        %v1693 = vpop.permute.xlu0 %1692
        %1694 = vrot.lane.b32.xlu0 %v1683, 112
        %v1695 = vpop.permute.xlu0 %1694
        %v1696 = vsel %vm987, %v1689, %v1691
        %v1697 = vsel %vm987, %v1693, %v1695
        %1700 = vst [vmem:[#allocation4 + $0x408] sm:$0xff] %v1696
        %1701 = vst [vmem:[#allocation4 + $0x418] sm:$0xff] %v1697
        %v1702 = vld [vmem:[#allocation8] sm:$0xff]
        %v1703 = vld [vmem:[#allocation8 + $0x8] sm:$0xff]
        %v1704 = vld [vmem:[#allocation8 + $0x10] sm:$0xff]
        %v1705 = vld [vmem:[#allocation8 + $0x18] sm:$0xff]
        %v1706 = vld [vmem:[#allocation8 + $0x20] sm:$0xff]
        %v1707 = vld [vmem:[#allocation8 + $0x28] sm:$0xff]
        %v1708 = vld [vmem:[#allocation8 + $0x30] sm:$0xff]
        %v1709 = vld [vmem:[#allocation8 + $0x38] sm:$0xff]
        %v1710 = vld [vmem:[#allocation8 + $0x40] sm:$0xff]
        %v1711 = vld [vmem:[#allocation8 + $0x48] sm:$0xff]
        %v1712 = vld [vmem:[#allocation4] sm:$0xff]
        %v1713 = vld [vmem:[#allocation4 + $0x8] sm:$0xff]
        %v1714 = vld [vmem:[#allocation4 + $0x10] sm:$0xff]
        %v1715 = vld [vmem:[#allocation4 + $0x18] sm:$0xff]
        %v1716 = vld [vmem:[#allocation4 + $0x20] sm:$0xff]
        %v1717 = vld [vmem:[#allocation4 + $0x28] sm:$0xff]
        %v1718 = vld [vmem:[#allocation4 + $0x30] sm:$0xff]
        %v1719 = vld [vmem:[#allocation4 + $0x38] sm:$0xff]
        %v1720 = vld [vmem:[#allocation4 + $0x40] sm:$0xff]
        %v1721 = vld [vmem:[#allocation4 + $0x48] sm:$0xff]
        %v1722 = vld [vmem:[#allocation4 + $0x50] sm:$0xff]
        %v1723 = vld [vmem:[#allocation4 + $0x58] sm:$0xff]
        %v1724 = vld [vmem:[#allocation4 + $0x60] sm:$0xff]
        %v1725 = vld [vmem:[#allocation4 + $0x68] sm:$0xff]
        %v1726 = vld [vmem:[#allocation4 + $0x70] sm:$0xff]
        %v1727 = vld [vmem:[#allocation4 + $0x78] sm:$0xff]
        %v1728 = vld [vmem:[#allocation4 + $0x80] sm:$0xff]
        %v1729 = vld [vmem:[#allocation4 + $0x88] sm:$0xff]
        %v1730 = vld [vmem:[#allocation4 + $0x90] sm:$0xff]
        %v1731 = vld [vmem:[#allocation4 + $0x98] sm:$0xff]
        %v1732 = vld [vmem:[#allocation4 + $0xa0] sm:$0xff]
        %v1733 = vld [vmem:[#allocation4 + $0xa8] sm:$0xff]
        %v1734 = vld [vmem:[#allocation4 + $0xb0] sm:$0xff]
        %v1735 = vld [vmem:[#allocation4 + $0xb8] sm:$0xff]
        %v1736 = vld [vmem:[#allocation4 + $0xc0] sm:$0xff]
        %v1737 = vld [vmem:[#allocation4 + $0xc8] sm:$0xff]
        %v1738 = vld [vmem:[#allocation4 + $0xd0] sm:$0xff]
        %v1739 = vld [vmem:[#allocation4 + $0xd8] sm:$0xff]
        %v1740 = vld [vmem:[#allocation4 + $0xe0] sm:$0xff]
        %v1741 = vld [vmem:[#allocation4 + $0xe8] sm:$0xff]
        %v1742 = vld [vmem:[#allocation4 + $0xf0] sm:$0xff]
        %v1743 = vld [vmem:[#allocation4 + $0xf8] sm:$0xff]
        %v1744 = vld [vmem:[#allocation4 + $0x100] sm:$0xff]
        %v1745 = vld [vmem:[#allocation4 + $0x108] sm:$0xff]
        %v1746 = vld [vmem:[#allocation4 + $0x110] sm:$0xff]
        %v1747 = vld [vmem:[#allocation4 + $0x118] sm:$0xff]
        %v1748 = vld [vmem:[#allocation4 + $0x120] sm:$0xff]
        %v1749 = vld [vmem:[#allocation4 + $0x128] sm:$0xff]
        %v1750 = vld [vmem:[#allocation4 + $0x130] sm:$0xff]
        %v1751 = vld [vmem:[#allocation4 + $0x138] sm:$0xff]
        %v1752 = vld [vmem:[#allocation4 + $0x140] sm:$0xff]
        %v1753 = vld [vmem:[#allocation4 + $0x148] sm:$0xff]
        %v1754 = vld [vmem:[#allocation4 + $0x150] sm:$0xff]
        %v1755 = vld [vmem:[#allocation4 + $0x158] sm:$0xff]
        %v1756 = vld [vmem:[#allocation4 + $0x160] sm:$0xff]
        %v1757 = vld [vmem:[#allocation4 + $0x168] sm:$0xff]
        %v1758 = vld [vmem:[#allocation4 + $0x170] sm:$0xff]
        %v1759 = vld [vmem:[#allocation4 + $0x178] sm:$0xff]
        %v1760 = vld [vmem:[#allocation4 + $0x180] sm:$0xff]
        %v1761 = vld [vmem:[#allocation4 + $0x188] sm:$0xff]
        %v1762 = vld [vmem:[#allocation4 + $0x190] sm:$0xff]
        %v1763 = vld [vmem:[#allocation4 + $0x198] sm:$0xff]
        %v1764 = vld [vmem:[#allocation4 + $0x1a0] sm:$0xff]
        %v1765 = vld [vmem:[#allocation4 + $0x1a8] sm:$0xff]
        %v1766 = vld [vmem:[#allocation4 + $0x1b0] sm:$0xff]
        %v1767 = vld [vmem:[#allocation4 + $0x1b8] sm:$0xff]
        %v1768 = vld [vmem:[#allocation4 + $0x1c0] sm:$0xff]
        %v1769 = vld [vmem:[#allocation4 + $0x1c8] sm:$0xff]
        %v1770 = vld [vmem:[#allocation4 + $0x1d0] sm:$0xff]
        %v1771 = vld [vmem:[#allocation4 + $0x1d8] sm:$0xff]
        %v1772 = vld [vmem:[#allocation4 + $0x1e0] sm:$0xff]
        %v1773 = vld [vmem:[#allocation4 + $0x1e8] sm:$0xff]
        %v1774 = vld [vmem:[#allocation4 + $0x1f0] sm:$0xff]
        %v1775 = vld [vmem:[#allocation4 + $0x1f8] sm:$0xff]
        %v1776 = vld [vmem:[#allocation4 + $0x200] sm:$0xff]
        %v1777 = vld [vmem:[#allocation4 + $0x208] sm:$0xff]
        %v1778 = vld [vmem:[#allocation4 + $0x210] sm:$0xff]
        %v1779 = vld [vmem:[#allocation4 + $0x218] sm:$0xff]
        %v1780 = vld [vmem:[#allocation4 + $0x220] sm:$0xff]
        %v1781 = vld [vmem:[#allocation4 + $0x228] sm:$0xff]
        %v1782 = vld [vmem:[#allocation4 + $0x230] sm:$0xff]
        %v1783 = vld [vmem:[#allocation4 + $0x238] sm:$0xff]
        %v1784 = vld [vmem:[#allocation4 + $0x240] sm:$0xff]
        %v1785 = vld [vmem:[#allocation4 + $0x248] sm:$0xff]
        %v1786 = vld [vmem:[#allocation4 + $0x250] sm:$0xff]
        %v1787 = vld [vmem:[#allocation4 + $0x258] sm:$0xff]
        %v1788 = vld [vmem:[#allocation4 + $0x260] sm:$0xff]
        %v1789 = vld [vmem:[#allocation4 + $0x268] sm:$0xff]
        %v1790 = vld [vmem:[#allocation4 + $0x270] sm:$0xff]
        %v1791 = vld [vmem:[#allocation4 + $0x278] sm:$0xff]
        %v1792 = vld [vmem:[#allocation4 + $0x280] sm:$0xff]
        %v1793 = vld [vmem:[#allocation4 + $0x288] sm:$0xff]
        %v1794 = vld [vmem:[#allocation4 + $0x290] sm:$0xff]
        %v1795 = vld [vmem:[#allocation4 + $0x298] sm:$0xff]
        %v1796 = vld [vmem:[#allocation4 + $0x2a0] sm:$0xff]
        %v1797 = vld [vmem:[#allocation4 + $0x2a8] sm:$0xff]
        %v1798 = vld [vmem:[#allocation4 + $0x2b0] sm:$0xff]
        %v1799 = vld [vmem:[#allocation4 + $0x2b8] sm:$0xff]
        %v1800 = vld [vmem:[#allocation4 + $0x2c0] sm:$0xff]
        %v1801 = vld [vmem:[#allocation4 + $0x2c8] sm:$0xff]
        %v1802 = vld [vmem:[#allocation4 + $0x2d0] sm:$0xff]
        %v1803 = vld [vmem:[#allocation4 + $0x2d8] sm:$0xff]
        %v1804 = vld [vmem:[#allocation4 + $0x2e0] sm:$0xff]
        %v1805 = vld [vmem:[#allocation4 + $0x2e8] sm:$0xff]
        %v1806 = vld [vmem:[#allocation4 + $0x2f0] sm:$0xff]
        %v1807 = vld [vmem:[#allocation4 + $0x2f8] sm:$0xff]
        %v1808 = vld [vmem:[#allocation4 + $0x300] sm:$0xff]
        %v1809 = vld [vmem:[#allocation4 + $0x308] sm:$0xff]
        %v1810 = vld [vmem:[#allocation4 + $0x310] sm:$0xff]
        %v1811 = vld [vmem:[#allocation4 + $0x318] sm:$0xff]
        %v1812 = vld [vmem:[#allocation4 + $0x320] sm:$0xff]
        %v1813 = vld [vmem:[#allocation4 + $0x328] sm:$0xff]
        %v1814 = vld [vmem:[#allocation4 + $0x330] sm:$0xff]
        %v1815 = vld [vmem:[#allocation4 + $0x338] sm:$0xff]
        %v1816 = vld [vmem:[#allocation4 + $0x340] sm:$0xff]
        %v1817 = vld [vmem:[#allocation4 + $0x348] sm:$0xff]
        %v1818 = vld [vmem:[#allocation4 + $0x350] sm:$0xff]
        %v1819 = vld [vmem:[#allocation4 + $0x358] sm:$0xff]
        %v1820 = vld [vmem:[#allocation4 + $0x360] sm:$0xff]
        %v1821 = vld [vmem:[#allocation4 + $0x368] sm:$0xff]
        %v1822 = vld [vmem:[#allocation4 + $0x370] sm:$0xff]
        %v1823 = vld [vmem:[#allocation4 + $0x378] sm:$0xff]
        %v1824 = vld [vmem:[#allocation4 + $0x380] sm:$0xff]
        %v1825 = vld [vmem:[#allocation4 + $0x388] sm:$0xff]
        %v1826 = vld [vmem:[#allocation4 + $0x390] sm:$0xff]
        %v1827 = vld [vmem:[#allocation4 + $0x398] sm:$0xff]
        %v1828 = vld [vmem:[#allocation4 + $0x3a0] sm:$0xff]
        %v1829 = vld [vmem:[#allocation4 + $0x3a8] sm:$0xff]
        %v1830 = vld [vmem:[#allocation4 + $0x3b0] sm:$0xff]
        %v1831 = vld [vmem:[#allocation4 + $0x3b8] sm:$0xff]
        %v1832 = vld [vmem:[#allocation4 + $0x3c0] sm:$0xff]
        %v1833 = vld [vmem:[#allocation4 + $0x3c8] sm:$0xff]
        %v1834 = vld [vmem:[#allocation4 + $0x3d0] sm:$0xff]
        %v1835 = vld [vmem:[#allocation4 + $0x3d8] sm:$0xff]
        %v1836 = vld [vmem:[#allocation4 + $0x3e0] sm:$0xff]
        %v1837 = vld [vmem:[#allocation4 + $0x3e8] sm:$0xff]
        %v1838 = vld [vmem:[#allocation4 + $0x3f0] sm:$0xff]
        %v1839 = vld [vmem:[#allocation4 + $0x3f8] sm:$0xff]
        %v1840 = vld [vmem:[#allocation4 + $0x400] sm:$0xff]
        %v1841 = vld [vmem:[#allocation4 + $0x408] sm:$0xff]
        %v1842 = vld [vmem:[#allocation4 + $0x410] sm:$0xff]
        %v1843 = vld [vmem:[#allocation4 + $0x418] sm:$0xff]
        %v1844 = vld [vmem:[#allocation4 + $0x420] sm:$0xff]
        %v1845 = vld [vmem:[#allocation4 + $0x428] sm:$0xff]
        %v1846 = vld [vmem:[#allocation4 + $0x430] sm:$0xff]
        %v1847 = vld [vmem:[#allocation4 + $0x438] sm:$0xff]
        %vm1848 = vcmask 261120
        %v1850 = vsel %vm1848, %v1706, 0
        %v1853 = vsel %vm1848, %v1711, 0
        %1855 = vmatprep.subr.mxu0 %v1713
        %1856 = vmatpush1.msra.mxu0 %v1712
        %1857 = vmatprep.subr.mxu0 %v1715
        %1858 = vmatpush1.msra.mxu0 %v1714
        %1859 = vmatprep.subr.mxu0 %v1717
        %1860 = vmatpush1.msra.mxu0 %v1716
        %1861 = vmatprep.subr.mxu0 %v1719
        %1862 = vmatpush1.msra.mxu0 %v1718
        %1863 = vmatprep.subr.mxu0 %v1721
        %1864 = vmatpush1.msra.mxu0 %v1720
        %1865 = vmatprep.subr.mxu0 %v1723
        %1866 = vmatpush1.msra.mxu0 %v1722
        %1867 = vmatprep.subr.mxu0 %v1725
        %1868 = vmatpush1.msra.mxu0 %v1724
        %1869 = vmatprep.subr.mxu0 %v1727
        %1870 = vmatpush1.msra.mxu0 %v1726
        %1871 = vmatprep.subr.mxu0 %v1729
        %1872 = vmatpush1.msra.mxu0 %v1728
        %1873 = vmatprep.subr.mxu0 %v1731
        %1874 = vmatpush1.msra.mxu0 %v1730
        %1875 = vmatprep.subr.mxu0 %v1733
        %1876 = vmatpush1.msra.mxu0 %v1732
        %1877 = vmatprep.subr.mxu0 %v1735
        %1878 = vmatpush1.msra.mxu0 %v1734
        %1879 = vmatprep.subr.mxu0 %v1737
        %1880 = vmatpush1.msra.mxu0 %v1736
        %1881 = vmatprep.subr.mxu0 %v1739
        %1882 = vmatpush1.msra.mxu0 %v1738
        %1883 = vmatprep.subr.mxu0 %v1741
        %1884 = vmatpush1.msra.mxu0 %v1740
        %1885 = vmatprep.subr.mxu0 %v1743
        %1886 = vmatpush1.msra.mxu0 %v1742
        %1887 = vmatprep.subr.mxu0 %v1745
        %1888 = vmatpush1.msra.mxu0 %v1744
        %1889 = vmatprep.subr.mxu0 %v1747
        %1890 = vmatpush1.msra.mxu0 %v1746
        %1891 = vmatprep.subr.mxu0 %v1749
        %1892 = vmatpush1.msra.mxu0 %v1748
        %1893 = vmatprep.subr.mxu0 %v1751
        %1894 = vmatpush1.msra.mxu0 %v1750
        %1895 = vmatprep.subr.mxu0 %v1753
        %1896 = vmatpush1.msra.mxu0 %v1752
        %1897 = vmatprep.subr.mxu0 %v1755
        %1898 = vmatpush1.msra.mxu0 %v1754
        %1899 = vmatprep.subr.mxu0 %v1757
        %1900 = vmatpush1.msra.mxu0 %v1756
        %1901 = vmatprep.subr.mxu0 %v1759
        %1902 = vmatpush1.msra.mxu0 %v1758
        %1903 = vmatprep.subr.mxu0 %v1761
        %1904 = vmatpush1.msra.mxu0 %v1760
        %1905 = vmatprep.subr.mxu0 %v1763
        %1906 = vmatpush1.msra.mxu0 %v1762
        %1907 = vmatprep.subr.mxu0 %v1765
        %1908 = vmatpush1.msra.mxu0 %v1764
        %1909 = vmatprep.subr.mxu0 %v1767
        %1910 = vmatpush1.msra.mxu0 %v1766
        %1911 = vmatprep.subr.mxu0 %v1769
        %1912 = vmatpush1.msra.mxu0 %v1768
        %1913 = vmatprep.subr.mxu0 %v1771
        %1914 = vmatpush1.msra.mxu0 %v1770
        %1915 = vmatprep.subr.mxu0 %v1773
        %1916 = vmatpush1.msra.mxu0 %v1772
        %1917 = vmatprep.subr.mxu0 %v1775
        %1918 = vmatpush1.msra.mxu0 %v1774
        %1919 = vmatprep.mubr.f32.mxu0 %v1703
        %1920 = vmatmul.mubr.f32.gmra.mrb[0].mxu0 %v1702
        %v1921 = vpop.f32.mrb[0].mxu0
        %v1922 = vadd.f32 0.0, %v1921
        %v1923 = vpop.f32.mrb[0].mxu0
        %v1924 = vadd.f32 0.0, %v1923
        %1925 = vmatprep.mubr.f32.mxu0 %v1708
        %1926 = vmatmul.mubr.f32.gmra.mrb[0].mxu0 %v1707
        %v1927 = vpop.f32.mrb[0].mxu0
        %v1928 = vadd.f32 0.0, %v1927
        %v1929 = vpop.f32.mrb[0].mxu0
        %v1930 = vadd.f32 0.0, %v1929
        %1931 = vdwg.mxu0
        %1932 = vmatprep.subr.mxu0 %v1777
        %1933 = vmatpush1.msra.mxu0 %v1776
        %1934 = vmatprep.subr.mxu0 %v1779
        %1935 = vmatpush1.msra.mxu0 %v1778
        %1936 = vmatprep.subr.mxu0 %v1781
        %1937 = vmatpush1.msra.mxu0 %v1780
        %1938 = vmatprep.subr.mxu0 %v1783
        %1939 = vmatpush1.msra.mxu0 %v1782
        %1940 = vmatprep.subr.mxu0 %v1785
        %1941 = vmatpush1.msra.mxu0 %v1784
        %1942 = vmatprep.subr.mxu0 %v1787
        %1943 = vmatpush1.msra.mxu0 %v1786
        %1944 = vmatprep.subr.mxu0 %v1789
        %1945 = vmatpush1.msra.mxu0 %v1788
        %1946 = vmatprep.subr.mxu0 %v1791
        %1947 = vmatpush1.msra.mxu0 %v1790
        %1948 = vmatprep.subr.mxu0 %v1793
        %1949 = vmatpush1.msra.mxu0 %v1792
        %1950 = vmatprep.subr.mxu0 %v1795
        %1951 = vmatpush1.msra.mxu0 %v1794
        %1952 = vmatprep.subr.mxu0 %v1797
        %1953 = vmatpush1.msra.mxu0 %v1796
        %1954 = vmatprep.subr.mxu0 %v1799
        %1955 = vmatpush1.msra.mxu0 %v1798
        %1956 = vmatprep.subr.mxu0 %v1801
        %1957 = vmatpush1.msra.mxu0 %v1800
        %1958 = vmatprep.subr.mxu0 %v1803
        %1959 = vmatpush1.msra.mxu0 %v1802
        %1960 = vmatprep.subr.mxu0 %v1805
        %1961 = vmatpush1.msra.mxu0 %v1804
        %1962 = vmatprep.subr.mxu0 %v1807
        %1963 = vmatpush1.msra.mxu0 %v1806
        %1964 = vmatprep.subr.mxu0 %v1809
        %1965 = vmatpush1.msra.mxu0 %v1808
        %1966 = vmatprep.subr.mxu0 %v1811
        %1967 = vmatpush1.msra.mxu0 %v1810
        %1968 = vmatprep.subr.mxu0 %v1813
        %1969 = vmatpush1.msra.mxu0 %v1812
        %1970 = vmatprep.subr.mxu0 %v1815
        %1971 = vmatpush1.msra.mxu0 %v1814
        %1972 = vmatprep.subr.mxu0 %v1817
        %1973 = vmatpush1.msra.mxu0 %v1816
        %1974 = vmatprep.subr.mxu0 %v1819
        %1975 = vmatpush1.msra.mxu0 %v1818
        %1976 = vmatprep.subr.mxu0 %v1821
        %1977 = vmatpush1.msra.mxu0 %v1820
        %1978 = vmatprep.subr.mxu0 %v1823
        %1979 = vmatpush1.msra.mxu0 %v1822
        %1980 = vmatprep.subr.mxu0 %v1825
        %1981 = vmatpush1.msra.mxu0 %v1824
        %1982 = vmatprep.subr.mxu0 %v1827
        %1983 = vmatpush1.msra.mxu0 %v1826
        %1984 = vmatprep.subr.mxu0 %v1829
        %1985 = vmatpush1.msra.mxu0 %v1828
        %1986 = vmatprep.subr.mxu0 %v1831
        %1987 = vmatpush1.msra.mxu0 %v1830
        %1988 = vmatprep.subr.mxu0 %v1833
        %1989 = vmatpush1.msra.mxu0 %v1832
        %1990 = vmatprep.subr.mxu0 %v1835
        %1991 = vmatpush1.msra.mxu0 %v1834
        %1992 = vmatprep.subr.mxu0 %v1837
        %1993 = vmatpush1.msra.mxu0 %v1836
        %1994 = vmatprep.subr.mxu0 %v1839
        %1995 = vmatpush1.msra.mxu0 %v1838
        %1996 = vmatprep.mubr.f32.mxu0 %v1705
        %1997 = vmatmul.mubr.f32.gmra.mrb[0].mxu0 %v1704
        %v1998 = vpop.f32.mrb[0].mxu0
        %v1999 = vadd.f32 %v1922, %v1998
        %v2000 = vpop.f32.mrb[0].mxu0
        %v2001 = vadd.f32 %v1924, %v2000
        %2002 = vmatprep.mubr.f32.mxu0 %v1710
        %2003 = vmatmul.mubr.f32.gmra.mrb[0].mxu0 %v1709
        %v2004 = vpop.f32.mrb[0].mxu0
        %v2005 = vadd.f32 %v1928, %v2004
        %v2006 = vpop.f32.mrb[0].mxu0
        %v2007 = vadd.f32 %v1930, %v2006
        %2008 = vdwg.mxu0
        %2009 = vmatprep.subr.mxu0 %v1841
        %2010 = vmatpush1.msra.mxu0 %v1840
        %2011 = vmatprep.subr.mxu0 %v1843
        %2012 = vmatpush1.msra.mxu0 %v1842
        %2013 = vmatprep.subr.mxu0 %v1845
        %2014 = vmatpush1.msra.mxu0 %v1844
        %2015 = vmatprep.subr.mxu0 %v1847
        %2016 = vmatpush1.msra.mxu0 %v1846
        %2017 = vmatprep.subr.mxu0 0.0
        %2018 = vmatpush1.msra.mxu0 0.0
        %2019 = vmatprep.subr.mxu0 0.0
        %2020 = vmatpush1.msra.mxu0 0.0
        %2021 = vmatprep.subr.mxu0 0.0
        %2022 = vmatpush1.msra.mxu0 0.0
        %2023 = vmatprep.subr.mxu0 0.0
        %2024 = vmatpush1.msra.mxu0 0.0
        %2025 = vmatprep.subr.mxu0 0.0
        %2026 = vmatpush1.msra.mxu0 0.0
        %2027 = vmatprep.subr.mxu0 0.0
        %2028 = vmatpush1.msra.mxu0 0.0
        %2029 = vmatprep.subr.mxu0 0.0
        %2030 = vmatpush1.msra.mxu0 0.0
        %2031 = vmatprep.subr.mxu0 0.0
        %2032 = vmatpush1.msra.mxu0 0.0
        %2033 = vmatprep.subr.mxu0 0.0
        %2034 = vmatpush1.msra.mxu0 0.0
        %2035 = vmatprep.subr.mxu0 0.0
        %2036 = vmatpush1.msra.mxu0 0.0
        %2037 = vmatprep.subr.mxu0 0.0
        %2038 = vmatpush1.msra.mxu0 0.0
        %2039 = vmatprep.subr.mxu0 0.0
        %2040 = vmatpush1.msra.mxu0 0.0
        %2041 = vmatprep.subr.mxu0 0.0
        %2042 = vmatpush1.msra.mxu0 0.0
        %2043 = vmatprep.subr.mxu0 0.0
        %2044 = vmatpush1.msra.mxu0 0.0
        %2045 = vmatprep.subr.mxu0 0.0
        %2046 = vmatpush1.msra.mxu0 0.0
        %2047 = vmatprep.subr.mxu0 0.0
        %2048 = vmatpush1.msra.mxu0 0.0
        %2049 = vmatprep.subr.mxu0 0.0
        %2050 = vmatpush1.msra.mxu0 0.0
        %2051 = vmatprep.subr.mxu0 0.0
        %2052 = vmatpush1.msra.mxu0 0.0
        %2053 = vmatprep.subr.mxu0 0.0
        %2054 = vmatpush1.msra.mxu0 0.0
        %2055 = vmatprep.subr.mxu0 0.0
        %2056 = vmatpush1.msra.mxu0 0.0
        %2057 = vmatprep.subr.mxu0 0.0
        %2058 = vmatpush1.msra.mxu0 0.0
        %2059 = vmatprep.subr.mxu0 0.0
        %2060 = vmatpush1.msra.mxu0 0.0
        %2061 = vmatprep.subr.mxu0 0.0
        %2062 = vmatpush1.msra.mxu0 0.0
        %2063 = vmatprep.subr.mxu0 0.0
        %2064 = vmatpush1.msra.mxu0 0.0
        %2065 = vmatprep.subr.mxu0 0.0
        %2066 = vmatpush1.msra.mxu0 0.0
        %2067 = vmatprep.subr.mxu0 0.0
        %2068 = vmatpush1.msra.mxu0 0.0
        %2069 = vmatprep.subr.mxu0 0.0
        %2070 = vmatpush1.msra.mxu0 0.0
        %2071 = vmatprep.subr.mxu0 0.0
        %2072 = vmatpush1.msra.mxu0 0.0
        %2073 = vmatprep.mubr.f32.mxu0 0.0
        %2074 = vmatmul.mubr.f32.gmra.mrb[0].mxu0 %v1850
        %v2075 = vpop.f32.mrb[0].mxu0
        %v2076 = vadd.f32 %v1999, %v2075
        %v2077 = vpop.f32.mrb[0].mxu0
        %v2078 = vadd.f32 %v2001, %v2077
        %2079 = vmatprep.mubr.f32.mxu0 0.0
        %2080 = vmatmul.mubr.f32.gmra.mrb[0].mxu0 %v1853
        %v2081 = vpop.f32.mrb[0].mxu0
        %v2082 = vadd.f32 %v2005, %v2081
        %v2083 = vpop.f32.mrb[0].mxu0
        %v2084 = vadd.f32 %v2007, %v2083
        %2085 = vdwg.mxu0
        %v2086 = vmax.f32 %v2076, 0.0
        %v2087 = vmax.f32 %v2078, 0.0
        %v2088 = vmax.f32 %v2082, 0.0
        %v2089 = vmax.f32 %v2084, 0.0
        %2090 = vst [vmem:[#allocation3 + $0x8] sm:$0xff] %v2086
        %2091 = vst [vmem:[#allocation3 + $0x40] sm:$0xff] %v2088
        %2092 = vst [vmem:[#allocation3 + $0x20] sm:$0xff] %v2087
        %2093 = vst [vmem:[#allocation3 + $0x58] sm:$0xff] %v2089
        %v2094 = vld [vmem:[#allocation2 + $0x8] sm:$0xff]
        %v2095 = vld [vmem:[#allocation2 + $0x10] sm:$0xff]
        %v2096 = vld [vmem:[#allocation2 + $0x40] sm:$0xff]
        %v2097 = vld [vmem:[#allocation2 + $0x48] sm:$0xff]
        %2102 = vrot.lane.b32.xlu0 %v2094, 16
        %v2103 = vpop.permute.xlu0 %2102
        %2104 = vrot.lane.b32.xlu0 %v2095, 16
        %v2105 = vpop.permute.xlu0 %2104
        %2106 = vrot.lane.b32.xlu0 %v2096, 16
        %v2107 = vpop.permute.xlu0 %2106
        %2108 = vrot.lane.b32.xlu0 %v2097, 16
        %v2109 = vpop.permute.xlu0 %2108
        %v2110 = vsel %vm270, %v2103, %v2105
        %v2111 = vsel %vm270, %v2107, %v2109
        %2114 = vst [vmem:[#allocation4] sm:$0xff] %v2110
        %2115 = vst [vmem:[#allocation4 + $0x10] sm:$0xff] %v2111
        %v2116 = vld [vmem:[#allocation2 + $0x8] sm:$0xff]
        %v2117 = vld [vmem:[#allocation2 + $0x10] sm:$0xff]
        %v2118 = vld [vmem:[#allocation2 + $0x40] sm:$0xff]
        %v2119 = vld [vmem:[#allocation2 + $0x48] sm:$0xff]
        %2124 = vrot.lane.b32.xlu0 %v2116, 15
        %v2125 = vpop.permute.xlu0 %2124
        %2126 = vrot.lane.b32.xlu0 %v2117, 15
        %v2127 = vpop.permute.xlu0 %2126
        %2128 = vrot.lane.b32.xlu0 %v2118, 15
        %v2129 = vpop.permute.xlu0 %2128
        %2130 = vrot.lane.b32.xlu0 %v2119, 15
        %v2131 = vpop.permute.xlu0 %2130
        %v2132 = vsel %vm293, %v2125, %v2127
        %v2133 = vsel %vm293, %v2129, %v2131
        %2136 = vst [vmem:[#allocation4 + $0x20] sm:$0xff] %v2132
        %2137 = vst [vmem:[#allocation4 + $0x30] sm:$0xff] %v2133
        %v2138 = vld [vmem:[#allocation2 + $0x8] sm:$0xff]
        %v2139 = vld [vmem:[#allocation2 + $0x10] sm:$0xff]
        %v2140 = vld [vmem:[#allocation2 + $0x40] sm:$0xff]
        %v2141 = vld [vmem:[#allocation2 + $0x48] sm:$0xff]
        %2146 = vrot.lane.b32.xlu0 %v2138, 14
        %v2147 = vpop.permute.xlu0 %2146
        %2148 = vrot.lane.b32.xlu0 %v2139, 14
        %v2149 = vpop.permute.xlu0 %2148
        %2150 = vrot.lane.b32.xlu0 %v2140, 14
        %v2151 = vpop.permute.xlu0 %2150
        %2152 = vrot.lane.b32.xlu0 %v2141, 14
        %v2153 = vpop.permute.xlu0 %2152
        %v2154 = vsel %vm316, %v2147, %v2149
        %v2155 = vsel %vm316, %v2151, %v2153
        %2158 = vst [vmem:[#allocation4 + $0x40] sm:$0xff] %v2154
        %2159 = vst [vmem:[#allocation4 + $0x50] sm:$0xff] %v2155
        %v2160 = vld [vmem:[#allocation2 + $0x8] sm:$0xff]
        %v2161 = vld [vmem:[#allocation2 + $0x10] sm:$0xff]
        %v2162 = vld [vmem:[#allocation2 + $0x40] sm:$0xff]
        %v2163 = vld [vmem:[#allocation2 + $0x48] sm:$0xff]
        %2168 = vrot.lane.b32.xlu0 %v2160, 13
        %v2169 = vpop.permute.xlu0 %2168
        %2170 = vrot.lane.b32.xlu0 %v2161, 13
        %v2171 = vpop.permute.xlu0 %2170
        %2172 = vrot.lane.b32.xlu0 %v2162, 13
        %v2173 = vpop.permute.xlu0 %2172
        %2174 = vrot.lane.b32.xlu0 %v2163, 13
        %v2175 = vpop.permute.xlu0 %2174
        %v2176 = vsel %vm339, %v2169, %v2171
        %v2177 = vsel %vm339, %v2173, %v2175
        %2180 = vst [vmem:[#allocation4 + $0x60] sm:$0xff] %v2176
        %2181 = vst [vmem:[#allocation4 + $0x70] sm:$0xff] %v2177
        %v2182 = vld [vmem:[#allocation2 + $0x8] sm:$0xff]
        %v2183 = vld [vmem:[#allocation2 + $0x10] sm:$0xff]
        %v2184 = vld [vmem:[#allocation2 + $0x40] sm:$0xff]
        %v2185 = vld [vmem:[#allocation2 + $0x48] sm:$0xff]
        %2190 = vrot.lane.b32.xlu0 %v2182, 12
        %v2191 = vpop.permute.xlu0 %2190
        %2192 = vrot.lane.b32.xlu0 %v2183, 12
        %v2193 = vpop.permute.xlu0 %2192
        %2194 = vrot.lane.b32.xlu0 %v2184, 12
        %v2195 = vpop.permute.xlu0 %2194
        %2196 = vrot.lane.b32.xlu0 %v2185, 12
        %v2197 = vpop.permute.xlu0 %2196
        %v2198 = vsel %vm362, %v2191, %v2193
        %v2199 = vsel %vm362, %v2195, %v2197
        %2202 = vst [vmem:[#allocation4 + $0x80] sm:$0xff] %v2198
        %2203 = vst [vmem:[#allocation4 + $0x90] sm:$0xff] %v2199
        %v2204 = vld [vmem:[#allocation2 + $0x8] sm:$0xff]
        %v2205 = vld [vmem:[#allocation2 + $0x10] sm:$0xff]
        %v2206 = vld [vmem:[#allocation2 + $0x40] sm:$0xff]
        %v2207 = vld [vmem:[#allocation2 + $0x48] sm:$0xff]
        %2212 = vrot.lane.b32.xlu0 %v2204, 11
        %v2213 = vpop.permute.xlu0 %2212
        %2214 = vrot.lane.b32.xlu0 %v2205, 11
        %v2215 = vpop.permute.xlu0 %2214
        %2216 = vrot.lane.b32.xlu0 %v2206, 11
        %v2217 = vpop.permute.xlu0 %2216
        %2218 = vrot.lane.b32.xlu0 %v2207, 11
        %v2219 = vpop.permute.xlu0 %2218
        %v2220 = vsel %vm385, %v2213, %v2215
        %v2221 = vsel %vm385, %v2217, %v2219
        %2224 = vst [vmem:[#allocation4 + $0xa0] sm:$0xff] %v2220
        %2225 = vst [vmem:[#allocation4 + $0xb0] sm:$0xff] %v2221
        %v2226 = vld [vmem:[#allocation2 + $0x8] sm:$0xff]
        %v2227 = vld [vmem:[#allocation2 + $0x10] sm:$0xff]
        %v2228 = vld [vmem:[#allocation2 + $0x40] sm:$0xff]
        %v2229 = vld [vmem:[#allocation2 + $0x48] sm:$0xff]
        %2234 = vrot.lane.b32.xlu0 %v2226, 10
        %v2235 = vpop.permute.xlu0 %2234
        %2236 = vrot.lane.b32.xlu0 %v2227, 10
        %v2237 = vpop.permute.xlu0 %2236
        %2238 = vrot.lane.b32.xlu0 %v2228, 10
        %v2239 = vpop.permute.xlu0 %2238
        %2240 = vrot.lane.b32.xlu0 %v2229, 10
        %v2241 = vpop.permute.xlu0 %2240
        %v2242 = vsel %vm408, %v2235, %v2237
        %v2243 = vsel %vm408, %v2239, %v2241
        %2246 = vst [vmem:[#allocation4 + $0xc0] sm:$0xff] %v2242
        %2247 = vst [vmem:[#allocation4 + $0xd0] sm:$0xff] %v2243
        %v2248 = vld [vmem:[#allocation2 + $0x8] sm:$0xff]
        %v2249 = vld [vmem:[#allocation2 + $0x10] sm:$0xff]
        %v2250 = vld [vmem:[#allocation2 + $0x40] sm:$0xff]
        %v2251 = vld [vmem:[#allocation2 + $0x48] sm:$0xff]
        %2256 = vrot.lane.b32.xlu0 %v2248, 9
        %v2257 = vpop.permute.xlu0 %2256
        %2258 = vrot.lane.b32.xlu0 %v2249, 9
        %v2259 = vpop.permute.xlu0 %2258
        %2260 = vrot.lane.b32.xlu0 %v2250, 9
        %v2261 = vpop.permute.xlu0 %2260
        %2262 = vrot.lane.b32.xlu0 %v2251, 9
        %v2263 = vpop.permute.xlu0 %2262
        %v2264 = vsel %vm431, %v2257, %v2259
        %v2265 = vsel %vm431, %v2261, %v2263
        %2268 = vst [vmem:[#allocation4 + $0xe0] sm:$0xff] %v2264
        %2269 = vst [vmem:[#allocation4 + $0xf0] sm:$0xff] %v2265
        %v2270 = vld [vmem:[#allocation2 + $0x8] sm:$0xff]
        %v2271 = vld [vmem:[#allocation2 + $0x10] sm:$0xff]
        %v2272 = vld [vmem:[#allocation2 + $0x40] sm:$0xff]
        %v2273 = vld [vmem:[#allocation2 + $0x48] sm:$0xff]
        %2278 = vrot.lane.b32.xlu0 %v2270, 8
        %v2279 = vpop.permute.xlu0 %2278
        %2280 = vrot.lane.b32.xlu0 %v2271, 8
        %v2281 = vpop.permute.xlu0 %2280
        %2282 = vrot.lane.b32.xlu0 %v2272, 8
        %v2283 = vpop.permute.xlu0 %2282
        %2284 = vrot.lane.b32.xlu0 %v2273, 8
        %v2285 = vpop.permute.xlu0 %2284
        %v2286 = vsel %vm454, %v2279, %v2281
        %v2287 = vsel %vm454, %v2283, %v2285
        %2290 = vst [vmem:[#allocation4 + $0x100] sm:$0xff] %v2286
        %2291 = vst [vmem:[#allocation4 + $0x110] sm:$0xff] %v2287
        %v2292 = vld [vmem:[#allocation2 + $0x8] sm:$0xff]
        %v2293 = vld [vmem:[#allocation2 + $0x10] sm:$0xff]
        %v2294 = vld [vmem:[#allocation2 + $0x40] sm:$0xff]
        %v2295 = vld [vmem:[#allocation2 + $0x48] sm:$0xff]
        %2300 = vrot.lane.b32.xlu0 %v2292, 7
        %v2301 = vpop.permute.xlu0 %2300
        %2302 = vrot.lane.b32.xlu0 %v2293, 7
        %v2303 = vpop.permute.xlu0 %2302
        %2304 = vrot.lane.b32.xlu0 %v2294, 7
        %v2305 = vpop.permute.xlu0 %2304
        %2306 = vrot.lane.b32.xlu0 %v2295, 7
        %v2307 = vpop.permute.xlu0 %2306
        %v2308 = vsel %vm477, %v2301, %v2303
        %v2309 = vsel %vm477, %v2305, %v2307
        %2312 = vst [vmem:[#allocation4 + $0x120] sm:$0xff] %v2308
        %2313 = vst [vmem:[#allocation4 + $0x130] sm:$0xff] %v2309
        %v2314 = vld [vmem:[#allocation2 + $0x8] sm:$0xff]
        %v2315 = vld [vmem:[#allocation2 + $0x10] sm:$0xff]
        %v2316 = vld [vmem:[#allocation2 + $0x40] sm:$0xff]
        %v2317 = vld [vmem:[#allocation2 + $0x48] sm:$0xff]
        %2322 = vrot.lane.b32.xlu0 %v2314, 6
        %v2323 = vpop.permute.xlu0 %2322
        %2324 = vrot.lane.b32.xlu0 %v2315, 6
        %v2325 = vpop.permute.xlu0 %2324
        %2326 = vrot.lane.b32.xlu0 %v2316, 6
        %v2327 = vpop.permute.xlu0 %2326
        %2328 = vrot.lane.b32.xlu0 %v2317, 6
        %v2329 = vpop.permute.xlu0 %2328
        %v2330 = vsel %vm500, %v2323, %v2325
        %v2331 = vsel %vm500, %v2327, %v2329
        %2334 = vst [vmem:[#allocation4 + $0x140] sm:$0xff] %v2330
        %2335 = vst [vmem:[#allocation4 + $0x150] sm:$0xff] %v2331
        %v2336 = vld [vmem:[#allocation2 + $0x8] sm:$0xff]
        %v2337 = vld [vmem:[#allocation2 + $0x10] sm:$0xff]
        %v2338 = vld [vmem:[#allocation2 + $0x40] sm:$0xff]
        %v2339 = vld [vmem:[#allocation2 + $0x48] sm:$0xff]
        %2344 = vrot.lane.b32.xlu0 %v2336, 5
        %v2345 = vpop.permute.xlu0 %2344
        %2346 = vrot.lane.b32.xlu0 %v2337, 5
        %v2347 = vpop.permute.xlu0 %2346
        %2348 = vrot.lane.b32.xlu0 %v2338, 5
        %v2349 = vpop.permute.xlu0 %2348
        %2350 = vrot.lane.b32.xlu0 %v2339, 5
        %v2351 = vpop.permute.xlu0 %2350
        %v2352 = vsel %vm523, %v2345, %v2347
        %v2353 = vsel %vm523, %v2349, %v2351
        %2356 = vst [vmem:[#allocation4 + $0x160] sm:$0xff] %v2352
        %2357 = vst [vmem:[#allocation4 + $0x170] sm:$0xff] %v2353
        %v2358 = vld [vmem:[#allocation2 + $0x8] sm:$0xff]
        %v2359 = vld [vmem:[#allocation2 + $0x10] sm:$0xff]
        %v2360 = vld [vmem:[#allocation2 + $0x40] sm:$0xff]
        %v2361 = vld [vmem:[#allocation2 + $0x48] sm:$0xff]
        %2366 = vrot.lane.b32.xlu0 %v2358, 4
        %v2367 = vpop.permute.xlu0 %2366
        %2368 = vrot.lane.b32.xlu0 %v2359, 4
        %v2369 = vpop.permute.xlu0 %2368
        %2370 = vrot.lane.b32.xlu0 %v2360, 4
        %v2371 = vpop.permute.xlu0 %2370
        %2372 = vrot.lane.b32.xlu0 %v2361, 4
        %v2373 = vpop.permute.xlu0 %2372
        %v2374 = vsel %vm546, %v2367, %v2369
        %v2375 = vsel %vm546, %v2371, %v2373
        %2378 = vst [vmem:[#allocation4 + $0x180] sm:$0xff] %v2374
        %2379 = vst [vmem:[#allocation4 + $0x190] sm:$0xff] %v2375
        %v2380 = vld [vmem:[#allocation2 + $0x8] sm:$0xff]
        %v2381 = vld [vmem:[#allocation2 + $0x10] sm:$0xff]
        %v2382 = vld [vmem:[#allocation2 + $0x40] sm:$0xff]
        %v2383 = vld [vmem:[#allocation2 + $0x48] sm:$0xff]
        %2388 = vrot.lane.b32.xlu0 %v2380, 3
        %v2389 = vpop.permute.xlu0 %2388
        %2390 = vrot.lane.b32.xlu0 %v2381, 3
        %v2391 = vpop.permute.xlu0 %2390
        %2392 = vrot.lane.b32.xlu0 %v2382, 3
        %v2393 = vpop.permute.xlu0 %2392
        %2394 = vrot.lane.b32.xlu0 %v2383, 3
        %v2395 = vpop.permute.xlu0 %2394
        %v2396 = vsel %vm569, %v2389, %v2391
        %v2397 = vsel %vm569, %v2393, %v2395
        %2400 = vst [vmem:[#allocation4 + $0x1a0] sm:$0xff] %v2396
        %2401 = vst [vmem:[#allocation4 + $0x1b0] sm:$0xff] %v2397
        %v2402 = vld [vmem:[#allocation2 + $0x8] sm:$0xff]
        %v2403 = vld [vmem:[#allocation2 + $0x10] sm:$0xff]
        %v2404 = vld [vmem:[#allocation2 + $0x40] sm:$0xff]
        %v2405 = vld [vmem:[#allocation2 + $0x48] sm:$0xff]
        %2410 = vrot.lane.b32.xlu0 %v2402, 2
        %v2411 = vpop.permute.xlu0 %2410
        %2412 = vrot.lane.b32.xlu0 %v2403, 2
        %v2413 = vpop.permute.xlu0 %2412
        %2414 = vrot.lane.b32.xlu0 %v2404, 2
        %v2415 = vpop.permute.xlu0 %2414
        %2416 = vrot.lane.b32.xlu0 %v2405, 2
        %v2417 = vpop.permute.xlu0 %2416
        %v2418 = vsel %vm592, %v2411, %v2413
        %v2419 = vsel %vm592, %v2415, %v2417
        %2422 = vst [vmem:[#allocation4 + $0x1c0] sm:$0xff] %v2418
        %2423 = vst [vmem:[#allocation4 + $0x1d0] sm:$0xff] %v2419
        %v2424 = vld [vmem:[#allocation2 + $0x8] sm:$0xff]
        %v2425 = vld [vmem:[#allocation2 + $0x10] sm:$0xff]
        %v2426 = vld [vmem:[#allocation2 + $0x40] sm:$0xff]
        %v2427 = vld [vmem:[#allocation2 + $0x48] sm:$0xff]
        %2432 = vrot.lane.b32.xlu0 %v2424, 1
        %v2433 = vpop.permute.xlu0 %2432
        %2434 = vrot.lane.b32.xlu0 %v2425, 1
        %v2435 = vpop.permute.xlu0 %2434
        %2436 = vrot.lane.b32.xlu0 %v2426, 1
        %v2437 = vpop.permute.xlu0 %2436
        %2438 = vrot.lane.b32.xlu0 %v2427, 1
        %v2439 = vpop.permute.xlu0 %2438
        %v2440 = vsel %vm615, %v2433, %v2435
        %v2441 = vsel %vm615, %v2437, %v2439
        %2444 = vst [vmem:[#allocation4 + $0x1e0] sm:$0xff] %v2440
        %2445 = vst [vmem:[#allocation4 + $0x1f0] sm:$0xff] %v2441
        %v2446 = vld [vmem:[#allocation2 + $0x10] sm:$0xff]
        %v2447 = vld [vmem:[#allocation2 + $0x48] sm:$0xff]
        %2448 = vst [vmem:[#allocation4 + $0x200] sm:$0xff] %v2446
        %2449 = vst [vmem:[#allocation4 + $0x210] sm:$0xff] %v2447
        %v2450 = vld [vmem:[#allocation2 + $0x10] sm:$0xff]
        %v2451 = vld [vmem:[#allocation2 + $0x18] sm:$0xff]
        %v2452 = vld [vmem:[#allocation2 + $0x48] sm:$0xff]
        %v2453 = vld [vmem:[#allocation2 + $0x50] sm:$0xff]
        %2458 = vrot.lane.b32.xlu0 %v2450, 127
        %v2459 = vpop.permute.xlu0 %2458
        %2460 = vrot.lane.b32.xlu0 %v2451, 127
        %v2461 = vpop.permute.xlu0 %2460
        %2462 = vrot.lane.b32.xlu0 %v2452, 127
        %v2463 = vpop.permute.xlu0 %2462
        %2464 = vrot.lane.b32.xlu0 %v2453, 127
        %v2465 = vpop.permute.xlu0 %2464
        %v2466 = vsel %vm642, %v2459, %v2461
        %v2467 = vsel %vm642, %v2463, %v2465
        %2470 = vst [vmem:[#allocation4 + $0x220] sm:$0xff] %v2466
        %2471 = vst [vmem:[#allocation4 + $0x230] sm:$0xff] %v2467
        %v2472 = vld [vmem:[#allocation2 + $0x10] sm:$0xff]
        %v2473 = vld [vmem:[#allocation2 + $0x18] sm:$0xff]
        %v2474 = vld [vmem:[#allocation2 + $0x48] sm:$0xff]
        %v2475 = vld [vmem:[#allocation2 + $0x50] sm:$0xff]
        %2480 = vrot.lane.b32.xlu0 %v2472, 126
        %v2481 = vpop.permute.xlu0 %2480
        %2482 = vrot.lane.b32.xlu0 %v2473, 126
        %v2483 = vpop.permute.xlu0 %2482
        %2484 = vrot.lane.b32.xlu0 %v2474, 126
        %v2485 = vpop.permute.xlu0 %2484
        %2486 = vrot.lane.b32.xlu0 %v2475, 126
        %v2487 = vpop.permute.xlu0 %2486
        %v2488 = vsel %vm665, %v2481, %v2483
        %v2489 = vsel %vm665, %v2485, %v2487
        %2492 = vst [vmem:[#allocation4 + $0x240] sm:$0xff] %v2488
        %2493 = vst [vmem:[#allocation4 + $0x250] sm:$0xff] %v2489
        %v2494 = vld [vmem:[#allocation2 + $0x10] sm:$0xff]
        %v2495 = vld [vmem:[#allocation2 + $0x18] sm:$0xff]
        %v2496 = vld [vmem:[#allocation2 + $0x48] sm:$0xff]
        %v2497 = vld [vmem:[#allocation2 + $0x50] sm:$0xff]
        %2502 = vrot.lane.b32.xlu0 %v2494, 125
        %v2503 = vpop.permute.xlu0 %2502
        %2504 = vrot.lane.b32.xlu0 %v2495, 125
        %v2505 = vpop.permute.xlu0 %2504
        %2506 = vrot.lane.b32.xlu0 %v2496, 125
        %v2507 = vpop.permute.xlu0 %2506
        %2508 = vrot.lane.b32.xlu0 %v2497, 125
        %v2509 = vpop.permute.xlu0 %2508
        %v2510 = vsel %vm688, %v2503, %v2505
        %v2511 = vsel %vm688, %v2507, %v2509
        %2514 = vst [vmem:[#allocation4 + $0x260] sm:$0xff] %v2510
        %2515 = vst [vmem:[#allocation4 + $0x270] sm:$0xff] %v2511
        %v2516 = vld [vmem:[#allocation2 + $0x10] sm:$0xff]
        %v2517 = vld [vmem:[#allocation2 + $0x18] sm:$0xff]
        %v2518 = vld [vmem:[#allocation2 + $0x48] sm:$0xff]
        %v2519 = vld [vmem:[#allocation2 + $0x50] sm:$0xff]
        %2524 = vrot.lane.b32.xlu0 %v2516, 124
        %v2525 = vpop.permute.xlu0 %2524
        %2526 = vrot.lane.b32.xlu0 %v2517, 124
        %v2527 = vpop.permute.xlu0 %2526
        %2528 = vrot.lane.b32.xlu0 %v2518, 124
        %v2529 = vpop.permute.xlu0 %2528
        %2530 = vrot.lane.b32.xlu0 %v2519, 124
        %v2531 = vpop.permute.xlu0 %2530
        %v2532 = vsel %vm711, %v2525, %v2527
        %v2533 = vsel %vm711, %v2529, %v2531
        %2536 = vst [vmem:[#allocation4 + $0x280] sm:$0xff] %v2532
        %2537 = vst [vmem:[#allocation4 + $0x290] sm:$0xff] %v2533
        %v2538 = vld [vmem:[#allocation2 + $0x10] sm:$0xff]
        %v2539 = vld [vmem:[#allocation2 + $0x18] sm:$0xff]
        %v2540 = vld [vmem:[#allocation2 + $0x48] sm:$0xff]
        %v2541 = vld [vmem:[#allocation2 + $0x50] sm:$0xff]
        %2546 = vrot.lane.b32.xlu0 %v2538, 123
        %v2547 = vpop.permute.xlu0 %2546
        %2548 = vrot.lane.b32.xlu0 %v2539, 123
        %v2549 = vpop.permute.xlu0 %2548
        %2550 = vrot.lane.b32.xlu0 %v2540, 123
        %v2551 = vpop.permute.xlu0 %2550
        %2552 = vrot.lane.b32.xlu0 %v2541, 123
        %v2553 = vpop.permute.xlu0 %2552
        %v2554 = vsel %vm734, %v2547, %v2549
        %v2555 = vsel %vm734, %v2551, %v2553
        %2558 = vst [vmem:[#allocation4 + $0x2a0] sm:$0xff] %v2554
        %2559 = vst [vmem:[#allocation4 + $0x2b0] sm:$0xff] %v2555
        %v2560 = vld [vmem:[#allocation2 + $0x10] sm:$0xff]
        %v2561 = vld [vmem:[#allocation2 + $0x18] sm:$0xff]
        %v2562 = vld [vmem:[#allocation2 + $0x48] sm:$0xff]
        %v2563 = vld [vmem:[#allocation2 + $0x50] sm:$0xff]
        %2568 = vrot.lane.b32.xlu0 %v2560, 122
        %v2569 = vpop.permute.xlu0 %2568
        %2570 = vrot.lane.b32.xlu0 %v2561, 122
        %v2571 = vpop.permute.xlu0 %2570
        %2572 = vrot.lane.b32.xlu0 %v2562, 122
        %v2573 = vpop.permute.xlu0 %2572
        %2574 = vrot.lane.b32.xlu0 %v2563, 122
        %v2575 = vpop.permute.xlu0 %2574
        %v2576 = vsel %vm757, %v2569, %v2571
        %v2577 = vsel %vm757, %v2573, %v2575
        %2580 = vst [vmem:[#allocation4 + $0x2c0] sm:$0xff] %v2576
        %2581 = vst [vmem:[#allocation4 + $0x2d0] sm:$0xff] %v2577
        %v2582 = vld [vmem:[#allocation2 + $0x10] sm:$0xff]
        %v2583 = vld [vmem:[#allocation2 + $0x18] sm:$0xff]
        %v2584 = vld [vmem:[#allocation2 + $0x48] sm:$0xff]
        %v2585 = vld [vmem:[#allocation2 + $0x50] sm:$0xff]
        %2590 = vrot.lane.b32.xlu0 %v2582, 121
        %v2591 = vpop.permute.xlu0 %2590
        %2592 = vrot.lane.b32.xlu0 %v2583, 121
        %v2593 = vpop.permute.xlu0 %2592
        %2594 = vrot.lane.b32.xlu0 %v2584, 121
        %v2595 = vpop.permute.xlu0 %2594
        %2596 = vrot.lane.b32.xlu0 %v2585, 121
        %v2597 = vpop.permute.xlu0 %2596
        %v2598 = vsel %vm780, %v2591, %v2593
        %v2599 = vsel %vm780, %v2595, %v2597
        %2602 = vst [vmem:[#allocation4 + $0x2e0] sm:$0xff] %v2598
        %2603 = vst [vmem:[#allocation4 + $0x2f0] sm:$0xff] %v2599
        %v2604 = vld [vmem:[#allocation2 + $0x10] sm:$0xff]
        %v2605 = vld [vmem:[#allocation2 + $0x18] sm:$0xff]
        %v2606 = vld [vmem:[#allocation2 + $0x48] sm:$0xff]
        %v2607 = vld [vmem:[#allocation2 + $0x50] sm:$0xff]
        %2612 = vrot.lane.b32.xlu0 %v2604, 120
        %v2613 = vpop.permute.xlu0 %2612
        %2614 = vrot.lane.b32.xlu0 %v2605, 120
        %v2615 = vpop.permute.xlu0 %2614
        %2616 = vrot.lane.b32.xlu0 %v2606, 120
        %v2617 = vpop.permute.xlu0 %2616
        %2618 = vrot.lane.b32.xlu0 %v2607, 120
        %v2619 = vpop.permute.xlu0 %2618
        %v2620 = vsel %vm803, %v2613, %v2615
        %v2621 = vsel %vm803, %v2617, %v2619
        %2624 = vst [vmem:[#allocation4 + $0x300] sm:$0xff] %v2620
        %2625 = vst [vmem:[#allocation4 + $0x310] sm:$0xff] %v2621
        %v2626 = vld [vmem:[#allocation2 + $0x10] sm:$0xff]
        %v2627 = vld [vmem:[#allocation2 + $0x18] sm:$0xff]
        %v2628 = vld [vmem:[#allocation2 + $0x48] sm:$0xff]
        %v2629 = vld [vmem:[#allocation2 + $0x50] sm:$0xff]
        %2634 = vrot.lane.b32.xlu0 %v2626, 119
        %v2635 = vpop.permute.xlu0 %2634
        %2636 = vrot.lane.b32.xlu0 %v2627, 119
        %v2637 = vpop.permute.xlu0 %2636
        %2638 = vrot.lane.b32.xlu0 %v2628, 119
        %v2639 = vpop.permute.xlu0 %2638
        %2640 = vrot.lane.b32.xlu0 %v2629, 119
        %v2641 = vpop.permute.xlu0 %2640
        %v2642 = vsel %vm826, %v2635, %v2637
        %v2643 = vsel %vm826, %v2639, %v2641
        %2646 = vst [vmem:[#allocation4 + $0x320] sm:$0xff] %v2642
        %2647 = vst [vmem:[#allocation4 + $0x330] sm:$0xff] %v2643
        %v2648 = vld [vmem:[#allocation2 + $0x10] sm:$0xff]
        %v2649 = vld [vmem:[#allocation2 + $0x18] sm:$0xff]
        %v2650 = vld [vmem:[#allocation2 + $0x48] sm:$0xff]
        %v2651 = vld [vmem:[#allocation2 + $0x50] sm:$0xff]
        %2656 = vrot.lane.b32.xlu0 %v2648, 118
        %v2657 = vpop.permute.xlu0 %2656
        %2658 = vrot.lane.b32.xlu0 %v2649, 118
        %v2659 = vpop.permute.xlu0 %2658
        %2660 = vrot.lane.b32.xlu0 %v2650, 118
        %v2661 = vpop.permute.xlu0 %2660
        %2662 = vrot.lane.b32.xlu0 %v2651, 118
        %v2663 = vpop.permute.xlu0 %2662
        %v2664 = vsel %vm849, %v2657, %v2659
        %v2665 = vsel %vm849, %v2661, %v2663
        %2668 = vst [vmem:[#allocation4 + $0x340] sm:$0xff] %v2664
        %2669 = vst [vmem:[#allocation4 + $0x350] sm:$0xff] %v2665
        %v2670 = vld [vmem:[#allocation2 + $0x10] sm:$0xff]
        %v2671 = vld [vmem:[#allocation2 + $0x18] sm:$0xff]
        %v2672 = vld [vmem:[#allocation2 + $0x48] sm:$0xff]
        %v2673 = vld [vmem:[#allocation2 + $0x50] sm:$0xff]
        %2678 = vrot.lane.b32.xlu0 %v2670, 117
        %v2679 = vpop.permute.xlu0 %2678
        %2680 = vrot.lane.b32.xlu0 %v2671, 117
        %v2681 = vpop.permute.xlu0 %2680
        %2682 = vrot.lane.b32.xlu0 %v2672, 117
        %v2683 = vpop.permute.xlu0 %2682
        %2684 = vrot.lane.b32.xlu0 %v2673, 117
        %v2685 = vpop.permute.xlu0 %2684
        %v2686 = vsel %vm872, %v2679, %v2681
        %v2687 = vsel %vm872, %v2683, %v2685
        %2690 = vst [vmem:[#allocation4 + $0x360] sm:$0xff] %v2686
        %2691 = vst [vmem:[#allocation4 + $0x370] sm:$0xff] %v2687
        %v2692 = vld [vmem:[#allocation2 + $0x10] sm:$0xff]
        %v2693 = vld [vmem:[#allocation2 + $0x18] sm:$0xff]
        %v2694 = vld [vmem:[#allocation2 + $0x48] sm:$0xff]
        %v2695 = vld [vmem:[#allocation2 + $0x50] sm:$0xff]
        %2700 = vrot.lane.b32.xlu0 %v2692, 116
        %v2701 = vpop.permute.xlu0 %2700
        %2702 = vrot.lane.b32.xlu0 %v2693, 116
        %v2703 = vpop.permute.xlu0 %2702
        %2704 = vrot.lane.b32.xlu0 %v2694, 116
        %v2705 = vpop.permute.xlu0 %2704
        %2706 = vrot.lane.b32.xlu0 %v2695, 116
        %v2707 = vpop.permute.xlu0 %2706
        %v2708 = vsel %vm895, %v2701, %v2703
        %v2709 = vsel %vm895, %v2705, %v2707
        %2712 = vst [vmem:[#allocation4 + $0x380] sm:$0xff] %v2708
        %2713 = vst [vmem:[#allocation4 + $0x390] sm:$0xff] %v2709
        %v2714 = vld [vmem:[#allocation2 + $0x10] sm:$0xff]
        %v2715 = vld [vmem:[#allocation2 + $0x18] sm:$0xff]
        %v2716 = vld [vmem:[#allocation2 + $0x48] sm:$0xff]
        %v2717 = vld [vmem:[#allocation2 + $0x50] sm:$0xff]
        %2722 = vrot.lane.b32.xlu0 %v2714, 115
        %v2723 = vpop.permute.xlu0 %2722
        %2724 = vrot.lane.b32.xlu0 %v2715, 115
        %v2725 = vpop.permute.xlu0 %2724
        %2726 = vrot.lane.b32.xlu0 %v2716, 115
        %v2727 = vpop.permute.xlu0 %2726
        %2728 = vrot.lane.b32.xlu0 %v2717, 115
        %v2729 = vpop.permute.xlu0 %2728
        %v2730 = vsel %vm918, %v2723, %v2725
        %v2731 = vsel %vm918, %v2727, %v2729
        %2734 = vst [vmem:[#allocation4 + $0x3a0] sm:$0xff] %v2730
        %2735 = vst [vmem:[#allocation4 + $0x3b0] sm:$0xff] %v2731
        %v2736 = vld [vmem:[#allocation2 + $0x10] sm:$0xff]
        %v2737 = vld [vmem:[#allocation2 + $0x18] sm:$0xff]
        %v2738 = vld [vmem:[#allocation2 + $0x48] sm:$0xff]
        %v2739 = vld [vmem:[#allocation2 + $0x50] sm:$0xff]
        %2744 = vrot.lane.b32.xlu0 %v2736, 114
        %v2745 = vpop.permute.xlu0 %2744
        %2746 = vrot.lane.b32.xlu0 %v2737, 114
        %v2747 = vpop.permute.xlu0 %2746
        %2748 = vrot.lane.b32.xlu0 %v2738, 114
        %v2749 = vpop.permute.xlu0 %2748
        %2750 = vrot.lane.b32.xlu0 %v2739, 114
        %v2751 = vpop.permute.xlu0 %2750
        %v2752 = vsel %vm941, %v2745, %v2747
        %v2753 = vsel %vm941, %v2749, %v2751
        %2756 = vst [vmem:[#allocation4 + $0x3c0] sm:$0xff] %v2752
        %2757 = vst [vmem:[#allocation4 + $0x3d0] sm:$0xff] %v2753
        %v2758 = vld [vmem:[#allocation2 + $0x10] sm:$0xff]
        %v2759 = vld [vmem:[#allocation2 + $0x18] sm:$0xff]
        %v2760 = vld [vmem:[#allocation2 + $0x48] sm:$0xff]
        %v2761 = vld [vmem:[#allocation2 + $0x50] sm:$0xff]
        %2766 = vrot.lane.b32.xlu0 %v2758, 113
        %v2767 = vpop.permute.xlu0 %2766
        %2768 = vrot.lane.b32.xlu0 %v2759, 113
        %v2769 = vpop.permute.xlu0 %2768
        %2770 = vrot.lane.b32.xlu0 %v2760, 113
        %v2771 = vpop.permute.xlu0 %2770
        %2772 = vrot.lane.b32.xlu0 %v2761, 113
        %v2773 = vpop.permute.xlu0 %2772
        %v2774 = vsel %vm964, %v2767, %v2769
        %v2775 = vsel %vm964, %v2771, %v2773
        %2778 = vst [vmem:[#allocation4 + $0x3e0] sm:$0xff] %v2774
        %2779 = vst [vmem:[#allocation4 + $0x3f0] sm:$0xff] %v2775
        %v2780 = vld [vmem:[#allocation2 + $0x10] sm:$0xff]
        %v2781 = vld [vmem:[#allocation2 + $0x18] sm:$0xff]
        %v2782 = vld [vmem:[#allocation2 + $0x48] sm:$0xff]
        %v2783 = vld [vmem:[#allocation2 + $0x50] sm:$0xff]
        %2788 = vrot.lane.b32.xlu0 %v2780, 112
        %v2789 = vpop.permute.xlu0 %2788
        %2790 = vrot.lane.b32.xlu0 %v2781, 112
        %v2791 = vpop.permute.xlu0 %2790
        %2792 = vrot.lane.b32.xlu0 %v2782, 112
        %v2793 = vpop.permute.xlu0 %2792
        %2794 = vrot.lane.b32.xlu0 %v2783, 112
        %v2795 = vpop.permute.xlu0 %2794
        %v2796 = vsel %vm987, %v2789, %v2791
        %v2797 = vsel %vm987, %v2793, %v2795
        %2800 = vst [vmem:[#allocation4 + $0x400] sm:$0xff] %v2796
        %2801 = vst [vmem:[#allocation4 + $0x410] sm:$0xff] %v2797
        %v2802 = vld [vmem:[#allocation2 + $0x20] sm:$0xff]
        %v2803 = vld [vmem:[#allocation2 + $0x28] sm:$0xff]
        %v2804 = vld [vmem:[#allocation2 + $0x58] sm:$0xff]
        %v2805 = vld [vmem:[#allocation2 + $0x60] sm:$0xff]
        %2810 = vrot.lane.b32.xlu0 %v2802, 16
        %v2811 = vpop.permute.xlu0 %2810
        %2812 = vrot.lane.b32.xlu0 %v2803, 16
        %v2813 = vpop.permute.xlu0 %2812
        %2814 = vrot.lane.b32.xlu0 %v2804, 16
        %v2815 = vpop.permute.xlu0 %2814
        %2816 = vrot.lane.b32.xlu0 %v2805, 16
        %v2817 = vpop.permute.xlu0 %2816
        %v2818 = vsel %vm270, %v2811, %v2813
        %v2819 = vsel %vm270, %v2815, %v2817
        %2822 = vst [vmem:[#allocation4 + $0x8] sm:$0xff] %v2818
        %2823 = vst [vmem:[#allocation4 + $0x18] sm:$0xff] %v2819
        %v2824 = vld [vmem:[#allocation2 + $0x20] sm:$0xff]
        %v2825 = vld [vmem:[#allocation2 + $0x28] sm:$0xff]
        %v2826 = vld [vmem:[#allocation2 + $0x58] sm:$0xff]
        %v2827 = vld [vmem:[#allocation2 + $0x60] sm:$0xff]
        %2832 = vrot.lane.b32.xlu0 %v2824, 15
        %v2833 = vpop.permute.xlu0 %2832
        %2834 = vrot.lane.b32.xlu0 %v2825, 15
        %v2835 = vpop.permute.xlu0 %2834
        %2836 = vrot.lane.b32.xlu0 %v2826, 15
        %v2837 = vpop.permute.xlu0 %2836
        %2838 = vrot.lane.b32.xlu0 %v2827, 15
        %v2839 = vpop.permute.xlu0 %2838
        %v2840 = vsel %vm293, %v2833, %v2835
        %v2841 = vsel %vm293, %v2837, %v2839
        %2844 = vst [vmem:[#allocation4 + $0x28] sm:$0xff] %v2840
        %2845 = vst [vmem:[#allocation4 + $0x38] sm:$0xff] %v2841
        %v2846 = vld [vmem:[#allocation2 + $0x20] sm:$0xff]
        %v2847 = vld [vmem:[#allocation2 + $0x28] sm:$0xff]
        %v2848 = vld [vmem:[#allocation2 + $0x58] sm:$0xff]
        %v2849 = vld [vmem:[#allocation2 + $0x60] sm:$0xff]
        %2854 = vrot.lane.b32.xlu0 %v2846, 14
        %v2855 = vpop.permute.xlu0 %2854
        %2856 = vrot.lane.b32.xlu0 %v2847, 14
        %v2857 = vpop.permute.xlu0 %2856
        %2858 = vrot.lane.b32.xlu0 %v2848, 14
        %v2859 = vpop.permute.xlu0 %2858
        %2860 = vrot.lane.b32.xlu0 %v2849, 14
        %v2861 = vpop.permute.xlu0 %2860
        %v2862 = vsel %vm316, %v2855, %v2857
        %v2863 = vsel %vm316, %v2859, %v2861
        %2866 = vst [vmem:[#allocation4 + $0x48] sm:$0xff] %v2862
        %2867 = vst [vmem:[#allocation4 + $0x58] sm:$0xff] %v2863
        %v2868 = vld [vmem:[#allocation2 + $0x20] sm:$0xff]
        %v2869 = vld [vmem:[#allocation2 + $0x28] sm:$0xff]
        %v2870 = vld [vmem:[#allocation2 + $0x58] sm:$0xff]
        %v2871 = vld [vmem:[#allocation2 + $0x60] sm:$0xff]
        %2876 = vrot.lane.b32.xlu0 %v2868, 13
        %v2877 = vpop.permute.xlu0 %2876
        %2878 = vrot.lane.b32.xlu0 %v2869, 13
        %v2879 = vpop.permute.xlu0 %2878
        %2880 = vrot.lane.b32.xlu0 %v2870, 13
        %v2881 = vpop.permute.xlu0 %2880
        %2882 = vrot.lane.b32.xlu0 %v2871, 13
        %v2883 = vpop.permute.xlu0 %2882
        %v2884 = vsel %vm339, %v2877, %v2879
        %v2885 = vsel %vm339, %v2881, %v2883
        %2888 = vst [vmem:[#allocation4 + $0x68] sm:$0xff] %v2884
        %2889 = vst [vmem:[#allocation4 + $0x78] sm:$0xff] %v2885
        %v2890 = vld [vmem:[#allocation2 + $0x20] sm:$0xff]
        %v2891 = vld [vmem:[#allocation2 + $0x28] sm:$0xff]
        %v2892 = vld [vmem:[#allocation2 + $0x58] sm:$0xff]
        %v2893 = vld [vmem:[#allocation2 + $0x60] sm:$0xff]
        %2898 = vrot.lane.b32.xlu0 %v2890, 12
        %v2899 = vpop.permute.xlu0 %2898
        %2900 = vrot.lane.b32.xlu0 %v2891, 12
        %v2901 = vpop.permute.xlu0 %2900
        %2902 = vrot.lane.b32.xlu0 %v2892, 12
        %v2903 = vpop.permute.xlu0 %2902
        %2904 = vrot.lane.b32.xlu0 %v2893, 12
        %v2905 = vpop.permute.xlu0 %2904
        %v2906 = vsel %vm362, %v2899, %v2901
        %v2907 = vsel %vm362, %v2903, %v2905
        %2910 = vst [vmem:[#allocation4 + $0x88] sm:$0xff] %v2906
        %2911 = vst [vmem:[#allocation4 + $0x98] sm:$0xff] %v2907
        %v2912 = vld [vmem:[#allocation2 + $0x20] sm:$0xff]
        %v2913 = vld [vmem:[#allocation2 + $0x28] sm:$0xff]
        %v2914 = vld [vmem:[#allocation2 + $0x58] sm:$0xff]
        %v2915 = vld [vmem:[#allocation2 + $0x60] sm:$0xff]
        %2920 = vrot.lane.b32.xlu0 %v2912, 11
        %v2921 = vpop.permute.xlu0 %2920
        %2922 = vrot.lane.b32.xlu0 %v2913, 11
        %v2923 = vpop.permute.xlu0 %2922
        %2924 = vrot.lane.b32.xlu0 %v2914, 11
        %v2925 = vpop.permute.xlu0 %2924
        %2926 = vrot.lane.b32.xlu0 %v2915, 11
        %v2927 = vpop.permute.xlu0 %2926
        %v2928 = vsel %vm385, %v2921, %v2923
        %v2929 = vsel %vm385, %v2925, %v2927
        %2932 = vst [vmem:[#allocation4 + $0xa8] sm:$0xff] %v2928
        %2933 = vst [vmem:[#allocation4 + $0xb8] sm:$0xff] %v2929
        %v2934 = vld [vmem:[#allocation2 + $0x20] sm:$0xff]
        %v2935 = vld [vmem:[#allocation2 + $0x28] sm:$0xff]
        %v2936 = vld [vmem:[#allocation2 + $0x58] sm:$0xff]
        %v2937 = vld [vmem:[#allocation2 + $0x60] sm:$0xff]
        %2942 = vrot.lane.b32.xlu0 %v2934, 10
        %v2943 = vpop.permute.xlu0 %2942
        %2944 = vrot.lane.b32.xlu0 %v2935, 10
        %v2945 = vpop.permute.xlu0 %2944
        %2946 = vrot.lane.b32.xlu0 %v2936, 10
        %v2947 = vpop.permute.xlu0 %2946
        %2948 = vrot.lane.b32.xlu0 %v2937, 10
        %v2949 = vpop.permute.xlu0 %2948
        %v2950 = vsel %vm408, %v2943, %v2945
        %v2951 = vsel %vm408, %v2947, %v2949
        %2954 = vst [vmem:[#allocation4 + $0xc8] sm:$0xff] %v2950
        %2955 = vst [vmem:[#allocation4 + $0xd8] sm:$0xff] %v2951
        %v2956 = vld [vmem:[#allocation2 + $0x20] sm:$0xff]
        %v2957 = vld [vmem:[#allocation2 + $0x28] sm:$0xff]
        %v2958 = vld [vmem:[#allocation2 + $0x58] sm:$0xff]
        %v2959 = vld [vmem:[#allocation2 + $0x60] sm:$0xff]
        %2964 = vrot.lane.b32.xlu0 %v2956, 9
        %v2965 = vpop.permute.xlu0 %2964
        %2966 = vrot.lane.b32.xlu0 %v2957, 9
        %v2967 = vpop.permute.xlu0 %2966
        %2968 = vrot.lane.b32.xlu0 %v2958, 9
        %v2969 = vpop.permute.xlu0 %2968
        %2970 = vrot.lane.b32.xlu0 %v2959, 9
        %v2971 = vpop.permute.xlu0 %2970
        %v2972 = vsel %vm431, %v2965, %v2967
        %v2973 = vsel %vm431, %v2969, %v2971
        %2976 = vst [vmem:[#allocation4 + $0xe8] sm:$0xff] %v2972
        %2977 = vst [vmem:[#allocation4 + $0xf8] sm:$0xff] %v2973
        %v2978 = vld [vmem:[#allocation2 + $0x20] sm:$0xff]
        %v2979 = vld [vmem:[#allocation2 + $0x28] sm:$0xff]
        %v2980 = vld [vmem:[#allocation2 + $0x58] sm:$0xff]
        %v2981 = vld [vmem:[#allocation2 + $0x60] sm:$0xff]
        %2986 = vrot.lane.b32.xlu0 %v2978, 8
        %v2987 = vpop.permute.xlu0 %2986
        %2988 = vrot.lane.b32.xlu0 %v2979, 8
        %v2989 = vpop.permute.xlu0 %2988
        %2990 = vrot.lane.b32.xlu0 %v2980, 8
        %v2991 = vpop.permute.xlu0 %2990
        %2992 = vrot.lane.b32.xlu0 %v2981, 8
        %v2993 = vpop.permute.xlu0 %2992
        %v2994 = vsel %vm454, %v2987, %v2989
        %v2995 = vsel %vm454, %v2991, %v2993
        %2998 = vst [vmem:[#allocation4 + $0x108] sm:$0xff] %v2994
        %2999 = vst [vmem:[#allocation4 + $0x118] sm:$0xff] %v2995
        %v3000 = vld [vmem:[#allocation2 + $0x20] sm:$0xff]
        %v3001 = vld [vmem:[#allocation2 + $0x28] sm:$0xff]
        %v3002 = vld [vmem:[#allocation2 + $0x58] sm:$0xff]
        %v3003 = vld [vmem:[#allocation2 + $0x60] sm:$0xff]
        %3008 = vrot.lane.b32.xlu0 %v3000, 7
        %v3009 = vpop.permute.xlu0 %3008
        %3010 = vrot.lane.b32.xlu0 %v3001, 7
        %v3011 = vpop.permute.xlu0 %3010
        %3012 = vrot.lane.b32.xlu0 %v3002, 7
        %v3013 = vpop.permute.xlu0 %3012
        %3014 = vrot.lane.b32.xlu0 %v3003, 7
        %v3015 = vpop.permute.xlu0 %3014
        %v3016 = vsel %vm477, %v3009, %v3011
        %v3017 = vsel %vm477, %v3013, %v3015
        %3020 = vst [vmem:[#allocation4 + $0x128] sm:$0xff] %v3016
        %3021 = vst [vmem:[#allocation4 + $0x138] sm:$0xff] %v3017
        %v3022 = vld [vmem:[#allocation2 + $0x20] sm:$0xff]
        %v3023 = vld [vmem:[#allocation2 + $0x28] sm:$0xff]
        %v3024 = vld [vmem:[#allocation2 + $0x58] sm:$0xff]
        %v3025 = vld [vmem:[#allocation2 + $0x60] sm:$0xff]
        %3030 = vrot.lane.b32.xlu0 %v3022, 6
        %v3031 = vpop.permute.xlu0 %3030
        %3032 = vrot.lane.b32.xlu0 %v3023, 6
        %v3033 = vpop.permute.xlu0 %3032
        %3034 = vrot.lane.b32.xlu0 %v3024, 6
        %v3035 = vpop.permute.xlu0 %3034
        %3036 = vrot.lane.b32.xlu0 %v3025, 6
        %v3037 = vpop.permute.xlu0 %3036
        %v3038 = vsel %vm500, %v3031, %v3033
        %v3039 = vsel %vm500, %v3035, %v3037
        %3042 = vst [vmem:[#allocation4 + $0x148] sm:$0xff] %v3038
        %3043 = vst [vmem:[#allocation4 + $0x158] sm:$0xff] %v3039
        %v3044 = vld [vmem:[#allocation2 + $0x20] sm:$0xff]
        %v3045 = vld [vmem:[#allocation2 + $0x28] sm:$0xff]
        %v3046 = vld [vmem:[#allocation2 + $0x58] sm:$0xff]
        %v3047 = vld [vmem:[#allocation2 + $0x60] sm:$0xff]
        %3052 = vrot.lane.b32.xlu0 %v3044, 5
        %v3053 = vpop.permute.xlu0 %3052
        %3054 = vrot.lane.b32.xlu0 %v3045, 5
        %v3055 = vpop.permute.xlu0 %3054
        %3056 = vrot.lane.b32.xlu0 %v3046, 5
        %v3057 = vpop.permute.xlu0 %3056
        %3058 = vrot.lane.b32.xlu0 %v3047, 5
        %v3059 = vpop.permute.xlu0 %3058
        %v3060 = vsel %vm523, %v3053, %v3055
        %v3061 = vsel %vm523, %v3057, %v3059
        %3064 = vst [vmem:[#allocation4 + $0x168] sm:$0xff] %v3060
        %3065 = vst [vmem:[#allocation4 + $0x178] sm:$0xff] %v3061
        %v3066 = vld [vmem:[#allocation2 + $0x20] sm:$0xff]
        %v3067 = vld [vmem:[#allocation2 + $0x28] sm:$0xff]
        %v3068 = vld [vmem:[#allocation2 + $0x58] sm:$0xff]
        %v3069 = vld [vmem:[#allocation2 + $0x60] sm:$0xff]
        %3074 = vrot.lane.b32.xlu0 %v3066, 4
        %v3075 = vpop.permute.xlu0 %3074
        %3076 = vrot.lane.b32.xlu0 %v3067, 4
        %v3077 = vpop.permute.xlu0 %3076
        %3078 = vrot.lane.b32.xlu0 %v3068, 4
        %v3079 = vpop.permute.xlu0 %3078
        %3080 = vrot.lane.b32.xlu0 %v3069, 4
        %v3081 = vpop.permute.xlu0 %3080
        %v3082 = vsel %vm546, %v3075, %v3077
        %v3083 = vsel %vm546, %v3079, %v3081
        %3086 = vst [vmem:[#allocation4 + $0x188] sm:$0xff] %v3082
        %3087 = vst [vmem:[#allocation4 + $0x198] sm:$0xff] %v3083
        %v3088 = vld [vmem:[#allocation2 + $0x20] sm:$0xff]
        %v3089 = vld [vmem:[#allocation2 + $0x28] sm:$0xff]
        %v3090 = vld [vmem:[#allocation2 + $0x58] sm:$0xff]
        %v3091 = vld [vmem:[#allocation2 + $0x60] sm:$0xff]
        %3096 = vrot.lane.b32.xlu0 %v3088, 3
        %v3097 = vpop.permute.xlu0 %3096
        %3098 = vrot.lane.b32.xlu0 %v3089, 3
        %v3099 = vpop.permute.xlu0 %3098
        %3100 = vrot.lane.b32.xlu0 %v3090, 3
        %v3101 = vpop.permute.xlu0 %3100
        %3102 = vrot.lane.b32.xlu0 %v3091, 3
        %v3103 = vpop.permute.xlu0 %3102
        %v3104 = vsel %vm569, %v3097, %v3099
        %v3105 = vsel %vm569, %v3101, %v3103
        %3108 = vst [vmem:[#allocation4 + $0x1a8] sm:$0xff] %v3104
        %3109 = vst [vmem:[#allocation4 + $0x1b8] sm:$0xff] %v3105
        %v3110 = vld [vmem:[#allocation2 + $0x20] sm:$0xff]
        %v3111 = vld [vmem:[#allocation2 + $0x28] sm:$0xff]
        %v3112 = vld [vmem:[#allocation2 + $0x58] sm:$0xff]
        %v3113 = vld [vmem:[#allocation2 + $0x60] sm:$0xff]
        %3118 = vrot.lane.b32.xlu0 %v3110, 2
        %v3119 = vpop.permute.xlu0 %3118
        %3120 = vrot.lane.b32.xlu0 %v3111, 2
        %v3121 = vpop.permute.xlu0 %3120
        %3122 = vrot.lane.b32.xlu0 %v3112, 2
        %v3123 = vpop.permute.xlu0 %3122
        %3124 = vrot.lane.b32.xlu0 %v3113, 2
        %v3125 = vpop.permute.xlu0 %3124
        %v3126 = vsel %vm592, %v3119, %v3121
        %v3127 = vsel %vm592, %v3123, %v3125
        %3130 = vst [vmem:[#allocation4 + $0x1c8] sm:$0xff] %v3126
        %3131 = vst [vmem:[#allocation4 + $0x1d8] sm:$0xff] %v3127
        %v3132 = vld [vmem:[#allocation2 + $0x20] sm:$0xff]
        %v3133 = vld [vmem:[#allocation2 + $0x28] sm:$0xff]
        %v3134 = vld [vmem:[#allocation2 + $0x58] sm:$0xff]
        %v3135 = vld [vmem:[#allocation2 + $0x60] sm:$0xff]
        %3140 = vrot.lane.b32.xlu0 %v3132, 1
        %v3141 = vpop.permute.xlu0 %3140
        %3142 = vrot.lane.b32.xlu0 %v3133, 1
        %v3143 = vpop.permute.xlu0 %3142
        %3144 = vrot.lane.b32.xlu0 %v3134, 1
        %v3145 = vpop.permute.xlu0 %3144
        %3146 = vrot.lane.b32.xlu0 %v3135, 1
        %v3147 = vpop.permute.xlu0 %3146
        %v3148 = vsel %vm615, %v3141, %v3143
        %v3149 = vsel %vm615, %v3145, %v3147
        %3152 = vst [vmem:[#allocation4 + $0x1e8] sm:$0xff] %v3148
        %3153 = vst [vmem:[#allocation4 + $0x1f8] sm:$0xff] %v3149
        %v3154 = vld [vmem:[#allocation2 + $0x28] sm:$0xff]
        %v3155 = vld [vmem:[#allocation2 + $0x60] sm:$0xff]
        %3156 = vst [vmem:[#allocation4 + $0x208] sm:$0xff] %v3154
        %3157 = vst [vmem:[#allocation4 + $0x218] sm:$0xff] %v3155
        %v3158 = vld [vmem:[#allocation2 + $0x28] sm:$0xff]
        %v3159 = vld [vmem:[#allocation2 + $0x30] sm:$0xff]
        %v3160 = vld [vmem:[#allocation2 + $0x60] sm:$0xff]
        %v3161 = vld [vmem:[#allocation2 + $0x68] sm:$0xff]
        %3166 = vrot.lane.b32.xlu0 %v3158, 127
        %v3167 = vpop.permute.xlu0 %3166
        %3168 = vrot.lane.b32.xlu0 %v3159, 127
        %v3169 = vpop.permute.xlu0 %3168
        %3170 = vrot.lane.b32.xlu0 %v3160, 127
        %v3171 = vpop.permute.xlu0 %3170
        %3172 = vrot.lane.b32.xlu0 %v3161, 127
        %v3173 = vpop.permute.xlu0 %3172
        %v3174 = vsel %vm642, %v3167, %v3169
        %v3175 = vsel %vm642, %v3171, %v3173
        %3178 = vst [vmem:[#allocation4 + $0x228] sm:$0xff] %v3174
        %3179 = vst [vmem:[#allocation4 + $0x238] sm:$0xff] %v3175
        %v3180 = vld [vmem:[#allocation2 + $0x28] sm:$0xff]
        %v3181 = vld [vmem:[#allocation2 + $0x30] sm:$0xff]
        %v3182 = vld [vmem:[#allocation2 + $0x60] sm:$0xff]
        %v3183 = vld [vmem:[#allocation2 + $0x68] sm:$0xff]
        %3188 = vrot.lane.b32.xlu0 %v3180, 126
        %v3189 = vpop.permute.xlu0 %3188
        %3190 = vrot.lane.b32.xlu0 %v3181, 126
        %v3191 = vpop.permute.xlu0 %3190
        %3192 = vrot.lane.b32.xlu0 %v3182, 126
        %v3193 = vpop.permute.xlu0 %3192
        %3194 = vrot.lane.b32.xlu0 %v3183, 126
        %v3195 = vpop.permute.xlu0 %3194
        %v3196 = vsel %vm665, %v3189, %v3191
        %v3197 = vsel %vm665, %v3193, %v3195
        %3200 = vst [vmem:[#allocation4 + $0x248] sm:$0xff] %v3196
        %3201 = vst [vmem:[#allocation4 + $0x258] sm:$0xff] %v3197
        %v3202 = vld [vmem:[#allocation2 + $0x28] sm:$0xff]
        %v3203 = vld [vmem:[#allocation2 + $0x30] sm:$0xff]
        %v3204 = vld [vmem:[#allocation2 + $0x60] sm:$0xff]
        %v3205 = vld [vmem:[#allocation2 + $0x68] sm:$0xff]
        %3210 = vrot.lane.b32.xlu0 %v3202, 125
        %v3211 = vpop.permute.xlu0 %3210
        %3212 = vrot.lane.b32.xlu0 %v3203, 125
        %v3213 = vpop.permute.xlu0 %3212
        %3214 = vrot.lane.b32.xlu0 %v3204, 125
        %v3215 = vpop.permute.xlu0 %3214
        %3216 = vrot.lane.b32.xlu0 %v3205, 125
        %v3217 = vpop.permute.xlu0 %3216
        %v3218 = vsel %vm688, %v3211, %v3213
        %v3219 = vsel %vm688, %v3215, %v3217
        %3222 = vst [vmem:[#allocation4 + $0x268] sm:$0xff] %v3218
        %3223 = vst [vmem:[#allocation4 + $0x278] sm:$0xff] %v3219
        %v3224 = vld [vmem:[#allocation2 + $0x28] sm:$0xff]
        %v3225 = vld [vmem:[#allocation2 + $0x30] sm:$0xff]
        %v3226 = vld [vmem:[#allocation2 + $0x60] sm:$0xff]
        %v3227 = vld [vmem:[#allocation2 + $0x68] sm:$0xff]
        %3232 = vrot.lane.b32.xlu0 %v3224, 124
        %v3233 = vpop.permute.xlu0 %3232
        %3234 = vrot.lane.b32.xlu0 %v3225, 124
        %v3235 = vpop.permute.xlu0 %3234
        %3236 = vrot.lane.b32.xlu0 %v3226, 124
        %v3237 = vpop.permute.xlu0 %3236
        %3238 = vrot.lane.b32.xlu0 %v3227, 124
        %v3239 = vpop.permute.xlu0 %3238
        %v3240 = vsel %vm711, %v3233, %v3235
        %v3241 = vsel %vm711, %v3237, %v3239
        %3244 = vst [vmem:[#allocation4 + $0x288] sm:$0xff] %v3240
        %3245 = vst [vmem:[#allocation4 + $0x298] sm:$0xff] %v3241
        %v3246 = vld [vmem:[#allocation2 + $0x28] sm:$0xff]
        %v3247 = vld [vmem:[#allocation2 + $0x30] sm:$0xff]
        %v3248 = vld [vmem:[#allocation2 + $0x60] sm:$0xff]
        %v3249 = vld [vmem:[#allocation2 + $0x68] sm:$0xff]
        %3254 = vrot.lane.b32.xlu0 %v3246, 123
        %v3255 = vpop.permute.xlu0 %3254
        %3256 = vrot.lane.b32.xlu0 %v3247, 123
        %v3257 = vpop.permute.xlu0 %3256
        %3258 = vrot.lane.b32.xlu0 %v3248, 123
        %v3259 = vpop.permute.xlu0 %3258
        %3260 = vrot.lane.b32.xlu0 %v3249, 123
        %v3261 = vpop.permute.xlu0 %3260
        %v3262 = vsel %vm734, %v3255, %v3257
        %v3263 = vsel %vm734, %v3259, %v3261
        %3266 = vst [vmem:[#allocation4 + $0x2a8] sm:$0xff] %v3262
        %3267 = vst [vmem:[#allocation4 + $0x2b8] sm:$0xff] %v3263
        %v3268 = vld [vmem:[#allocation2 + $0x28] sm:$0xff]
        %v3269 = vld [vmem:[#allocation2 + $0x30] sm:$0xff]
        %v3270 = vld [vmem:[#allocation2 + $0x60] sm:$0xff]
        %v3271 = vld [vmem:[#allocation2 + $0x68] sm:$0xff]
        %3276 = vrot.lane.b32.xlu0 %v3268, 122
        %v3277 = vpop.permute.xlu0 %3276
        %3278 = vrot.lane.b32.xlu0 %v3269, 122
        %v3279 = vpop.permute.xlu0 %3278
        %3280 = vrot.lane.b32.xlu0 %v3270, 122
        %v3281 = vpop.permute.xlu0 %3280
        %3282 = vrot.lane.b32.xlu0 %v3271, 122
        %v3283 = vpop.permute.xlu0 %3282
        %v3284 = vsel %vm757, %v3277, %v3279
        %v3285 = vsel %vm757, %v3281, %v3283
        %3288 = vst [vmem:[#allocation4 + $0x2c8] sm:$0xff] %v3284
        %3289 = vst [vmem:[#allocation4 + $0x2d8] sm:$0xff] %v3285
        %v3290 = vld [vmem:[#allocation2 + $0x28] sm:$0xff]
        %v3291 = vld [vmem:[#allocation2 + $0x30] sm:$0xff]
        %v3292 = vld [vmem:[#allocation2 + $0x60] sm:$0xff]
        %v3293 = vld [vmem:[#allocation2 + $0x68] sm:$0xff]
        %3298 = vrot.lane.b32.xlu0 %v3290, 121
        %v3299 = vpop.permute.xlu0 %3298
        %3300 = vrot.lane.b32.xlu0 %v3291, 121
        %v3301 = vpop.permute.xlu0 %3300
        %3302 = vrot.lane.b32.xlu0 %v3292, 121
        %v3303 = vpop.permute.xlu0 %3302
        %3304 = vrot.lane.b32.xlu0 %v3293, 121
        %v3305 = vpop.permute.xlu0 %3304
        %v3306 = vsel %vm780, %v3299, %v3301
        %v3307 = vsel %vm780, %v3303, %v3305
        %3310 = vst [vmem:[#allocation4 + $0x2e8] sm:$0xff] %v3306
        %3311 = vst [vmem:[#allocation4 + $0x2f8] sm:$0xff] %v3307
        %v3312 = vld [vmem:[#allocation2 + $0x28] sm:$0xff]
        %v3313 = vld [vmem:[#allocation2 + $0x30] sm:$0xff]
        %v3314 = vld [vmem:[#allocation2 + $0x60] sm:$0xff]
        %v3315 = vld [vmem:[#allocation2 + $0x68] sm:$0xff]
        %3320 = vrot.lane.b32.xlu0 %v3312, 120
        %v3321 = vpop.permute.xlu0 %3320
        %3322 = vrot.lane.b32.xlu0 %v3313, 120
        %v3323 = vpop.permute.xlu0 %3322
        %3324 = vrot.lane.b32.xlu0 %v3314, 120
        %v3325 = vpop.permute.xlu0 %3324
        %3326 = vrot.lane.b32.xlu0 %v3315, 120
        %v3327 = vpop.permute.xlu0 %3326
        %v3328 = vsel %vm803, %v3321, %v3323
        %v3329 = vsel %vm803, %v3325, %v3327
        %3332 = vst [vmem:[#allocation4 + $0x308] sm:$0xff] %v3328
        %3333 = vst [vmem:[#allocation4 + $0x318] sm:$0xff] %v3329
        %v3334 = vld [vmem:[#allocation2 + $0x28] sm:$0xff]
        %v3335 = vld [vmem:[#allocation2 + $0x30] sm:$0xff]
        %v3336 = vld [vmem:[#allocation2 + $0x60] sm:$0xff]
        %v3337 = vld [vmem:[#allocation2 + $0x68] sm:$0xff]
        %3342 = vrot.lane.b32.xlu0 %v3334, 119
        %v3343 = vpop.permute.xlu0 %3342
        %3344 = vrot.lane.b32.xlu0 %v3335, 119
        %v3345 = vpop.permute.xlu0 %3344
        %3346 = vrot.lane.b32.xlu0 %v3336, 119
        %v3347 = vpop.permute.xlu0 %3346
        %3348 = vrot.lane.b32.xlu0 %v3337, 119
        %v3349 = vpop.permute.xlu0 %3348
        %v3350 = vsel %vm826, %v3343, %v3345
        %v3351 = vsel %vm826, %v3347, %v3349
        %3354 = vst [vmem:[#allocation4 + $0x328] sm:$0xff] %v3350
        %3355 = vst [vmem:[#allocation4 + $0x338] sm:$0xff] %v3351
        %v3356 = vld [vmem:[#allocation2 + $0x28] sm:$0xff]
        %v3357 = vld [vmem:[#allocation2 + $0x30] sm:$0xff]
        %v3358 = vld [vmem:[#allocation2 + $0x60] sm:$0xff]
        %v3359 = vld [vmem:[#allocation2 + $0x68] sm:$0xff]
        %3364 = vrot.lane.b32.xlu0 %v3356, 118
        %v3365 = vpop.permute.xlu0 %3364
        %3366 = vrot.lane.b32.xlu0 %v3357, 118
        %v3367 = vpop.permute.xlu0 %3366
        %3368 = vrot.lane.b32.xlu0 %v3358, 118
        %v3369 = vpop.permute.xlu0 %3368
        %3370 = vrot.lane.b32.xlu0 %v3359, 118
        %v3371 = vpop.permute.xlu0 %3370
        %v3372 = vsel %vm849, %v3365, %v3367
        %v3373 = vsel %vm849, %v3369, %v3371
        %3376 = vst [vmem:[#allocation4 + $0x348] sm:$0xff] %v3372
        %3377 = vst [vmem:[#allocation4 + $0x358] sm:$0xff] %v3373
        %v3378 = vld [vmem:[#allocation2 + $0x28] sm:$0xff]
        %v3379 = vld [vmem:[#allocation2 + $0x30] sm:$0xff]
        %v3380 = vld [vmem:[#allocation2 + $0x60] sm:$0xff]
        %v3381 = vld [vmem:[#allocation2 + $0x68] sm:$0xff]
        %3386 = vrot.lane.b32.xlu0 %v3378, 117
        %v3387 = vpop.permute.xlu0 %3386
        %3388 = vrot.lane.b32.xlu0 %v3379, 117
        %v3389 = vpop.permute.xlu0 %3388
        %3390 = vrot.lane.b32.xlu0 %v3380, 117
        %v3391 = vpop.permute.xlu0 %3390
        %3392 = vrot.lane.b32.xlu0 %v3381, 117
        %v3393 = vpop.permute.xlu0 %3392
        %v3394 = vsel %vm872, %v3387, %v3389
        %v3395 = vsel %vm872, %v3391, %v3393
        %3398 = vst [vmem:[#allocation4 + $0x368] sm:$0xff] %v3394
        %3399 = vst [vmem:[#allocation4 + $0x378] sm:$0xff] %v3395
        %v3400 = vld [vmem:[#allocation2 + $0x28] sm:$0xff]
        %v3401 = vld [vmem:[#allocation2 + $0x30] sm:$0xff]
        %v3402 = vld [vmem:[#allocation2 + $0x60] sm:$0xff]
        %v3403 = vld [vmem:[#allocation2 + $0x68] sm:$0xff]
        %3408 = vrot.lane.b32.xlu0 %v3400, 116
        %v3409 = vpop.permute.xlu0 %3408
        %3410 = vrot.lane.b32.xlu0 %v3401, 116
        %v3411 = vpop.permute.xlu0 %3410
        %3412 = vrot.lane.b32.xlu0 %v3402, 116
        %v3413 = vpop.permute.xlu0 %3412
        %3414 = vrot.lane.b32.xlu0 %v3403, 116
        %v3415 = vpop.permute.xlu0 %3414
        %v3416 = vsel %vm895, %v3409, %v3411
        %v3417 = vsel %vm895, %v3413, %v3415
        %3420 = vst [vmem:[#allocation4 + $0x388] sm:$0xff] %v3416
        %3421 = vst [vmem:[#allocation4 + $0x398] sm:$0xff] %v3417
        %v3422 = vld [vmem:[#allocation2 + $0x28] sm:$0xff]
        %v3423 = vld [vmem:[#allocation2 + $0x30] sm:$0xff]
        %v3424 = vld [vmem:[#allocation2 + $0x60] sm:$0xff]
        %v3425 = vld [vmem:[#allocation2 + $0x68] sm:$0xff]
        %3430 = vrot.lane.b32.xlu0 %v3422, 115
        %v3431 = vpop.permute.xlu0 %3430
        %3432 = vrot.lane.b32.xlu0 %v3423, 115
        %v3433 = vpop.permute.xlu0 %3432
        %3434 = vrot.lane.b32.xlu0 %v3424, 115
        %v3435 = vpop.permute.xlu0 %3434
        %3436 = vrot.lane.b32.xlu0 %v3425, 115
        %v3437 = vpop.permute.xlu0 %3436
        %v3438 = vsel %vm918, %v3431, %v3433
        %v3439 = vsel %vm918, %v3435, %v3437
        %3442 = vst [vmem:[#allocation4 + $0x3a8] sm:$0xff] %v3438
        %3443 = vst [vmem:[#allocation4 + $0x3b8] sm:$0xff] %v3439
        %v3444 = vld [vmem:[#allocation2 + $0x28] sm:$0xff]
        %v3445 = vld [vmem:[#allocation2 + $0x30] sm:$0xff]
        %v3446 = vld [vmem:[#allocation2 + $0x60] sm:$0xff]
        %v3447 = vld [vmem:[#allocation2 + $0x68] sm:$0xff]
        %3452 = vrot.lane.b32.xlu0 %v3444, 114
        %v3453 = vpop.permute.xlu0 %3452
        %3454 = vrot.lane.b32.xlu0 %v3445, 114
        %v3455 = vpop.permute.xlu0 %3454
        %3456 = vrot.lane.b32.xlu0 %v3446, 114
        %v3457 = vpop.permute.xlu0 %3456
        %3458 = vrot.lane.b32.xlu0 %v3447, 114
        %v3459 = vpop.permute.xlu0 %3458
        %v3460 = vsel %vm941, %v3453, %v3455
        %v3461 = vsel %vm941, %v3457, %v3459
        %3464 = vst [vmem:[#allocation4 + $0x3c8] sm:$0xff] %v3460
        %3465 = vst [vmem:[#allocation4 + $0x3d8] sm:$0xff] %v3461
        %v3466 = vld [vmem:[#allocation2 + $0x28] sm:$0xff]
        %v3467 = vld [vmem:[#allocation2 + $0x30] sm:$0xff]
        %v3468 = vld [vmem:[#allocation2 + $0x60] sm:$0xff]
        %v3469 = vld [vmem:[#allocation2 + $0x68] sm:$0xff]
        %3474 = vrot.lane.b32.xlu0 %v3466, 113
        %v3475 = vpop.permute.xlu0 %3474
        %3476 = vrot.lane.b32.xlu0 %v3467, 113
        %v3477 = vpop.permute.xlu0 %3476
        %3478 = vrot.lane.b32.xlu0 %v3468, 113
        %v3479 = vpop.permute.xlu0 %3478
        %3480 = vrot.lane.b32.xlu0 %v3469, 113
        %v3481 = vpop.permute.xlu0 %3480
        %v3482 = vsel %vm964, %v3475, %v3477
        %v3483 = vsel %vm964, %v3479, %v3481
        %3486 = vst [vmem:[#allocation4 + $0x3e8] sm:$0xff] %v3482
        %3487 = vst [vmem:[#allocation4 + $0x3f8] sm:$0xff] %v3483
        %v3488 = vld [vmem:[#allocation2 + $0x28] sm:$0xff]
        %v3489 = vld [vmem:[#allocation2 + $0x30] sm:$0xff]
        %v3490 = vld [vmem:[#allocation2 + $0x60] sm:$0xff]
        %v3491 = vld [vmem:[#allocation2 + $0x68] sm:$0xff]
        %3496 = vrot.lane.b32.xlu0 %v3488, 112
        %v3497 = vpop.permute.xlu0 %3496
        %3498 = vrot.lane.b32.xlu0 %v3489, 112
        %v3499 = vpop.permute.xlu0 %3498
        %3500 = vrot.lane.b32.xlu0 %v3490, 112
        %v3501 = vpop.permute.xlu0 %3500
        %3502 = vrot.lane.b32.xlu0 %v3491, 112
        %v3503 = vpop.permute.xlu0 %3502
        %v3504 = vsel %vm987, %v3497, %v3499
        %v3505 = vsel %vm987, %v3501, %v3503
        %3508 = vst [vmem:[#allocation4 + $0x408] sm:$0xff] %v3504
        %3509 = vst [vmem:[#allocation4 + $0x418] sm:$0xff] %v3505
        %v3510 = vld [vmem:[#allocation8] sm:$0xff]
        %v3511 = vld [vmem:[#allocation8 + $0x8] sm:$0xff]
        %v3512 = vld [vmem:[#allocation8 + $0x10] sm:$0xff]
        %v3513 = vld [vmem:[#allocation8 + $0x18] sm:$0xff]
        %v3514 = vld [vmem:[#allocation8 + $0x20] sm:$0xff]
        %v3515 = vld [vmem:[#allocation8 + $0x28] sm:$0xff]
        %v3516 = vld [vmem:[#allocation8 + $0x30] sm:$0xff]
        %v3517 = vld [vmem:[#allocation8 + $0x38] sm:$0xff]
        %v3518 = vld [vmem:[#allocation8 + $0x40] sm:$0xff]
        %v3519 = vld [vmem:[#allocation8 + $0x48] sm:$0xff]
        %v3520 = vld [vmem:[#allocation4] sm:$0xff]
        %v3521 = vld [vmem:[#allocation4 + $0x8] sm:$0xff]
        %v3522 = vld [vmem:[#allocation4 + $0x10] sm:$0xff]
        %v3523 = vld [vmem:[#allocation4 + $0x18] sm:$0xff]
        %v3524 = vld [vmem:[#allocation4 + $0x20] sm:$0xff]
        %v3525 = vld [vmem:[#allocation4 + $0x28] sm:$0xff]
        %v3526 = vld [vmem:[#allocation4 + $0x30] sm:$0xff]
        %v3527 = vld [vmem:[#allocation4 + $0x38] sm:$0xff]
        %v3528 = vld [vmem:[#allocation4 + $0x40] sm:$0xff]
        %v3529 = vld [vmem:[#allocation4 + $0x48] sm:$0xff]
        %v3530 = vld [vmem:[#allocation4 + $0x50] sm:$0xff]
        %v3531 = vld [vmem:[#allocation4 + $0x58] sm:$0xff]
        %v3532 = vld [vmem:[#allocation4 + $0x60] sm:$0xff]
        %v3533 = vld [vmem:[#allocation4 + $0x68] sm:$0xff]
        %v3534 = vld [vmem:[#allocation4 + $0x70] sm:$0xff]
        %v3535 = vld [vmem:[#allocation4 + $0x78] sm:$0xff]
        %v3536 = vld [vmem:[#allocation4 + $0x80] sm:$0xff]
        %v3537 = vld [vmem:[#allocation4 + $0x88] sm:$0xff]
        %v3538 = vld [vmem:[#allocation4 + $0x90] sm:$0xff]
        %v3539 = vld [vmem:[#allocation4 + $0x98] sm:$0xff]
        %v3540 = vld [vmem:[#allocation4 + $0xa0] sm:$0xff]
        %v3541 = vld [vmem:[#allocation4 + $0xa8] sm:$0xff]
        %v3542 = vld [vmem:[#allocation4 + $0xb0] sm:$0xff]
        %v3543 = vld [vmem:[#allocation4 + $0xb8] sm:$0xff]
        %v3544 = vld [vmem:[#allocation4 + $0xc0] sm:$0xff]
        %v3545 = vld [vmem:[#allocation4 + $0xc8] sm:$0xff]
        %v3546 = vld [vmem:[#allocation4 + $0xd0] sm:$0xff]
        %v3547 = vld [vmem:[#allocation4 + $0xd8] sm:$0xff]
        %v3548 = vld [vmem:[#allocation4 + $0xe0] sm:$0xff]
        %v3549 = vld [vmem:[#allocation4 + $0xe8] sm:$0xff]
        %v3550 = vld [vmem:[#allocation4 + $0xf0] sm:$0xff]
        %v3551 = vld [vmem:[#allocation4 + $0xf8] sm:$0xff]
        %v3552 = vld [vmem:[#allocation4 + $0x100] sm:$0xff]
        %v3553 = vld [vmem:[#allocation4 + $0x108] sm:$0xff]
        %v3554 = vld [vmem:[#allocation4 + $0x110] sm:$0xff]
        %v3555 = vld [vmem:[#allocation4 + $0x118] sm:$0xff]
        %v3556 = vld [vmem:[#allocation4 + $0x120] sm:$0xff]
        %v3557 = vld [vmem:[#allocation4 + $0x128] sm:$0xff]
        %v3558 = vld [vmem:[#allocation4 + $0x130] sm:$0xff]
        %v3559 = vld [vmem:[#allocation4 + $0x138] sm:$0xff]
        %v3560 = vld [vmem:[#allocation4 + $0x140] sm:$0xff]
        %v3561 = vld [vmem:[#allocation4 + $0x148] sm:$0xff]
        %v3562 = vld [vmem:[#allocation4 + $0x150] sm:$0xff]
        %v3563 = vld [vmem:[#allocation4 + $0x158] sm:$0xff]
        %v3564 = vld [vmem:[#allocation4 + $0x160] sm:$0xff]
        %v3565 = vld [vmem:[#allocation4 + $0x168] sm:$0xff]
        %v3566 = vld [vmem:[#allocation4 + $0x170] sm:$0xff]
        %v3567 = vld [vmem:[#allocation4 + $0x178] sm:$0xff]
        %v3568 = vld [vmem:[#allocation4 + $0x180] sm:$0xff]
        %v3569 = vld [vmem:[#allocation4 + $0x188] sm:$0xff]
        %v3570 = vld [vmem:[#allocation4 + $0x190] sm:$0xff]
        %v3571 = vld [vmem:[#allocation4 + $0x198] sm:$0xff]
        %v3572 = vld [vmem:[#allocation4 + $0x1a0] sm:$0xff]
        %v3573 = vld [vmem:[#allocation4 + $0x1a8] sm:$0xff]
        %v3574 = vld [vmem:[#allocation4 + $0x1b0] sm:$0xff]
        %v3575 = vld [vmem:[#allocation4 + $0x1b8] sm:$0xff]
        %v3576 = vld [vmem:[#allocation4 + $0x1c0] sm:$0xff]
        %v3577 = vld [vmem:[#allocation4 + $0x1c8] sm:$0xff]
        %v3578 = vld [vmem:[#allocation4 + $0x1d0] sm:$0xff]
        %v3579 = vld [vmem:[#allocation4 + $0x1d8] sm:$0xff]
        %v3580 = vld [vmem:[#allocation4 + $0x1e0] sm:$0xff]
        %v3581 = vld [vmem:[#allocation4 + $0x1e8] sm:$0xff]
        %v3582 = vld [vmem:[#allocation4 + $0x1f0] sm:$0xff]
        %v3583 = vld [vmem:[#allocation4 + $0x1f8] sm:$0xff]
        %v3584 = vld [vmem:[#allocation4 + $0x200] sm:$0xff]
        %v3585 = vld [vmem:[#allocation4 + $0x208] sm:$0xff]
        %v3586 = vld [vmem:[#allocation4 + $0x210] sm:$0xff]
        %v3587 = vld [vmem:[#allocation4 + $0x218] sm:$0xff]
        %v3588 = vld [vmem:[#allocation4 + $0x220] sm:$0xff]
        %v3589 = vld [vmem:[#allocation4 + $0x228] sm:$0xff]
        %v3590 = vld [vmem:[#allocation4 + $0x230] sm:$0xff]
        %v3591 = vld [vmem:[#allocation4 + $0x238] sm:$0xff]
        %v3592 = vld [vmem:[#allocation4 + $0x240] sm:$0xff]
        %v3593 = vld [vmem:[#allocation4 + $0x248] sm:$0xff]
        %v3594 = vld [vmem:[#allocation4 + $0x250] sm:$0xff]
        %v3595 = vld [vmem:[#allocation4 + $0x258] sm:$0xff]
        %v3596 = vld [vmem:[#allocation4 + $0x260] sm:$0xff]
        %v3597 = vld [vmem:[#allocation4 + $0x268] sm:$0xff]
        %v3598 = vld [vmem:[#allocation4 + $0x270] sm:$0xff]
        %v3599 = vld [vmem:[#allocation4 + $0x278] sm:$0xff]
        %v3600 = vld [vmem:[#allocation4 + $0x280] sm:$0xff]
        %v3601 = vld [vmem:[#allocation4 + $0x288] sm:$0xff]
        %v3602 = vld [vmem:[#allocation4 + $0x290] sm:$0xff]
        %v3603 = vld [vmem:[#allocation4 + $0x298] sm:$0xff]
        %v3604 = vld [vmem:[#allocation4 + $0x2a0] sm:$0xff]
        %v3605 = vld [vmem:[#allocation4 + $0x2a8] sm:$0xff]
        %v3606 = vld [vmem:[#allocation4 + $0x2b0] sm:$0xff]
        %v3607 = vld [vmem:[#allocation4 + $0x2b8] sm:$0xff]
        %v3608 = vld [vmem:[#allocation4 + $0x2c0] sm:$0xff]
        %v3609 = vld [vmem:[#allocation4 + $0x2c8] sm:$0xff]
        %v3610 = vld [vmem:[#allocation4 + $0x2d0] sm:$0xff]
        %v3611 = vld [vmem:[#allocation4 + $0x2d8] sm:$0xff]
        %v3612 = vld [vmem:[#allocation4 + $0x2e0] sm:$0xff]
        %v3613 = vld [vmem:[#allocation4 + $0x2e8] sm:$0xff]
        %v3614 = vld [vmem:[#allocation4 + $0x2f0] sm:$0xff]
        %v3615 = vld [vmem:[#allocation4 + $0x2f8] sm:$0xff]
        %v3616 = vld [vmem:[#allocation4 + $0x300] sm:$0xff]
        %v3617 = vld [vmem:[#allocation4 + $0x308] sm:$0xff]
        %v3618 = vld [vmem:[#allocation4 + $0x310] sm:$0xff]
        %v3619 = vld [vmem:[#allocation4 + $0x318] sm:$0xff]
        %v3620 = vld [vmem:[#allocation4 + $0x320] sm:$0xff]
        %v3621 = vld [vmem:[#allocation4 + $0x328] sm:$0xff]
        %v3622 = vld [vmem:[#allocation4 + $0x330] sm:$0xff]
        %v3623 = vld [vmem:[#allocation4 + $0x338] sm:$0xff]
        %v3624 = vld [vmem:[#allocation4 + $0x340] sm:$0xff]
        %v3625 = vld [vmem:[#allocation4 + $0x348] sm:$0xff]
        %v3626 = vld [vmem:[#allocation4 + $0x350] sm:$0xff]
        %v3627 = vld [vmem:[#allocation4 + $0x358] sm:$0xff]
        %v3628 = vld [vmem:[#allocation4 + $0x360] sm:$0xff]
        %v3629 = vld [vmem:[#allocation4 + $0x368] sm:$0xff]
        %v3630 = vld [vmem:[#allocation4 + $0x370] sm:$0xff]
        %v3631 = vld [vmem:[#allocation4 + $0x378] sm:$0xff]
        %v3632 = vld [vmem:[#allocation4 + $0x380] sm:$0xff]
        %v3633 = vld [vmem:[#allocation4 + $0x388] sm:$0xff]
        %v3634 = vld [vmem:[#allocation4 + $0x390] sm:$0xff]
        %v3635 = vld [vmem:[#allocation4 + $0x398] sm:$0xff]
        %v3636 = vld [vmem:[#allocation4 + $0x3a0] sm:$0xff]
        %v3637 = vld [vmem:[#allocation4 + $0x3a8] sm:$0xff]
        %v3638 = vld [vmem:[#allocation4 + $0x3b0] sm:$0xff]
        %v3639 = vld [vmem:[#allocation4 + $0x3b8] sm:$0xff]
        %v3640 = vld [vmem:[#allocation4 + $0x3c0] sm:$0xff]
        %v3641 = vld [vmem:[#allocation4 + $0x3c8] sm:$0xff]
        %v3642 = vld [vmem:[#allocation4 + $0x3d0] sm:$0xff]
        %v3643 = vld [vmem:[#allocation4 + $0x3d8] sm:$0xff]
        %v3644 = vld [vmem:[#allocation4 + $0x3e0] sm:$0xff]
        %v3645 = vld [vmem:[#allocation4 + $0x3e8] sm:$0xff]
        %v3646 = vld [vmem:[#allocation4 + $0x3f0] sm:$0xff]
        %v3647 = vld [vmem:[#allocation4 + $0x3f8] sm:$0xff]
        %v3648 = vld [vmem:[#allocation4 + $0x400] sm:$0xff]
        %v3649 = vld [vmem:[#allocation4 + $0x408] sm:$0xff]
        %v3650 = vld [vmem:[#allocation4 + $0x410] sm:$0xff]
        %v3651 = vld [vmem:[#allocation4 + $0x418] sm:$0xff]
        %v3652 = vld [vmem:[#allocation4 + $0x420] sm:$0xff]
        %v3653 = vld [vmem:[#allocation4 + $0x428] sm:$0xff]
        %v3654 = vld [vmem:[#allocation4 + $0x430] sm:$0xff]
        %v3655 = vld [vmem:[#allocation4 + $0x438] sm:$0xff]
        %v3657 = vsel %vm1848, %v3514, 0
        %v3660 = vsel %vm1848, %v3519, 0
        %3662 = vmatprep.subr.mxu0 %v3521
        %3663 = vmatpush1.msra.mxu0 %v3520
        %3664 = vmatprep.subr.mxu0 %v3523
        %3665 = vmatpush1.msra.mxu0 %v3522
        %3666 = vmatprep.subr.mxu0 %v3525
        %3667 = vmatpush1.msra.mxu0 %v3524
        %3668 = vmatprep.subr.mxu0 %v3527
        %3669 = vmatpush1.msra.mxu0 %v3526
        %3670 = vmatprep.subr.mxu0 %v3529
        %3671 = vmatpush1.msra.mxu0 %v3528
        %3672 = vmatprep.subr.mxu0 %v3531
        %3673 = vmatpush1.msra.mxu0 %v3530
        %3674 = vmatprep.subr.mxu0 %v3533
        %3675 = vmatpush1.msra.mxu0 %v3532
        %3676 = vmatprep.subr.mxu0 %v3535
        %3677 = vmatpush1.msra.mxu0 %v3534
        %3678 = vmatprep.subr.mxu0 %v3537
        %3679 = vmatpush1.msra.mxu0 %v3536
        %3680 = vmatprep.subr.mxu0 %v3539
        %3681 = vmatpush1.msra.mxu0 %v3538
        %3682 = vmatprep.subr.mxu0 %v3541
        %3683 = vmatpush1.msra.mxu0 %v3540
        %3684 = vmatprep.subr.mxu0 %v3543
        %3685 = vmatpush1.msra.mxu0 %v3542
        %3686 = vmatprep.subr.mxu0 %v3545
        %3687 = vmatpush1.msra.mxu0 %v3544
        %3688 = vmatprep.subr.mxu0 %v3547
        %3689 = vmatpush1.msra.mxu0 %v3546
        %3690 = vmatprep.subr.mxu0 %v3549
        %3691 = vmatpush1.msra.mxu0 %v3548
        %3692 = vmatprep.subr.mxu0 %v3551
        %3693 = vmatpush1.msra.mxu0 %v3550
        %3694 = vmatprep.subr.mxu0 %v3553
        %3695 = vmatpush1.msra.mxu0 %v3552
        %3696 = vmatprep.subr.mxu0 %v3555
        %3697 = vmatpush1.msra.mxu0 %v3554
        %3698 = vmatprep.subr.mxu0 %v3557
        %3699 = vmatpush1.msra.mxu0 %v3556
        %3700 = vmatprep.subr.mxu0 %v3559
        %3701 = vmatpush1.msra.mxu0 %v3558
        %3702 = vmatprep.subr.mxu0 %v3561
        %3703 = vmatpush1.msra.mxu0 %v3560
        %3704 = vmatprep.subr.mxu0 %v3563
        %3705 = vmatpush1.msra.mxu0 %v3562
        %3706 = vmatprep.subr.mxu0 %v3565
        %3707 = vmatpush1.msra.mxu0 %v3564
        %3708 = vmatprep.subr.mxu0 %v3567
        %3709 = vmatpush1.msra.mxu0 %v3566
        %3710 = vmatprep.subr.mxu0 %v3569
        %3711 = vmatpush1.msra.mxu0 %v3568
        %3712 = vmatprep.subr.mxu0 %v3571
        %3713 = vmatpush1.msra.mxu0 %v3570
        %3714 = vmatprep.subr.mxu0 %v3573
        %3715 = vmatpush1.msra.mxu0 %v3572
        %3716 = vmatprep.subr.mxu0 %v3575
        %3717 = vmatpush1.msra.mxu0 %v3574
        %3718 = vmatprep.subr.mxu0 %v3577
        %3719 = vmatpush1.msra.mxu0 %v3576
        %3720 = vmatprep.subr.mxu0 %v3579
        %3721 = vmatpush1.msra.mxu0 %v3578
        %3722 = vmatprep.subr.mxu0 %v3581
        %3723 = vmatpush1.msra.mxu0 %v3580
        %3724 = vmatprep.subr.mxu0 %v3583
        %3725 = vmatpush1.msra.mxu0 %v3582
        %3726 = vmatprep.mubr.f32.mxu0 %v3511
        %3727 = vmatmul.mubr.f32.gmra.mrb[0].mxu0 %v3510
        %v3728 = vpop.f32.mrb[0].mxu0
        %v3729 = vadd.f32 0.0, %v3728
        %v3730 = vpop.f32.mrb[0].mxu0
        %v3731 = vadd.f32 0.0, %v3730
        %3732 = vmatprep.mubr.f32.mxu0 %v3516
        %3733 = vmatmul.mubr.f32.gmra.mrb[0].mxu0 %v3515
        %v3734 = vpop.f32.mrb[0].mxu0
        %v3735 = vadd.f32 0.0, %v3734
        %v3736 = vpop.f32.mrb[0].mxu0
        %v3737 = vadd.f32 0.0, %v3736
        %3738 = vdwg.mxu0
        %3739 = vmatprep.subr.mxu0 %v3585
        %3740 = vmatpush1.msra.mxu0 %v3584
        %3741 = vmatprep.subr.mxu0 %v3587
        %3742 = vmatpush1.msra.mxu0 %v3586
        %3743 = vmatprep.subr.mxu0 %v3589
        %3744 = vmatpush1.msra.mxu0 %v3588
        %3745 = vmatprep.subr.mxu0 %v3591
        %3746 = vmatpush1.msra.mxu0 %v3590
        %3747 = vmatprep.subr.mxu0 %v3593
        %3748 = vmatpush1.msra.mxu0 %v3592
        %3749 = vmatprep.subr.mxu0 %v3595
        %3750 = vmatpush1.msra.mxu0 %v3594
        %3751 = vmatprep.subr.mxu0 %v3597
        %3752 = vmatpush1.msra.mxu0 %v3596
        %3753 = vmatprep.subr.mxu0 %v3599
        %3754 = vmatpush1.msra.mxu0 %v3598
        %3755 = vmatprep.subr.mxu0 %v3601
        %3756 = vmatpush1.msra.mxu0 %v3600
        %3757 = vmatprep.subr.mxu0 %v3603
        %3758 = vmatpush1.msra.mxu0 %v3602
        %3759 = vmatprep.subr.mxu0 %v3605
        %3760 = vmatpush1.msra.mxu0 %v3604
        %3761 = vmatprep.subr.mxu0 %v3607
        %3762 = vmatpush1.msra.mxu0 %v3606
        %3763 = vmatprep.subr.mxu0 %v3609
        %3764 = vmatpush1.msra.mxu0 %v3608
        %3765 = vmatprep.subr.mxu0 %v3611
        %3766 = vmatpush1.msra.mxu0 %v3610
        %3767 = vmatprep.subr.mxu0 %v3613
        %3768 = vmatpush1.msra.mxu0 %v3612
        %3769 = vmatprep.subr.mxu0 %v3615
        %3770 = vmatpush1.msra.mxu0 %v3614
        %3771 = vmatprep.subr.mxu0 %v3617
        %3772 = vmatpush1.msra.mxu0 %v3616
        %3773 = vmatprep.subr.mxu0 %v3619
        %3774 = vmatpush1.msra.mxu0 %v3618
        %3775 = vmatprep.subr.mxu0 %v3621
        %3776 = vmatpush1.msra.mxu0 %v3620
        %3777 = vmatprep.subr.mxu0 %v3623
        %3778 = vmatpush1.msra.mxu0 %v3622
        %3779 = vmatprep.subr.mxu0 %v3625
        %3780 = vmatpush1.msra.mxu0 %v3624
        %3781 = vmatprep.subr.mxu0 %v3627
        %3782 = vmatpush1.msra.mxu0 %v3626
        %3783 = vmatprep.subr.mxu0 %v3629
        %3784 = vmatpush1.msra.mxu0 %v3628
        %3785 = vmatprep.subr.mxu0 %v3631
        %3786 = vmatpush1.msra.mxu0 %v3630
        %3787 = vmatprep.subr.mxu0 %v3633
        %3788 = vmatpush1.msra.mxu0 %v3632
        %3789 = vmatprep.subr.mxu0 %v3635
        %3790 = vmatpush1.msra.mxu0 %v3634
        %3791 = vmatprep.subr.mxu0 %v3637
        %3792 = vmatpush1.msra.mxu0 %v3636
        %3793 = vmatprep.subr.mxu0 %v3639
        %3794 = vmatpush1.msra.mxu0 %v3638
        %3795 = vmatprep.subr.mxu0 %v3641
        %3796 = vmatpush1.msra.mxu0 %v3640
        %3797 = vmatprep.subr.mxu0 %v3643
        %3798 = vmatpush1.msra.mxu0 %v3642
        %3799 = vmatprep.subr.mxu0 %v3645
        %3800 = vmatpush1.msra.mxu0 %v3644
        %3801 = vmatprep.subr.mxu0 %v3647
        %3802 = vmatpush1.msra.mxu0 %v3646
        %3803 = vmatprep.mubr.f32.mxu0 %v3513
        %3804 = vmatmul.mubr.f32.gmra.mrb[0].mxu0 %v3512
        %v3805 = vpop.f32.mrb[0].mxu0
        %v3806 = vadd.f32 %v3729, %v3805
        %v3807 = vpop.f32.mrb[0].mxu0
        %v3808 = vadd.f32 %v3731, %v3807
        %3809 = vmatprep.mubr.f32.mxu0 %v3518
        %3810 = vmatmul.mubr.f32.gmra.mrb[0].mxu0 %v3517
        %v3811 = vpop.f32.mrb[0].mxu0
        %v3812 = vadd.f32 %v3735, %v3811
        %v3813 = vpop.f32.mrb[0].mxu0
        %v3814 = vadd.f32 %v3737, %v3813
        %3815 = vdwg.mxu0
        %3816 = vmatprep.subr.mxu0 %v3649
        %3817 = vmatpush1.msra.mxu0 %v3648
        %3818 = vmatprep.subr.mxu0 %v3651
        %3819 = vmatpush1.msra.mxu0 %v3650
        %3820 = vmatprep.subr.mxu0 %v3653
        %3821 = vmatpush1.msra.mxu0 %v3652
        %3822 = vmatprep.subr.mxu0 %v3655
        %3823 = vmatpush1.msra.mxu0 %v3654
        %3824 = vmatprep.subr.mxu0 0.0
        %3825 = vmatpush1.msra.mxu0 0.0
        %3826 = vmatprep.subr.mxu0 0.0
        %3827 = vmatpush1.msra.mxu0 0.0
        %3828 = vmatprep.subr.mxu0 0.0
        %3829 = vmatpush1.msra.mxu0 0.0
        %3830 = vmatprep.subr.mxu0 0.0
        %3831 = vmatpush1.msra.mxu0 0.0
        %3832 = vmatprep.subr.mxu0 0.0
        %3833 = vmatpush1.msra.mxu0 0.0
        %3834 = vmatprep.subr.mxu0 0.0
        %3835 = vmatpush1.msra.mxu0 0.0
        %3836 = vmatprep.subr.mxu0 0.0
        %3837 = vmatpush1.msra.mxu0 0.0
        %3838 = vmatprep.subr.mxu0 0.0
        %3839 = vmatpush1.msra.mxu0 0.0
        %3840 = vmatprep.subr.mxu0 0.0
        %3841 = vmatpush1.msra.mxu0 0.0
        %3842 = vmatprep.subr.mxu0 0.0
        %3843 = vmatpush1.msra.mxu0 0.0
        %3844 = vmatprep.subr.mxu0 0.0
        %3845 = vmatpush1.msra.mxu0 0.0
        %3846 = vmatprep.subr.mxu0 0.0
        %3847 = vmatpush1.msra.mxu0 0.0
        %3848 = vmatprep.subr.mxu0 0.0
        %3849 = vmatpush1.msra.mxu0 0.0
        %3850 = vmatprep.subr.mxu0 0.0
        %3851 = vmatpush1.msra.mxu0 0.0
        %3852 = vmatprep.subr.mxu0 0.0
        %3853 = vmatpush1.msra.mxu0 0.0
        %3854 = vmatprep.subr.mxu0 0.0
        %3855 = vmatpush1.msra.mxu0 0.0
        %3856 = vmatprep.subr.mxu0 0.0
        %3857 = vmatpush1.msra.mxu0 0.0
        %3858 = vmatprep.subr.mxu0 0.0
        %3859 = vmatpush1.msra.mxu0 0.0
        %3860 = vmatprep.subr.mxu0 0.0
        %3861 = vmatpush1.msra.mxu0 0.0
        %3862 = vmatprep.subr.mxu0 0.0
        %3863 = vmatpush1.msra.mxu0 0.0
        %3864 = vmatprep.subr.mxu0 0.0
        %3865 = vmatpush1.msra.mxu0 0.0
        %3866 = vmatprep.subr.mxu0 0.0
        %3867 = vmatpush1.msra.mxu0 0.0
        %3868 = vmatprep.subr.mxu0 0.0
        %3869 = vmatpush1.msra.mxu0 0.0
        %3870 = vmatprep.subr.mxu0 0.0
        %3871 = vmatpush1.msra.mxu0 0.0
        %3872 = vmatprep.subr.mxu0 0.0
        %3873 = vmatpush1.msra.mxu0 0.0
        %3874 = vmatprep.subr.mxu0 0.0
        %3875 = vmatpush1.msra.mxu0 0.0
        %3876 = vmatprep.subr.mxu0 0.0
        %3877 = vmatpush1.msra.mxu0 0.0
        %3878 = vmatprep.subr.mxu0 0.0
        %3879 = vmatpush1.msra.mxu0 0.0
        %3880 = vmatprep.mubr.f32.mxu0 0.0
        %3881 = vmatmul.mubr.f32.gmra.mrb[0].mxu0 %v3657
        %v3882 = vpop.f32.mrb[0].mxu0
        %v3883 = vadd.f32 %v3806, %v3882
        %v3884 = vpop.f32.mrb[0].mxu0
        %v3885 = vadd.f32 %v3808, %v3884
        %3886 = vmatprep.mubr.f32.mxu0 0.0
        %3887 = vmatmul.mubr.f32.gmra.mrb[0].mxu0 %v3660
        %v3888 = vpop.f32.mrb[0].mxu0
        %v3889 = vadd.f32 %v3812, %v3888
        %v3890 = vpop.f32.mrb[0].mxu0
        %v3891 = vadd.f32 %v3814, %v3890
        %3892 = vdwg.mxu0
        %v3893 = vmax.f32 %v3883, 0.0
        %v3894 = vmax.f32 %v3885, 0.0
        %v3895 = vmax.f32 %v3889, 0.0
        %v3896 = vmax.f32 %v3891, 0.0
        %3897 = vst [vmem:[#allocation3 + $0x10] sm:$0xff] %v3893
        %3898 = vst [vmem:[#allocation3 + $0x48] sm:$0xff] %v3895
        %3899 = vst [vmem:[#allocation3 + $0x28] sm:$0xff] %v3894
        %3900 = vst [vmem:[#allocation3 + $0x60] sm:$0xff] %v3896
        %v3901 = vld [vmem:[#allocation3] sm:$0xff]
        %v3902 = vld [vmem:[#allocation3 + $0x8] sm:$0xff]
        %v3903 = vld [vmem:[#allocation3 + $0x38] sm:$0xff]
        %v3904 = vld [vmem:[#allocation3 + $0x40] sm:$0xff]
        %3909 = vrot.lane.b32.xlu0 %v3901, 16
        %v3910 = vpop.permute.xlu0 %3909
        %3911 = vrot.lane.b32.xlu0 %v3902, 16
        %v3912 = vpop.permute.xlu0 %3911
        %3913 = vrot.lane.b32.xlu0 %v3903, 16
        %v3914 = vpop.permute.xlu0 %3913
        %3915 = vrot.lane.b32.xlu0 %v3904, 16
        %v3916 = vpop.permute.xlu0 %3915
        %v3917 = vsel %vm270, %v3910, %v3912
        %v3918 = vsel %vm270, %v3914, %v3916
        %3921 = vst [vmem:[#allocation4] sm:$0xff] %v3917
        %3922 = vst [vmem:[#allocation4 + $0x10] sm:$0xff] %v3918
        %v3923 = vld [vmem:[#allocation3] sm:$0xff]
        %v3924 = vld [vmem:[#allocation3 + $0x8] sm:$0xff]
        %v3925 = vld [vmem:[#allocation3 + $0x38] sm:$0xff]
        %v3926 = vld [vmem:[#allocation3 + $0x40] sm:$0xff]
        %3931 = vrot.lane.b32.xlu0 %v3923, 15
        %v3932 = vpop.permute.xlu0 %3931
        %3933 = vrot.lane.b32.xlu0 %v3924, 15
        %v3934 = vpop.permute.xlu0 %3933
        %3935 = vrot.lane.b32.xlu0 %v3925, 15
        %v3936 = vpop.permute.xlu0 %3935
        %3937 = vrot.lane.b32.xlu0 %v3926, 15
        %v3938 = vpop.permute.xlu0 %3937
        %v3939 = vsel %vm293, %v3932, %v3934
        %v3940 = vsel %vm293, %v3936, %v3938
        %3943 = vst [vmem:[#allocation4 + $0x20] sm:$0xff] %v3939
        %3944 = vst [vmem:[#allocation4 + $0x30] sm:$0xff] %v3940
        %v3945 = vld [vmem:[#allocation3] sm:$0xff]
        %v3946 = vld [vmem:[#allocation3 + $0x8] sm:$0xff]
        %v3947 = vld [vmem:[#allocation3 + $0x38] sm:$0xff]
        %v3948 = vld [vmem:[#allocation3 + $0x40] sm:$0xff]
        %3953 = vrot.lane.b32.xlu0 %v3945, 14
        %v3954 = vpop.permute.xlu0 %3953
        %3955 = vrot.lane.b32.xlu0 %v3946, 14
        %v3956 = vpop.permute.xlu0 %3955
        %3957 = vrot.lane.b32.xlu0 %v3947, 14
        %v3958 = vpop.permute.xlu0 %3957
        %3959 = vrot.lane.b32.xlu0 %v3948, 14
        %v3960 = vpop.permute.xlu0 %3959
        %v3961 = vsel %vm316, %v3954, %v3956
        %v3962 = vsel %vm316, %v3958, %v3960
        %3965 = vst [vmem:[#allocation4 + $0x40] sm:$0xff] %v3961
        %3966 = vst [vmem:[#allocation4 + $0x50] sm:$0xff] %v3962
        %v3967 = vld [vmem:[#allocation3] sm:$0xff]
        %v3968 = vld [vmem:[#allocation3 + $0x8] sm:$0xff]
        %v3969 = vld [vmem:[#allocation3 + $0x38] sm:$0xff]
        %v3970 = vld [vmem:[#allocation3 + $0x40] sm:$0xff]
        %3975 = vrot.lane.b32.xlu0 %v3967, 13
        %v3976 = vpop.permute.xlu0 %3975
        %3977 = vrot.lane.b32.xlu0 %v3968, 13
        %v3978 = vpop.permute.xlu0 %3977
        %3979 = vrot.lane.b32.xlu0 %v3969, 13
        %v3980 = vpop.permute.xlu0 %3979
        %3981 = vrot.lane.b32.xlu0 %v3970, 13
        %v3982 = vpop.permute.xlu0 %3981
        %v3983 = vsel %vm339, %v3976, %v3978
        %v3984 = vsel %vm339, %v3980, %v3982
        %3987 = vst [vmem:[#allocation4 + $0x60] sm:$0xff] %v3983
        %3988 = vst [vmem:[#allocation4 + $0x70] sm:$0xff] %v3984
        %v3989 = vld [vmem:[#allocation3] sm:$0xff]
        %v3990 = vld [vmem:[#allocation3 + $0x8] sm:$0xff]
        %v3991 = vld [vmem:[#allocation3 + $0x38] sm:$0xff]
        %v3992 = vld [vmem:[#allocation3 + $0x40] sm:$0xff]
        %3997 = vrot.lane.b32.xlu0 %v3989, 12
        %v3998 = vpop.permute.xlu0 %3997
        %3999 = vrot.lane.b32.xlu0 %v3990, 12
        %v4000 = vpop.permute.xlu0 %3999
        %4001 = vrot.lane.b32.xlu0 %v3991, 12
        %v4002 = vpop.permute.xlu0 %4001
        %4003 = vrot.lane.b32.xlu0 %v3992, 12
        %v4004 = vpop.permute.xlu0 %4003
        %v4005 = vsel %vm362, %v3998, %v4000
        %v4006 = vsel %vm362, %v4002, %v4004
        %4009 = vst [vmem:[#allocation4 + $0x80] sm:$0xff] %v4005
        %4010 = vst [vmem:[#allocation4 + $0x90] sm:$0xff] %v4006
        %v4011 = vld [vmem:[#allocation3] sm:$0xff]
        %v4012 = vld [vmem:[#allocation3 + $0x8] sm:$0xff]
        %v4013 = vld [vmem:[#allocation3 + $0x38] sm:$0xff]
        %v4014 = vld [vmem:[#allocation3 + $0x40] sm:$0xff]
        %4019 = vrot.lane.b32.xlu0 %v4011, 11
        %v4020 = vpop.permute.xlu0 %4019
        %4021 = vrot.lane.b32.xlu0 %v4012, 11
        %v4022 = vpop.permute.xlu0 %4021
        %4023 = vrot.lane.b32.xlu0 %v4013, 11
        %v4024 = vpop.permute.xlu0 %4023
        %4025 = vrot.lane.b32.xlu0 %v4014, 11
        %v4026 = vpop.permute.xlu0 %4025
        %v4027 = vsel %vm385, %v4020, %v4022
        %v4028 = vsel %vm385, %v4024, %v4026
        %4031 = vst [vmem:[#allocation4 + $0xa0] sm:$0xff] %v4027
        %4032 = vst [vmem:[#allocation4 + $0xb0] sm:$0xff] %v4028
        %v4033 = vld [vmem:[#allocation3] sm:$0xff]
        %v4034 = vld [vmem:[#allocation3 + $0x8] sm:$0xff]
        %v4035 = vld [vmem:[#allocation3 + $0x38] sm:$0xff]
        %v4036 = vld [vmem:[#allocation3 + $0x40] sm:$0xff]
        %4041 = vrot.lane.b32.xlu0 %v4033, 10
        %v4042 = vpop.permute.xlu0 %4041
        %4043 = vrot.lane.b32.xlu0 %v4034, 10
        %v4044 = vpop.permute.xlu0 %4043
        %4045 = vrot.lane.b32.xlu0 %v4035, 10
        %v4046 = vpop.permute.xlu0 %4045
        %4047 = vrot.lane.b32.xlu0 %v4036, 10
        %v4048 = vpop.permute.xlu0 %4047
        %v4049 = vsel %vm408, %v4042, %v4044
        %v4050 = vsel %vm408, %v4046, %v4048
        %4053 = vst [vmem:[#allocation4 + $0xc0] sm:$0xff] %v4049
        %4054 = vst [vmem:[#allocation4 + $0xd0] sm:$0xff] %v4050
        %v4055 = vld [vmem:[#allocation3] sm:$0xff]
        %v4056 = vld [vmem:[#allocation3 + $0x8] sm:$0xff]
        %v4057 = vld [vmem:[#allocation3 + $0x38] sm:$0xff]
        %v4058 = vld [vmem:[#allocation3 + $0x40] sm:$0xff]
        %4063 = vrot.lane.b32.xlu0 %v4055, 9
        %v4064 = vpop.permute.xlu0 %4063
        %4065 = vrot.lane.b32.xlu0 %v4056, 9
        %v4066 = vpop.permute.xlu0 %4065
        %4067 = vrot.lane.b32.xlu0 %v4057, 9
        %v4068 = vpop.permute.xlu0 %4067
        %4069 = vrot.lane.b32.xlu0 %v4058, 9
        %v4070 = vpop.permute.xlu0 %4069
        %v4071 = vsel %vm431, %v4064, %v4066
        %v4072 = vsel %vm431, %v4068, %v4070
        %4075 = vst [vmem:[#allocation4 + $0xe0] sm:$0xff] %v4071
        %4076 = vst [vmem:[#allocation4 + $0xf0] sm:$0xff] %v4072
        %v4077 = vld [vmem:[#allocation3] sm:$0xff]
        %v4078 = vld [vmem:[#allocation3 + $0x8] sm:$0xff]
        %v4079 = vld [vmem:[#allocation3 + $0x38] sm:$0xff]
        %v4080 = vld [vmem:[#allocation3 + $0x40] sm:$0xff]
        %4085 = vrot.lane.b32.xlu0 %v4077, 8
        %v4086 = vpop.permute.xlu0 %4085
        %4087 = vrot.lane.b32.xlu0 %v4078, 8
        %v4088 = vpop.permute.xlu0 %4087
        %4089 = vrot.lane.b32.xlu0 %v4079, 8
        %v4090 = vpop.permute.xlu0 %4089
        %4091 = vrot.lane.b32.xlu0 %v4080, 8
        %v4092 = vpop.permute.xlu0 %4091
        %v4093 = vsel %vm454, %v4086, %v4088
        %v4094 = vsel %vm454, %v4090, %v4092
        %4097 = vst [vmem:[#allocation4 + $0x100] sm:$0xff] %v4093
        %4098 = vst [vmem:[#allocation4 + $0x110] sm:$0xff] %v4094
        %v4099 = vld [vmem:[#allocation3] sm:$0xff]
        %v4100 = vld [vmem:[#allocation3 + $0x8] sm:$0xff]
        %v4101 = vld [vmem:[#allocation3 + $0x38] sm:$0xff]
        %v4102 = vld [vmem:[#allocation3 + $0x40] sm:$0xff]
        %4107 = vrot.lane.b32.xlu0 %v4099, 7
        %v4108 = vpop.permute.xlu0 %4107
        %4109 = vrot.lane.b32.xlu0 %v4100, 7
        %v4110 = vpop.permute.xlu0 %4109
        %4111 = vrot.lane.b32.xlu0 %v4101, 7
        %v4112 = vpop.permute.xlu0 %4111
        %4113 = vrot.lane.b32.xlu0 %v4102, 7
        %v4114 = vpop.permute.xlu0 %4113
        %v4115 = vsel %vm477, %v4108, %v4110
        %v4116 = vsel %vm477, %v4112, %v4114
        %4119 = vst [vmem:[#allocation4 + $0x120] sm:$0xff] %v4115
        %4120 = vst [vmem:[#allocation4 + $0x130] sm:$0xff] %v4116
        %v4121 = vld [vmem:[#allocation3] sm:$0xff]
        %v4122 = vld [vmem:[#allocation3 + $0x8] sm:$0xff]
        %v4123 = vld [vmem:[#allocation3 + $0x38] sm:$0xff]
        %v4124 = vld [vmem:[#allocation3 + $0x40] sm:$0xff]
        %4129 = vrot.lane.b32.xlu0 %v4121, 6
        %v4130 = vpop.permute.xlu0 %4129
        %4131 = vrot.lane.b32.xlu0 %v4122, 6
        %v4132 = vpop.permute.xlu0 %4131
        %4133 = vrot.lane.b32.xlu0 %v4123, 6
        %v4134 = vpop.permute.xlu0 %4133
        %4135 = vrot.lane.b32.xlu0 %v4124, 6
        %v4136 = vpop.permute.xlu0 %4135
        %v4137 = vsel %vm500, %v4130, %v4132
        %v4138 = vsel %vm500, %v4134, %v4136
        %4141 = vst [vmem:[#allocation4 + $0x140] sm:$0xff] %v4137
        %4142 = vst [vmem:[#allocation4 + $0x150] sm:$0xff] %v4138
        %v4143 = vld [vmem:[#allocation3] sm:$0xff]
        %v4144 = vld [vmem:[#allocation3 + $0x8] sm:$0xff]
        %v4145 = vld [vmem:[#allocation3 + $0x38] sm:$0xff]
        %v4146 = vld [vmem:[#allocation3 + $0x40] sm:$0xff]
        %4151 = vrot.lane.b32.xlu0 %v4143, 5
        %v4152 = vpop.permute.xlu0 %4151
        %4153 = vrot.lane.b32.xlu0 %v4144, 5
        %v4154 = vpop.permute.xlu0 %4153
        %4155 = vrot.lane.b32.xlu0 %v4145, 5
        %v4156 = vpop.permute.xlu0 %4155
        %4157 = vrot.lane.b32.xlu0 %v4146, 5
        %v4158 = vpop.permute.xlu0 %4157
        %v4159 = vsel %vm523, %v4152, %v4154
        %v4160 = vsel %vm523, %v4156, %v4158
        %4163 = vst [vmem:[#allocation4 + $0x160] sm:$0xff] %v4159
        %4164 = vst [vmem:[#allocation4 + $0x170] sm:$0xff] %v4160
        %v4165 = vld [vmem:[#allocation3] sm:$0xff]
        %v4166 = vld [vmem:[#allocation3 + $0x8] sm:$0xff]
        %v4167 = vld [vmem:[#allocation3 + $0x38] sm:$0xff]
        %v4168 = vld [vmem:[#allocation3 + $0x40] sm:$0xff]
        %4173 = vrot.lane.b32.xlu0 %v4165, 4
        %v4174 = vpop.permute.xlu0 %4173
        %4175 = vrot.lane.b32.xlu0 %v4166, 4
        %v4176 = vpop.permute.xlu0 %4175
        %4177 = vrot.lane.b32.xlu0 %v4167, 4
        %v4178 = vpop.permute.xlu0 %4177
        %4179 = vrot.lane.b32.xlu0 %v4168, 4
        %v4180 = vpop.permute.xlu0 %4179
        %v4181 = vsel %vm546, %v4174, %v4176
        %v4182 = vsel %vm546, %v4178, %v4180
        %4185 = vst [vmem:[#allocation4 + $0x180] sm:$0xff] %v4181
        %4186 = vst [vmem:[#allocation4 + $0x190] sm:$0xff] %v4182
        %v4187 = vld [vmem:[#allocation3] sm:$0xff]
        %v4188 = vld [vmem:[#allocation3 + $0x8] sm:$0xff]
        %v4189 = vld [vmem:[#allocation3 + $0x38] sm:$0xff]
        %v4190 = vld [vmem:[#allocation3 + $0x40] sm:$0xff]
        %4195 = vrot.lane.b32.xlu0 %v4187, 3
        %v4196 = vpop.permute.xlu0 %4195
        %4197 = vrot.lane.b32.xlu0 %v4188, 3
        %v4198 = vpop.permute.xlu0 %4197
        %4199 = vrot.lane.b32.xlu0 %v4189, 3
        %v4200 = vpop.permute.xlu0 %4199
        %4201 = vrot.lane.b32.xlu0 %v4190, 3
        %v4202 = vpop.permute.xlu0 %4201
        %v4203 = vsel %vm569, %v4196, %v4198
        %v4204 = vsel %vm569, %v4200, %v4202
        %4207 = vst [vmem:[#allocation4 + $0x1a0] sm:$0xff] %v4203
        %4208 = vst [vmem:[#allocation4 + $0x1b0] sm:$0xff] %v4204
        %v4209 = vld [vmem:[#allocation3] sm:$0xff]
        %v4210 = vld [vmem:[#allocation3 + $0x8] sm:$0xff]
        %v4211 = vld [vmem:[#allocation3 + $0x38] sm:$0xff]
        %v4212 = vld [vmem:[#allocation3 + $0x40] sm:$0xff]
        %4217 = vrot.lane.b32.xlu0 %v4209, 2
        %v4218 = vpop.permute.xlu0 %4217
        %4219 = vrot.lane.b32.xlu0 %v4210, 2
        %v4220 = vpop.permute.xlu0 %4219
        %4221 = vrot.lane.b32.xlu0 %v4211, 2
        %v4222 = vpop.permute.xlu0 %4221
        %4223 = vrot.lane.b32.xlu0 %v4212, 2
        %v4224 = vpop.permute.xlu0 %4223
        %v4225 = vsel %vm592, %v4218, %v4220
        %v4226 = vsel %vm592, %v4222, %v4224
        %4229 = vst [vmem:[#allocation4 + $0x1c0] sm:$0xff] %v4225
        %4230 = vst [vmem:[#allocation4 + $0x1d0] sm:$0xff] %v4226
        %v4231 = vld [vmem:[#allocation3] sm:$0xff]
        %v4232 = vld [vmem:[#allocation3 + $0x8] sm:$0xff]
        %v4233 = vld [vmem:[#allocation3 + $0x38] sm:$0xff]
        %v4234 = vld [vmem:[#allocation3 + $0x40] sm:$0xff]
        %4239 = vrot.lane.b32.xlu0 %v4231, 1
        %v4240 = vpop.permute.xlu0 %4239
        %4241 = vrot.lane.b32.xlu0 %v4232, 1
        %v4242 = vpop.permute.xlu0 %4241
        %4243 = vrot.lane.b32.xlu0 %v4233, 1
        %v4244 = vpop.permute.xlu0 %4243
        %4245 = vrot.lane.b32.xlu0 %v4234, 1
        %v4246 = vpop.permute.xlu0 %4245
        %v4247 = vsel %vm615, %v4240, %v4242
        %v4248 = vsel %vm615, %v4244, %v4246
        %4251 = vst [vmem:[#allocation4 + $0x1e0] sm:$0xff] %v4247
        %4252 = vst [vmem:[#allocation4 + $0x1f0] sm:$0xff] %v4248
        %v4253 = vld [vmem:[#allocation3 + $0x8] sm:$0xff]
        %v4254 = vld [vmem:[#allocation3 + $0x40] sm:$0xff]
        %4255 = vst [vmem:[#allocation4 + $0x200] sm:$0xff] %v4253
        %4256 = vst [vmem:[#allocation4 + $0x210] sm:$0xff] %v4254
        %v4257 = vld [vmem:[#allocation3 + $0x8] sm:$0xff]
        %v4258 = vld [vmem:[#allocation3 + $0x10] sm:$0xff]
        %v4259 = vld [vmem:[#allocation3 + $0x40] sm:$0xff]
        %v4260 = vld [vmem:[#allocation3 + $0x48] sm:$0xff]
        %4265 = vrot.lane.b32.xlu0 %v4257, 127
        %v4266 = vpop.permute.xlu0 %4265
        %4267 = vrot.lane.b32.xlu0 %v4258, 127
        %v4268 = vpop.permute.xlu0 %4267
        %4269 = vrot.lane.b32.xlu0 %v4259, 127
        %v4270 = vpop.permute.xlu0 %4269
        %4271 = vrot.lane.b32.xlu0 %v4260, 127
        %v4272 = vpop.permute.xlu0 %4271
        %v4273 = vsel %vm642, %v4266, %v4268
        %v4274 = vsel %vm642, %v4270, %v4272
        %4277 = vst [vmem:[#allocation4 + $0x220] sm:$0xff] %v4273
        %4278 = vst [vmem:[#allocation4 + $0x230] sm:$0xff] %v4274
        %v4279 = vld [vmem:[#allocation3 + $0x8] sm:$0xff]
        %v4280 = vld [vmem:[#allocation3 + $0x10] sm:$0xff]
        %v4281 = vld [vmem:[#allocation3 + $0x40] sm:$0xff]
        %v4282 = vld [vmem:[#allocation3 + $0x48] sm:$0xff]
        %4287 = vrot.lane.b32.xlu0 %v4279, 126
        %v4288 = vpop.permute.xlu0 %4287
        %4289 = vrot.lane.b32.xlu0 %v4280, 126
        %v4290 = vpop.permute.xlu0 %4289
        %4291 = vrot.lane.b32.xlu0 %v4281, 126
        %v4292 = vpop.permute.xlu0 %4291
        %4293 = vrot.lane.b32.xlu0 %v4282, 126
        %v4294 = vpop.permute.xlu0 %4293
        %v4295 = vsel %vm665, %v4288, %v4290
        %v4296 = vsel %vm665, %v4292, %v4294
        %4299 = vst [vmem:[#allocation4 + $0x240] sm:$0xff] %v4295
        %4300 = vst [vmem:[#allocation4 + $0x250] sm:$0xff] %v4296
        %v4301 = vld [vmem:[#allocation3 + $0x8] sm:$0xff]
        %v4302 = vld [vmem:[#allocation3 + $0x10] sm:$0xff]
        %v4303 = vld [vmem:[#allocation3 + $0x40] sm:$0xff]
        %v4304 = vld [vmem:[#allocation3 + $0x48] sm:$0xff]
        %4309 = vrot.lane.b32.xlu0 %v4301, 125
        %v4310 = vpop.permute.xlu0 %4309
        %4311 = vrot.lane.b32.xlu0 %v4302, 125
        %v4312 = vpop.permute.xlu0 %4311
        %4313 = vrot.lane.b32.xlu0 %v4303, 125
        %v4314 = vpop.permute.xlu0 %4313
        %4315 = vrot.lane.b32.xlu0 %v4304, 125
        %v4316 = vpop.permute.xlu0 %4315
        %v4317 = vsel %vm688, %v4310, %v4312
        %v4318 = vsel %vm688, %v4314, %v4316
        %4321 = vst [vmem:[#allocation4 + $0x260] sm:$0xff] %v4317
        %4322 = vst [vmem:[#allocation4 + $0x270] sm:$0xff] %v4318
        %v4323 = vld [vmem:[#allocation3 + $0x8] sm:$0xff]
        %v4324 = vld [vmem:[#allocation3 + $0x10] sm:$0xff]
        %v4325 = vld [vmem:[#allocation3 + $0x40] sm:$0xff]
        %v4326 = vld [vmem:[#allocation3 + $0x48] sm:$0xff]
        %4331 = vrot.lane.b32.xlu0 %v4323, 124
        %v4332 = vpop.permute.xlu0 %4331
        %4333 = vrot.lane.b32.xlu0 %v4324, 124
        %v4334 = vpop.permute.xlu0 %4333
        %4335 = vrot.lane.b32.xlu0 %v4325, 124
        %v4336 = vpop.permute.xlu0 %4335
        %4337 = vrot.lane.b32.xlu0 %v4326, 124
        %v4338 = vpop.permute.xlu0 %4337
        %v4339 = vsel %vm711, %v4332, %v4334
        %v4340 = vsel %vm711, %v4336, %v4338
        %4343 = vst [vmem:[#allocation4 + $0x280] sm:$0xff] %v4339
        %4344 = vst [vmem:[#allocation4 + $0x290] sm:$0xff] %v4340
        %v4345 = vld [vmem:[#allocation3 + $0x8] sm:$0xff]
        %v4346 = vld [vmem:[#allocation3 + $0x10] sm:$0xff]
        %v4347 = vld [vmem:[#allocation3 + $0x40] sm:$0xff]
        %v4348 = vld [vmem:[#allocation3 + $0x48] sm:$0xff]
        %4353 = vrot.lane.b32.xlu0 %v4345, 123
        %v4354 = vpop.permute.xlu0 %4353
        %4355 = vrot.lane.b32.xlu0 %v4346, 123
        %v4356 = vpop.permute.xlu0 %4355
        %4357 = vrot.lane.b32.xlu0 %v4347, 123
        %v4358 = vpop.permute.xlu0 %4357
        %4359 = vrot.lane.b32.xlu0 %v4348, 123
        %v4360 = vpop.permute.xlu0 %4359
        %v4361 = vsel %vm734, %v4354, %v4356
        %v4362 = vsel %vm734, %v4358, %v4360
        %4365 = vst [vmem:[#allocation4 + $0x2a0] sm:$0xff] %v4361
        %4366 = vst [vmem:[#allocation4 + $0x2b0] sm:$0xff] %v4362
        %v4367 = vld [vmem:[#allocation3 + $0x8] sm:$0xff]
        %v4368 = vld [vmem:[#allocation3 + $0x10] sm:$0xff]
        %v4369 = vld [vmem:[#allocation3 + $0x40] sm:$0xff]
        %v4370 = vld [vmem:[#allocation3 + $0x48] sm:$0xff]
        %4375 = vrot.lane.b32.xlu0 %v4367, 122
        %v4376 = vpop.permute.xlu0 %4375
        %4377 = vrot.lane.b32.xlu0 %v4368, 122
        %v4378 = vpop.permute.xlu0 %4377
        %4379 = vrot.lane.b32.xlu0 %v4369, 122
        %v4380 = vpop.permute.xlu0 %4379
        %4381 = vrot.lane.b32.xlu0 %v4370, 122
        %v4382 = vpop.permute.xlu0 %4381
        %v4383 = vsel %vm757, %v4376, %v4378
        %v4384 = vsel %vm757, %v4380, %v4382
        %4387 = vst [vmem:[#allocation4 + $0x2c0] sm:$0xff] %v4383
        %4388 = vst [vmem:[#allocation4 + $0x2d0] sm:$0xff] %v4384
        %v4389 = vld [vmem:[#allocation3 + $0x8] sm:$0xff]
        %v4390 = vld [vmem:[#allocation3 + $0x10] sm:$0xff]
        %v4391 = vld [vmem:[#allocation3 + $0x40] sm:$0xff]
        %v4392 = vld [vmem:[#allocation3 + $0x48] sm:$0xff]
        %4397 = vrot.lane.b32.xlu0 %v4389, 121
        %v4398 = vpop.permute.xlu0 %4397
        %4399 = vrot.lane.b32.xlu0 %v4390, 121
        %v4400 = vpop.permute.xlu0 %4399
        %4401 = vrot.lane.b32.xlu0 %v4391, 121
        %v4402 = vpop.permute.xlu0 %4401
        %4403 = vrot.lane.b32.xlu0 %v4392, 121
        %v4404 = vpop.permute.xlu0 %4403
        %v4405 = vsel %vm780, %v4398, %v4400
        %v4406 = vsel %vm780, %v4402, %v4404
        %4409 = vst [vmem:[#allocation4 + $0x2e0] sm:$0xff] %v4405
        %4410 = vst [vmem:[#allocation4 + $0x2f0] sm:$0xff] %v4406
        %v4411 = vld [vmem:[#allocation3 + $0x8] sm:$0xff]
        %v4412 = vld [vmem:[#allocation3 + $0x10] sm:$0xff]
        %v4413 = vld [vmem:[#allocation3 + $0x40] sm:$0xff]
        %v4414 = vld [vmem:[#allocation3 + $0x48] sm:$0xff]
        %4419 = vrot.lane.b32.xlu0 %v4411, 120
        %v4420 = vpop.permute.xlu0 %4419
        %4421 = vrot.lane.b32.xlu0 %v4412, 120
        %v4422 = vpop.permute.xlu0 %4421
        %4423 = vrot.lane.b32.xlu0 %v4413, 120
        %v4424 = vpop.permute.xlu0 %4423
        %4425 = vrot.lane.b32.xlu0 %v4414, 120
        %v4426 = vpop.permute.xlu0 %4425
        %v4427 = vsel %vm803, %v4420, %v4422
        %v4428 = vsel %vm803, %v4424, %v4426
        %4431 = vst [vmem:[#allocation4 + $0x300] sm:$0xff] %v4427
        %4432 = vst [vmem:[#allocation4 + $0x310] sm:$0xff] %v4428
        %v4433 = vld [vmem:[#allocation3 + $0x8] sm:$0xff]
        %v4434 = vld [vmem:[#allocation3 + $0x10] sm:$0xff]
        %v4435 = vld [vmem:[#allocation3 + $0x40] sm:$0xff]
        %v4436 = vld [vmem:[#allocation3 + $0x48] sm:$0xff]
        %4441 = vrot.lane.b32.xlu0 %v4433, 119
        %v4442 = vpop.permute.xlu0 %4441
        %4443 = vrot.lane.b32.xlu0 %v4434, 119
        %v4444 = vpop.permute.xlu0 %4443
        %4445 = vrot.lane.b32.xlu0 %v4435, 119
        %v4446 = vpop.permute.xlu0 %4445
        %4447 = vrot.lane.b32.xlu0 %v4436, 119
        %v4448 = vpop.permute.xlu0 %4447
        %v4449 = vsel %vm826, %v4442, %v4444
        %v4450 = vsel %vm826, %v4446, %v4448
        %4453 = vst [vmem:[#allocation4 + $0x320] sm:$0xff] %v4449
        %4454 = vst [vmem:[#allocation4 + $0x330] sm:$0xff] %v4450
        %v4455 = vld [vmem:[#allocation3 + $0x8] sm:$0xff]
        %v4456 = vld [vmem:[#allocation3 + $0x10] sm:$0xff]
        %v4457 = vld [vmem:[#allocation3 + $0x40] sm:$0xff]
        %v4458 = vld [vmem:[#allocation3 + $0x48] sm:$0xff]
        %4463 = vrot.lane.b32.xlu0 %v4455, 118
        %v4464 = vpop.permute.xlu0 %4463
        %4465 = vrot.lane.b32.xlu0 %v4456, 118
        %v4466 = vpop.permute.xlu0 %4465
        %4467 = vrot.lane.b32.xlu0 %v4457, 118
        %v4468 = vpop.permute.xlu0 %4467
        %4469 = vrot.lane.b32.xlu0 %v4458, 118
        %v4470 = vpop.permute.xlu0 %4469
        %v4471 = vsel %vm849, %v4464, %v4466
        %v4472 = vsel %vm849, %v4468, %v4470
        %4475 = vst [vmem:[#allocation4 + $0x340] sm:$0xff] %v4471
        %4476 = vst [vmem:[#allocation4 + $0x350] sm:$0xff] %v4472
        %v4477 = vld [vmem:[#allocation3 + $0x8] sm:$0xff]
        %v4478 = vld [vmem:[#allocation3 + $0x10] sm:$0xff]
        %v4479 = vld [vmem:[#allocation3 + $0x40] sm:$0xff]
        %v4480 = vld [vmem:[#allocation3 + $0x48] sm:$0xff]
        %4485 = vrot.lane.b32.xlu0 %v4477, 117
        %v4486 = vpop.permute.xlu0 %4485
        %4487 = vrot.lane.b32.xlu0 %v4478, 117
        %v4488 = vpop.permute.xlu0 %4487
        %4489 = vrot.lane.b32.xlu0 %v4479, 117
        %v4490 = vpop.permute.xlu0 %4489
        %4491 = vrot.lane.b32.xlu0 %v4480, 117
        %v4492 = vpop.permute.xlu0 %4491
        %v4493 = vsel %vm872, %v4486, %v4488
        %v4494 = vsel %vm872, %v4490, %v4492
        %4497 = vst [vmem:[#allocation4 + $0x360] sm:$0xff] %v4493
        %4498 = vst [vmem:[#allocation4 + $0x370] sm:$0xff] %v4494
        %v4499 = vld [vmem:[#allocation3 + $0x8] sm:$0xff]
        %v4500 = vld [vmem:[#allocation3 + $0x10] sm:$0xff]
        %v4501 = vld [vmem:[#allocation3 + $0x40] sm:$0xff]
        %v4502 = vld [vmem:[#allocation3 + $0x48] sm:$0xff]
        %4507 = vrot.lane.b32.xlu0 %v4499, 116
        %v4508 = vpop.permute.xlu0 %4507
        %4509 = vrot.lane.b32.xlu0 %v4500, 116
        %v4510 = vpop.permute.xlu0 %4509
        %4511 = vrot.lane.b32.xlu0 %v4501, 116
        %v4512 = vpop.permute.xlu0 %4511
        %4513 = vrot.lane.b32.xlu0 %v4502, 116
        %v4514 = vpop.permute.xlu0 %4513
        %v4515 = vsel %vm895, %v4508, %v4510
        %v4516 = vsel %vm895, %v4512, %v4514
        %4519 = vst [vmem:[#allocation4 + $0x380] sm:$0xff] %v4515
        %4520 = vst [vmem:[#allocation4 + $0x390] sm:$0xff] %v4516
        %v4521 = vld [vmem:[#allocation3 + $0x8] sm:$0xff]
        %v4522 = vld [vmem:[#allocation3 + $0x10] sm:$0xff]
        %v4523 = vld [vmem:[#allocation3 + $0x40] sm:$0xff]
        %v4524 = vld [vmem:[#allocation3 + $0x48] sm:$0xff]
        %4529 = vrot.lane.b32.xlu0 %v4521, 115
        %v4530 = vpop.permute.xlu0 %4529
        %4531 = vrot.lane.b32.xlu0 %v4522, 115
        %v4532 = vpop.permute.xlu0 %4531
        %4533 = vrot.lane.b32.xlu0 %v4523, 115
        %v4534 = vpop.permute.xlu0 %4533
        %4535 = vrot.lane.b32.xlu0 %v4524, 115
        %v4536 = vpop.permute.xlu0 %4535
        %v4537 = vsel %vm918, %v4530, %v4532
        %v4538 = vsel %vm918, %v4534, %v4536
        %4541 = vst [vmem:[#allocation4 + $0x3a0] sm:$0xff] %v4537
        %4542 = vst [vmem:[#allocation4 + $0x3b0] sm:$0xff] %v4538
        %v4543 = vld [vmem:[#allocation3 + $0x8] sm:$0xff]
        %v4544 = vld [vmem:[#allocation3 + $0x10] sm:$0xff]
        %v4545 = vld [vmem:[#allocation3 + $0x40] sm:$0xff]
        %v4546 = vld [vmem:[#allocation3 + $0x48] sm:$0xff]
        %4551 = vrot.lane.b32.xlu0 %v4543, 114
        %v4552 = vpop.permute.xlu0 %4551
        %4553 = vrot.lane.b32.xlu0 %v4544, 114
        %v4554 = vpop.permute.xlu0 %4553
        %4555 = vrot.lane.b32.xlu0 %v4545, 114
        %v4556 = vpop.permute.xlu0 %4555
        %4557 = vrot.lane.b32.xlu0 %v4546, 114
        %v4558 = vpop.permute.xlu0 %4557
        %v4559 = vsel %vm941, %v4552, %v4554
        %v4560 = vsel %vm941, %v4556, %v4558
        %4563 = vst [vmem:[#allocation4 + $0x3c0] sm:$0xff] %v4559
        %4564 = vst [vmem:[#allocation4 + $0x3d0] sm:$0xff] %v4560
        %v4565 = vld [vmem:[#allocation3 + $0x8] sm:$0xff]
        %v4566 = vld [vmem:[#allocation3 + $0x10] sm:$0xff]
        %v4567 = vld [vmem:[#allocation3 + $0x40] sm:$0xff]
        %v4568 = vld [vmem:[#allocation3 + $0x48] sm:$0xff]
        %4573 = vrot.lane.b32.xlu0 %v4565, 113
        %v4574 = vpop.permute.xlu0 %4573
        %4575 = vrot.lane.b32.xlu0 %v4566, 113
        %v4576 = vpop.permute.xlu0 %4575
        %4577 = vrot.lane.b32.xlu0 %v4567, 113
        %v4578 = vpop.permute.xlu0 %4577
        %4579 = vrot.lane.b32.xlu0 %v4568, 113
        %v4580 = vpop.permute.xlu0 %4579
        %v4581 = vsel %vm964, %v4574, %v4576
        %v4582 = vsel %vm964, %v4578, %v4580
        %4585 = vst [vmem:[#allocation4 + $0x3e0] sm:$0xff] %v4581
        %4586 = vst [vmem:[#allocation4 + $0x3f0] sm:$0xff] %v4582
        %v4587 = vld [vmem:[#allocation3 + $0x8] sm:$0xff]
        %v4588 = vld [vmem:[#allocation3 + $0x10] sm:$0xff]
        %v4589 = vld [vmem:[#allocation3 + $0x40] sm:$0xff]
        %v4590 = vld [vmem:[#allocation3 + $0x48] sm:$0xff]
        %4595 = vrot.lane.b32.xlu0 %v4587, 112
        %v4596 = vpop.permute.xlu0 %4595
        %4597 = vrot.lane.b32.xlu0 %v4588, 112
        %v4598 = vpop.permute.xlu0 %4597
        %4599 = vrot.lane.b32.xlu0 %v4589, 112
        %v4600 = vpop.permute.xlu0 %4599
        %4601 = vrot.lane.b32.xlu0 %v4590, 112
        %v4602 = vpop.permute.xlu0 %4601
        %v4603 = vsel %vm987, %v4596, %v4598
        %v4604 = vsel %vm987, %v4600, %v4602
        %4607 = vst [vmem:[#allocation4 + $0x400] sm:$0xff] %v4603
        %4608 = vst [vmem:[#allocation4 + $0x410] sm:$0xff] %v4604
        %v4609 = vld [vmem:[#allocation3 + $0x18] sm:$0xff]
        %v4610 = vld [vmem:[#allocation3 + $0x20] sm:$0xff]
        %v4611 = vld [vmem:[#allocation3 + $0x50] sm:$0xff]
        %v4612 = vld [vmem:[#allocation3 + $0x58] sm:$0xff]
        %4617 = vrot.lane.b32.xlu0 %v4609, 16
        %v4618 = vpop.permute.xlu0 %4617
        %4619 = vrot.lane.b32.xlu0 %v4610, 16
        %v4620 = vpop.permute.xlu0 %4619
        %4621 = vrot.lane.b32.xlu0 %v4611, 16
        %v4622 = vpop.permute.xlu0 %4621
        %4623 = vrot.lane.b32.xlu0 %v4612, 16
        %v4624 = vpop.permute.xlu0 %4623
        %v4625 = vsel %vm270, %v4618, %v4620
        %v4626 = vsel %vm270, %v4622, %v4624
        %4629 = vst [vmem:[#allocation4 + $0x8] sm:$0xff] %v4625
        %4630 = vst [vmem:[#allocation4 + $0x18] sm:$0xff] %v4626
        %v4631 = vld [vmem:[#allocation3 + $0x18] sm:$0xff]
        %v4632 = vld [vmem:[#allocation3 + $0x20] sm:$0xff]
        %v4633 = vld [vmem:[#allocation3 + $0x50] sm:$0xff]
        %v4634 = vld [vmem:[#allocation3 + $0x58] sm:$0xff]
        %4639 = vrot.lane.b32.xlu0 %v4631, 15
        %v4640 = vpop.permute.xlu0 %4639
        %4641 = vrot.lane.b32.xlu0 %v4632, 15
        %v4642 = vpop.permute.xlu0 %4641
        %4643 = vrot.lane.b32.xlu0 %v4633, 15
        %v4644 = vpop.permute.xlu0 %4643
        %4645 = vrot.lane.b32.xlu0 %v4634, 15
        %v4646 = vpop.permute.xlu0 %4645
        %v4647 = vsel %vm293, %v4640, %v4642
        %v4648 = vsel %vm293, %v4644, %v4646
        %4651 = vst [vmem:[#allocation4 + $0x28] sm:$0xff] %v4647
        %4652 = vst [vmem:[#allocation4 + $0x38] sm:$0xff] %v4648
        %v4653 = vld [vmem:[#allocation3 + $0x18] sm:$0xff]
        %v4654 = vld [vmem:[#allocation3 + $0x20] sm:$0xff]
        %v4655 = vld [vmem:[#allocation3 + $0x50] sm:$0xff]
        %v4656 = vld [vmem:[#allocation3 + $0x58] sm:$0xff]
        %4661 = vrot.lane.b32.xlu0 %v4653, 14
        %v4662 = vpop.permute.xlu0 %4661
        %4663 = vrot.lane.b32.xlu0 %v4654, 14
        %v4664 = vpop.permute.xlu0 %4663
        %4665 = vrot.lane.b32.xlu0 %v4655, 14
        %v4666 = vpop.permute.xlu0 %4665
        %4667 = vrot.lane.b32.xlu0 %v4656, 14
        %v4668 = vpop.permute.xlu0 %4667
        %v4669 = vsel %vm316, %v4662, %v4664
        %v4670 = vsel %vm316, %v4666, %v4668
        %4673 = vst [vmem:[#allocation4 + $0x48] sm:$0xff] %v4669
        %4674 = vst [vmem:[#allocation4 + $0x58] sm:$0xff] %v4670
        %v4675 = vld [vmem:[#allocation3 + $0x18] sm:$0xff]
        %v4676 = vld [vmem:[#allocation3 + $0x20] sm:$0xff]
        %v4677 = vld [vmem:[#allocation3 + $0x50] sm:$0xff]
        %v4678 = vld [vmem:[#allocation3 + $0x58] sm:$0xff]
        %4683 = vrot.lane.b32.xlu0 %v4675, 13
        %v4684 = vpop.permute.xlu0 %4683
        %4685 = vrot.lane.b32.xlu0 %v4676, 13
        %v4686 = vpop.permute.xlu0 %4685
        %4687 = vrot.lane.b32.xlu0 %v4677, 13
        %v4688 = vpop.permute.xlu0 %4687
        %4689 = vrot.lane.b32.xlu0 %v4678, 13
        %v4690 = vpop.permute.xlu0 %4689
        %v4691 = vsel %vm339, %v4684, %v4686
        %v4692 = vsel %vm339, %v4688, %v4690
        %4695 = vst [vmem:[#allocation4 + $0x68] sm:$0xff] %v4691
        %4696 = vst [vmem:[#allocation4 + $0x78] sm:$0xff] %v4692
        %v4697 = vld [vmem:[#allocation3 + $0x18] sm:$0xff]
        %v4698 = vld [vmem:[#allocation3 + $0x20] sm:$0xff]
        %v4699 = vld [vmem:[#allocation3 + $0x50] sm:$0xff]
        %v4700 = vld [vmem:[#allocation3 + $0x58] sm:$0xff]
        %4705 = vrot.lane.b32.xlu0 %v4697, 12
        %v4706 = vpop.permute.xlu0 %4705
        %4707 = vrot.lane.b32.xlu0 %v4698, 12
        %v4708 = vpop.permute.xlu0 %4707
        %4709 = vrot.lane.b32.xlu0 %v4699, 12
        %v4710 = vpop.permute.xlu0 %4709
        %4711 = vrot.lane.b32.xlu0 %v4700, 12
        %v4712 = vpop.permute.xlu0 %4711
        %v4713 = vsel %vm362, %v4706, %v4708
        %v4714 = vsel %vm362, %v4710, %v4712
        %4717 = vst [vmem:[#allocation4 + $0x88] sm:$0xff] %v4713
        %4718 = vst [vmem:[#allocation4 + $0x98] sm:$0xff] %v4714
        %v4719 = vld [vmem:[#allocation3 + $0x18] sm:$0xff]
        %v4720 = vld [vmem:[#allocation3 + $0x20] sm:$0xff]
        %v4721 = vld [vmem:[#allocation3 + $0x50] sm:$0xff]
        %v4722 = vld [vmem:[#allocation3 + $0x58] sm:$0xff]
        %4727 = vrot.lane.b32.xlu0 %v4719, 11
        %v4728 = vpop.permute.xlu0 %4727
        %4729 = vrot.lane.b32.xlu0 %v4720, 11
        %v4730 = vpop.permute.xlu0 %4729
        %4731 = vrot.lane.b32.xlu0 %v4721, 11
        %v4732 = vpop.permute.xlu0 %4731
        %4733 = vrot.lane.b32.xlu0 %v4722, 11
        %v4734 = vpop.permute.xlu0 %4733
        %v4735 = vsel %vm385, %v4728, %v4730
        %v4736 = vsel %vm385, %v4732, %v4734
        %4739 = vst [vmem:[#allocation4 + $0xa8] sm:$0xff] %v4735
        %4740 = vst [vmem:[#allocation4 + $0xb8] sm:$0xff] %v4736
        %v4741 = vld [vmem:[#allocation3 + $0x18] sm:$0xff]
        %v4742 = vld [vmem:[#allocation3 + $0x20] sm:$0xff]
        %v4743 = vld [vmem:[#allocation3 + $0x50] sm:$0xff]
        %v4744 = vld [vmem:[#allocation3 + $0x58] sm:$0xff]
        %4749 = vrot.lane.b32.xlu0 %v4741, 10
        %v4750 = vpop.permute.xlu0 %4749
        %4751 = vrot.lane.b32.xlu0 %v4742, 10
        %v4752 = vpop.permute.xlu0 %4751
        %4753 = vrot.lane.b32.xlu0 %v4743, 10
        %v4754 = vpop.permute.xlu0 %4753
        %4755 = vrot.lane.b32.xlu0 %v4744, 10
        %v4756 = vpop.permute.xlu0 %4755
        %v4757 = vsel %vm408, %v4750, %v4752
        %v4758 = vsel %vm408, %v4754, %v4756
        %4761 = vst [vmem:[#allocation4 + $0xc8] sm:$0xff] %v4757
        %4762 = vst [vmem:[#allocation4 + $0xd8] sm:$0xff] %v4758
        %v4763 = vld [vmem:[#allocation3 + $0x18] sm:$0xff]
        %v4764 = vld [vmem:[#allocation3 + $0x20] sm:$0xff]
        %v4765 = vld [vmem:[#allocation3 + $0x50] sm:$0xff]
        %v4766 = vld [vmem:[#allocation3 + $0x58] sm:$0xff]
        %4771 = vrot.lane.b32.xlu0 %v4763, 9
        %v4772 = vpop.permute.xlu0 %4771
        %4773 = vrot.lane.b32.xlu0 %v4764, 9
        %v4774 = vpop.permute.xlu0 %4773
        %4775 = vrot.lane.b32.xlu0 %v4765, 9
        %v4776 = vpop.permute.xlu0 %4775
        %4777 = vrot.lane.b32.xlu0 %v4766, 9
        %v4778 = vpop.permute.xlu0 %4777
        %v4779 = vsel %vm431, %v4772, %v4774
        %v4780 = vsel %vm431, %v4776, %v4778
        %4783 = vst [vmem:[#allocation4 + $0xe8] sm:$0xff] %v4779
        %4784 = vst [vmem:[#allocation4 + $0xf8] sm:$0xff] %v4780
        %v4785 = vld [vmem:[#allocation3 + $0x18] sm:$0xff]
        %v4786 = vld [vmem:[#allocation3 + $0x20] sm:$0xff]
        %v4787 = vld [vmem:[#allocation3 + $0x50] sm:$0xff]
        %v4788 = vld [vmem:[#allocation3 + $0x58] sm:$0xff]
        %4793 = vrot.lane.b32.xlu0 %v4785, 8
        %v4794 = vpop.permute.xlu0 %4793
        %4795 = vrot.lane.b32.xlu0 %v4786, 8
        %v4796 = vpop.permute.xlu0 %4795
        %4797 = vrot.lane.b32.xlu0 %v4787, 8
        %v4798 = vpop.permute.xlu0 %4797
        %4799 = vrot.lane.b32.xlu0 %v4788, 8
        %v4800 = vpop.permute.xlu0 %4799
        %v4801 = vsel %vm454, %v4794, %v4796
        %v4802 = vsel %vm454, %v4798, %v4800
        %4805 = vst [vmem:[#allocation4 + $0x108] sm:$0xff] %v4801
        %4806 = vst [vmem:[#allocation4 + $0x118] sm:$0xff] %v4802
        %v4807 = vld [vmem:[#allocation3 + $0x18] sm:$0xff]
        %v4808 = vld [vmem:[#allocation3 + $0x20] sm:$0xff]
        %v4809 = vld [vmem:[#allocation3 + $0x50] sm:$0xff]
        %v4810 = vld [vmem:[#allocation3 + $0x58] sm:$0xff]
        %4815 = vrot.lane.b32.xlu0 %v4807, 7
        %v4816 = vpop.permute.xlu0 %4815
        %4817 = vrot.lane.b32.xlu0 %v4808, 7
        %v4818 = vpop.permute.xlu0 %4817
        %4819 = vrot.lane.b32.xlu0 %v4809, 7
        %v4820 = vpop.permute.xlu0 %4819
        %4821 = vrot.lane.b32.xlu0 %v4810, 7
        %v4822 = vpop.permute.xlu0 %4821
        %v4823 = vsel %vm477, %v4816, %v4818
        %v4824 = vsel %vm477, %v4820, %v4822
        %4827 = vst [vmem:[#allocation4 + $0x128] sm:$0xff] %v4823
        %4828 = vst [vmem:[#allocation4 + $0x138] sm:$0xff] %v4824
        %v4829 = vld [vmem:[#allocation3 + $0x18] sm:$0xff]
        %v4830 = vld [vmem:[#allocation3 + $0x20] sm:$0xff]
        %v4831 = vld [vmem:[#allocation3 + $0x50] sm:$0xff]
        %v4832 = vld [vmem:[#allocation3 + $0x58] sm:$0xff]
        %4837 = vrot.lane.b32.xlu0 %v4829, 6
        %v4838 = vpop.permute.xlu0 %4837
        %4839 = vrot.lane.b32.xlu0 %v4830, 6
        %v4840 = vpop.permute.xlu0 %4839
        %4841 = vrot.lane.b32.xlu0 %v4831, 6
        %v4842 = vpop.permute.xlu0 %4841
        %4843 = vrot.lane.b32.xlu0 %v4832, 6
        %v4844 = vpop.permute.xlu0 %4843
        %v4845 = vsel %vm500, %v4838, %v4840
        %v4846 = vsel %vm500, %v4842, %v4844
        %4849 = vst [vmem:[#allocation4 + $0x148] sm:$0xff] %v4845
        %4850 = vst [vmem:[#allocation4 + $0x158] sm:$0xff] %v4846
        %v4851 = vld [vmem:[#allocation3 + $0x18] sm:$0xff]
        %v4852 = vld [vmem:[#allocation3 + $0x20] sm:$0xff]
        %v4853 = vld [vmem:[#allocation3 + $0x50] sm:$0xff]
        %v4854 = vld [vmem:[#allocation3 + $0x58] sm:$0xff]
        %4859 = vrot.lane.b32.xlu0 %v4851, 5
        %v4860 = vpop.permute.xlu0 %4859
        %4861 = vrot.lane.b32.xlu0 %v4852, 5
        %v4862 = vpop.permute.xlu0 %4861
        %4863 = vrot.lane.b32.xlu0 %v4853, 5
        %v4864 = vpop.permute.xlu0 %4863
        %4865 = vrot.lane.b32.xlu0 %v4854, 5
        %v4866 = vpop.permute.xlu0 %4865
        %v4867 = vsel %vm523, %v4860, %v4862
        %v4868 = vsel %vm523, %v4864, %v4866
        %4871 = vst [vmem:[#allocation4 + $0x168] sm:$0xff] %v4867
        %4872 = vst [vmem:[#allocation4 + $0x178] sm:$0xff] %v4868
        %v4873 = vld [vmem:[#allocation3 + $0x18] sm:$0xff]
        %v4874 = vld [vmem:[#allocation3 + $0x20] sm:$0xff]
        %v4875 = vld [vmem:[#allocation3 + $0x50] sm:$0xff]
        %v4876 = vld [vmem:[#allocation3 + $0x58] sm:$0xff]
        %4881 = vrot.lane.b32.xlu0 %v4873, 4
        %v4882 = vpop.permute.xlu0 %4881
        %4883 = vrot.lane.b32.xlu0 %v4874, 4
        %v4884 = vpop.permute.xlu0 %4883
        %4885 = vrot.lane.b32.xlu0 %v4875, 4
        %v4886 = vpop.permute.xlu0 %4885
        %4887 = vrot.lane.b32.xlu0 %v4876, 4
        %v4888 = vpop.permute.xlu0 %4887
        %v4889 = vsel %vm546, %v4882, %v4884
        %v4890 = vsel %vm546, %v4886, %v4888
        %4893 = vst [vmem:[#allocation4 + $0x188] sm:$0xff] %v4889
        %4894 = vst [vmem:[#allocation4 + $0x198] sm:$0xff] %v4890
        %v4895 = vld [vmem:[#allocation3 + $0x18] sm:$0xff]
        %v4896 = vld [vmem:[#allocation3 + $0x20] sm:$0xff]
        %v4897 = vld [vmem:[#allocation3 + $0x50] sm:$0xff]
        %v4898 = vld [vmem:[#allocation3 + $0x58] sm:$0xff]
        %4903 = vrot.lane.b32.xlu0 %v4895, 3
        %v4904 = vpop.permute.xlu0 %4903
        %4905 = vrot.lane.b32.xlu0 %v4896, 3
        %v4906 = vpop.permute.xlu0 %4905
        %4907 = vrot.lane.b32.xlu0 %v4897, 3
        %v4908 = vpop.permute.xlu0 %4907
        %4909 = vrot.lane.b32.xlu0 %v4898, 3
        %v4910 = vpop.permute.xlu0 %4909
        %v4911 = vsel %vm569, %v4904, %v4906
        %v4912 = vsel %vm569, %v4908, %v4910
        %4915 = vst [vmem:[#allocation4 + $0x1a8] sm:$0xff] %v4911
        %4916 = vst [vmem:[#allocation4 + $0x1b8] sm:$0xff] %v4912
        %v4917 = vld [vmem:[#allocation3 + $0x18] sm:$0xff]
        %v4918 = vld [vmem:[#allocation3 + $0x20] sm:$0xff]
        %v4919 = vld [vmem:[#allocation3 + $0x50] sm:$0xff]
        %v4920 = vld [vmem:[#allocation3 + $0x58] sm:$0xff]
        %4925 = vrot.lane.b32.xlu0 %v4917, 2
        %v4926 = vpop.permute.xlu0 %4925
        %4927 = vrot.lane.b32.xlu0 %v4918, 2
        %v4928 = vpop.permute.xlu0 %4927
        %4929 = vrot.lane.b32.xlu0 %v4919, 2
        %v4930 = vpop.permute.xlu0 %4929
        %4931 = vrot.lane.b32.xlu0 %v4920, 2
        %v4932 = vpop.permute.xlu0 %4931
        %v4933 = vsel %vm592, %v4926, %v4928
        %v4934 = vsel %vm592, %v4930, %v4932
        %4937 = vst [vmem:[#allocation4 + $0x1c8] sm:$0xff] %v4933
        %4938 = vst [vmem:[#allocation4 + $0x1d8] sm:$0xff] %v4934
        %v4939 = vld [vmem:[#allocation3 + $0x18] sm:$0xff]
        %v4940 = vld [vmem:[#allocation3 + $0x20] sm:$0xff]
        %v4941 = vld [vmem:[#allocation3 + $0x50] sm:$0xff]
        %v4942 = vld [vmem:[#allocation3 + $0x58] sm:$0xff]
        %4947 = vrot.lane.b32.xlu0 %v4939, 1
        %v4948 = vpop.permute.xlu0 %4947
        %4949 = vrot.lane.b32.xlu0 %v4940, 1
        %v4950 = vpop.permute.xlu0 %4949
        %4951 = vrot.lane.b32.xlu0 %v4941, 1
        %v4952 = vpop.permute.xlu0 %4951
        %4953 = vrot.lane.b32.xlu0 %v4942, 1
        %v4954 = vpop.permute.xlu0 %4953
        %v4955 = vsel %vm615, %v4948, %v4950
        %v4956 = vsel %vm615, %v4952, %v4954
        %4959 = vst [vmem:[#allocation4 + $0x1e8] sm:$0xff] %v4955
        %4960 = vst [vmem:[#allocation4 + $0x1f8] sm:$0xff] %v4956
        %v4961 = vld [vmem:[#allocation3 + $0x20] sm:$0xff]
        %v4962 = vld [vmem:[#allocation3 + $0x58] sm:$0xff]
        %4963 = vst [vmem:[#allocation4 + $0x208] sm:$0xff] %v4961
        %4964 = vst [vmem:[#allocation4 + $0x218] sm:$0xff] %v4962
        %v4965 = vld [vmem:[#allocation3 + $0x20] sm:$0xff]
        %v4966 = vld [vmem:[#allocation3 + $0x28] sm:$0xff]
        %v4967 = vld [vmem:[#allocation3 + $0x58] sm:$0xff]
        %v4968 = vld [vmem:[#allocation3 + $0x60] sm:$0xff]
        %4973 = vrot.lane.b32.xlu0 %v4965, 127
        %v4974 = vpop.permute.xlu0 %4973
        %4975 = vrot.lane.b32.xlu0 %v4966, 127
        %v4976 = vpop.permute.xlu0 %4975
        %4977 = vrot.lane.b32.xlu0 %v4967, 127
        %v4978 = vpop.permute.xlu0 %4977
        %4979 = vrot.lane.b32.xlu0 %v4968, 127
        %v4980 = vpop.permute.xlu0 %4979
        %v4981 = vsel %vm642, %v4974, %v4976
        %v4982 = vsel %vm642, %v4978, %v4980
        %4985 = vst [vmem:[#allocation4 + $0x228] sm:$0xff] %v4981
        %4986 = vst [vmem:[#allocation4 + $0x238] sm:$0xff] %v4982
        %v4987 = vld [vmem:[#allocation3 + $0x20] sm:$0xff]
        %v4988 = vld [vmem:[#allocation3 + $0x28] sm:$0xff]
        %v4989 = vld [vmem:[#allocation3 + $0x58] sm:$0xff]
        %v4990 = vld [vmem:[#allocation3 + $0x60] sm:$0xff]
        %4995 = vrot.lane.b32.xlu0 %v4987, 126
        %v4996 = vpop.permute.xlu0 %4995
        %4997 = vrot.lane.b32.xlu0 %v4988, 126
        %v4998 = vpop.permute.xlu0 %4997
        %4999 = vrot.lane.b32.xlu0 %v4989, 126
        %v5000 = vpop.permute.xlu0 %4999
        %5001 = vrot.lane.b32.xlu0 %v4990, 126
        %v5002 = vpop.permute.xlu0 %5001
        %v5003 = vsel %vm665, %v4996, %v4998
        %v5004 = vsel %vm665, %v5000, %v5002
        %5007 = vst [vmem:[#allocation4 + $0x248] sm:$0xff] %v5003
        %5008 = vst [vmem:[#allocation4 + $0x258] sm:$0xff] %v5004
        %v5009 = vld [vmem:[#allocation3 + $0x20] sm:$0xff]
        %v5010 = vld [vmem:[#allocation3 + $0x28] sm:$0xff]
        %v5011 = vld [vmem:[#allocation3 + $0x58] sm:$0xff]
        %v5012 = vld [vmem:[#allocation3 + $0x60] sm:$0xff]
        %5017 = vrot.lane.b32.xlu0 %v5009, 125
        %v5018 = vpop.permute.xlu0 %5017
        %5019 = vrot.lane.b32.xlu0 %v5010, 125
        %v5020 = vpop.permute.xlu0 %5019
        %5021 = vrot.lane.b32.xlu0 %v5011, 125
        %v5022 = vpop.permute.xlu0 %5021
        %5023 = vrot.lane.b32.xlu0 %v5012, 125
        %v5024 = vpop.permute.xlu0 %5023
        %v5025 = vsel %vm688, %v5018, %v5020
        %v5026 = vsel %vm688, %v5022, %v5024
        %5029 = vst [vmem:[#allocation4 + $0x268] sm:$0xff] %v5025
        %5030 = vst [vmem:[#allocation4 + $0x278] sm:$0xff] %v5026
        %v5031 = vld [vmem:[#allocation3 + $0x20] sm:$0xff]
        %v5032 = vld [vmem:[#allocation3 + $0x28] sm:$0xff]
        %v5033 = vld [vmem:[#allocation3 + $0x58] sm:$0xff]
        %v5034 = vld [vmem:[#allocation3 + $0x60] sm:$0xff]
        %5039 = vrot.lane.b32.xlu0 %v5031, 124
        %v5040 = vpop.permute.xlu0 %5039
        %5041 = vrot.lane.b32.xlu0 %v5032, 124
        %v5042 = vpop.permute.xlu0 %5041
        %5043 = vrot.lane.b32.xlu0 %v5033, 124
        %v5044 = vpop.permute.xlu0 %5043
        %5045 = vrot.lane.b32.xlu0 %v5034, 124
        %v5046 = vpop.permute.xlu0 %5045
        %v5047 = vsel %vm711, %v5040, %v5042
        %v5048 = vsel %vm711, %v5044, %v5046
        %5051 = vst [vmem:[#allocation4 + $0x288] sm:$0xff] %v5047
        %5052 = vst [vmem:[#allocation4 + $0x298] sm:$0xff] %v5048
        %v5053 = vld [vmem:[#allocation3 + $0x20] sm:$0xff]
        %v5054 = vld [vmem:[#allocation3 + $0x28] sm:$0xff]
        %v5055 = vld [vmem:[#allocation3 + $0x58] sm:$0xff]
        %v5056 = vld [vmem:[#allocation3 + $0x60] sm:$0xff]
        %5061 = vrot.lane.b32.xlu0 %v5053, 123
        %v5062 = vpop.permute.xlu0 %5061
        %5063 = vrot.lane.b32.xlu0 %v5054, 123
        %v5064 = vpop.permute.xlu0 %5063
        %5065 = vrot.lane.b32.xlu0 %v5055, 123
        %v5066 = vpop.permute.xlu0 %5065
        %5067 = vrot.lane.b32.xlu0 %v5056, 123
        %v5068 = vpop.permute.xlu0 %5067
        %v5069 = vsel %vm734, %v5062, %v5064
        %v5070 = vsel %vm734, %v5066, %v5068
        %5073 = vst [vmem:[#allocation4 + $0x2a8] sm:$0xff] %v5069
        %5074 = vst [vmem:[#allocation4 + $0x2b8] sm:$0xff] %v5070
        %v5075 = vld [vmem:[#allocation3 + $0x20] sm:$0xff]
        %v5076 = vld [vmem:[#allocation3 + $0x28] sm:$0xff]
        %v5077 = vld [vmem:[#allocation3 + $0x58] sm:$0xff]
        %v5078 = vld [vmem:[#allocation3 + $0x60] sm:$0xff]
        %5083 = vrot.lane.b32.xlu0 %v5075, 122
        %v5084 = vpop.permute.xlu0 %5083
        %5085 = vrot.lane.b32.xlu0 %v5076, 122
        %v5086 = vpop.permute.xlu0 %5085
        %5087 = vrot.lane.b32.xlu0 %v5077, 122
        %v5088 = vpop.permute.xlu0 %5087
        %5089 = vrot.lane.b32.xlu0 %v5078, 122
        %v5090 = vpop.permute.xlu0 %5089
        %v5091 = vsel %vm757, %v5084, %v5086
        %v5092 = vsel %vm757, %v5088, %v5090
        %5095 = vst [vmem:[#allocation4 + $0x2c8] sm:$0xff] %v5091
        %5096 = vst [vmem:[#allocation4 + $0x2d8] sm:$0xff] %v5092
        %v5097 = vld [vmem:[#allocation3 + $0x20] sm:$0xff]
        %v5098 = vld [vmem:[#allocation3 + $0x28] sm:$0xff]
        %v5099 = vld [vmem:[#allocation3 + $0x58] sm:$0xff]
        %v5100 = vld [vmem:[#allocation3 + $0x60] sm:$0xff]
        %5105 = vrot.lane.b32.xlu0 %v5097, 121
        %v5106 = vpop.permute.xlu0 %5105
        %5107 = vrot.lane.b32.xlu0 %v5098, 121
        %v5108 = vpop.permute.xlu0 %5107
        %5109 = vrot.lane.b32.xlu0 %v5099, 121
        %v5110 = vpop.permute.xlu0 %5109
        %5111 = vrot.lane.b32.xlu0 %v5100, 121
        %v5112 = vpop.permute.xlu0 %5111
        %v5113 = vsel %vm780, %v5106, %v5108
        %v5114 = vsel %vm780, %v5110, %v5112
        %5117 = vst [vmem:[#allocation4 + $0x2e8] sm:$0xff] %v5113
        %5118 = vst [vmem:[#allocation4 + $0x2f8] sm:$0xff] %v5114
        %v5119 = vld [vmem:[#allocation3 + $0x20] sm:$0xff]
        %v5120 = vld [vmem:[#allocation3 + $0x28] sm:$0xff]
        %v5121 = vld [vmem:[#allocation3 + $0x58] sm:$0xff]
        %v5122 = vld [vmem:[#allocation3 + $0x60] sm:$0xff]
        %5127 = vrot.lane.b32.xlu0 %v5119, 120
        %v5128 = vpop.permute.xlu0 %5127
        %5129 = vrot.lane.b32.xlu0 %v5120, 120
        %v5130 = vpop.permute.xlu0 %5129
        %5131 = vrot.lane.b32.xlu0 %v5121, 120
        %v5132 = vpop.permute.xlu0 %5131
        %5133 = vrot.lane.b32.xlu0 %v5122, 120
        %v5134 = vpop.permute.xlu0 %5133
        %v5135 = vsel %vm803, %v5128, %v5130
        %v5136 = vsel %vm803, %v5132, %v5134
        %5139 = vst [vmem:[#allocation4 + $0x308] sm:$0xff] %v5135
        %5140 = vst [vmem:[#allocation4 + $0x318] sm:$0xff] %v5136
        %v5141 = vld [vmem:[#allocation3 + $0x20] sm:$0xff]
        %v5142 = vld [vmem:[#allocation3 + $0x28] sm:$0xff]
        %v5143 = vld [vmem:[#allocation3 + $0x58] sm:$0xff]
        %v5144 = vld [vmem:[#allocation3 + $0x60] sm:$0xff]
        %5149 = vrot.lane.b32.xlu0 %v5141, 119
        %v5150 = vpop.permute.xlu0 %5149
        %5151 = vrot.lane.b32.xlu0 %v5142, 119
        %v5152 = vpop.permute.xlu0 %5151
        %5153 = vrot.lane.b32.xlu0 %v5143, 119
        %v5154 = vpop.permute.xlu0 %5153
        %5155 = vrot.lane.b32.xlu0 %v5144, 119
        %v5156 = vpop.permute.xlu0 %5155
        %v5157 = vsel %vm826, %v5150, %v5152
        %v5158 = vsel %vm826, %v5154, %v5156
        %5161 = vst [vmem:[#allocation4 + $0x328] sm:$0xff] %v5157
        %5162 = vst [vmem:[#allocation4 + $0x338] sm:$0xff] %v5158
        %v5163 = vld [vmem:[#allocation3 + $0x20] sm:$0xff]
        %v5164 = vld [vmem:[#allocation3 + $0x28] sm:$0xff]
        %v5165 = vld [vmem:[#allocation3 + $0x58] sm:$0xff]
        %v5166 = vld [vmem:[#allocation3 + $0x60] sm:$0xff]
        %5171 = vrot.lane.b32.xlu0 %v5163, 118
        %v5172 = vpop.permute.xlu0 %5171
        %5173 = vrot.lane.b32.xlu0 %v5164, 118
        %v5174 = vpop.permute.xlu0 %5173
        %5175 = vrot.lane.b32.xlu0 %v5165, 118
        %v5176 = vpop.permute.xlu0 %5175
        %5177 = vrot.lane.b32.xlu0 %v5166, 118
        %v5178 = vpop.permute.xlu0 %5177
        %v5179 = vsel %vm849, %v5172, %v5174
        %v5180 = vsel %vm849, %v5176, %v5178
        %5183 = vst [vmem:[#allocation4 + $0x348] sm:$0xff] %v5179
        %5184 = vst [vmem:[#allocation4 + $0x358] sm:$0xff] %v5180
        %v5185 = vld [vmem:[#allocation3 + $0x20] sm:$0xff]
        %v5186 = vld [vmem:[#allocation3 + $0x28] sm:$0xff]
        %v5187 = vld [vmem:[#allocation3 + $0x58] sm:$0xff]
        %v5188 = vld [vmem:[#allocation3 + $0x60] sm:$0xff]
        %5193 = vrot.lane.b32.xlu0 %v5185, 117
        %v5194 = vpop.permute.xlu0 %5193
        %5195 = vrot.lane.b32.xlu0 %v5186, 117
        %v5196 = vpop.permute.xlu0 %5195
        %5197 = vrot.lane.b32.xlu0 %v5187, 117
        %v5198 = vpop.permute.xlu0 %5197
        %5199 = vrot.lane.b32.xlu0 %v5188, 117
        %v5200 = vpop.permute.xlu0 %5199
        %v5201 = vsel %vm872, %v5194, %v5196
        %v5202 = vsel %vm872, %v5198, %v5200
        %5205 = vst [vmem:[#allocation4 + $0x368] sm:$0xff] %v5201
        %5206 = vst [vmem:[#allocation4 + $0x378] sm:$0xff] %v5202
        %v5207 = vld [vmem:[#allocation3 + $0x20] sm:$0xff]
        %v5208 = vld [vmem:[#allocation3 + $0x28] sm:$0xff]
        %v5209 = vld [vmem:[#allocation3 + $0x58] sm:$0xff]
        %v5210 = vld [vmem:[#allocation3 + $0x60] sm:$0xff]
        %5215 = vrot.lane.b32.xlu0 %v5207, 116
        %v5216 = vpop.permute.xlu0 %5215
        %5217 = vrot.lane.b32.xlu0 %v5208, 116
        %v5218 = vpop.permute.xlu0 %5217
        %5219 = vrot.lane.b32.xlu0 %v5209, 116
        %v5220 = vpop.permute.xlu0 %5219
        %5221 = vrot.lane.b32.xlu0 %v5210, 116
        %v5222 = vpop.permute.xlu0 %5221
        %v5223 = vsel %vm895, %v5216, %v5218
        %v5224 = vsel %vm895, %v5220, %v5222
        %5227 = vst [vmem:[#allocation4 + $0x388] sm:$0xff] %v5223
        %5228 = vst [vmem:[#allocation4 + $0x398] sm:$0xff] %v5224
        %v5229 = vld [vmem:[#allocation3 + $0x20] sm:$0xff]
        %v5230 = vld [vmem:[#allocation3 + $0x28] sm:$0xff]
        %v5231 = vld [vmem:[#allocation3 + $0x58] sm:$0xff]
        %v5232 = vld [vmem:[#allocation3 + $0x60] sm:$0xff]
        %5237 = vrot.lane.b32.xlu0 %v5229, 115
        %v5238 = vpop.permute.xlu0 %5237
        %5239 = vrot.lane.b32.xlu0 %v5230, 115
        %v5240 = vpop.permute.xlu0 %5239
        %5241 = vrot.lane.b32.xlu0 %v5231, 115
        %v5242 = vpop.permute.xlu0 %5241
        %5243 = vrot.lane.b32.xlu0 %v5232, 115
        %v5244 = vpop.permute.xlu0 %5243
        %v5245 = vsel %vm918, %v5238, %v5240
        %v5246 = vsel %vm918, %v5242, %v5244
        %5249 = vst [vmem:[#allocation4 + $0x3a8] sm:$0xff] %v5245
        %5250 = vst [vmem:[#allocation4 + $0x3b8] sm:$0xff] %v5246
        %v5251 = vld [vmem:[#allocation3 + $0x20] sm:$0xff]
        %v5252 = vld [vmem:[#allocation3 + $0x28] sm:$0xff]
        %v5253 = vld [vmem:[#allocation3 + $0x58] sm:$0xff]
        %v5254 = vld [vmem:[#allocation3 + $0x60] sm:$0xff]
        %5259 = vrot.lane.b32.xlu0 %v5251, 114
        %v5260 = vpop.permute.xlu0 %5259
        %5261 = vrot.lane.b32.xlu0 %v5252, 114
        %v5262 = vpop.permute.xlu0 %5261
        %5263 = vrot.lane.b32.xlu0 %v5253, 114
        %v5264 = vpop.permute.xlu0 %5263
        %5265 = vrot.lane.b32.xlu0 %v5254, 114
        %v5266 = vpop.permute.xlu0 %5265
        %v5267 = vsel %vm941, %v5260, %v5262
        %v5268 = vsel %vm941, %v5264, %v5266
        %5271 = vst [vmem:[#allocation4 + $0x3c8] sm:$0xff] %v5267
        %5272 = vst [vmem:[#allocation4 + $0x3d8] sm:$0xff] %v5268
        %v5273 = vld [vmem:[#allocation3 + $0x20] sm:$0xff]
        %v5274 = vld [vmem:[#allocation3 + $0x28] sm:$0xff]
        %v5275 = vld [vmem:[#allocation3 + $0x58] sm:$0xff]
        %v5276 = vld [vmem:[#allocation3 + $0x60] sm:$0xff]
        %5281 = vrot.lane.b32.xlu0 %v5273, 113
        %v5282 = vpop.permute.xlu0 %5281
        %5283 = vrot.lane.b32.xlu0 %v5274, 113
        %v5284 = vpop.permute.xlu0 %5283
        %5285 = vrot.lane.b32.xlu0 %v5275, 113
        %v5286 = vpop.permute.xlu0 %5285
        %5287 = vrot.lane.b32.xlu0 %v5276, 113
        %v5288 = vpop.permute.xlu0 %5287
        %v5289 = vsel %vm964, %v5282, %v5284
        %v5290 = vsel %vm964, %v5286, %v5288
        %5293 = vst [vmem:[#allocation4 + $0x3e8] sm:$0xff] %v5289
        %5294 = vst [vmem:[#allocation4 + $0x3f8] sm:$0xff] %v5290
        %v5295 = vld [vmem:[#allocation3 + $0x20] sm:$0xff]
        %v5296 = vld [vmem:[#allocation3 + $0x28] sm:$0xff]
        %v5297 = vld [vmem:[#allocation3 + $0x58] sm:$0xff]
        %v5298 = vld [vmem:[#allocation3 + $0x60] sm:$0xff]
        %5303 = vrot.lane.b32.xlu0 %v5295, 112
        %v5304 = vpop.permute.xlu0 %5303
        %5305 = vrot.lane.b32.xlu0 %v5296, 112
        %v5306 = vpop.permute.xlu0 %5305
        %5307 = vrot.lane.b32.xlu0 %v5297, 112
        %v5308 = vpop.permute.xlu0 %5307
        %5309 = vrot.lane.b32.xlu0 %v5298, 112
        %v5310 = vpop.permute.xlu0 %5309
        %v5311 = vsel %vm987, %v5304, %v5306
        %v5312 = vsel %vm987, %v5308, %v5310
        %5315 = vst [vmem:[#allocation4 + $0x408] sm:$0xff] %v5311
        %5316 = vst [vmem:[#allocation4 + $0x418] sm:$0xff] %v5312
        %v5317 = vld [vmem:[#allocation10] sm:$0xff]
        %v5318 = vld [vmem:[#allocation10 + $0x8] sm:$0xff]
        %v5319 = vld [vmem:[#allocation10 + $0x10] sm:$0xff]
        %v5320 = vld [vmem:[#allocation10 + $0x18] sm:$0xff]
        %v5321 = vld [vmem:[#allocation10 + $0x20] sm:$0xff]
        %v5322 = vld [vmem:[#allocation10 + $0x28] sm:$0xff]
        %v5323 = vld [vmem:[#allocation10 + $0x30] sm:$0xff]
        %v5324 = vld [vmem:[#allocation10 + $0x38] sm:$0xff]
        %v5325 = vld [vmem:[#allocation10 + $0x40] sm:$0xff]
        %v5326 = vld [vmem:[#allocation10 + $0x48] sm:$0xff]
        %v5327 = vld [vmem:[#allocation4] sm:$0xff]
        %v5328 = vld [vmem:[#allocation4 + $0x8] sm:$0xff]
        %v5329 = vld [vmem:[#allocation4 + $0x10] sm:$0xff]
        %v5330 = vld [vmem:[#allocation4 + $0x18] sm:$0xff]
        %v5331 = vld [vmem:[#allocation4 + $0x20] sm:$0xff]
        %v5332 = vld [vmem:[#allocation4 + $0x28] sm:$0xff]
        %v5333 = vld [vmem:[#allocation4 + $0x30] sm:$0xff]
        %v5334 = vld [vmem:[#allocation4 + $0x38] sm:$0xff]
        %v5335 = vld [vmem:[#allocation4 + $0x40] sm:$0xff]
        %v5336 = vld [vmem:[#allocation4 + $0x48] sm:$0xff]
        %v5337 = vld [vmem:[#allocation4 + $0x50] sm:$0xff]
        %v5338 = vld [vmem:[#allocation4 + $0x58] sm:$0xff]
        %v5339 = vld [vmem:[#allocation4 + $0x60] sm:$0xff]
        %v5340 = vld [vmem:[#allocation4 + $0x68] sm:$0xff]
        %v5341 = vld [vmem:[#allocation4 + $0x70] sm:$0xff]
        %v5342 = vld [vmem:[#allocation4 + $0x78] sm:$0xff]
        %v5343 = vld [vmem:[#allocation4 + $0x80] sm:$0xff]
        %v5344 = vld [vmem:[#allocation4 + $0x88] sm:$0xff]
        %v5345 = vld [vmem:[#allocation4 + $0x90] sm:$0xff]
        %v5346 = vld [vmem:[#allocation4 + $0x98] sm:$0xff]
        %v5347 = vld [vmem:[#allocation4 + $0xa0] sm:$0xff]
        %v5348 = vld [vmem:[#allocation4 + $0xa8] sm:$0xff]
        %v5349 = vld [vmem:[#allocation4 + $0xb0] sm:$0xff]
        %v5350 = vld [vmem:[#allocation4 + $0xb8] sm:$0xff]
        %v5351 = vld [vmem:[#allocation4 + $0xc0] sm:$0xff]
        %v5352 = vld [vmem:[#allocation4 + $0xc8] sm:$0xff]
        %v5353 = vld [vmem:[#allocation4 + $0xd0] sm:$0xff]
        %v5354 = vld [vmem:[#allocation4 + $0xd8] sm:$0xff]
        %v5355 = vld [vmem:[#allocation4 + $0xe0] sm:$0xff]
        %v5356 = vld [vmem:[#allocation4 + $0xe8] sm:$0xff]
        %v5357 = vld [vmem:[#allocation4 + $0xf0] sm:$0xff]
        %v5358 = vld [vmem:[#allocation4 + $0xf8] sm:$0xff]
        %v5359 = vld [vmem:[#allocation4 + $0x100] sm:$0xff]
        %v5360 = vld [vmem:[#allocation4 + $0x108] sm:$0xff]
        %v5361 = vld [vmem:[#allocation4 + $0x110] sm:$0xff]
        %v5362 = vld [vmem:[#allocation4 + $0x118] sm:$0xff]
        %v5363 = vld [vmem:[#allocation4 + $0x120] sm:$0xff]
        %v5364 = vld [vmem:[#allocation4 + $0x128] sm:$0xff]
        %v5365 = vld [vmem:[#allocation4 + $0x130] sm:$0xff]
        %v5366 = vld [vmem:[#allocation4 + $0x138] sm:$0xff]
        %v5367 = vld [vmem:[#allocation4 + $0x140] sm:$0xff]
        %v5368 = vld [vmem:[#allocation4 + $0x148] sm:$0xff]
        %v5369 = vld [vmem:[#allocation4 + $0x150] sm:$0xff]
        %v5370 = vld [vmem:[#allocation4 + $0x158] sm:$0xff]
        %v5371 = vld [vmem:[#allocation4 + $0x160] sm:$0xff]
        %v5372 = vld [vmem:[#allocation4 + $0x168] sm:$0xff]
        %v5373 = vld [vmem:[#allocation4 + $0x170] sm:$0xff]
        %v5374 = vld [vmem:[#allocation4 + $0x178] sm:$0xff]
        %v5375 = vld [vmem:[#allocation4 + $0x180] sm:$0xff]
        %v5376 = vld [vmem:[#allocation4 + $0x188] sm:$0xff]
        %v5377 = vld [vmem:[#allocation4 + $0x190] sm:$0xff]
        %v5378 = vld [vmem:[#allocation4 + $0x198] sm:$0xff]
        %v5379 = vld [vmem:[#allocation4 + $0x1a0] sm:$0xff]
        %v5380 = vld [vmem:[#allocation4 + $0x1a8] sm:$0xff]
        %v5381 = vld [vmem:[#allocation4 + $0x1b0] sm:$0xff]
        %v5382 = vld [vmem:[#allocation4 + $0x1b8] sm:$0xff]
        %v5383 = vld [vmem:[#allocation4 + $0x1c0] sm:$0xff]
        %v5384 = vld [vmem:[#allocation4 + $0x1c8] sm:$0xff]
        %v5385 = vld [vmem:[#allocation4 + $0x1d0] sm:$0xff]
        %v5386 = vld [vmem:[#allocation4 + $0x1d8] sm:$0xff]
        %v5387 = vld [vmem:[#allocation4 + $0x1e0] sm:$0xff]
        %v5388 = vld [vmem:[#allocation4 + $0x1e8] sm:$0xff]
        %v5389 = vld [vmem:[#allocation4 + $0x1f0] sm:$0xff]
        %v5390 = vld [vmem:[#allocation4 + $0x1f8] sm:$0xff]
        %v5391 = vld [vmem:[#allocation4 + $0x200] sm:$0xff]
        %v5392 = vld [vmem:[#allocation4 + $0x208] sm:$0xff]
        %v5393 = vld [vmem:[#allocation4 + $0x210] sm:$0xff]
        %v5394 = vld [vmem:[#allocation4 + $0x218] sm:$0xff]
        %v5395 = vld [vmem:[#allocation4 + $0x220] sm:$0xff]
        %v5396 = vld [vmem:[#allocation4 + $0x228] sm:$0xff]
        %v5397 = vld [vmem:[#allocation4 + $0x230] sm:$0xff]
        %v5398 = vld [vmem:[#allocation4 + $0x238] sm:$0xff]
        %v5399 = vld [vmem:[#allocation4 + $0x240] sm:$0xff]
        %v5400 = vld [vmem:[#allocation4 + $0x248] sm:$0xff]
        %v5401 = vld [vmem:[#allocation4 + $0x250] sm:$0xff]
        %v5402 = vld [vmem:[#allocation4 + $0x258] sm:$0xff]
        %v5403 = vld [vmem:[#allocation4 + $0x260] sm:$0xff]
        %v5404 = vld [vmem:[#allocation4 + $0x268] sm:$0xff]
        %v5405 = vld [vmem:[#allocation4 + $0x270] sm:$0xff]
        %v5406 = vld [vmem:[#allocation4 + $0x278] sm:$0xff]
        %v5407 = vld [vmem:[#allocation4 + $0x280] sm:$0xff]
        %v5408 = vld [vmem:[#allocation4 + $0x288] sm:$0xff]
        %v5409 = vld [vmem:[#allocation4 + $0x290] sm:$0xff]
        %v5410 = vld [vmem:[#allocation4 + $0x298] sm:$0xff]
        %v5411 = vld [vmem:[#allocation4 + $0x2a0] sm:$0xff]
        %v5412 = vld [vmem:[#allocation4 + $0x2a8] sm:$0xff]
        %v5413 = vld [vmem:[#allocation4 + $0x2b0] sm:$0xff]
        %v5414 = vld [vmem:[#allocation4 + $0x2b8] sm:$0xff]
        %v5415 = vld [vmem:[#allocation4 + $0x2c0] sm:$0xff]
        %v5416 = vld [vmem:[#allocation4 + $0x2c8] sm:$0xff]
        %v5417 = vld [vmem:[#allocation4 + $0x2d0] sm:$0xff]
        %v5418 = vld [vmem:[#allocation4 + $0x2d8] sm:$0xff]
        %v5419 = vld [vmem:[#allocation4 + $0x2e0] sm:$0xff]
        %v5420 = vld [vmem:[#allocation4 + $0x2e8] sm:$0xff]
        %v5421 = vld [vmem:[#allocation4 + $0x2f0] sm:$0xff]
        %v5422 = vld [vmem:[#allocation4 + $0x2f8] sm:$0xff]
        %v5423 = vld [vmem:[#allocation4 + $0x300] sm:$0xff]
        %v5424 = vld [vmem:[#allocation4 + $0x308] sm:$0xff]
        %v5425 = vld [vmem:[#allocation4 + $0x310] sm:$0xff]
        %v5426 = vld [vmem:[#allocation4 + $0x318] sm:$0xff]
        %v5427 = vld [vmem:[#allocation4 + $0x320] sm:$0xff]
        %v5428 = vld [vmem:[#allocation4 + $0x328] sm:$0xff]
        %v5429 = vld [vmem:[#allocation4 + $0x330] sm:$0xff]
        %v5430 = vld [vmem:[#allocation4 + $0x338] sm:$0xff]
        %v5431 = vld [vmem:[#allocation4 + $0x340] sm:$0xff]
        %v5432 = vld [vmem:[#allocation4 + $0x348] sm:$0xff]
        %v5433 = vld [vmem:[#allocation4 + $0x350] sm:$0xff]
        %v5434 = vld [vmem:[#allocation4 + $0x358] sm:$0xff]
        %v5435 = vld [vmem:[#allocation4 + $0x360] sm:$0xff]
        %v5436 = vld [vmem:[#allocation4 + $0x368] sm:$0xff]
        %v5437 = vld [vmem:[#allocation4 + $0x370] sm:$0xff]
        %v5438 = vld [vmem:[#allocation4 + $0x378] sm:$0xff]
        %v5439 = vld [vmem:[#allocation4 + $0x380] sm:$0xff]
        %v5440 = vld [vmem:[#allocation4 + $0x388] sm:$0xff]
        %v5441 = vld [vmem:[#allocation4 + $0x390] sm:$0xff]
        %v5442 = vld [vmem:[#allocation4 + $0x398] sm:$0xff]
        %v5443 = vld [vmem:[#allocation4 + $0x3a0] sm:$0xff]
        %v5444 = vld [vmem:[#allocation4 + $0x3a8] sm:$0xff]
        %v5445 = vld [vmem:[#allocation4 + $0x3b0] sm:$0xff]
        %v5446 = vld [vmem:[#allocation4 + $0x3b8] sm:$0xff]
        %v5447 = vld [vmem:[#allocation4 + $0x3c0] sm:$0xff]
        %v5448 = vld [vmem:[#allocation4 + $0x3c8] sm:$0xff]
        %v5449 = vld [vmem:[#allocation4 + $0x3d0] sm:$0xff]
        %v5450 = vld [vmem:[#allocation4 + $0x3d8] sm:$0xff]
        %v5451 = vld [vmem:[#allocation4 + $0x3e0] sm:$0xff]
        %v5452 = vld [vmem:[#allocation4 + $0x3e8] sm:$0xff]
        %v5453 = vld [vmem:[#allocation4 + $0x3f0] sm:$0xff]
        %v5454 = vld [vmem:[#allocation4 + $0x3f8] sm:$0xff]
        %v5455 = vld [vmem:[#allocation4 + $0x400] sm:$0xff]
        %v5456 = vld [vmem:[#allocation4 + $0x408] sm:$0xff]
        %v5457 = vld [vmem:[#allocation4 + $0x410] sm:$0xff]
        %v5458 = vld [vmem:[#allocation4 + $0x418] sm:$0xff]
        %v5459 = vld [vmem:[#allocation4 + $0x420] sm:$0xff]
        %v5460 = vld [vmem:[#allocation4 + $0x428] sm:$0xff]
        %v5461 = vld [vmem:[#allocation4 + $0x430] sm:$0xff]
        %v5462 = vld [vmem:[#allocation4 + $0x438] sm:$0xff]
        %v5464 = vsel %vm1848, %v5321, 0
        %v5467 = vsel %vm1848, %v5326, 0
        %5469 = vmatprep.subr.mxu0 %v5328
        %5470 = vmatpush1.msra.mxu0 %v5327
        %5471 = vmatprep.subr.mxu0 %v5330
        %5472 = vmatpush1.msra.mxu0 %v5329
        %5473 = vmatprep.subr.mxu0 %v5332
        %5474 = vmatpush1.msra.mxu0 %v5331
        %5475 = vmatprep.subr.mxu0 %v5334
        %5476 = vmatpush1.msra.mxu0 %v5333
        %5477 = vmatprep.subr.mxu0 %v5336
        %5478 = vmatpush1.msra.mxu0 %v5335
        %5479 = vmatprep.subr.mxu0 %v5338
        %5480 = vmatpush1.msra.mxu0 %v5337
        %5481 = vmatprep.subr.mxu0 %v5340
        %5482 = vmatpush1.msra.mxu0 %v5339
        %5483 = vmatprep.subr.mxu0 %v5342
        %5484 = vmatpush1.msra.mxu0 %v5341
        %5485 = vmatprep.subr.mxu0 %v5344
        %5486 = vmatpush1.msra.mxu0 %v5343
        %5487 = vmatprep.subr.mxu0 %v5346
        %5488 = vmatpush1.msra.mxu0 %v5345
        %5489 = vmatprep.subr.mxu0 %v5348
        %5490 = vmatpush1.msra.mxu0 %v5347
        %5491 = vmatprep.subr.mxu0 %v5350
        %5492 = vmatpush1.msra.mxu0 %v5349
        %5493 = vmatprep.subr.mxu0 %v5352
        %5494 = vmatpush1.msra.mxu0 %v5351
        %5495 = vmatprep.subr.mxu0 %v5354
        %5496 = vmatpush1.msra.mxu0 %v5353
        %5497 = vmatprep.subr.mxu0 %v5356
        %5498 = vmatpush1.msra.mxu0 %v5355
        %5499 = vmatprep.subr.mxu0 %v5358
        %5500 = vmatpush1.msra.mxu0 %v5357
        %5501 = vmatprep.subr.mxu0 %v5360
        %5502 = vmatpush1.msra.mxu0 %v5359
        %5503 = vmatprep.subr.mxu0 %v5362
        %5504 = vmatpush1.msra.mxu0 %v5361
        %5505 = vmatprep.subr.mxu0 %v5364
        %5506 = vmatpush1.msra.mxu0 %v5363
        %5507 = vmatprep.subr.mxu0 %v5366
        %5508 = vmatpush1.msra.mxu0 %v5365
        %5509 = vmatprep.subr.mxu0 %v5368
        %5510 = vmatpush1.msra.mxu0 %v5367
        %5511 = vmatprep.subr.mxu0 %v5370
        %5512 = vmatpush1.msra.mxu0 %v5369
        %5513 = vmatprep.subr.mxu0 %v5372
        %5514 = vmatpush1.msra.mxu0 %v5371
        %5515 = vmatprep.subr.mxu0 %v5374
        %5516 = vmatpush1.msra.mxu0 %v5373
        %5517 = vmatprep.subr.mxu0 %v5376
        %5518 = vmatpush1.msra.mxu0 %v5375
        %5519 = vmatprep.subr.mxu0 %v5378
        %5520 = vmatpush1.msra.mxu0 %v5377
        %5521 = vmatprep.subr.mxu0 %v5380
        %5522 = vmatpush1.msra.mxu0 %v5379
        %5523 = vmatprep.subr.mxu0 %v5382
        %5524 = vmatpush1.msra.mxu0 %v5381
        %5525 = vmatprep.subr.mxu0 %v5384
        %5526 = vmatpush1.msra.mxu0 %v5383
        %5527 = vmatprep.subr.mxu0 %v5386
        %5528 = vmatpush1.msra.mxu0 %v5385
        %5529 = vmatprep.subr.mxu0 %v5388
        %5530 = vmatpush1.msra.mxu0 %v5387
        %5531 = vmatprep.subr.mxu0 %v5390
        %5532 = vmatpush1.msra.mxu0 %v5389
        %5533 = vmatprep.mubr.f32.mxu0 %v5318
        %5534 = vmatmul.mubr.f32.gmra.mrb[0].mxu0 %v5317
        %v5535 = vpop.f32.mrb[0].mxu0
        %v5536 = vadd.f32 0.0, %v5535
        %v5537 = vpop.f32.mrb[0].mxu0
        %v5538 = vadd.f32 0.0, %v5537
        %5539 = vmatprep.mubr.f32.mxu0 %v5323
        %5540 = vmatmul.mubr.f32.gmra.mrb[0].mxu0 %v5322
        %v5541 = vpop.f32.mrb[0].mxu0
        %v5542 = vadd.f32 0.0, %v5541
        %v5543 = vpop.f32.mrb[0].mxu0
        %v5544 = vadd.f32 0.0, %v5543
        %5545 = vdwg.mxu0
        %5546 = vmatprep.subr.mxu0 %v5392
        %5547 = vmatpush1.msra.mxu0 %v5391
        %5548 = vmatprep.subr.mxu0 %v5394
        %5549 = vmatpush1.msra.mxu0 %v5393
        %5550 = vmatprep.subr.mxu0 %v5396
        %5551 = vmatpush1.msra.mxu0 %v5395
        %5552 = vmatprep.subr.mxu0 %v5398
        %5553 = vmatpush1.msra.mxu0 %v5397
        %5554 = vmatprep.subr.mxu0 %v5400
        %5555 = vmatpush1.msra.mxu0 %v5399
        %5556 = vmatprep.subr.mxu0 %v5402
        %5557 = vmatpush1.msra.mxu0 %v5401
        %5558 = vmatprep.subr.mxu0 %v5404
        %5559 = vmatpush1.msra.mxu0 %v5403
        %5560 = vmatprep.subr.mxu0 %v5406
        %5561 = vmatpush1.msra.mxu0 %v5405
        %5562 = vmatprep.subr.mxu0 %v5408
        %5563 = vmatpush1.msra.mxu0 %v5407
        %5564 = vmatprep.subr.mxu0 %v5410
        %5565 = vmatpush1.msra.mxu0 %v5409
        %5566 = vmatprep.subr.mxu0 %v5412
        %5567 = vmatpush1.msra.mxu0 %v5411
        %5568 = vmatprep.subr.mxu0 %v5414
        %5569 = vmatpush1.msra.mxu0 %v5413
        %5570 = vmatprep.subr.mxu0 %v5416
        %5571 = vmatpush1.msra.mxu0 %v5415
        %5572 = vmatprep.subr.mxu0 %v5418
        %5573 = vmatpush1.msra.mxu0 %v5417
        %5574 = vmatprep.subr.mxu0 %v5420
        %5575 = vmatpush1.msra.mxu0 %v5419
        %5576 = vmatprep.subr.mxu0 %v5422
        %5577 = vmatpush1.msra.mxu0 %v5421
        %5578 = vmatprep.subr.mxu0 %v5424
        %5579 = vmatpush1.msra.mxu0 %v5423
        %5580 = vmatprep.subr.mxu0 %v5426
        %5581 = vmatpush1.msra.mxu0 %v5425
        %5582 = vmatprep.subr.mxu0 %v5428
        %5583 = vmatpush1.msra.mxu0 %v5427
        %5584 = vmatprep.subr.mxu0 %v5430
        %5585 = vmatpush1.msra.mxu0 %v5429
        %5586 = vmatprep.subr.mxu0 %v5432
        %5587 = vmatpush1.msra.mxu0 %v5431
        %5588 = vmatprep.subr.mxu0 %v5434
        %5589 = vmatpush1.msra.mxu0 %v5433
        %5590 = vmatprep.subr.mxu0 %v5436
        %5591 = vmatpush1.msra.mxu0 %v5435
        %5592 = vmatprep.subr.mxu0 %v5438
        %5593 = vmatpush1.msra.mxu0 %v5437
        %5594 = vmatprep.subr.mxu0 %v5440
        %5595 = vmatpush1.msra.mxu0 %v5439
        %5596 = vmatprep.subr.mxu0 %v5442
        %5597 = vmatpush1.msra.mxu0 %v5441
        %5598 = vmatprep.subr.mxu0 %v5444
        %5599 = vmatpush1.msra.mxu0 %v5443
        %5600 = vmatprep.subr.mxu0 %v5446
        %5601 = vmatpush1.msra.mxu0 %v5445
        %5602 = vmatprep.subr.mxu0 %v5448
        %5603 = vmatpush1.msra.mxu0 %v5447
        %5604 = vmatprep.subr.mxu0 %v5450
        %5605 = vmatpush1.msra.mxu0 %v5449
        %5606 = vmatprep.subr.mxu0 %v5452
        %5607 = vmatpush1.msra.mxu0 %v5451
        %5608 = vmatprep.subr.mxu0 %v5454
        %5609 = vmatpush1.msra.mxu0 %v5453
        %5610 = vmatprep.mubr.f32.mxu0 %v5320
        %5611 = vmatmul.mubr.f32.gmra.mrb[0].mxu0 %v5319
        %v5612 = vpop.f32.mrb[0].mxu0
        %v5613 = vadd.f32 %v5536, %v5612
        %v5614 = vpop.f32.mrb[0].mxu0
        %v5615 = vadd.f32 %v5538, %v5614
        %5616 = vmatprep.mubr.f32.mxu0 %v5325
        %5617 = vmatmul.mubr.f32.gmra.mrb[0].mxu0 %v5324
        %v5618 = vpop.f32.mrb[0].mxu0
        %v5619 = vadd.f32 %v5542, %v5618
        %v5620 = vpop.f32.mrb[0].mxu0
        %v5621 = vadd.f32 %v5544, %v5620
        %5622 = vdwg.mxu0
        %5623 = vmatprep.subr.mxu0 %v5456
        %5624 = vmatpush1.msra.mxu0 %v5455
        %5625 = vmatprep.subr.mxu0 %v5458
        %5626 = vmatpush1.msra.mxu0 %v5457
        %5627 = vmatprep.subr.mxu0 %v5460
        %5628 = vmatpush1.msra.mxu0 %v5459
        %5629 = vmatprep.subr.mxu0 %v5462
        %5630 = vmatpush1.msra.mxu0 %v5461
        %5631 = vmatprep.subr.mxu0 0.0
        %5632 = vmatpush1.msra.mxu0 0.0
        %5633 = vmatprep.subr.mxu0 0.0
        %5634 = vmatpush1.msra.mxu0 0.0
        %5635 = vmatprep.subr.mxu0 0.0
        %5636 = vmatpush1.msra.mxu0 0.0
        %5637 = vmatprep.subr.mxu0 0.0
        %5638 = vmatpush1.msra.mxu0 0.0
        %5639 = vmatprep.subr.mxu0 0.0
        %5640 = vmatpush1.msra.mxu0 0.0
        %5641 = vmatprep.subr.mxu0 0.0
        %5642 = vmatpush1.msra.mxu0 0.0
        %5643 = vmatprep.subr.mxu0 0.0
        %5644 = vmatpush1.msra.mxu0 0.0
        %5645 = vmatprep.subr.mxu0 0.0
        %5646 = vmatpush1.msra.mxu0 0.0
        %5647 = vmatprep.subr.mxu0 0.0
        %5648 = vmatpush1.msra.mxu0 0.0
        %5649 = vmatprep.subr.mxu0 0.0
        %5650 = vmatpush1.msra.mxu0 0.0
        %5651 = vmatprep.subr.mxu0 0.0
        %5652 = vmatpush1.msra.mxu0 0.0
        %5653 = vmatprep.subr.mxu0 0.0
        %5654 = vmatpush1.msra.mxu0 0.0
        %5655 = vmatprep.subr.mxu0 0.0
        %5656 = vmatpush1.msra.mxu0 0.0
        %5657 = vmatprep.subr.mxu0 0.0
        %5658 = vmatpush1.msra.mxu0 0.0
        %5659 = vmatprep.subr.mxu0 0.0
        %5660 = vmatpush1.msra.mxu0 0.0
        %5661 = vmatprep.subr.mxu0 0.0
        %5662 = vmatpush1.msra.mxu0 0.0
        %5663 = vmatprep.subr.mxu0 0.0
        %5664 = vmatpush1.msra.mxu0 0.0
        %5665 = vmatprep.subr.mxu0 0.0
        %5666 = vmatpush1.msra.mxu0 0.0
        %5667 = vmatprep.subr.mxu0 0.0
        %5668 = vmatpush1.msra.mxu0 0.0
        %5669 = vmatprep.subr.mxu0 0.0
        %5670 = vmatpush1.msra.mxu0 0.0
        %5671 = vmatprep.subr.mxu0 0.0
        %5672 = vmatpush1.msra.mxu0 0.0
        %5673 = vmatprep.subr.mxu0 0.0
        %5674 = vmatpush1.msra.mxu0 0.0
        %5675 = vmatprep.subr.mxu0 0.0
        %5676 = vmatpush1.msra.mxu0 0.0
        %5677 = vmatprep.subr.mxu0 0.0
        %5678 = vmatpush1.msra.mxu0 0.0
        %5679 = vmatprep.subr.mxu0 0.0
        %5680 = vmatpush1.msra.mxu0 0.0
        %5681 = vmatprep.subr.mxu0 0.0
        %5682 = vmatpush1.msra.mxu0 0.0
        %5683 = vmatprep.subr.mxu0 0.0
        %5684 = vmatpush1.msra.mxu0 0.0
        %5685 = vmatprep.subr.mxu0 0.0
        %5686 = vmatpush1.msra.mxu0 0.0
        %5687 = vmatprep.mubr.f32.mxu0 0.0
        %5688 = vmatmul.mubr.f32.gmra.mrb[0].mxu0 %v5464
        %v5689 = vpop.f32.mrb[0].mxu0
        %v5690 = vadd.f32 %v5613, %v5689
        %v5691 = vpop.f32.mrb[0].mxu0
        %v5692 = vadd.f32 %v5615, %v5691
        %5693 = vmatprep.mubr.f32.mxu0 0.0
        %5694 = vmatmul.mubr.f32.gmra.mrb[0].mxu0 %v5467
        %v5695 = vpop.f32.mrb[0].mxu0
        %v5696 = vadd.f32 %v5619, %v5695
        %v5697 = vpop.f32.mrb[0].mxu0
        %v5698 = vadd.f32 %v5621, %v5697
        %5699 = vdwg.mxu0
        %v5700 = vld [vmem:[%s188] sm:$0xff]
        %v5701 = vld [vmem:[%s188 + $0x10] sm:$0xff]
        %v5702 = vadd.f32 %v5690, %v5700
        %v5703 = vadd.f32 %v5696, %v5701
        %5704 = vst [vmem:[%s218] sm:$0xff] %v5702
        %5705 = vst [vmem:[%s218 + $0x10] sm:$0xff] %v5703
        %v5706 = vld [vmem:[%s245] sm:$0xff]
        %v5707 = vld [vmem:[%s245 + $0x10] sm:$0xff]
        %v5708 = vadd.f32 %v5692, %v5706
        %v5709 = vadd.f32 %v5698, %v5707
        %s5710 = scalar_lea.vmem %s218, 32 [#allocation11]
        %5711 = vst [vmem:[%s5710] sm:$0xff] %v5708
        %5712 = vst [vmem:[%s5710 + $0x10] sm:$0xff] %v5709
        %v5713 = vld [vmem:[#allocation3 + $0x8] sm:$0xff]
        %v5714 = vld [vmem:[#allocation3 + $0x10] sm:$0xff]
        %v5715 = vld [vmem:[#allocation3 + $0x40] sm:$0xff]
        %v5716 = vld [vmem:[#allocation3 + $0x48] sm:$0xff]
        %5721 = vrot.lane.b32.xlu0 %v5713, 16
        %v5722 = vpop.permute.xlu0 %5721
        %5723 = vrot.lane.b32.xlu0 %v5714, 16
        %v5724 = vpop.permute.xlu0 %5723
        %5725 = vrot.lane.b32.xlu0 %v5715, 16
        %v5726 = vpop.permute.xlu0 %5725
        %5727 = vrot.lane.b32.xlu0 %v5716, 16
        %v5728 = vpop.permute.xlu0 %5727
        %v5729 = vsel %vm270, %v5722, %v5724
        %v5730 = vsel %vm270, %v5726, %v5728
        %5733 = vst [vmem:[#allocation4] sm:$0xff] %v5729
        %5734 = vst [vmem:[#allocation4 + $0x10] sm:$0xff] %v5730
        %v5735 = vld [vmem:[#allocation3 + $0x8] sm:$0xff]
        %v5736 = vld [vmem:[#allocation3 + $0x10] sm:$0xff]
        %v5737 = vld [vmem:[#allocation3 + $0x40] sm:$0xff]
        %v5738 = vld [vmem:[#allocation3 + $0x48] sm:$0xff]
        %5743 = vrot.lane.b32.xlu0 %v5735, 15
        %v5744 = vpop.permute.xlu0 %5743
        %5745 = vrot.lane.b32.xlu0 %v5736, 15
        %v5746 = vpop.permute.xlu0 %5745
        %5747 = vrot.lane.b32.xlu0 %v5737, 15
        %v5748 = vpop.permute.xlu0 %5747
        %5749 = vrot.lane.b32.xlu0 %v5738, 15
        %v5750 = vpop.permute.xlu0 %5749
        %v5751 = vsel %vm293, %v5744, %v5746
        %v5752 = vsel %vm293, %v5748, %v5750
        %5755 = vst [vmem:[#allocation4 + $0x20] sm:$0xff] %v5751
        %5756 = vst [vmem:[#allocation4 + $0x30] sm:$0xff] %v5752
        %v5757 = vld [vmem:[#allocation3 + $0x8] sm:$0xff]
        %v5758 = vld [vmem:[#allocation3 + $0x10] sm:$0xff]
        %v5759 = vld [vmem:[#allocation3 + $0x40] sm:$0xff]
        %v5760 = vld [vmem:[#allocation3 + $0x48] sm:$0xff]
        %5765 = vrot.lane.b32.xlu0 %v5757, 14
        %v5766 = vpop.permute.xlu0 %5765
        %5767 = vrot.lane.b32.xlu0 %v5758, 14
        %v5768 = vpop.permute.xlu0 %5767
        %5769 = vrot.lane.b32.xlu0 %v5759, 14
        %v5770 = vpop.permute.xlu0 %5769
        %5771 = vrot.lane.b32.xlu0 %v5760, 14
        %v5772 = vpop.permute.xlu0 %5771
        %v5773 = vsel %vm316, %v5766, %v5768
        %v5774 = vsel %vm316, %v5770, %v5772
        %5777 = vst [vmem:[#allocation4 + $0x40] sm:$0xff] %v5773
        %5778 = vst [vmem:[#allocation4 + $0x50] sm:$0xff] %v5774
        %v5779 = vld [vmem:[#allocation3 + $0x8] sm:$0xff]
        %v5780 = vld [vmem:[#allocation3 + $0x10] sm:$0xff]
        %v5781 = vld [vmem:[#allocation3 + $0x40] sm:$0xff]
        %v5782 = vld [vmem:[#allocation3 + $0x48] sm:$0xff]
        %5787 = vrot.lane.b32.xlu0 %v5779, 13
        %v5788 = vpop.permute.xlu0 %5787
        %5789 = vrot.lane.b32.xlu0 %v5780, 13
        %v5790 = vpop.permute.xlu0 %5789
        %5791 = vrot.lane.b32.xlu0 %v5781, 13
        %v5792 = vpop.permute.xlu0 %5791
        %5793 = vrot.lane.b32.xlu0 %v5782, 13
        %v5794 = vpop.permute.xlu0 %5793
        %v5795 = vsel %vm339, %v5788, %v5790
        %v5796 = vsel %vm339, %v5792, %v5794
        %5799 = vst [vmem:[#allocation4 + $0x60] sm:$0xff] %v5795
        %5800 = vst [vmem:[#allocation4 + $0x70] sm:$0xff] %v5796
        %v5801 = vld [vmem:[#allocation3 + $0x8] sm:$0xff]
        %v5802 = vld [vmem:[#allocation3 + $0x10] sm:$0xff]
        %v5803 = vld [vmem:[#allocation3 + $0x40] sm:$0xff]
        %v5804 = vld [vmem:[#allocation3 + $0x48] sm:$0xff]
        %5809 = vrot.lane.b32.xlu0 %v5801, 12
        %v5810 = vpop.permute.xlu0 %5809
        %5811 = vrot.lane.b32.xlu0 %v5802, 12
        %v5812 = vpop.permute.xlu0 %5811
        %5813 = vrot.lane.b32.xlu0 %v5803, 12
        %v5814 = vpop.permute.xlu0 %5813
        %5815 = vrot.lane.b32.xlu0 %v5804, 12
        %v5816 = vpop.permute.xlu0 %5815
        %v5817 = vsel %vm362, %v5810, %v5812
        %v5818 = vsel %vm362, %v5814, %v5816
        %5821 = vst [vmem:[#allocation4 + $0x80] sm:$0xff] %v5817
        %5822 = vst [vmem:[#allocation4 + $0x90] sm:$0xff] %v5818
        %v5823 = vld [vmem:[#allocation3 + $0x8] sm:$0xff]
        %v5824 = vld [vmem:[#allocation3 + $0x10] sm:$0xff]
        %v5825 = vld [vmem:[#allocation3 + $0x40] sm:$0xff]
        %v5826 = vld [vmem:[#allocation3 + $0x48] sm:$0xff]
        %5831 = vrot.lane.b32.xlu0 %v5823, 11
        %v5832 = vpop.permute.xlu0 %5831
        %5833 = vrot.lane.b32.xlu0 %v5824, 11
        %v5834 = vpop.permute.xlu0 %5833
        %5835 = vrot.lane.b32.xlu0 %v5825, 11
        %v5836 = vpop.permute.xlu0 %5835
        %5837 = vrot.lane.b32.xlu0 %v5826, 11
        %v5838 = vpop.permute.xlu0 %5837
        %v5839 = vsel %vm385, %v5832, %v5834
        %v5840 = vsel %vm385, %v5836, %v5838
        %5843 = vst [vmem:[#allocation4 + $0xa0] sm:$0xff] %v5839
        %5844 = vst [vmem:[#allocation4 + $0xb0] sm:$0xff] %v5840
        %v5845 = vld [vmem:[#allocation3 + $0x8] sm:$0xff]
        %v5846 = vld [vmem:[#allocation3 + $0x10] sm:$0xff]
        %v5847 = vld [vmem:[#allocation3 + $0x40] sm:$0xff]
        %v5848 = vld [vmem:[#allocation3 + $0x48] sm:$0xff]
        %5853 = vrot.lane.b32.xlu0 %v5845, 10
        %v5854 = vpop.permute.xlu0 %5853
        %5855 = vrot.lane.b32.xlu0 %v5846, 10
        %v5856 = vpop.permute.xlu0 %5855
        %5857 = vrot.lane.b32.xlu0 %v5847, 10
        %v5858 = vpop.permute.xlu0 %5857
        %5859 = vrot.lane.b32.xlu0 %v5848, 10
        %v5860 = vpop.permute.xlu0 %5859
        %v5861 = vsel %vm408, %v5854, %v5856
        %v5862 = vsel %vm408, %v5858, %v5860
        %5865 = vst [vmem:[#allocation4 + $0xc0] sm:$0xff] %v5861
        %5866 = vst [vmem:[#allocation4 + $0xd0] sm:$0xff] %v5862
        %v5867 = vld [vmem:[#allocation3 + $0x8] sm:$0xff]
        %v5868 = vld [vmem:[#allocation3 + $0x10] sm:$0xff]
        %v5869 = vld [vmem:[#allocation3 + $0x40] sm:$0xff]
        %v5870 = vld [vmem:[#allocation3 + $0x48] sm:$0xff]
        %5875 = vrot.lane.b32.xlu0 %v5867, 9
        %v5876 = vpop.permute.xlu0 %5875
        %5877 = vrot.lane.b32.xlu0 %v5868, 9
        %v5878 = vpop.permute.xlu0 %5877
        %5879 = vrot.lane.b32.xlu0 %v5869, 9
        %v5880 = vpop.permute.xlu0 %5879
        %5881 = vrot.lane.b32.xlu0 %v5870, 9
        %v5882 = vpop.permute.xlu0 %5881
        %v5883 = vsel %vm431, %v5876, %v5878
        %v5884 = vsel %vm431, %v5880, %v5882
        %5887 = vst [vmem:[#allocation4 + $0xe0] sm:$0xff] %v5883
        %5888 = vst [vmem:[#allocation4 + $0xf0] sm:$0xff] %v5884
        %v5889 = vld [vmem:[#allocation3 + $0x8] sm:$0xff]
        %v5890 = vld [vmem:[#allocation3 + $0x10] sm:$0xff]
        %v5891 = vld [vmem:[#allocation3 + $0x40] sm:$0xff]
        %v5892 = vld [vmem:[#allocation3 + $0x48] sm:$0xff]
        %5897 = vrot.lane.b32.xlu0 %v5889, 8
        %v5898 = vpop.permute.xlu0 %5897
        %5899 = vrot.lane.b32.xlu0 %v5890, 8
        %v5900 = vpop.permute.xlu0 %5899
        %5901 = vrot.lane.b32.xlu0 %v5891, 8
        %v5902 = vpop.permute.xlu0 %5901
        %5903 = vrot.lane.b32.xlu0 %v5892, 8
        %v5904 = vpop.permute.xlu0 %5903
        %v5905 = vsel %vm454, %v5898, %v5900
        %v5906 = vsel %vm454, %v5902, %v5904
        %5909 = vst [vmem:[#allocation4 + $0x100] sm:$0xff] %v5905
        %5910 = vst [vmem:[#allocation4 + $0x110] sm:$0xff] %v5906
        %v5911 = vld [vmem:[#allocation3 + $0x8] sm:$0xff]
        %v5912 = vld [vmem:[#allocation3 + $0x10] sm:$0xff]
        %v5913 = vld [vmem:[#allocation3 + $0x40] sm:$0xff]
        %v5914 = vld [vmem:[#allocation3 + $0x48] sm:$0xff]
        %5919 = vrot.lane.b32.xlu0 %v5911, 7
        %v5920 = vpop.permute.xlu0 %5919
        %5921 = vrot.lane.b32.xlu0 %v5912, 7
        %v5922 = vpop.permute.xlu0 %5921
        %5923 = vrot.lane.b32.xlu0 %v5913, 7
        %v5924 = vpop.permute.xlu0 %5923
        %5925 = vrot.lane.b32.xlu0 %v5914, 7
        %v5926 = vpop.permute.xlu0 %5925
        %v5927 = vsel %vm477, %v5920, %v5922
        %v5928 = vsel %vm477, %v5924, %v5926
        %5931 = vst [vmem:[#allocation4 + $0x120] sm:$0xff] %v5927
        %5932 = vst [vmem:[#allocation4 + $0x130] sm:$0xff] %v5928
        %v5933 = vld [vmem:[#allocation3 + $0x8] sm:$0xff]
        %v5934 = vld [vmem:[#allocation3 + $0x10] sm:$0xff]
        %v5935 = vld [vmem:[#allocation3 + $0x40] sm:$0xff]
        %v5936 = vld [vmem:[#allocation3 + $0x48] sm:$0xff]
        %5941 = vrot.lane.b32.xlu0 %v5933, 6
        %v5942 = vpop.permute.xlu0 %5941
        %5943 = vrot.lane.b32.xlu0 %v5934, 6
        %v5944 = vpop.permute.xlu0 %5943
        %5945 = vrot.lane.b32.xlu0 %v5935, 6
        %v5946 = vpop.permute.xlu0 %5945
        %5947 = vrot.lane.b32.xlu0 %v5936, 6
        %v5948 = vpop.permute.xlu0 %5947
        %v5949 = vsel %vm500, %v5942, %v5944
        %v5950 = vsel %vm500, %v5946, %v5948
        %5953 = vst [vmem:[#allocation4 + $0x140] sm:$0xff] %v5949
        %5954 = vst [vmem:[#allocation4 + $0x150] sm:$0xff] %v5950
        %v5955 = vld [vmem:[#allocation3 + $0x8] sm:$0xff]
        %v5956 = vld [vmem:[#allocation3 + $0x10] sm:$0xff]
        %v5957 = vld [vmem:[#allocation3 + $0x40] sm:$0xff]
        %v5958 = vld [vmem:[#allocation3 + $0x48] sm:$0xff]
        %5963 = vrot.lane.b32.xlu0 %v5955, 5
        %v5964 = vpop.permute.xlu0 %5963
        %5965 = vrot.lane.b32.xlu0 %v5956, 5
        %v5966 = vpop.permute.xlu0 %5965
        %5967 = vrot.lane.b32.xlu0 %v5957, 5
        %v5968 = vpop.permute.xlu0 %5967
        %5969 = vrot.lane.b32.xlu0 %v5958, 5
        %v5970 = vpop.permute.xlu0 %5969
        %v5971 = vsel %vm523, %v5964, %v5966
        %v5972 = vsel %vm523, %v5968, %v5970
        %5975 = vst [vmem:[#allocation4 + $0x160] sm:$0xff] %v5971
        %5976 = vst [vmem:[#allocation4 + $0x170] sm:$0xff] %v5972
        %v5977 = vld [vmem:[#allocation3 + $0x8] sm:$0xff]
        %v5978 = vld [vmem:[#allocation3 + $0x10] sm:$0xff]
        %v5979 = vld [vmem:[#allocation3 + $0x40] sm:$0xff]
        %v5980 = vld [vmem:[#allocation3 + $0x48] sm:$0xff]
        %5985 = vrot.lane.b32.xlu0 %v5977, 4
        %v5986 = vpop.permute.xlu0 %5985
        %5987 = vrot.lane.b32.xlu0 %v5978, 4
        %v5988 = vpop.permute.xlu0 %5987
        %5989 = vrot.lane.b32.xlu0 %v5979, 4
        %v5990 = vpop.permute.xlu0 %5989
        %5991 = vrot.lane.b32.xlu0 %v5980, 4
        %v5992 = vpop.permute.xlu0 %5991
        %v5993 = vsel %vm546, %v5986, %v5988
        %v5994 = vsel %vm546, %v5990, %v5992
        %5997 = vst [vmem:[#allocation4 + $0x180] sm:$0xff] %v5993
        %5998 = vst [vmem:[#allocation4 + $0x190] sm:$0xff] %v5994
        %v5999 = vld [vmem:[#allocation3 + $0x8] sm:$0xff]
        %v6000 = vld [vmem:[#allocation3 + $0x10] sm:$0xff]
        %v6001 = vld [vmem:[#allocation3 + $0x40] sm:$0xff]
        %v6002 = vld [vmem:[#allocation3 + $0x48] sm:$0xff]
        %6007 = vrot.lane.b32.xlu0 %v5999, 3
        %v6008 = vpop.permute.xlu0 %6007
        %6009 = vrot.lane.b32.xlu0 %v6000, 3
        %v6010 = vpop.permute.xlu0 %6009
        %6011 = vrot.lane.b32.xlu0 %v6001, 3
        %v6012 = vpop.permute.xlu0 %6011
        %6013 = vrot.lane.b32.xlu0 %v6002, 3
        %v6014 = vpop.permute.xlu0 %6013
        %v6015 = vsel %vm569, %v6008, %v6010
        %v6016 = vsel %vm569, %v6012, %v6014
        %6019 = vst [vmem:[#allocation4 + $0x1a0] sm:$0xff] %v6015
        %6020 = vst [vmem:[#allocation4 + $0x1b0] sm:$0xff] %v6016
        %v6021 = vld [vmem:[#allocation3 + $0x8] sm:$0xff]
        %v6022 = vld [vmem:[#allocation3 + $0x10] sm:$0xff]
        %v6023 = vld [vmem:[#allocation3 + $0x40] sm:$0xff]
        %v6024 = vld [vmem:[#allocation3 + $0x48] sm:$0xff]
        %6029 = vrot.lane.b32.xlu0 %v6021, 2
        %v6030 = vpop.permute.xlu0 %6029
        %6031 = vrot.lane.b32.xlu0 %v6022, 2
        %v6032 = vpop.permute.xlu0 %6031
        %6033 = vrot.lane.b32.xlu0 %v6023, 2
        %v6034 = vpop.permute.xlu0 %6033
        %6035 = vrot.lane.b32.xlu0 %v6024, 2
        %v6036 = vpop.permute.xlu0 %6035
        %v6037 = vsel %vm592, %v6030, %v6032
        %v6038 = vsel %vm592, %v6034, %v6036
        %6041 = vst [vmem:[#allocation4 + $0x1c0] sm:$0xff] %v6037
        %6042 = vst [vmem:[#allocation4 + $0x1d0] sm:$0xff] %v6038
        %v6043 = vld [vmem:[#allocation3 + $0x8] sm:$0xff]
        %v6044 = vld [vmem:[#allocation3 + $0x10] sm:$0xff]
        %v6045 = vld [vmem:[#allocation3 + $0x40] sm:$0xff]
        %v6046 = vld [vmem:[#allocation3 + $0x48] sm:$0xff]
        %6051 = vrot.lane.b32.xlu0 %v6043, 1
        %v6052 = vpop.permute.xlu0 %6051
        %6053 = vrot.lane.b32.xlu0 %v6044, 1
        %v6054 = vpop.permute.xlu0 %6053
        %6055 = vrot.lane.b32.xlu0 %v6045, 1
        %v6056 = vpop.permute.xlu0 %6055
        %6057 = vrot.lane.b32.xlu0 %v6046, 1
        %v6058 = vpop.permute.xlu0 %6057
        %v6059 = vsel %vm615, %v6052, %v6054
        %v6060 = vsel %vm615, %v6056, %v6058
        %6063 = vst [vmem:[#allocation4 + $0x1e0] sm:$0xff] %v6059
        %6064 = vst [vmem:[#allocation4 + $0x1f0] sm:$0xff] %v6060
        %v6065 = vld [vmem:[#allocation3 + $0x10] sm:$0xff]
        %v6066 = vld [vmem:[#allocation3 + $0x48] sm:$0xff]
        %6067 = vst [vmem:[#allocation4 + $0x200] sm:$0xff] %v6065
        %6068 = vst [vmem:[#allocation4 + $0x210] sm:$0xff] %v6066
        %v6069 = vld [vmem:[#allocation3 + $0x10] sm:$0xff]
        %v6070 = vld [vmem:[#allocation3 + $0x18] sm:$0xff]
        %v6071 = vld [vmem:[#allocation3 + $0x48] sm:$0xff]
        %v6072 = vld [vmem:[#allocation3 + $0x50] sm:$0xff]
        %6077 = vrot.lane.b32.xlu0 %v6069, 127
        %v6078 = vpop.permute.xlu0 %6077
        %6079 = vrot.lane.b32.xlu0 %v6070, 127
        %v6080 = vpop.permute.xlu0 %6079
        %6081 = vrot.lane.b32.xlu0 %v6071, 127
        %v6082 = vpop.permute.xlu0 %6081
        %6083 = vrot.lane.b32.xlu0 %v6072, 127
        %v6084 = vpop.permute.xlu0 %6083
        %v6085 = vsel %vm642, %v6078, %v6080
        %v6086 = vsel %vm642, %v6082, %v6084
        %6089 = vst [vmem:[#allocation4 + $0x220] sm:$0xff] %v6085
        %6090 = vst [vmem:[#allocation4 + $0x230] sm:$0xff] %v6086
        %v6091 = vld [vmem:[#allocation3 + $0x10] sm:$0xff]
        %v6092 = vld [vmem:[#allocation3 + $0x18] sm:$0xff]
        %v6093 = vld [vmem:[#allocation3 + $0x48] sm:$0xff]
        %v6094 = vld [vmem:[#allocation3 + $0x50] sm:$0xff]
        %6099 = vrot.lane.b32.xlu0 %v6091, 126
        %v6100 = vpop.permute.xlu0 %6099
        %6101 = vrot.lane.b32.xlu0 %v6092, 126
        %v6102 = vpop.permute.xlu0 %6101
        %6103 = vrot.lane.b32.xlu0 %v6093, 126
        %v6104 = vpop.permute.xlu0 %6103
        %6105 = vrot.lane.b32.xlu0 %v6094, 126
        %v6106 = vpop.permute.xlu0 %6105
        %v6107 = vsel %vm665, %v6100, %v6102
        %v6108 = vsel %vm665, %v6104, %v6106
        %6111 = vst [vmem:[#allocation4 + $0x240] sm:$0xff] %v6107
        %6112 = vst [vmem:[#allocation4 + $0x250] sm:$0xff] %v6108
        %v6113 = vld [vmem:[#allocation3 + $0x10] sm:$0xff]
        %v6114 = vld [vmem:[#allocation3 + $0x18] sm:$0xff]
        %v6115 = vld [vmem:[#allocation3 + $0x48] sm:$0xff]
        %v6116 = vld [vmem:[#allocation3 + $0x50] sm:$0xff]
        %6121 = vrot.lane.b32.xlu0 %v6113, 125
        %v6122 = vpop.permute.xlu0 %6121
        %6123 = vrot.lane.b32.xlu0 %v6114, 125
        %v6124 = vpop.permute.xlu0 %6123
        %6125 = vrot.lane.b32.xlu0 %v6115, 125
        %v6126 = vpop.permute.xlu0 %6125
        %6127 = vrot.lane.b32.xlu0 %v6116, 125
        %v6128 = vpop.permute.xlu0 %6127
        %v6129 = vsel %vm688, %v6122, %v6124
        %v6130 = vsel %vm688, %v6126, %v6128
        %6133 = vst [vmem:[#allocation4 + $0x260] sm:$0xff] %v6129
        %6134 = vst [vmem:[#allocation4 + $0x270] sm:$0xff] %v6130
        %v6135 = vld [vmem:[#allocation3 + $0x10] sm:$0xff]
        %v6136 = vld [vmem:[#allocation3 + $0x18] sm:$0xff]
        %v6137 = vld [vmem:[#allocation3 + $0x48] sm:$0xff]
        %v6138 = vld [vmem:[#allocation3 + $0x50] sm:$0xff]
        %6143 = vrot.lane.b32.xlu0 %v6135, 124
        %v6144 = vpop.permute.xlu0 %6143
        %6145 = vrot.lane.b32.xlu0 %v6136, 124
        %v6146 = vpop.permute.xlu0 %6145
        %6147 = vrot.lane.b32.xlu0 %v6137, 124
        %v6148 = vpop.permute.xlu0 %6147
        %6149 = vrot.lane.b32.xlu0 %v6138, 124
        %v6150 = vpop.permute.xlu0 %6149
        %v6151 = vsel %vm711, %v6144, %v6146
        %v6152 = vsel %vm711, %v6148, %v6150
        %6155 = vst [vmem:[#allocation4 + $0x280] sm:$0xff] %v6151
        %6156 = vst [vmem:[#allocation4 + $0x290] sm:$0xff] %v6152
        %v6157 = vld [vmem:[#allocation3 + $0x10] sm:$0xff]
        %v6158 = vld [vmem:[#allocation3 + $0x18] sm:$0xff]
        %v6159 = vld [vmem:[#allocation3 + $0x48] sm:$0xff]
        %v6160 = vld [vmem:[#allocation3 + $0x50] sm:$0xff]
        %6165 = vrot.lane.b32.xlu0 %v6157, 123
        %v6166 = vpop.permute.xlu0 %6165
        %6167 = vrot.lane.b32.xlu0 %v6158, 123
        %v6168 = vpop.permute.xlu0 %6167
        %6169 = vrot.lane.b32.xlu0 %v6159, 123
        %v6170 = vpop.permute.xlu0 %6169
        %6171 = vrot.lane.b32.xlu0 %v6160, 123
        %v6172 = vpop.permute.xlu0 %6171
        %v6173 = vsel %vm734, %v6166, %v6168
        %v6174 = vsel %vm734, %v6170, %v6172
        %6177 = vst [vmem:[#allocation4 + $0x2a0] sm:$0xff] %v6173
        %6178 = vst [vmem:[#allocation4 + $0x2b0] sm:$0xff] %v6174
        %v6179 = vld [vmem:[#allocation3 + $0x10] sm:$0xff]
        %v6180 = vld [vmem:[#allocation3 + $0x18] sm:$0xff]
        %v6181 = vld [vmem:[#allocation3 + $0x48] sm:$0xff]
        %v6182 = vld [vmem:[#allocation3 + $0x50] sm:$0xff]
        %6187 = vrot.lane.b32.xlu0 %v6179, 122
        %v6188 = vpop.permute.xlu0 %6187
        %6189 = vrot.lane.b32.xlu0 %v6180, 122
        %v6190 = vpop.permute.xlu0 %6189
        %6191 = vrot.lane.b32.xlu0 %v6181, 122
        %v6192 = vpop.permute.xlu0 %6191
        %6193 = vrot.lane.b32.xlu0 %v6182, 122
        %v6194 = vpop.permute.xlu0 %6193
        %v6195 = vsel %vm757, %v6188, %v6190
        %v6196 = vsel %vm757, %v6192, %v6194
        %6199 = vst [vmem:[#allocation4 + $0x2c0] sm:$0xff] %v6195
        %6200 = vst [vmem:[#allocation4 + $0x2d0] sm:$0xff] %v6196
        %v6201 = vld [vmem:[#allocation3 + $0x10] sm:$0xff]
        %v6202 = vld [vmem:[#allocation3 + $0x18] sm:$0xff]
        %v6203 = vld [vmem:[#allocation3 + $0x48] sm:$0xff]
        %v6204 = vld [vmem:[#allocation3 + $0x50] sm:$0xff]
        %6209 = vrot.lane.b32.xlu0 %v6201, 121
        %v6210 = vpop.permute.xlu0 %6209
        %6211 = vrot.lane.b32.xlu0 %v6202, 121
        %v6212 = vpop.permute.xlu0 %6211
        %6213 = vrot.lane.b32.xlu0 %v6203, 121
        %v6214 = vpop.permute.xlu0 %6213
        %6215 = vrot.lane.b32.xlu0 %v6204, 121
        %v6216 = vpop.permute.xlu0 %6215
        %v6217 = vsel %vm780, %v6210, %v6212
        %v6218 = vsel %vm780, %v6214, %v6216
        %6221 = vst [vmem:[#allocation4 + $0x2e0] sm:$0xff] %v6217
        %6222 = vst [vmem:[#allocation4 + $0x2f0] sm:$0xff] %v6218
        %v6223 = vld [vmem:[#allocation3 + $0x10] sm:$0xff]
        %v6224 = vld [vmem:[#allocation3 + $0x18] sm:$0xff]
        %v6225 = vld [vmem:[#allocation3 + $0x48] sm:$0xff]
        %v6226 = vld [vmem:[#allocation3 + $0x50] sm:$0xff]
        %6231 = vrot.lane.b32.xlu0 %v6223, 120
        %v6232 = vpop.permute.xlu0 %6231
        %6233 = vrot.lane.b32.xlu0 %v6224, 120
        %v6234 = vpop.permute.xlu0 %6233
        %6235 = vrot.lane.b32.xlu0 %v6225, 120
        %v6236 = vpop.permute.xlu0 %6235
        %6237 = vrot.lane.b32.xlu0 %v6226, 120
        %v6238 = vpop.permute.xlu0 %6237
        %v6239 = vsel %vm803, %v6232, %v6234
        %v6240 = vsel %vm803, %v6236, %v6238
        %6243 = vst [vmem:[#allocation4 + $0x300] sm:$0xff] %v6239
        %6244 = vst [vmem:[#allocation4 + $0x310] sm:$0xff] %v6240
        %v6245 = vld [vmem:[#allocation3 + $0x10] sm:$0xff]
        %v6246 = vld [vmem:[#allocation3 + $0x18] sm:$0xff]
        %v6247 = vld [vmem:[#allocation3 + $0x48] sm:$0xff]
        %v6248 = vld [vmem:[#allocation3 + $0x50] sm:$0xff]
        %6253 = vrot.lane.b32.xlu0 %v6245, 119
        %v6254 = vpop.permute.xlu0 %6253
        %6255 = vrot.lane.b32.xlu0 %v6246, 119
        %v6256 = vpop.permute.xlu0 %6255
        %6257 = vrot.lane.b32.xlu0 %v6247, 119
        %v6258 = vpop.permute.xlu0 %6257
        %6259 = vrot.lane.b32.xlu0 %v6248, 119
        %v6260 = vpop.permute.xlu0 %6259
        %v6261 = vsel %vm826, %v6254, %v6256
        %v6262 = vsel %vm826, %v6258, %v6260
        %6265 = vst [vmem:[#allocation4 + $0x320] sm:$0xff] %v6261
        %6266 = vst [vmem:[#allocation4 + $0x330] sm:$0xff] %v6262
        %v6267 = vld [vmem:[#allocation3 + $0x10] sm:$0xff]
        %v6268 = vld [vmem:[#allocation3 + $0x18] sm:$0xff]
        %v6269 = vld [vmem:[#allocation3 + $0x48] sm:$0xff]
        %v6270 = vld [vmem:[#allocation3 + $0x50] sm:$0xff]
        %6275 = vrot.lane.b32.xlu0 %v6267, 118
        %v6276 = vpop.permute.xlu0 %6275
        %6277 = vrot.lane.b32.xlu0 %v6268, 118
        %v6278 = vpop.permute.xlu0 %6277
        %6279 = vrot.lane.b32.xlu0 %v6269, 118
        %v6280 = vpop.permute.xlu0 %6279
        %6281 = vrot.lane.b32.xlu0 %v6270, 118
        %v6282 = vpop.permute.xlu0 %6281
        %v6283 = vsel %vm849, %v6276, %v6278
        %v6284 = vsel %vm849, %v6280, %v6282
        %6287 = vst [vmem:[#allocation4 + $0x340] sm:$0xff] %v6283
        %6288 = vst [vmem:[#allocation4 + $0x350] sm:$0xff] %v6284
        %v6289 = vld [vmem:[#allocation3 + $0x10] sm:$0xff]
        %v6290 = vld [vmem:[#allocation3 + $0x18] sm:$0xff]
        %v6291 = vld [vmem:[#allocation3 + $0x48] sm:$0xff]
        %v6292 = vld [vmem:[#allocation3 + $0x50] sm:$0xff]
        %6297 = vrot.lane.b32.xlu0 %v6289, 117
        %v6298 = vpop.permute.xlu0 %6297
        %6299 = vrot.lane.b32.xlu0 %v6290, 117
        %v6300 = vpop.permute.xlu0 %6299
        %6301 = vrot.lane.b32.xlu0 %v6291, 117
        %v6302 = vpop.permute.xlu0 %6301
        %6303 = vrot.lane.b32.xlu0 %v6292, 117
        %v6304 = vpop.permute.xlu0 %6303
        %v6305 = vsel %vm872, %v6298, %v6300
        %v6306 = vsel %vm872, %v6302, %v6304
        %6309 = vst [vmem:[#allocation4 + $0x360] sm:$0xff] %v6305
        %6310 = vst [vmem:[#allocation4 + $0x370] sm:$0xff] %v6306
        %v6311 = vld [vmem:[#allocation3 + $0x10] sm:$0xff]
        %v6312 = vld [vmem:[#allocation3 + $0x18] sm:$0xff]
        %v6313 = vld [vmem:[#allocation3 + $0x48] sm:$0xff]
        %v6314 = vld [vmem:[#allocation3 + $0x50] sm:$0xff]
        %6319 = vrot.lane.b32.xlu0 %v6311, 116
        %v6320 = vpop.permute.xlu0 %6319
        %6321 = vrot.lane.b32.xlu0 %v6312, 116
        %v6322 = vpop.permute.xlu0 %6321
        %6323 = vrot.lane.b32.xlu0 %v6313, 116
        %v6324 = vpop.permute.xlu0 %6323
        %6325 = vrot.lane.b32.xlu0 %v6314, 116
        %v6326 = vpop.permute.xlu0 %6325
        %v6327 = vsel %vm895, %v6320, %v6322
        %v6328 = vsel %vm895, %v6324, %v6326
        %6331 = vst [vmem:[#allocation4 + $0x380] sm:$0xff] %v6327
        %6332 = vst [vmem:[#allocation4 + $0x390] sm:$0xff] %v6328
        %v6333 = vld [vmem:[#allocation3 + $0x10] sm:$0xff]
        %v6334 = vld [vmem:[#allocation3 + $0x18] sm:$0xff]
        %v6335 = vld [vmem:[#allocation3 + $0x48] sm:$0xff]
        %v6336 = vld [vmem:[#allocation3 + $0x50] sm:$0xff]
        %6341 = vrot.lane.b32.xlu0 %v6333, 115
        %v6342 = vpop.permute.xlu0 %6341
        %6343 = vrot.lane.b32.xlu0 %v6334, 115
        %v6344 = vpop.permute.xlu0 %6343
        %6345 = vrot.lane.b32.xlu0 %v6335, 115
        %v6346 = vpop.permute.xlu0 %6345
        %6347 = vrot.lane.b32.xlu0 %v6336, 115
        %v6348 = vpop.permute.xlu0 %6347
        %v6349 = vsel %vm918, %v6342, %v6344
        %v6350 = vsel %vm918, %v6346, %v6348
        %6353 = vst [vmem:[#allocation4 + $0x3a0] sm:$0xff] %v6349
        %6354 = vst [vmem:[#allocation4 + $0x3b0] sm:$0xff] %v6350
        %v6355 = vld [vmem:[#allocation3 + $0x10] sm:$0xff]
        %v6356 = vld [vmem:[#allocation3 + $0x18] sm:$0xff]
        %v6357 = vld [vmem:[#allocation3 + $0x48] sm:$0xff]
        %v6358 = vld [vmem:[#allocation3 + $0x50] sm:$0xff]
        %6363 = vrot.lane.b32.xlu0 %v6355, 114
        %v6364 = vpop.permute.xlu0 %6363
        %6365 = vrot.lane.b32.xlu0 %v6356, 114
        %v6366 = vpop.permute.xlu0 %6365
        %6367 = vrot.lane.b32.xlu0 %v6357, 114
        %v6368 = vpop.permute.xlu0 %6367
        %6369 = vrot.lane.b32.xlu0 %v6358, 114
        %v6370 = vpop.permute.xlu0 %6369
        %v6371 = vsel %vm941, %v6364, %v6366
        %v6372 = vsel %vm941, %v6368, %v6370
        %6375 = vst [vmem:[#allocation4 + $0x3c0] sm:$0xff] %v6371
        %6376 = vst [vmem:[#allocation4 + $0x3d0] sm:$0xff] %v6372
        %v6377 = vld [vmem:[#allocation3 + $0x10] sm:$0xff]
        %v6378 = vld [vmem:[#allocation3 + $0x18] sm:$0xff]
        %v6379 = vld [vmem:[#allocation3 + $0x48] sm:$0xff]
        %v6380 = vld [vmem:[#allocation3 + $0x50] sm:$0xff]
        %6385 = vrot.lane.b32.xlu0 %v6377, 113
        %v6386 = vpop.permute.xlu0 %6385
        %6387 = vrot.lane.b32.xlu0 %v6378, 113
        %v6388 = vpop.permute.xlu0 %6387
        %6389 = vrot.lane.b32.xlu0 %v6379, 113
        %v6390 = vpop.permute.xlu0 %6389
        %6391 = vrot.lane.b32.xlu0 %v6380, 113
        %v6392 = vpop.permute.xlu0 %6391
        %v6393 = vsel %vm964, %v6386, %v6388
        %v6394 = vsel %vm964, %v6390, %v6392
        %6397 = vst [vmem:[#allocation4 + $0x3e0] sm:$0xff] %v6393
        %6398 = vst [vmem:[#allocation4 + $0x3f0] sm:$0xff] %v6394
        %v6399 = vld [vmem:[#allocation3 + $0x10] sm:$0xff]
        %v6400 = vld [vmem:[#allocation3 + $0x18] sm:$0xff]
        %v6401 = vld [vmem:[#allocation3 + $0x48] sm:$0xff]
        %v6402 = vld [vmem:[#allocation3 + $0x50] sm:$0xff]
        %6407 = vrot.lane.b32.xlu0 %v6399, 112
        %v6408 = vpop.permute.xlu0 %6407
        %6409 = vrot.lane.b32.xlu0 %v6400, 112
        %v6410 = vpop.permute.xlu0 %6409
        %6411 = vrot.lane.b32.xlu0 %v6401, 112
        %v6412 = vpop.permute.xlu0 %6411
        %6413 = vrot.lane.b32.xlu0 %v6402, 112
        %v6414 = vpop.permute.xlu0 %6413
        %v6415 = vsel %vm987, %v6408, %v6410
        %v6416 = vsel %vm987, %v6412, %v6414
        %6419 = vst [vmem:[#allocation4 + $0x400] sm:$0xff] %v6415
        %6420 = vst [vmem:[#allocation4 + $0x410] sm:$0xff] %v6416
        %v6421 = vld [vmem:[#allocation3 + $0x20] sm:$0xff]
        %v6422 = vld [vmem:[#allocation3 + $0x28] sm:$0xff]
        %v6423 = vld [vmem:[#allocation3 + $0x58] sm:$0xff]
        %v6424 = vld [vmem:[#allocation3 + $0x60] sm:$0xff]
        %6429 = vrot.lane.b32.xlu0 %v6421, 16
        %v6430 = vpop.permute.xlu0 %6429
        %6431 = vrot.lane.b32.xlu0 %v6422, 16
        %v6432 = vpop.permute.xlu0 %6431
        %6433 = vrot.lane.b32.xlu0 %v6423, 16
        %v6434 = vpop.permute.xlu0 %6433
        %6435 = vrot.lane.b32.xlu0 %v6424, 16
        %v6436 = vpop.permute.xlu0 %6435
        %v6437 = vsel %vm270, %v6430, %v6432
        %v6438 = vsel %vm270, %v6434, %v6436
        %6441 = vst [vmem:[#allocation4 + $0x8] sm:$0xff] %v6437
        %6442 = vst [vmem:[#allocation4 + $0x18] sm:$0xff] %v6438
        %v6443 = vld [vmem:[#allocation3 + $0x20] sm:$0xff]
        %v6444 = vld [vmem:[#allocation3 + $0x28] sm:$0xff]
        %v6445 = vld [vmem:[#allocation3 + $0x58] sm:$0xff]
        %v6446 = vld [vmem:[#allocation3 + $0x60] sm:$0xff]
        %6451 = vrot.lane.b32.xlu0 %v6443, 15
        %v6452 = vpop.permute.xlu0 %6451
        %6453 = vrot.lane.b32.xlu0 %v6444, 15
        %v6454 = vpop.permute.xlu0 %6453
        %6455 = vrot.lane.b32.xlu0 %v6445, 15
        %v6456 = vpop.permute.xlu0 %6455
        %6457 = vrot.lane.b32.xlu0 %v6446, 15
        %v6458 = vpop.permute.xlu0 %6457
        %v6459 = vsel %vm293, %v6452, %v6454
        %v6460 = vsel %vm293, %v6456, %v6458
        %6463 = vst [vmem:[#allocation4 + $0x28] sm:$0xff] %v6459
        %6464 = vst [vmem:[#allocation4 + $0x38] sm:$0xff] %v6460
        %v6465 = vld [vmem:[#allocation3 + $0x20] sm:$0xff]
        %v6466 = vld [vmem:[#allocation3 + $0x28] sm:$0xff]
        %v6467 = vld [vmem:[#allocation3 + $0x58] sm:$0xff]
        %v6468 = vld [vmem:[#allocation3 + $0x60] sm:$0xff]
        %6473 = vrot.lane.b32.xlu0 %v6465, 14
        %v6474 = vpop.permute.xlu0 %6473
        %6475 = vrot.lane.b32.xlu0 %v6466, 14
        %v6476 = vpop.permute.xlu0 %6475
        %6477 = vrot.lane.b32.xlu0 %v6467, 14
        %v6478 = vpop.permute.xlu0 %6477
        %6479 = vrot.lane.b32.xlu0 %v6468, 14
        %v6480 = vpop.permute.xlu0 %6479
        %v6481 = vsel %vm316, %v6474, %v6476
        %v6482 = vsel %vm316, %v6478, %v6480
        %6485 = vst [vmem:[#allocation4 + $0x48] sm:$0xff] %v6481
        %6486 = vst [vmem:[#allocation4 + $0x58] sm:$0xff] %v6482
        %v6487 = vld [vmem:[#allocation3 + $0x20] sm:$0xff]
        %v6488 = vld [vmem:[#allocation3 + $0x28] sm:$0xff]
        %v6489 = vld [vmem:[#allocation3 + $0x58] sm:$0xff]
        %v6490 = vld [vmem:[#allocation3 + $0x60] sm:$0xff]
        %6495 = vrot.lane.b32.xlu0 %v6487, 13
        %v6496 = vpop.permute.xlu0 %6495
        %6497 = vrot.lane.b32.xlu0 %v6488, 13
        %v6498 = vpop.permute.xlu0 %6497
        %6499 = vrot.lane.b32.xlu0 %v6489, 13
        %v6500 = vpop.permute.xlu0 %6499
        %6501 = vrot.lane.b32.xlu0 %v6490, 13
        %v6502 = vpop.permute.xlu0 %6501
        %v6503 = vsel %vm339, %v6496, %v6498
        %v6504 = vsel %vm339, %v6500, %v6502
        %6507 = vst [vmem:[#allocation4 + $0x68] sm:$0xff] %v6503
        %6508 = vst [vmem:[#allocation4 + $0x78] sm:$0xff] %v6504
        %v6509 = vld [vmem:[#allocation3 + $0x20] sm:$0xff]
        %v6510 = vld [vmem:[#allocation3 + $0x28] sm:$0xff]
        %v6511 = vld [vmem:[#allocation3 + $0x58] sm:$0xff]
        %v6512 = vld [vmem:[#allocation3 + $0x60] sm:$0xff]
        %6517 = vrot.lane.b32.xlu0 %v6509, 12
        %v6518 = vpop.permute.xlu0 %6517
        %6519 = vrot.lane.b32.xlu0 %v6510, 12
        %v6520 = vpop.permute.xlu0 %6519
        %6521 = vrot.lane.b32.xlu0 %v6511, 12
        %v6522 = vpop.permute.xlu0 %6521
        %6523 = vrot.lane.b32.xlu0 %v6512, 12
        %v6524 = vpop.permute.xlu0 %6523
        %v6525 = vsel %vm362, %v6518, %v6520
        %v6526 = vsel %vm362, %v6522, %v6524
        %6529 = vst [vmem:[#allocation4 + $0x88] sm:$0xff] %v6525
        %6530 = vst [vmem:[#allocation4 + $0x98] sm:$0xff] %v6526
        %v6531 = vld [vmem:[#allocation3 + $0x20] sm:$0xff]
        %v6532 = vld [vmem:[#allocation3 + $0x28] sm:$0xff]
        %v6533 = vld [vmem:[#allocation3 + $0x58] sm:$0xff]
        %v6534 = vld [vmem:[#allocation3 + $0x60] sm:$0xff]
        %6539 = vrot.lane.b32.xlu0 %v6531, 11
        %v6540 = vpop.permute.xlu0 %6539
        %6541 = vrot.lane.b32.xlu0 %v6532, 11
        %v6542 = vpop.permute.xlu0 %6541
        %6543 = vrot.lane.b32.xlu0 %v6533, 11
        %v6544 = vpop.permute.xlu0 %6543
        %6545 = vrot.lane.b32.xlu0 %v6534, 11
        %v6546 = vpop.permute.xlu0 %6545
        %v6547 = vsel %vm385, %v6540, %v6542
        %v6548 = vsel %vm385, %v6544, %v6546
        %6551 = vst [vmem:[#allocation4 + $0xa8] sm:$0xff] %v6547
        %6552 = vst [vmem:[#allocation4 + $0xb8] sm:$0xff] %v6548
        %v6553 = vld [vmem:[#allocation3 + $0x20] sm:$0xff]
        %v6554 = vld [vmem:[#allocation3 + $0x28] sm:$0xff]
        %v6555 = vld [vmem:[#allocation3 + $0x58] sm:$0xff]
        %v6556 = vld [vmem:[#allocation3 + $0x60] sm:$0xff]
        %6561 = vrot.lane.b32.xlu0 %v6553, 10
        %v6562 = vpop.permute.xlu0 %6561
        %6563 = vrot.lane.b32.xlu0 %v6554, 10
        %v6564 = vpop.permute.xlu0 %6563
        %6565 = vrot.lane.b32.xlu0 %v6555, 10
        %v6566 = vpop.permute.xlu0 %6565
        %6567 = vrot.lane.b32.xlu0 %v6556, 10
        %v6568 = vpop.permute.xlu0 %6567
        %v6569 = vsel %vm408, %v6562, %v6564
        %v6570 = vsel %vm408, %v6566, %v6568
        %6573 = vst [vmem:[#allocation4 + $0xc8] sm:$0xff] %v6569
        %6574 = vst [vmem:[#allocation4 + $0xd8] sm:$0xff] %v6570
        %v6575 = vld [vmem:[#allocation3 + $0x20] sm:$0xff]
        %v6576 = vld [vmem:[#allocation3 + $0x28] sm:$0xff]
        %v6577 = vld [vmem:[#allocation3 + $0x58] sm:$0xff]
        %v6578 = vld [vmem:[#allocation3 + $0x60] sm:$0xff]
        %6583 = vrot.lane.b32.xlu0 %v6575, 9
        %v6584 = vpop.permute.xlu0 %6583
        %6585 = vrot.lane.b32.xlu0 %v6576, 9
        %v6586 = vpop.permute.xlu0 %6585
        %6587 = vrot.lane.b32.xlu0 %v6577, 9
        %v6588 = vpop.permute.xlu0 %6587
        %6589 = vrot.lane.b32.xlu0 %v6578, 9
        %v6590 = vpop.permute.xlu0 %6589
        %v6591 = vsel %vm431, %v6584, %v6586
        %v6592 = vsel %vm431, %v6588, %v6590
        %6595 = vst [vmem:[#allocation4 + $0xe8] sm:$0xff] %v6591
        %6596 = vst [vmem:[#allocation4 + $0xf8] sm:$0xff] %v6592
        %v6597 = vld [vmem:[#allocation3 + $0x20] sm:$0xff]
        %v6598 = vld [vmem:[#allocation3 + $0x28] sm:$0xff]
        %v6599 = vld [vmem:[#allocation3 + $0x58] sm:$0xff]
        %v6600 = vld [vmem:[#allocation3 + $0x60] sm:$0xff]
        %6605 = vrot.lane.b32.xlu0 %v6597, 8
        %v6606 = vpop.permute.xlu0 %6605
        %6607 = vrot.lane.b32.xlu0 %v6598, 8
        %v6608 = vpop.permute.xlu0 %6607
        %6609 = vrot.lane.b32.xlu0 %v6599, 8
        %v6610 = vpop.permute.xlu0 %6609
        %6611 = vrot.lane.b32.xlu0 %v6600, 8
        %v6612 = vpop.permute.xlu0 %6611
        %v6613 = vsel %vm454, %v6606, %v6608
        %v6614 = vsel %vm454, %v6610, %v6612
        %6617 = vst [vmem:[#allocation4 + $0x108] sm:$0xff] %v6613
        %6618 = vst [vmem:[#allocation4 + $0x118] sm:$0xff] %v6614
        %v6619 = vld [vmem:[#allocation3 + $0x20] sm:$0xff]
        %v6620 = vld [vmem:[#allocation3 + $0x28] sm:$0xff]
        %v6621 = vld [vmem:[#allocation3 + $0x58] sm:$0xff]
        %v6622 = vld [vmem:[#allocation3 + $0x60] sm:$0xff]
        %6627 = vrot.lane.b32.xlu0 %v6619, 7
        %v6628 = vpop.permute.xlu0 %6627
        %6629 = vrot.lane.b32.xlu0 %v6620, 7
        %v6630 = vpop.permute.xlu0 %6629
        %6631 = vrot.lane.b32.xlu0 %v6621, 7
        %v6632 = vpop.permute.xlu0 %6631
        %6633 = vrot.lane.b32.xlu0 %v6622, 7
        %v6634 = vpop.permute.xlu0 %6633
        %v6635 = vsel %vm477, %v6628, %v6630
        %v6636 = vsel %vm477, %v6632, %v6634
        %6639 = vst [vmem:[#allocation4 + $0x128] sm:$0xff] %v6635
        %6640 = vst [vmem:[#allocation4 + $0x138] sm:$0xff] %v6636
        %v6641 = vld [vmem:[#allocation3 + $0x20] sm:$0xff]
        %v6642 = vld [vmem:[#allocation3 + $0x28] sm:$0xff]
        %v6643 = vld [vmem:[#allocation3 + $0x58] sm:$0xff]
        %v6644 = vld [vmem:[#allocation3 + $0x60] sm:$0xff]
        %6649 = vrot.lane.b32.xlu0 %v6641, 6
        %v6650 = vpop.permute.xlu0 %6649
        %6651 = vrot.lane.b32.xlu0 %v6642, 6
        %v6652 = vpop.permute.xlu0 %6651
        %6653 = vrot.lane.b32.xlu0 %v6643, 6
        %v6654 = vpop.permute.xlu0 %6653
        %6655 = vrot.lane.b32.xlu0 %v6644, 6
        %v6656 = vpop.permute.xlu0 %6655
        %v6657 = vsel %vm500, %v6650, %v6652
        %v6658 = vsel %vm500, %v6654, %v6656
        %6661 = vst [vmem:[#allocation4 + $0x148] sm:$0xff] %v6657
        %6662 = vst [vmem:[#allocation4 + $0x158] sm:$0xff] %v6658
        %v6663 = vld [vmem:[#allocation3 + $0x20] sm:$0xff]
        %v6664 = vld [vmem:[#allocation3 + $0x28] sm:$0xff]
        %v6665 = vld [vmem:[#allocation3 + $0x58] sm:$0xff]
        %v6666 = vld [vmem:[#allocation3 + $0x60] sm:$0xff]
        %6671 = vrot.lane.b32.xlu0 %v6663, 5
        %v6672 = vpop.permute.xlu0 %6671
        %6673 = vrot.lane.b32.xlu0 %v6664, 5
        %v6674 = vpop.permute.xlu0 %6673
        %6675 = vrot.lane.b32.xlu0 %v6665, 5
        %v6676 = vpop.permute.xlu0 %6675
        %6677 = vrot.lane.b32.xlu0 %v6666, 5
        %v6678 = vpop.permute.xlu0 %6677
        %v6679 = vsel %vm523, %v6672, %v6674
        %v6680 = vsel %vm523, %v6676, %v6678
        %6683 = vst [vmem:[#allocation4 + $0x168] sm:$0xff] %v6679
        %6684 = vst [vmem:[#allocation4 + $0x178] sm:$0xff] %v6680
        %v6685 = vld [vmem:[#allocation3 + $0x20] sm:$0xff]
        %v6686 = vld [vmem:[#allocation3 + $0x28] sm:$0xff]
        %v6687 = vld [vmem:[#allocation3 + $0x58] sm:$0xff]
        %v6688 = vld [vmem:[#allocation3 + $0x60] sm:$0xff]
        %6693 = vrot.lane.b32.xlu0 %v6685, 4
        %v6694 = vpop.permute.xlu0 %6693
        %6695 = vrot.lane.b32.xlu0 %v6686, 4
        %v6696 = vpop.permute.xlu0 %6695
        %6697 = vrot.lane.b32.xlu0 %v6687, 4
        %v6698 = vpop.permute.xlu0 %6697
        %6699 = vrot.lane.b32.xlu0 %v6688, 4
        %v6700 = vpop.permute.xlu0 %6699
        %v6701 = vsel %vm546, %v6694, %v6696
        %v6702 = vsel %vm546, %v6698, %v6700
        %6705 = vst [vmem:[#allocation4 + $0x188] sm:$0xff] %v6701
        %6706 = vst [vmem:[#allocation4 + $0x198] sm:$0xff] %v6702
        %v6707 = vld [vmem:[#allocation3 + $0x20] sm:$0xff]
        %v6708 = vld [vmem:[#allocation3 + $0x28] sm:$0xff]
        %v6709 = vld [vmem:[#allocation3 + $0x58] sm:$0xff]
        %v6710 = vld [vmem:[#allocation3 + $0x60] sm:$0xff]
        %6715 = vrot.lane.b32.xlu0 %v6707, 3
        %v6716 = vpop.permute.xlu0 %6715
        %6717 = vrot.lane.b32.xlu0 %v6708, 3
        %v6718 = vpop.permute.xlu0 %6717
        %6719 = vrot.lane.b32.xlu0 %v6709, 3
        %v6720 = vpop.permute.xlu0 %6719
        %6721 = vrot.lane.b32.xlu0 %v6710, 3
        %v6722 = vpop.permute.xlu0 %6721
        %v6723 = vsel %vm569, %v6716, %v6718
        %v6724 = vsel %vm569, %v6720, %v6722
        %6727 = vst [vmem:[#allocation4 + $0x1a8] sm:$0xff] %v6723
        %6728 = vst [vmem:[#allocation4 + $0x1b8] sm:$0xff] %v6724
        %v6729 = vld [vmem:[#allocation3 + $0x20] sm:$0xff]
        %v6730 = vld [vmem:[#allocation3 + $0x28] sm:$0xff]
        %v6731 = vld [vmem:[#allocation3 + $0x58] sm:$0xff]
        %v6732 = vld [vmem:[#allocation3 + $0x60] sm:$0xff]
        %6737 = vrot.lane.b32.xlu0 %v6729, 2
        %v6738 = vpop.permute.xlu0 %6737
        %6739 = vrot.lane.b32.xlu0 %v6730, 2
        %v6740 = vpop.permute.xlu0 %6739
        %6741 = vrot.lane.b32.xlu0 %v6731, 2
        %v6742 = vpop.permute.xlu0 %6741
        %6743 = vrot.lane.b32.xlu0 %v6732, 2
        %v6744 = vpop.permute.xlu0 %6743
        %v6745 = vsel %vm592, %v6738, %v6740
        %v6746 = vsel %vm592, %v6742, %v6744
        %6749 = vst [vmem:[#allocation4 + $0x1c8] sm:$0xff] %v6745
        %6750 = vst [vmem:[#allocation4 + $0x1d8] sm:$0xff] %v6746
        %v6751 = vld [vmem:[#allocation3 + $0x20] sm:$0xff]
        %v6752 = vld [vmem:[#allocation3 + $0x28] sm:$0xff]
        %v6753 = vld [vmem:[#allocation3 + $0x58] sm:$0xff]
        %v6754 = vld [vmem:[#allocation3 + $0x60] sm:$0xff]
        %6759 = vrot.lane.b32.xlu0 %v6751, 1
        %v6760 = vpop.permute.xlu0 %6759
        %6761 = vrot.lane.b32.xlu0 %v6752, 1
        %v6762 = vpop.permute.xlu0 %6761
        %6763 = vrot.lane.b32.xlu0 %v6753, 1
        %v6764 = vpop.permute.xlu0 %6763
        %6765 = vrot.lane.b32.xlu0 %v6754, 1
        %v6766 = vpop.permute.xlu0 %6765
        %v6767 = vsel %vm615, %v6760, %v6762
        %v6768 = vsel %vm615, %v6764, %v6766
        %6771 = vst [vmem:[#allocation4 + $0x1e8] sm:$0xff] %v6767
        %6772 = vst [vmem:[#allocation4 + $0x1f8] sm:$0xff] %v6768
        %v6773 = vld [vmem:[#allocation3 + $0x28] sm:$0xff]
        %v6774 = vld [vmem:[#allocation3 + $0x60] sm:$0xff]
        %6775 = vst [vmem:[#allocation4 + $0x208] sm:$0xff] %v6773
        %6776 = vst [vmem:[#allocation4 + $0x218] sm:$0xff] %v6774
        %v6777 = vld [vmem:[#allocation3 + $0x28] sm:$0xff]
        %v6778 = vld [vmem:[#allocation3 + $0x30] sm:$0xff]
        %v6779 = vld [vmem:[#allocation3 + $0x60] sm:$0xff]
        %v6780 = vld [vmem:[#allocation3 + $0x68] sm:$0xff]
        %6785 = vrot.lane.b32.xlu0 %v6777, 127
        %v6786 = vpop.permute.xlu0 %6785
        %6787 = vrot.lane.b32.xlu0 %v6778, 127
        %v6788 = vpop.permute.xlu0 %6787
        %6789 = vrot.lane.b32.xlu0 %v6779, 127
        %v6790 = vpop.permute.xlu0 %6789
        %6791 = vrot.lane.b32.xlu0 %v6780, 127
        %v6792 = vpop.permute.xlu0 %6791
        %v6793 = vsel %vm642, %v6786, %v6788
        %v6794 = vsel %vm642, %v6790, %v6792
        %6797 = vst [vmem:[#allocation4 + $0x228] sm:$0xff] %v6793
        %6798 = vst [vmem:[#allocation4 + $0x238] sm:$0xff] %v6794
        %v6799 = vld [vmem:[#allocation3 + $0x28] sm:$0xff]
        %v6800 = vld [vmem:[#allocation3 + $0x30] sm:$0xff]
        %v6801 = vld [vmem:[#allocation3 + $0x60] sm:$0xff]
        %v6802 = vld [vmem:[#allocation3 + $0x68] sm:$0xff]
        %6807 = vrot.lane.b32.xlu0 %v6799, 126
        %v6808 = vpop.permute.xlu0 %6807
        %6809 = vrot.lane.b32.xlu0 %v6800, 126
        %v6810 = vpop.permute.xlu0 %6809
        %6811 = vrot.lane.b32.xlu0 %v6801, 126
        %v6812 = vpop.permute.xlu0 %6811
        %6813 = vrot.lane.b32.xlu0 %v6802, 126
        %v6814 = vpop.permute.xlu0 %6813
        %v6815 = vsel %vm665, %v6808, %v6810
        %v6816 = vsel %vm665, %v6812, %v6814
        %6819 = vst [vmem:[#allocation4 + $0x248] sm:$0xff] %v6815
        %6820 = vst [vmem:[#allocation4 + $0x258] sm:$0xff] %v6816
        %v6821 = vld [vmem:[#allocation3 + $0x28] sm:$0xff]
        %v6822 = vld [vmem:[#allocation3 + $0x30] sm:$0xff]
        %v6823 = vld [vmem:[#allocation3 + $0x60] sm:$0xff]
        %v6824 = vld [vmem:[#allocation3 + $0x68] sm:$0xff]
        %6829 = vrot.lane.b32.xlu0 %v6821, 125
        %v6830 = vpop.permute.xlu0 %6829
        %6831 = vrot.lane.b32.xlu0 %v6822, 125
        %v6832 = vpop.permute.xlu0 %6831
        %6833 = vrot.lane.b32.xlu0 %v6823, 125
        %v6834 = vpop.permute.xlu0 %6833
        %6835 = vrot.lane.b32.xlu0 %v6824, 125
        %v6836 = vpop.permute.xlu0 %6835
        %v6837 = vsel %vm688, %v6830, %v6832
        %v6838 = vsel %vm688, %v6834, %v6836
        %6841 = vst [vmem:[#allocation4 + $0x268] sm:$0xff] %v6837
        %6842 = vst [vmem:[#allocation4 + $0x278] sm:$0xff] %v6838
        %v6843 = vld [vmem:[#allocation3 + $0x28] sm:$0xff]
        %v6844 = vld [vmem:[#allocation3 + $0x30] sm:$0xff]
        %v6845 = vld [vmem:[#allocation3 + $0x60] sm:$0xff]
        %v6846 = vld [vmem:[#allocation3 + $0x68] sm:$0xff]
        %6851 = vrot.lane.b32.xlu0 %v6843, 124
        %v6852 = vpop.permute.xlu0 %6851
        %6853 = vrot.lane.b32.xlu0 %v6844, 124
        %v6854 = vpop.permute.xlu0 %6853
        %6855 = vrot.lane.b32.xlu0 %v6845, 124
        %v6856 = vpop.permute.xlu0 %6855
        %6857 = vrot.lane.b32.xlu0 %v6846, 124
        %v6858 = vpop.permute.xlu0 %6857
        %v6859 = vsel %vm711, %v6852, %v6854
        %v6860 = vsel %vm711, %v6856, %v6858
        %6863 = vst [vmem:[#allocation4 + $0x288] sm:$0xff] %v6859
        %6864 = vst [vmem:[#allocation4 + $0x298] sm:$0xff] %v6860
        %v6865 = vld [vmem:[#allocation3 + $0x28] sm:$0xff]
        %v6866 = vld [vmem:[#allocation3 + $0x30] sm:$0xff]
        %v6867 = vld [vmem:[#allocation3 + $0x60] sm:$0xff]
        %v6868 = vld [vmem:[#allocation3 + $0x68] sm:$0xff]
        %6873 = vrot.lane.b32.xlu0 %v6865, 123
        %v6874 = vpop.permute.xlu0 %6873
        %6875 = vrot.lane.b32.xlu0 %v6866, 123
        %v6876 = vpop.permute.xlu0 %6875
        %6877 = vrot.lane.b32.xlu0 %v6867, 123
        %v6878 = vpop.permute.xlu0 %6877
        %6879 = vrot.lane.b32.xlu0 %v6868, 123
        %v6880 = vpop.permute.xlu0 %6879
        %v6881 = vsel %vm734, %v6874, %v6876
        %v6882 = vsel %vm734, %v6878, %v6880
        %6885 = vst [vmem:[#allocation4 + $0x2a8] sm:$0xff] %v6881
        %6886 = vst [vmem:[#allocation4 + $0x2b8] sm:$0xff] %v6882
        %v6887 = vld [vmem:[#allocation3 + $0x28] sm:$0xff]
        %v6888 = vld [vmem:[#allocation3 + $0x30] sm:$0xff]
        %v6889 = vld [vmem:[#allocation3 + $0x60] sm:$0xff]
        %v6890 = vld [vmem:[#allocation3 + $0x68] sm:$0xff]
        %6895 = vrot.lane.b32.xlu0 %v6887, 122
        %v6896 = vpop.permute.xlu0 %6895
        %6897 = vrot.lane.b32.xlu0 %v6888, 122
        %v6898 = vpop.permute.xlu0 %6897
        %6899 = vrot.lane.b32.xlu0 %v6889, 122
        %v6900 = vpop.permute.xlu0 %6899
        %6901 = vrot.lane.b32.xlu0 %v6890, 122
        %v6902 = vpop.permute.xlu0 %6901
        %v6903 = vsel %vm757, %v6896, %v6898
        %v6904 = vsel %vm757, %v6900, %v6902
        %6907 = vst [vmem:[#allocation4 + $0x2c8] sm:$0xff] %v6903
        %6908 = vst [vmem:[#allocation4 + $0x2d8] sm:$0xff] %v6904
        %v6909 = vld [vmem:[#allocation3 + $0x28] sm:$0xff]
        %v6910 = vld [vmem:[#allocation3 + $0x30] sm:$0xff]
        %v6911 = vld [vmem:[#allocation3 + $0x60] sm:$0xff]
        %v6912 = vld [vmem:[#allocation3 + $0x68] sm:$0xff]
        %6917 = vrot.lane.b32.xlu0 %v6909, 121
        %v6918 = vpop.permute.xlu0 %6917
        %6919 = vrot.lane.b32.xlu0 %v6910, 121
        %v6920 = vpop.permute.xlu0 %6919
        %6921 = vrot.lane.b32.xlu0 %v6911, 121
        %v6922 = vpop.permute.xlu0 %6921
        %6923 = vrot.lane.b32.xlu0 %v6912, 121
        %v6924 = vpop.permute.xlu0 %6923
        %v6925 = vsel %vm780, %v6918, %v6920
        %v6926 = vsel %vm780, %v6922, %v6924
        %6929 = vst [vmem:[#allocation4 + $0x2e8] sm:$0xff] %v6925
        %6930 = vst [vmem:[#allocation4 + $0x2f8] sm:$0xff] %v6926
        %v6931 = vld [vmem:[#allocation3 + $0x28] sm:$0xff]
        %v6932 = vld [vmem:[#allocation3 + $0x30] sm:$0xff]
        %v6933 = vld [vmem:[#allocation3 + $0x60] sm:$0xff]
        %v6934 = vld [vmem:[#allocation3 + $0x68] sm:$0xff]
        %6939 = vrot.lane.b32.xlu0 %v6931, 120
        %v6940 = vpop.permute.xlu0 %6939
        %6941 = vrot.lane.b32.xlu0 %v6932, 120
        %v6942 = vpop.permute.xlu0 %6941
        %6943 = vrot.lane.b32.xlu0 %v6933, 120
        %v6944 = vpop.permute.xlu0 %6943
        %6945 = vrot.lane.b32.xlu0 %v6934, 120
        %v6946 = vpop.permute.xlu0 %6945
        %v6947 = vsel %vm803, %v6940, %v6942
        %v6948 = vsel %vm803, %v6944, %v6946
        %6951 = vst [vmem:[#allocation4 + $0x308] sm:$0xff] %v6947
        %6952 = vst [vmem:[#allocation4 + $0x318] sm:$0xff] %v6948
        %v6953 = vld [vmem:[#allocation3 + $0x28] sm:$0xff]
        %v6954 = vld [vmem:[#allocation3 + $0x30] sm:$0xff]
        %v6955 = vld [vmem:[#allocation3 + $0x60] sm:$0xff]
        %v6956 = vld [vmem:[#allocation3 + $0x68] sm:$0xff]
        %6961 = vrot.lane.b32.xlu0 %v6953, 119
        %v6962 = vpop.permute.xlu0 %6961
        %6963 = vrot.lane.b32.xlu0 %v6954, 119
        %v6964 = vpop.permute.xlu0 %6963
        %6965 = vrot.lane.b32.xlu0 %v6955, 119
        %v6966 = vpop.permute.xlu0 %6965
        %6967 = vrot.lane.b32.xlu0 %v6956, 119
        %v6968 = vpop.permute.xlu0 %6967
        %v6969 = vsel %vm826, %v6962, %v6964
        %v6970 = vsel %vm826, %v6966, %v6968
        %6973 = vst [vmem:[#allocation4 + $0x328] sm:$0xff] %v6969
        %6974 = vst [vmem:[#allocation4 + $0x338] sm:$0xff] %v6970
        %v6975 = vld [vmem:[#allocation3 + $0x28] sm:$0xff]
        %v6976 = vld [vmem:[#allocation3 + $0x30] sm:$0xff]
        %v6977 = vld [vmem:[#allocation3 + $0x60] sm:$0xff]
        %v6978 = vld [vmem:[#allocation3 + $0x68] sm:$0xff]
        %6983 = vrot.lane.b32.xlu0 %v6975, 118
        %v6984 = vpop.permute.xlu0 %6983
        %6985 = vrot.lane.b32.xlu0 %v6976, 118
        %v6986 = vpop.permute.xlu0 %6985
        %6987 = vrot.lane.b32.xlu0 %v6977, 118
        %v6988 = vpop.permute.xlu0 %6987
        %6989 = vrot.lane.b32.xlu0 %v6978, 118
        %v6990 = vpop.permute.xlu0 %6989
        %v6991 = vsel %vm849, %v6984, %v6986
        %v6992 = vsel %vm849, %v6988, %v6990
        %6995 = vst [vmem:[#allocation4 + $0x348] sm:$0xff] %v6991
        %6996 = vst [vmem:[#allocation4 + $0x358] sm:$0xff] %v6992
        %v6997 = vld [vmem:[#allocation3 + $0x28] sm:$0xff]
        %v6998 = vld [vmem:[#allocation3 + $0x30] sm:$0xff]
        %v6999 = vld [vmem:[#allocation3 + $0x60] sm:$0xff]
        %v7000 = vld [vmem:[#allocation3 + $0x68] sm:$0xff]
        %7005 = vrot.lane.b32.xlu0 %v6997, 117
        %v7006 = vpop.permute.xlu0 %7005
        %7007 = vrot.lane.b32.xlu0 %v6998, 117
        %v7008 = vpop.permute.xlu0 %7007
        %7009 = vrot.lane.b32.xlu0 %v6999, 117
        %v7010 = vpop.permute.xlu0 %7009
        %7011 = vrot.lane.b32.xlu0 %v7000, 117
        %v7012 = vpop.permute.xlu0 %7011
        %v7013 = vsel %vm872, %v7006, %v7008
        %v7014 = vsel %vm872, %v7010, %v7012
        %7017 = vst [vmem:[#allocation4 + $0x368] sm:$0xff] %v7013
        %7018 = vst [vmem:[#allocation4 + $0x378] sm:$0xff] %v7014
        %v7019 = vld [vmem:[#allocation3 + $0x28] sm:$0xff]
        %v7020 = vld [vmem:[#allocation3 + $0x30] sm:$0xff]
        %v7021 = vld [vmem:[#allocation3 + $0x60] sm:$0xff]
        %v7022 = vld [vmem:[#allocation3 + $0x68] sm:$0xff]
        %7027 = vrot.lane.b32.xlu0 %v7019, 116
        %v7028 = vpop.permute.xlu0 %7027
        %7029 = vrot.lane.b32.xlu0 %v7020, 116
        %v7030 = vpop.permute.xlu0 %7029
        %7031 = vrot.lane.b32.xlu0 %v7021, 116
        %v7032 = vpop.permute.xlu0 %7031
        %7033 = vrot.lane.b32.xlu0 %v7022, 116
        %v7034 = vpop.permute.xlu0 %7033
        %v7035 = vsel %vm895, %v7028, %v7030
        %v7036 = vsel %vm895, %v7032, %v7034
        %7039 = vst [vmem:[#allocation4 + $0x388] sm:$0xff] %v7035
        %7040 = vst [vmem:[#allocation4 + $0x398] sm:$0xff] %v7036
        %v7041 = vld [vmem:[#allocation3 + $0x28] sm:$0xff]
        %v7042 = vld [vmem:[#allocation3 + $0x30] sm:$0xff]
        %v7043 = vld [vmem:[#allocation3 + $0x60] sm:$0xff]
        %v7044 = vld [vmem:[#allocation3 + $0x68] sm:$0xff]
        %7049 = vrot.lane.b32.xlu0 %v7041, 115
        %v7050 = vpop.permute.xlu0 %7049
        %7051 = vrot.lane.b32.xlu0 %v7042, 115
        %v7052 = vpop.permute.xlu0 %7051
        %7053 = vrot.lane.b32.xlu0 %v7043, 115
        %v7054 = vpop.permute.xlu0 %7053
        %7055 = vrot.lane.b32.xlu0 %v7044, 115
        %v7056 = vpop.permute.xlu0 %7055
        %v7057 = vsel %vm918, %v7050, %v7052
        %v7058 = vsel %vm918, %v7054, %v7056
        %7061 = vst [vmem:[#allocation4 + $0x3a8] sm:$0xff] %v7057
        %7062 = vst [vmem:[#allocation4 + $0x3b8] sm:$0xff] %v7058
        %v7063 = vld [vmem:[#allocation3 + $0x28] sm:$0xff]
        %v7064 = vld [vmem:[#allocation3 + $0x30] sm:$0xff]
        %v7065 = vld [vmem:[#allocation3 + $0x60] sm:$0xff]
        %v7066 = vld [vmem:[#allocation3 + $0x68] sm:$0xff]
        %7071 = vrot.lane.b32.xlu0 %v7063, 114
        %v7072 = vpop.permute.xlu0 %7071
        %7073 = vrot.lane.b32.xlu0 %v7064, 114
        %v7074 = vpop.permute.xlu0 %7073
        %7075 = vrot.lane.b32.xlu0 %v7065, 114
        %v7076 = vpop.permute.xlu0 %7075
        %7077 = vrot.lane.b32.xlu0 %v7066, 114
        %v7078 = vpop.permute.xlu0 %7077
        %v7079 = vsel %vm941, %v7072, %v7074
        %v7080 = vsel %vm941, %v7076, %v7078
        %7083 = vst [vmem:[#allocation4 + $0x3c8] sm:$0xff] %v7079
        %7084 = vst [vmem:[#allocation4 + $0x3d8] sm:$0xff] %v7080
        %v7085 = vld [vmem:[#allocation3 + $0x28] sm:$0xff]
        %v7086 = vld [vmem:[#allocation3 + $0x30] sm:$0xff]
        %v7087 = vld [vmem:[#allocation3 + $0x60] sm:$0xff]
        %v7088 = vld [vmem:[#allocation3 + $0x68] sm:$0xff]
        %7093 = vrot.lane.b32.xlu0 %v7085, 113
        %v7094 = vpop.permute.xlu0 %7093
        %7095 = vrot.lane.b32.xlu0 %v7086, 113
        %v7096 = vpop.permute.xlu0 %7095
        %7097 = vrot.lane.b32.xlu0 %v7087, 113
        %v7098 = vpop.permute.xlu0 %7097
        %7099 = vrot.lane.b32.xlu0 %v7088, 113
        %v7100 = vpop.permute.xlu0 %7099
        %v7101 = vsel %vm964, %v7094, %v7096
        %v7102 = vsel %vm964, %v7098, %v7100
        %7105 = vst [vmem:[#allocation4 + $0x3e8] sm:$0xff] %v7101
        %7106 = vst [vmem:[#allocation4 + $0x3f8] sm:$0xff] %v7102
        %v7107 = vld [vmem:[#allocation3 + $0x28] sm:$0xff]
        %v7108 = vld [vmem:[#allocation3 + $0x30] sm:$0xff]
        %v7109 = vld [vmem:[#allocation3 + $0x60] sm:$0xff]
        %v7110 = vld [vmem:[#allocation3 + $0x68] sm:$0xff]
        %7115 = vrot.lane.b32.xlu0 %v7107, 112
        %v7116 = vpop.permute.xlu0 %7115
        %7117 = vrot.lane.b32.xlu0 %v7108, 112
        %v7118 = vpop.permute.xlu0 %7117
        %7119 = vrot.lane.b32.xlu0 %v7109, 112
        %v7120 = vpop.permute.xlu0 %7119
        %7121 = vrot.lane.b32.xlu0 %v7110, 112
        %v7122 = vpop.permute.xlu0 %7121
        %v7123 = vsel %vm987, %v7116, %v7118
        %v7124 = vsel %vm987, %v7120, %v7122
        %7127 = vst [vmem:[#allocation4 + $0x408] sm:$0xff] %v7123
        %7128 = vst [vmem:[#allocation4 + $0x418] sm:$0xff] %v7124
        %v7129 = vld [vmem:[#allocation10] sm:$0xff]
        %v7130 = vld [vmem:[#allocation10 + $0x8] sm:$0xff]
        %v7131 = vld [vmem:[#allocation10 + $0x10] sm:$0xff]
        %v7132 = vld [vmem:[#allocation10 + $0x18] sm:$0xff]
        %v7133 = vld [vmem:[#allocation10 + $0x20] sm:$0xff]
        %v7134 = vld [vmem:[#allocation10 + $0x28] sm:$0xff]
        %v7135 = vld [vmem:[#allocation10 + $0x30] sm:$0xff]
        %v7136 = vld [vmem:[#allocation10 + $0x38] sm:$0xff]
        %v7137 = vld [vmem:[#allocation10 + $0x40] sm:$0xff]
        %v7138 = vld [vmem:[#allocation10 + $0x48] sm:$0xff]
        %v7139 = vld [vmem:[#allocation4] sm:$0xff]
        %v7140 = vld [vmem:[#allocation4 + $0x8] sm:$0xff]
        %v7141 = vld [vmem:[#allocation4 + $0x10] sm:$0xff]
        %v7142 = vld [vmem:[#allocation4 + $0x18] sm:$0xff]
        %v7143 = vld [vmem:[#allocation4 + $0x20] sm:$0xff]
        %v7144 = vld [vmem:[#allocation4 + $0x28] sm:$0xff]
        %v7145 = vld [vmem:[#allocation4 + $0x30] sm:$0xff]
        %v7146 = vld [vmem:[#allocation4 + $0x38] sm:$0xff]
        %v7147 = vld [vmem:[#allocation4 + $0x40] sm:$0xff]
        %v7148 = vld [vmem:[#allocation4 + $0x48] sm:$0xff]
        %v7149 = vld [vmem:[#allocation4 + $0x50] sm:$0xff]
        %v7150 = vld [vmem:[#allocation4 + $0x58] sm:$0xff]
        %v7151 = vld [vmem:[#allocation4 + $0x60] sm:$0xff]
        %v7152 = vld [vmem:[#allocation4 + $0x68] sm:$0xff]
        %v7153 = vld [vmem:[#allocation4 + $0x70] sm:$0xff]
        %v7154 = vld [vmem:[#allocation4 + $0x78] sm:$0xff]
        %v7155 = vld [vmem:[#allocation4 + $0x80] sm:$0xff]
        %v7156 = vld [vmem:[#allocation4 + $0x88] sm:$0xff]
        %v7157 = vld [vmem:[#allocation4 + $0x90] sm:$0xff]
        %v7158 = vld [vmem:[#allocation4 + $0x98] sm:$0xff]
        %v7159 = vld [vmem:[#allocation4 + $0xa0] sm:$0xff]
        %v7160 = vld [vmem:[#allocation4 + $0xa8] sm:$0xff]
        %v7161 = vld [vmem:[#allocation4 + $0xb0] sm:$0xff]
        %v7162 = vld [vmem:[#allocation4 + $0xb8] sm:$0xff]
        %v7163 = vld [vmem:[#allocation4 + $0xc0] sm:$0xff]
        %v7164 = vld [vmem:[#allocation4 + $0xc8] sm:$0xff]
        %v7165 = vld [vmem:[#allocation4 + $0xd0] sm:$0xff]
        %v7166 = vld [vmem:[#allocation4 + $0xd8] sm:$0xff]
        %v7167 = vld [vmem:[#allocation4 + $0xe0] sm:$0xff]
        %v7168 = vld [vmem:[#allocation4 + $0xe8] sm:$0xff]
        %v7169 = vld [vmem:[#allocation4 + $0xf0] sm:$0xff]
        %v7170 = vld [vmem:[#allocation4 + $0xf8] sm:$0xff]
        %v7171 = vld [vmem:[#allocation4 + $0x100] sm:$0xff]
        %v7172 = vld [vmem:[#allocation4 + $0x108] sm:$0xff]
        %v7173 = vld [vmem:[#allocation4 + $0x110] sm:$0xff]
        %v7174 = vld [vmem:[#allocation4 + $0x118] sm:$0xff]
        %v7175 = vld [vmem:[#allocation4 + $0x120] sm:$0xff]
        %v7176 = vld [vmem:[#allocation4 + $0x128] sm:$0xff]
        %v7177 = vld [vmem:[#allocation4 + $0x130] sm:$0xff]
        %v7178 = vld [vmem:[#allocation4 + $0x138] sm:$0xff]
        %v7179 = vld [vmem:[#allocation4 + $0x140] sm:$0xff]
        %v7180 = vld [vmem:[#allocation4 + $0x148] sm:$0xff]
        %v7181 = vld [vmem:[#allocation4 + $0x150] sm:$0xff]
        %v7182 = vld [vmem:[#allocation4 + $0x158] sm:$0xff]
        %v7183 = vld [vmem:[#allocation4 + $0x160] sm:$0xff]
        %v7184 = vld [vmem:[#allocation4 + $0x168] sm:$0xff]
        %v7185 = vld [vmem:[#allocation4 + $0x170] sm:$0xff]
        %v7186 = vld [vmem:[#allocation4 + $0x178] sm:$0xff]
        %v7187 = vld [vmem:[#allocation4 + $0x180] sm:$0xff]
        %v7188 = vld [vmem:[#allocation4 + $0x188] sm:$0xff]
        %v7189 = vld [vmem:[#allocation4 + $0x190] sm:$0xff]
        %v7190 = vld [vmem:[#allocation4 + $0x198] sm:$0xff]
        %v7191 = vld [vmem:[#allocation4 + $0x1a0] sm:$0xff]
        %v7192 = vld [vmem:[#allocation4 + $0x1a8] sm:$0xff]
        %v7193 = vld [vmem:[#allocation4 + $0x1b0] sm:$0xff]
        %v7194 = vld [vmem:[#allocation4 + $0x1b8] sm:$0xff]
        %v7195 = vld [vmem:[#allocation4 + $0x1c0] sm:$0xff]
        %v7196 = vld [vmem:[#allocation4 + $0x1c8] sm:$0xff]
        %v7197 = vld [vmem:[#allocation4 + $0x1d0] sm:$0xff]
        %v7198 = vld [vmem:[#allocation4 + $0x1d8] sm:$0xff]
        %v7199 = vld [vmem:[#allocation4 + $0x1e0] sm:$0xff]
        %v7200 = vld [vmem:[#allocation4 + $0x1e8] sm:$0xff]
        %v7201 = vld [vmem:[#allocation4 + $0x1f0] sm:$0xff]
        %v7202 = vld [vmem:[#allocation4 + $0x1f8] sm:$0xff]
        %v7203 = vld [vmem:[#allocation4 + $0x200] sm:$0xff]
        %v7204 = vld [vmem:[#allocation4 + $0x208] sm:$0xff]
        %v7205 = vld [vmem:[#allocation4 + $0x210] sm:$0xff]
        %v7206 = vld [vmem:[#allocation4 + $0x218] sm:$0xff]
        %v7207 = vld [vmem:[#allocation4 + $0x220] sm:$0xff]
        %v7208 = vld [vmem:[#allocation4 + $0x228] sm:$0xff]
        %v7209 = vld [vmem:[#allocation4 + $0x230] sm:$0xff]
        %v7210 = vld [vmem:[#allocation4 + $0x238] sm:$0xff]
        %v7211 = vld [vmem:[#allocation4 + $0x240] sm:$0xff]
        %v7212 = vld [vmem:[#allocation4 + $0x248] sm:$0xff]
        %v7213 = vld [vmem:[#allocation4 + $0x250] sm:$0xff]
        %v7214 = vld [vmem:[#allocation4 + $0x258] sm:$0xff]
        %v7215 = vld [vmem:[#allocation4 + $0x260] sm:$0xff]
        %v7216 = vld [vmem:[#allocation4 + $0x268] sm:$0xff]
        %v7217 = vld [vmem:[#allocation4 + $0x270] sm:$0xff]
        %v7218 = vld [vmem:[#allocation4 + $0x278] sm:$0xff]
        %v7219 = vld [vmem:[#allocation4 + $0x280] sm:$0xff]
        %v7220 = vld [vmem:[#allocation4 + $0x288] sm:$0xff]
        %v7221 = vld [vmem:[#allocation4 + $0x290] sm:$0xff]
        %v7222 = vld [vmem:[#allocation4 + $0x298] sm:$0xff]
        %v7223 = vld [vmem:[#allocation4 + $0x2a0] sm:$0xff]
        %v7224 = vld [vmem:[#allocation4 + $0x2a8] sm:$0xff]
        %v7225 = vld [vmem:[#allocation4 + $0x2b0] sm:$0xff]
        %v7226 = vld [vmem:[#allocation4 + $0x2b8] sm:$0xff]
        %v7227 = vld [vmem:[#allocation4 + $0x2c0] sm:$0xff]
        %v7228 = vld [vmem:[#allocation4 + $0x2c8] sm:$0xff]
        %v7229 = vld [vmem:[#allocation4 + $0x2d0] sm:$0xff]
        %v7230 = vld [vmem:[#allocation4 + $0x2d8] sm:$0xff]
        %v7231 = vld [vmem:[#allocation4 + $0x2e0] sm:$0xff]
        %v7232 = vld [vmem:[#allocation4 + $0x2e8] sm:$0xff]
        %v7233 = vld [vmem:[#allocation4 + $0x2f0] sm:$0xff]
        %v7234 = vld [vmem:[#allocation4 + $0x2f8] sm:$0xff]
        %v7235 = vld [vmem:[#allocation4 + $0x300] sm:$0xff]
        %v7236 = vld [vmem:[#allocation4 + $0x308] sm:$0xff]
        %v7237 = vld [vmem:[#allocation4 + $0x310] sm:$0xff]
        %v7238 = vld [vmem:[#allocation4 + $0x318] sm:$0xff]
        %v7239 = vld [vmem:[#allocation4 + $0x320] sm:$0xff]
        %v7240 = vld [vmem:[#allocation4 + $0x328] sm:$0xff]
        %v7241 = vld [vmem:[#allocation4 + $0x330] sm:$0xff]
        %v7242 = vld [vmem:[#allocation4 + $0x338] sm:$0xff]
        %v7243 = vld [vmem:[#allocation4 + $0x340] sm:$0xff]
        %v7244 = vld [vmem:[#allocation4 + $0x348] sm:$0xff]
        %v7245 = vld [vmem:[#allocation4 + $0x350] sm:$0xff]
        %v7246 = vld [vmem:[#allocation4 + $0x358] sm:$0xff]
        %v7247 = vld [vmem:[#allocation4 + $0x360] sm:$0xff]
        %v7248 = vld [vmem:[#allocation4 + $0x368] sm:$0xff]
        %v7249 = vld [vmem:[#allocation4 + $0x370] sm:$0xff]
        %v7250 = vld [vmem:[#allocation4 + $0x378] sm:$0xff]
        %v7251 = vld [vmem:[#allocation4 + $0x380] sm:$0xff]
        %v7252 = vld [vmem:[#allocation4 + $0x388] sm:$0xff]
        %v7253 = vld [vmem:[#allocation4 + $0x390] sm:$0xff]
        %v7254 = vld [vmem:[#allocation4 + $0x398] sm:$0xff]
        %v7255 = vld [vmem:[#allocation4 + $0x3a0] sm:$0xff]
        %v7256 = vld [vmem:[#allocation4 + $0x3a8] sm:$0xff]
        %v7257 = vld [vmem:[#allocation4 + $0x3b0] sm:$0xff]
        %v7258 = vld [vmem:[#allocation4 + $0x3b8] sm:$0xff]
        %v7259 = vld [vmem:[#allocation4 + $0x3c0] sm:$0xff]
        %v7260 = vld [vmem:[#allocation4 + $0x3c8] sm:$0xff]
        %v7261 = vld [vmem:[#allocation4 + $0x3d0] sm:$0xff]
        %v7262 = vld [vmem:[#allocation4 + $0x3d8] sm:$0xff]
        %v7263 = vld [vmem:[#allocation4 + $0x3e0] sm:$0xff]
        %v7264 = vld [vmem:[#allocation4 + $0x3e8] sm:$0xff]
        %v7265 = vld [vmem:[#allocation4 + $0x3f0] sm:$0xff]
        %v7266 = vld [vmem:[#allocation4 + $0x3f8] sm:$0xff]
        %v7267 = vld [vmem:[#allocation4 + $0x400] sm:$0xff]
        %v7268 = vld [vmem:[#allocation4 + $0x408] sm:$0xff]
        %v7269 = vld [vmem:[#allocation4 + $0x410] sm:$0xff]
        %v7270 = vld [vmem:[#allocation4 + $0x418] sm:$0xff]
        %v7271 = vld [vmem:[#allocation4 + $0x420] sm:$0xff]
        %v7272 = vld [vmem:[#allocation4 + $0x428] sm:$0xff]
        %v7273 = vld [vmem:[#allocation4 + $0x430] sm:$0xff]
        %v7274 = vld [vmem:[#allocation4 + $0x438] sm:$0xff]
        %v7276 = vsel %vm1848, %v7133, 0
        %v7279 = vsel %vm1848, %v7138, 0
        %7281 = vmatprep.subr.mxu0 %v7140
        %7282 = vmatpush1.msra.mxu0 %v7139
        %7283 = vmatprep.subr.mxu0 %v7142
        %7284 = vmatpush1.msra.mxu0 %v7141
        %7285 = vmatprep.subr.mxu0 %v7144
        %7286 = vmatpush1.msra.mxu0 %v7143
        %7287 = vmatprep.subr.mxu0 %v7146
        %7288 = vmatpush1.msra.mxu0 %v7145
        %7289 = vmatprep.subr.mxu0 %v7148
        %7290 = vmatpush1.msra.mxu0 %v7147
        %7291 = vmatprep.subr.mxu0 %v7150
        %7292 = vmatpush1.msra.mxu0 %v7149
        %7293 = vmatprep.subr.mxu0 %v7152
        %7294 = vmatpush1.msra.mxu0 %v7151
        %7295 = vmatprep.subr.mxu0 %v7154
        %7296 = vmatpush1.msra.mxu0 %v7153
        %7297 = vmatprep.subr.mxu0 %v7156
        %7298 = vmatpush1.msra.mxu0 %v7155
        %7299 = vmatprep.subr.mxu0 %v7158
        %7300 = vmatpush1.msra.mxu0 %v7157
        %7301 = vmatprep.subr.mxu0 %v7160
        %7302 = vmatpush1.msra.mxu0 %v7159
        %7303 = vmatprep.subr.mxu0 %v7162
        %7304 = vmatpush1.msra.mxu0 %v7161
        %7305 = vmatprep.subr.mxu0 %v7164
        %7306 = vmatpush1.msra.mxu0 %v7163
        %7307 = vmatprep.subr.mxu0 %v7166
        %7308 = vmatpush1.msra.mxu0 %v7165
        %7309 = vmatprep.subr.mxu0 %v7168
        %7310 = vmatpush1.msra.mxu0 %v7167
        %7311 = vmatprep.subr.mxu0 %v7170
        %7312 = vmatpush1.msra.mxu0 %v7169
        %7313 = vmatprep.subr.mxu0 %v7172
        %7314 = vmatpush1.msra.mxu0 %v7171
        %7315 = vmatprep.subr.mxu0 %v7174
        %7316 = vmatpush1.msra.mxu0 %v7173
        %7317 = vmatprep.subr.mxu0 %v7176
        %7318 = vmatpush1.msra.mxu0 %v7175
        %7319 = vmatprep.subr.mxu0 %v7178
        %7320 = vmatpush1.msra.mxu0 %v7177
        %7321 = vmatprep.subr.mxu0 %v7180
        %7322 = vmatpush1.msra.mxu0 %v7179
        %7323 = vmatprep.subr.mxu0 %v7182
        %7324 = vmatpush1.msra.mxu0 %v7181
        %7325 = vmatprep.subr.mxu0 %v7184
        %7326 = vmatpush1.msra.mxu0 %v7183
        %7327 = vmatprep.subr.mxu0 %v7186
        %7328 = vmatpush1.msra.mxu0 %v7185
        %7329 = vmatprep.subr.mxu0 %v7188
        %7330 = vmatpush1.msra.mxu0 %v7187
        %7331 = vmatprep.subr.mxu0 %v7190
        %7332 = vmatpush1.msra.mxu0 %v7189
        %7333 = vmatprep.subr.mxu0 %v7192
        %7334 = vmatpush1.msra.mxu0 %v7191
        %7335 = vmatprep.subr.mxu0 %v7194
        %7336 = vmatpush1.msra.mxu0 %v7193
        %7337 = vmatprep.subr.mxu0 %v7196
        %7338 = vmatpush1.msra.mxu0 %v7195
        %7339 = vmatprep.subr.mxu0 %v7198
        %7340 = vmatpush1.msra.mxu0 %v7197
        %7341 = vmatprep.subr.mxu0 %v7200
        %7342 = vmatpush1.msra.mxu0 %v7199
        %7343 = vmatprep.subr.mxu0 %v7202
        %7344 = vmatpush1.msra.mxu0 %v7201
        %7345 = vmatprep.mubr.f32.mxu0 %v7130
        %7346 = vmatmul.mubr.f32.gmra.mrb[0].mxu0 %v7129
        %v7347 = vpop.f32.mrb[0].mxu0
        %v7348 = vadd.f32 0.0, %v7347
        %v7349 = vpop.f32.mrb[0].mxu0
        %v7350 = vadd.f32 0.0, %v7349
        %7351 = vmatprep.mubr.f32.mxu0 %v7135
        %7352 = vmatmul.mubr.f32.gmra.mrb[0].mxu0 %v7134
        %v7353 = vpop.f32.mrb[0].mxu0
        %v7354 = vadd.f32 0.0, %v7353
        %v7355 = vpop.f32.mrb[0].mxu0
        %v7356 = vadd.f32 0.0, %v7355
        %7357 = vdwg.mxu0
        %7358 = vmatprep.subr.mxu0 %v7204
        %7359 = vmatpush1.msra.mxu0 %v7203
        %7360 = vmatprep.subr.mxu0 %v7206
        %7361 = vmatpush1.msra.mxu0 %v7205
        %7362 = vmatprep.subr.mxu0 %v7208
        %7363 = vmatpush1.msra.mxu0 %v7207
        %7364 = vmatprep.subr.mxu0 %v7210
        %7365 = vmatpush1.msra.mxu0 %v7209
        %7366 = vmatprep.subr.mxu0 %v7212
        %7367 = vmatpush1.msra.mxu0 %v7211
        %7368 = vmatprep.subr.mxu0 %v7214
        %7369 = vmatpush1.msra.mxu0 %v7213
        %7370 = vmatprep.subr.mxu0 %v7216
        %7371 = vmatpush1.msra.mxu0 %v7215
        %7372 = vmatprep.subr.mxu0 %v7218
        %7373 = vmatpush1.msra.mxu0 %v7217
        %7374 = vmatprep.subr.mxu0 %v7220
        %7375 = vmatpush1.msra.mxu0 %v7219
        %7376 = vmatprep.subr.mxu0 %v7222
        %7377 = vmatpush1.msra.mxu0 %v7221
        %7378 = vmatprep.subr.mxu0 %v7224
        %7379 = vmatpush1.msra.mxu0 %v7223
        %7380 = vmatprep.subr.mxu0 %v7226
        %7381 = vmatpush1.msra.mxu0 %v7225
        %7382 = vmatprep.subr.mxu0 %v7228
        %7383 = vmatpush1.msra.mxu0 %v7227
        %7384 = vmatprep.subr.mxu0 %v7230
        %7385 = vmatpush1.msra.mxu0 %v7229
        %7386 = vmatprep.subr.mxu0 %v7232
        %7387 = vmatpush1.msra.mxu0 %v7231
        %7388 = vmatprep.subr.mxu0 %v7234
        %7389 = vmatpush1.msra.mxu0 %v7233
        %7390 = vmatprep.subr.mxu0 %v7236
        %7391 = vmatpush1.msra.mxu0 %v7235
        %7392 = vmatprep.subr.mxu0 %v7238
        %7393 = vmatpush1.msra.mxu0 %v7237
        %7394 = vmatprep.subr.mxu0 %v7240
        %7395 = vmatpush1.msra.mxu0 %v7239
        %7396 = vmatprep.subr.mxu0 %v7242
        %7397 = vmatpush1.msra.mxu0 %v7241
        %7398 = vmatprep.subr.mxu0 %v7244
        %7399 = vmatpush1.msra.mxu0 %v7243
        %7400 = vmatprep.subr.mxu0 %v7246
        %7401 = vmatpush1.msra.mxu0 %v7245
        %7402 = vmatprep.subr.mxu0 %v7248
        %7403 = vmatpush1.msra.mxu0 %v7247
        %7404 = vmatprep.subr.mxu0 %v7250
        %7405 = vmatpush1.msra.mxu0 %v7249
        %7406 = vmatprep.subr.mxu0 %v7252
        %7407 = vmatpush1.msra.mxu0 %v7251
        %7408 = vmatprep.subr.mxu0 %v7254
        %7409 = vmatpush1.msra.mxu0 %v7253
        %7410 = vmatprep.subr.mxu0 %v7256
        %7411 = vmatpush1.msra.mxu0 %v7255
        %7412 = vmatprep.subr.mxu0 %v7258
        %7413 = vmatpush1.msra.mxu0 %v7257
        %7414 = vmatprep.subr.mxu0 %v7260
        %7415 = vmatpush1.msra.mxu0 %v7259
        %7416 = vmatprep.subr.mxu0 %v7262
        %7417 = vmatpush1.msra.mxu0 %v7261
        %7418 = vmatprep.subr.mxu0 %v7264
        %7419 = vmatpush1.msra.mxu0 %v7263
        %7420 = vmatprep.subr.mxu0 %v7266
        %7421 = vmatpush1.msra.mxu0 %v7265
        %7422 = vmatprep.mubr.f32.mxu0 %v7132
        %7423 = vmatmul.mubr.f32.gmra.mrb[0].mxu0 %v7131
        %v7424 = vpop.f32.mrb[0].mxu0
        %v7425 = vadd.f32 %v7348, %v7424
        %v7426 = vpop.f32.mrb[0].mxu0
        %v7427 = vadd.f32 %v7350, %v7426
        %7428 = vmatprep.mubr.f32.mxu0 %v7137
        %7429 = vmatmul.mubr.f32.gmra.mrb[0].mxu0 %v7136
        %v7430 = vpop.f32.mrb[0].mxu0
        %v7431 = vadd.f32 %v7354, %v7430
        %v7432 = vpop.f32.mrb[0].mxu0
        %v7433 = vadd.f32 %v7356, %v7432
        %7434 = vdwg.mxu0
        %7435 = vmatprep.subr.mxu0 %v7268
        %7436 = vmatpush1.msra.mxu0 %v7267
        %7437 = vmatprep.subr.mxu0 %v7270
        %7438 = vmatpush1.msra.mxu0 %v7269
        %7439 = vmatprep.subr.mxu0 %v7272
        %7440 = vmatpush1.msra.mxu0 %v7271
        %7441 = vmatprep.subr.mxu0 %v7274
        %7442 = vmatpush1.msra.mxu0 %v7273
        %7443 = vmatprep.subr.mxu0 0.0
        %7444 = vmatpush1.msra.mxu0 0.0
        %7445 = vmatprep.subr.mxu0 0.0
        %7446 = vmatpush1.msra.mxu0 0.0
        %7447 = vmatprep.subr.mxu0 0.0
        %7448 = vmatpush1.msra.mxu0 0.0
        %7449 = vmatprep.subr.mxu0 0.0
        %7450 = vmatpush1.msra.mxu0 0.0
        %7451 = vmatprep.subr.mxu0 0.0
        %7452 = vmatpush1.msra.mxu0 0.0
        %7453 = vmatprep.subr.mxu0 0.0
        %7454 = vmatpush1.msra.mxu0 0.0
        %7455 = vmatprep.subr.mxu0 0.0
        %7456 = vmatpush1.msra.mxu0 0.0
        %7457 = vmatprep.subr.mxu0 0.0
        %7458 = vmatpush1.msra.mxu0 0.0
        %7459 = vmatprep.subr.mxu0 0.0
        %7460 = vmatpush1.msra.mxu0 0.0
        %7461 = vmatprep.subr.mxu0 0.0
        %7462 = vmatpush1.msra.mxu0 0.0
        %7463 = vmatprep.subr.mxu0 0.0
        %7464 = vmatpush1.msra.mxu0 0.0
        %7465 = vmatprep.subr.mxu0 0.0
        %7466 = vmatpush1.msra.mxu0 0.0
        %7467 = vmatprep.subr.mxu0 0.0
        %7468 = vmatpush1.msra.mxu0 0.0
        %7469 = vmatprep.subr.mxu0 0.0
        %7470 = vmatpush1.msra.mxu0 0.0
        %7471 = vmatprep.subr.mxu0 0.0
        %7472 = vmatpush1.msra.mxu0 0.0
        %7473 = vmatprep.subr.mxu0 0.0
        %7474 = vmatpush1.msra.mxu0 0.0
        %7475 = vmatprep.subr.mxu0 0.0
        %7476 = vmatpush1.msra.mxu0 0.0
        %7477 = vmatprep.subr.mxu0 0.0
        %7478 = vmatpush1.msra.mxu0 0.0
        %7479 = vmatprep.subr.mxu0 0.0
        %7480 = vmatpush1.msra.mxu0 0.0
        %7481 = vmatprep.subr.mxu0 0.0
        %7482 = vmatpush1.msra.mxu0 0.0
        %7483 = vmatprep.subr.mxu0 0.0
        %7484 = vmatpush1.msra.mxu0 0.0
        %7485 = vmatprep.subr.mxu0 0.0
        %7486 = vmatpush1.msra.mxu0 0.0
        %7487 = vmatprep.subr.mxu0 0.0
        %7488 = vmatpush1.msra.mxu0 0.0
        %7489 = vmatprep.subr.mxu0 0.0
        %7490 = vmatpush1.msra.mxu0 0.0
        %7491 = vmatprep.subr.mxu0 0.0
        %7492 = vmatpush1.msra.mxu0 0.0
        %7493 = vmatprep.subr.mxu0 0.0
        %7494 = vmatpush1.msra.mxu0 0.0
        %7495 = vmatprep.subr.mxu0 0.0
        %7496 = vmatpush1.msra.mxu0 0.0
        %7497 = vmatprep.subr.mxu0 0.0
        %7498 = vmatpush1.msra.mxu0 0.0
        %7499 = vmatprep.mubr.f32.mxu0 0.0
        %7500 = vmatmul.mubr.f32.gmra.mrb[0].mxu0 %v7276
        %v7501 = vpop.f32.mrb[0].mxu0
        %v7502 = vadd.f32 %v7425, %v7501
        %v7503 = vpop.f32.mrb[0].mxu0
        %v7504 = vadd.f32 %v7427, %v7503
        %7505 = vmatprep.mubr.f32.mxu0 0.0
        %7506 = vmatmul.mubr.f32.gmra.mrb[0].mxu0 %v7279
        %v7507 = vpop.f32.mrb[0].mxu0
        %v7508 = vadd.f32 %v7431, %v7507
        %v7509 = vpop.f32.mrb[0].mxu0
        %v7510 = vadd.f32 %v7433, %v7509
        %7511 = vdwg.mxu0
        %v7512 = vld [vmem:[%s188 + $0x8] sm:$0xff]
        %v7513 = vld [vmem:[%s188 + $0x18] sm:$0xff]
        %v7514 = vadd.f32 %v7502, %v7512
        %v7515 = vadd.f32 %v7508, %v7513
        %7516 = vst [vmem:[%s218 + $0x8] sm:$0xff] %v7514
        %7517 = vst [vmem:[%s218 + $0x18] sm:$0xff] %v7515
        %v7518 = vld [vmem:[%s245 + $0x8] sm:$0xff]
        %v7519 = vld [vmem:[%s245 + $0x18] sm:$0xff]
        %v7520 = vadd.f32 %v7504, %v7518
        %v7521 = vadd.f32 %v7510, %v7519
        %7522 = vst [vmem:[%s5710 + $0x8] sm:$0xff] %v7520
        %7523 = vst [vmem:[%s5710 + $0x18] sm:$0xff] %v7521
        %s7524 = sand.u32 %s97, 1
        %s7525 = scalar_lea.sflag [#allocation7], %s7524
        %s7526 = sand.u32 %s97, 1
        %s7527 = smul.addr %s7526, 64
        %s7528 = scalar_lea.vmem [#allocation11], %s7527
        // Predicated region
        $region45: #{residual_block.1} parent=31 // pred_check
          %p7529 = pneg %p107
        $region46: #{residual_block.1} parent=31 // pred_check_branch
          %7531 = sbr.rel (%p7529) target = $region48
        $region47: #{residual_block.1} parent=31 // pred_region
          %s7532 = smul.u32 2, %s21
          %s7534 = ssub.s32 1024, 1024
          %7535 = vsyncadd %s7525, %s7534
          %s7536 = smul.addr %s7532, 4
          %s7537 = smul.addr %s7536, 128
          %s7538 = scalar_lea.hbm %s3, %s7537
          %s7539 = sshll.u32 %s7528, 4
          %s7540 = int_to_ptr.vmem [resolvable:$true] %s7539
          %7545 = dma.vmem_to_hbm [thread:$0]  %s7540, 1024, %s7538, %s7525, 256, 256, 16
        $region48: #{residual_block.1} parent=31 // pred_fallthru
          _
      $region32: #{residual_block.1} parent=5 // pred_fallthru
        _
      %p7546 = scmp.le.s32.totalorder 2, %s16
      // Predicated region
      $region49: #{residual_block.1} parent=5 // pred_check
        %p7547 = pneg %p7546
      $region50: #{residual_block.1} parent=5 // pred_check_branch
        %7549 = sbr.rel (%p7547) target = $region52
      $region51: #{residual_block.1} parent=5 // pred_region
        %s7550 = ssub.s32 %s16, 2
        // Predicated region
        $region53: #{residual_block.1} parent=51 // pred_check
          %p7551 = pneg %p113
        $region54: #{residual_block.1} parent=51 // pred_check_branch
          %7553 = sbr.rel (%p7551) target = $region56
        $region55: #{residual_block.1} parent=51 // pred_region
          %s7554 = sand.u32 %s98, 1
          %s7555 = scalar_lea.sflag [#allocation7], %s7554
          %s7556 = sand.u32 %s98, 1
          %s7557 = smul.addr %s7556, 64
          %s7558 = scalar_lea.vmem [#allocation11], %s7557
          %7559 = dma.done %s7555, 1024
        $region56: #{residual_block.1} parent=51 // pred_fallthru
          _
      $region52: #{residual_block.1} parent=5 // pred_fallthru
        _
    $region6: #{residual_block.1} parent=1 // loop_footer
      %s20 = sadd.s32 1, %s16
    $region7: #{residual_block.1} parent=1 // loop_footer_branch
      %15 = sbr.rel target = $region3
    $region8: #{residual_block.1} parent=1 // loop_exit
      _
    %7560 = vsyncpa [#allocation6], 1
    %s7561 = scalar_lea.sflag [#allocation6], 1
    %7562 = vsyncpa %s7561, 1
    %7563 = vsyncpa [#allocation9], 1
    %7564 = vsyncpa [#allocation7], 1
    %s7565 = scalar_lea.sflag [#allocation7], 1
    %7566 = vsyncpa %s7565, 1

</llo_original>
